<compile_context>
chip_gen: v5e
topology: v5e:2x2
jax: 0.10.0
libtpu: 0.0.40
codegen_flags: <defaults>
</compile_context>

<pallas_src>
import numpy as np
import jax
import jax.numpy as jnp
from jax.experimental import pallas as pl
from jax.experimental.pallas import tpu as pltpu

_BN_EPS = 1e-5
_SQRT_HALF = 0.7071067811865476


# ----------------------------------------------------------------- in-kernel helpers
def _erf(x):
    # Abramowitz & Stegun 7.1.26 polynomial erf; the approx reciprocal (EUP slot) adds a
    # ~2^-12 relative error on top of the 1.5e-7 polynomial bound, so GELU matches
    # torch.nn.GELU(approximate='none') to ~1e-4 -- well inside the test tolerance.
    a1, a2, a3, a4, a5 = (0.254829592, -0.284496736, 1.421413741,
                          -1.453152027, 1.061405429)
    p = 0.3275911
    ax = jnp.abs(x)
    t = pl.reciprocal(1.0 + p * ax, approx=True)
    poly = ((((a5 * t + a4) * t + a3) * t + a2) * t + a1) * t
    y = 1.0 - poly * jnp.exp(-ax * ax)
    return jnp.where(x >= 0, y, -y)


def _gelu(x):
    return 0.5 * x * (1.0 + _erf(x * _SQRT_HALF))


def _conv_bn(x, col_ref, w_ref, sc_ref, sh_ref, H, W):
    """3x3 'same' conv + folded BN on a flat (R=H*W, Cin) image -> (R, Cout) f32.

    Builds a (R, 9*Cin) im2col scratch: tap t = 3*(dy+1)+(dx+1) holds x shifted by
    s = dy*W + dx, with out-of-image rows zeroed and the row-wraparound contamination of
    the dx=+-1 taps removed by per-column masks.  One bf16 MXU matmul (K = 9*Cin) then
    produces the whole conv output.
    """
    R = H * W
    Cin = x.shape[1]
    colidx = jax.lax.broadcasted_iota(jnp.int32, (R, 1), 0) % W
    ml = (colidx != 0).astype(jnp.float32)        # kills dx=-1 wrap (output col 0)
    mr = (colidx != W - 1).astype(jnp.float32)    # kills dx=+1 wrap (output col W-1)
    t = 0
    for dy in (-1, 0, 1):
        for dx in (-1, 0, 1):
            s = dy * W + dx
            lo, hi = max(0, -s), R - max(0, s)    # dest rows that read inside the image
            blk = slice(t * Cin, (t + 1) * Cin)
            tap = x[lo + s:hi + s, :]
            if dx == -1:
                tap = tap * ml[lo:hi, :]
            elif dx == 1:
                tap = tap * mr[lo:hi, :]
            if lo > 0:
                col_ref[0:lo, blk] = jnp.zeros((lo, Cin), col_ref.dtype)
            col_ref[lo:hi, blk] = tap.astype(col_ref.dtype)
            if hi < R:
                col_ref[hi:R, blk] = jnp.zeros((R - hi, Cin), col_ref.dtype)
            t += 1
    acc = jnp.dot(col_ref[...].astype(jnp.bfloat16), w_ref[...],
                  preferred_element_type=jnp.float32)
    return acc * sc_ref[...] + sh_ref[...]


def _pool2x2(y, vbuf_ref, H, W):
    """2x2 max-pool of a flat (H*W, C) f32 value -> (H*W//4, C) f32 value."""
    R = H * W
    for q in range(H // 2):                                   # vertical pair max (contig.)
        top = y[(2 * q) * W:(2 * q + 1) * W, :]
        bot = y[(2 * q + 1) * W:(2 * q + 2) * W, :]
        vbuf_ref[q * W:(q + 1) * W, :] = jnp.maximum(top, bot)
    p0 = vbuf_ref[pl.ds(0, R // 4, stride=2), :]              # horizontal pair max
    p1 = vbuf_ref[pl.ds(1, R // 4, stride=2), :]
    return jnp.maximum(p0, p1)


def _upsample2x(y, hbuf_ref, dst_ref, H, W):
    """Nearest 2x upsample of a flat (H*W, C) value into dst_ref (4*H*W, C)."""
    R = H * W
    hbuf_ref[pl.ds(0, R, stride=2), :] = y                    # horizontal duplication
    hbuf_ref[pl.ds(1, R, stride=2), :] = y
    for h in range(H):                                        # vertical duplication
        blk = hbuf_ref[2 * h * W:2 * h * W + 2 * W, :]
        dst_ref[4 * h * W:4 * h * W + 2 * W, :] = blk.astype(dst_ref.dtype)
        dst_ref[4 * h * W + 2 * W:4 * h * W + 4 * W, :] = blk.astype(dst_ref.dtype)


# ---------------------------------------------------------------------- fused pallas call
def _bcast_spec(shape):
    nd = len(shape)
    return pl.BlockSpec(shape, lambda n, _nd=nd: (0,) * _nd)


def _hourglass_pallas(x_flat, params, H0, W0):
    N, R0, C0 = x_flat.shape
    enc, mid, dec = params["enc"], params["mid"], params["dec"]
    n_enc, n_dec = len(enc), len(dec)

    # static per-conv geometry, in call order: enc..., mid1, mid2, dec...
    sites = []
    h, w = H0, W0
    for (wk, _, _) in enc:
        sites.append((h, w, wk.shape[2], wk.shape[3]))
        h, w = h // 2, w // 2
    for (wk, _, _) in mid:
        sites.append((h, w, wk.shape[2], wk.shape[3]))
    for (wk, _, _) in dec:
        sites.append((h, w, wk.shape[2], wk.shape[3]))
        h, w = 2 * h, 2 * w
    n_conv = len(sites)
    H_out, W_out = h, w
    C_out = dec[-1][0].shape[3]
    R_out = H_out * W_out

    # inputs: x, then (weight(9Cin,Cout) bf16, scale(1,Cout), shift(1,Cout)) per conv
    inputs = [x_flat]
    in_specs = [pl.BlockSpec((None, R0, C0), lambda n: (n, 0, 0))]
    for (H, W, cin, cout), (wk, sc, sh) in zip(sites, list(enc) + list(mid) + list(dec)):
        inputs += [wk.reshape(9 * cin, cout).astype(jnp.bfloat16), sc, sh]
        in_specs += [_bcast_spec((9 * cin, cout)),
                     _bcast_spec((1, cout)), _bcast_spec((1, cout))]

    # scratch: im2col per conv, pool buffer per encoder, h-dup + (non-final) dest per decoder
    scratch = [pltpu.VMEM((H * W, 9 * cin), jnp.float32) for (H, W, cin, _) in sites]
    scratch += [pltpu.VMEM((H * W // 2, cout), jnp.float32)
                for (H, W, _, cout) in sites[:n_enc]]
    dec_sites = sites[n_enc + 2:]
    scratch += [pltpu.VMEM((2 * H * W, cout), jnp.float32) for (H, W, _, cout) in dec_sites]
    scratch += [pltpu.VMEM((4 * H * W, cout), jnp.float32)
                for (H, W, _, cout) in dec_sites[:-1]]

    def kernel(*refs):
        i = 0
        x_ref = refs[i]; i += 1
        conv_refs = [refs[i + 3 * k:i + 3 * k + 3] for k in range(n_conv)]
        i += 3 * n_conv
        out_ref = refs[i]; i += 1
        col_refs = refs[i:i + n_conv]; i += n_conv
        vbufs = refs[i:i + n_enc]; i += n_enc
        hbufs = refs[i:i + n_dec]; i += n_dec
        dsts = refs[i:i + n_dec - 1]; i += n_dec - 1

        x = x_ref[...].astype(jnp.float32)
        residuals = []
        ci = 0
        # ---------------- encoder: pool(gelu(bn(conv(x)))) ----------------
        for e in range(n_enc):
            H, W, _, _ = sites[ci]
            w_r, sc_r, sh_r = conv_refs[ci]
            y = _gelu(_conv_bn(x, col_refs[ci], w_r, sc_r, sh_r, H, W))
            x = _pool2x2(y, vbufs[e], H, W)
            residuals.append(x)
            ci += 1
        # ---------------- middle: ResidualBlock ---------------------------
        H, W, _, _ = sites[ci]
        w_r, sc_r, sh_r = conv_refs[ci]
        t = _gelu(_conv_bn(x, col_refs[ci], w_r, sc_r, sh_r, H, W)); ci += 1
        w_r, sc_r, sh_r = conv_refs[ci]
        x = _gelu(_conv_bn(t, col_refs[ci], w_r, sc_r, sh_r, H, W) + x); ci += 1
        # ---------------- decoder: up(gelu(bn(conv(gelu(x+res))))) --------
        for d in range(n_dec):
            H, W, _, _ = sites[ci]
            w_r, sc_r, sh_r = conv_refs[ci]
            t = _gelu(x + residuals.pop())
            y = _gelu(_conv_bn(t, col_refs[ci], w_r, sc_r, sh_r, H, W))
            dst = out_ref if d == n_dec - 1 else dsts[d]
            _upsample2x(y, hbufs[d], dst, H, W)
            if d < n_dec - 1:
                x = dsts[d][...]
            ci += 1

    return pl.pallas_call(
        kernel,
        out_shape=jax.ShapeDtypeStruct((N, R_out, C_out), x_flat.dtype),
        grid=(N,),
        in_specs=in_specs,
        out_specs=pl.BlockSpec((None, R_out, C_out), lambda n: (n, 0, 0)),
        scratch_shapes=scratch,
        compiler_params=pltpu.CompilerParams(
            dimension_semantics=("parallel",),
            vmem_limit_bytes=32 * 1024 * 1024),
    )(*inputs)


def hourglass_forward(x_nchw, params):
    """Pallas implementation of HourGlassModule.forward. Input/output are NCHW."""
    N, C0, H0, W0 = x_nchw.shape
    x = jnp.transpose(x_nchw, (0, 2, 3, 1)).reshape(N, H0 * W0, C0)
    out = _hourglass_pallas(x, params, H0, W0)
    C_out = params["dec"][-1][0].shape[3]
    return jnp.transpose(out.reshape(N, H0, W0, C_out), (0, 3, 1, 2))


# ---------------------------------------------------------------------- params / model
def _conv_bn_params(key, cin, cout):
    kw, kg, kb, km, kv = jax.random.split(key, 5)
    # conv weight in HWIO (3, 3, Cin, Cout); flattened host-side to (9*Cin, Cout) for the MXU
    w = jax.random.normal(kw, (3, 3, cin, cout), jnp.float32) * (1.0 / float(np.sqrt(9 * cin)))
    gamma = 1.0 + 0.1 * jax.random.normal(kg, (cout,), jnp.float32)
    beta = 0.1 * jax.random.normal(kb, (cout,), jnp.float32)
    rmean = 0.1 * jax.random.normal(km, (cout,), jnp.float32)
    rvar = 1.0 + 0.5 * jax.random.uniform(kv, (cout,), jnp.float32)
    scale = gamma / jnp.sqrt(rvar + _BN_EPS)
    shift = beta - rmean * scale
    return w, scale.reshape(1, cout), shift.reshape(1, cout)


def make_hourglass_params(key, in_channels, channel_num_list):
    keys = iter(jax.random.split(key, 64))
    params = {"enc": [], "mid": None, "dec": []}
    cin = in_channels
    for cout in channel_num_list[1:]:
        params["enc"].append(_conv_bn_params(next(keys), cin, cout))
        cin = cout
    params["mid"] = (_conv_bn_params(next(keys), cin, cin),
                     _conv_bn_params(next(keys), cin, cin))
    for cout in channel_num_list[::-1][1:]:
        params["dec"].append(_conv_bn_params(next(keys), cin, cout))
        cin = cout
    return params


# ------------------------------------------------------------------ pure-JAX reference
def _ref_forward(x_nchw, params):
    x = jnp.transpose(x_nchw, (0, 2, 3, 1))

    def conv(v, w):
        return jax.lax.conv_general_dilated(
            v, w, (1, 1), ((1, 1), (1, 1)),
            dimension_numbers=("NHWC", "HWIO", "NHWC"),
            precision=jax.lax.Precision.HIGHEST)

    gelu = lambda v: jax.nn.gelu(v, approximate=False)
    bn = lambda v, sc, sh: v * sc.reshape(1, 1, 1, -1) + sh.reshape(1, 1, 1, -1)

    residuals = []
    for (w, sc, sh) in params["enc"]:
        y = gelu(bn(conv(x, w), sc, sh))
        x = jax.lax.reduce_window(y, -jnp.inf, jax.lax.max,
                                  (1, 2, 2, 1), (1, 2, 2, 1), "VALID")
        residuals.append(x)
    (w1, s1, b1), (w2, s2, b2) = params["mid"]
    t = gelu(bn(conv(x, w1), s1, b1))
    x = gelu(bn(conv(t, w2), s2, b2) + x)
    for (w, sc, sh) in params["dec"]:
        t = gelu(x + residuals.pop())
        y = gelu(bn(conv(t, w), sc, sh))
        x = jnp.repeat(jnp.repeat(y, 2, axis=1), 2, axis=2)
    return jnp.transpose(x, (0, 3, 1, 2))


# -------------------------------------------------------------------------------- main
if __name__ == "__main__":
    key = jax.random.PRNGKey(0)
    kx, kp = jax.random.split(key)

    in_channels = 4
    channel_num_list = [4, 8, 16]        # enc: 4->8->16, middle: 16, dec: 16->8->4
    N, H, W = 2, 16, 16

    x = jax.random.normal(kx, (N, in_channels, H, W), jnp.float32)   # NCHW, like PyTorch
    params = make_hourglass_params(kp, in_channels, channel_num_list)

    fwd = jax.jit(hourglass_forward)
    out = jax.block_until_ready(fwd(x, params))
    assert out.shape == (N, channel_num_list[0], H, W), out.shape

    ref = _ref_forward(x, params)
    np.testing.assert_allclose(np.asarray(out), np.asarray(ref), rtol=5e-2, atol=5e-2)

    print("KERNEL_OK")
</pallas_src>

<mosaic_0001>
module attributes {stable_mosaic.version = 11 : i64} {
  func.func @kernel(%arg0: i32, %arg1: memref<1x256x4xf32, #tpu.memory_space<vmem>>, %arg2: memref<36x8xbf16, #tpu.memory_space<vmem>>, %arg3: memref<1x8xf32, #tpu.memory_space<vmem>>, %arg4: memref<1x8xf32, #tpu.memory_space<vmem>>, %arg5: memref<72x16xbf16, #tpu.memory_space<vmem>>, %arg6: memref<1x16xf32, #tpu.memory_space<vmem>>, %arg7: memref<1x16xf32, #tpu.memory_space<vmem>>, %arg8: memref<144x16xbf16, #tpu.memory_space<vmem>>, %arg9: memref<1x16xf32, #tpu.memory_space<vmem>>, %arg10: memref<1x16xf32, #tpu.memory_space<vmem>>, %arg11: memref<144x16xbf16, #tpu.memory_space<vmem>>, %arg12: memref<1x16xf32, #tpu.memory_space<vmem>>, %arg13: memref<1x16xf32, #tpu.memory_space<vmem>>, %arg14: memref<144x8xbf16, #tpu.memory_space<vmem>>, %arg15: memref<1x8xf32, #tpu.memory_space<vmem>>, %arg16: memref<1x8xf32, #tpu.memory_space<vmem>>, %arg17: memref<72x4xbf16, #tpu.memory_space<vmem>>, %arg18: memref<1x4xf32, #tpu.memory_space<vmem>>, %arg19: memref<1x4xf32, #tpu.memory_space<vmem>>, %arg20: memref<1x256x4xf32, #tpu.memory_space<vmem>>, %arg21: memref<256x36xf32, #tpu.memory_space<vmem>>, %arg22: memref<64x72xf32, #tpu.memory_space<vmem>>, %arg23: memref<16x144xf32, #tpu.memory_space<vmem>>, %arg24: memref<16x144xf32, #tpu.memory_space<vmem>>, %arg25: memref<16x144xf32, #tpu.memory_space<vmem>>, %arg26: memref<64x72xf32, #tpu.memory_space<vmem>>, %arg27: memref<128x8xf32, #tpu.memory_space<vmem>>, %arg28: memref<32x16xf32, #tpu.memory_space<vmem>>, %arg29: memref<32x8xf32, #tpu.memory_space<vmem>>, %arg30: memref<128x4xf32, #tpu.memory_space<vmem>>, %arg31: memref<64x8xf32, #tpu.memory_space<vmem>>) attributes {dimension_semantics = [#tpu.dimension_semantics<parallel>], iteration_bounds = array<i64: 2>, scalar_prefetch = 0 : i64, scratch_operands = 11 : i64, tpu.core_type = #tpu.core_type<tc>, window_params = [{transform_indices = @transform_0, window_bounds = array<i64: 1, 256, 4>}, {pipeline_mode = #tpu.pipeline_mode<synchronous>, transform_indices = @transform_1, window_bounds = array<i64: 36, 8>}, {pipeline_mode = #tpu.pipeline_mode<synchronous>, transform_indices = @transform_2, window_bounds = array<i64: 1, 8>}, {pipeline_mode = #tpu.pipeline_mode<synchronous>, transform_indices = @transform_3, window_bounds = array<i64: 1, 8>}, {pipeline_mode = #tpu.pipeline_mode<synchronous>, transform_indices = @transform_4, window_bounds = array<i64: 72, 16>}, {pipeline_mode = #tpu.pipeline_mode<synchronous>, transform_indices = @transform_5, window_bounds = array<i64: 1, 16>}, {pipeline_mode = #tpu.pipeline_mode<synchronous>, transform_indices = @transform_6, window_bounds = array<i64: 1, 16>}, {pipeline_mode = #tpu.pipeline_mode<synchronous>, transform_indices = @transform_7, window_bounds = array<i64: 144, 16>}, {pipeline_mode = #tpu.pipeline_mode<synchronous>, transform_indices = @transform_8, window_bounds = array<i64: 1, 16>}, {pipeline_mode = #tpu.pipeline_mode<synchronous>, transform_indices = @transform_9, window_bounds = array<i64: 1, 16>}, {pipeline_mode = #tpu.pipeline_mode<synchronous>, transform_indices = @transform_10, window_bounds = array<i64: 144, 16>}, {pipeline_mode = #tpu.pipeline_mode<synchronous>, transform_indices = @transform_11, window_bounds = array<i64: 1, 16>}, {pipeline_mode = #tpu.pipeline_mode<synchronous>, transform_indices = @transform_12, window_bounds = array<i64: 1, 16>}, {pipeline_mode = #tpu.pipeline_mode<synchronous>, transform_indices = @transform_13, window_bounds = array<i64: 144, 8>}, {pipeline_mode = #tpu.pipeline_mode<synchronous>, transform_indices = @transform_14, window_bounds = array<i64: 1, 8>}, {pipeline_mode = #tpu.pipeline_mode<synchronous>, transform_indices = @transform_15, window_bounds = array<i64: 1, 8>}, {pipeline_mode = #tpu.pipeline_mode<synchronous>, transform_indices = @transform_16, window_bounds = array<i64: 72, 4>}, {pipeline_mode = #tpu.pipeline_mode<synchronous>, transform_indices = @transform_17, window_bounds = array<i64: 1, 4>}, {pipeline_mode = #tpu.pipeline_mode<synchronous>, transform_indices = @transform_18, window_bounds = array<i64: 1, 4>}, {transform_indices = @transform_19, window_bounds = array<i64: 1, 256, 4>}]} {
    %c0 = arith.constant 0 : index
    %c0_0 = arith.constant 0 : index
    %c0_1 = arith.constant 0 : index
    %0 = vector.load %arg1[%c0, %c0_0, %c0_1] : memref<1x256x4xf32, #tpu.memory_space<vmem>>, vector<1x256x4xf32>
    %1 = vector.shape_cast %0 : vector<1x256x4xf32> to vector<256x4xf32>
    %2 = tpu.iota {dimensions = array<i32: 0>} : vector<256x1xi32>
    %c16_i32 = arith.constant 16 : i32
    %c0_i32 = arith.constant 0 : i32
    %3 = arith.cmpi eq, %c16_i32, %c0_i32 : i32
    %c1_i32 = arith.constant 1 : i32
    %4 = arith.select %3, %c1_i32, %c16_i32 : i32
    %5 = vector.broadcast %4 : i32 to vector<256x1xi32>
    %6 = arith.remsi %2, %5 : vector<256x1xi32>
    %c0_i32_2 = arith.constant 0 : i32
    %7 = vector.broadcast %c0_i32_2 : i32 to vector<256x1xi32>
    %8 = arith.cmpi ne, %6, %7 : vector<256x1xi32>
    %c0_i32_3 = arith.constant 0 : i32
    %9 = vector.broadcast %c0_i32_3 : i32 to vector<256x1xi32>
    %10 = arith.cmpi slt, %6, %9 : vector<256x1xi32>
    %c0_i32_4 = arith.constant 0 : i32
    %11 = arith.cmpi slt, %4, %c0_i32_4 : i32
    %12 = vector.broadcast %11 : i1 to vector<256x1xi1>
    %13 = vector.broadcast %12 : vector<256x1xi1> to vector<256x1xi1>
    %14 = arith.xori %10, %13 : vector<256x1xi1>
    %15 = arith.andi %14, %8 : vector<256x1xi1>
    %16 = vector.broadcast %4 : i32 to vector<256x1xi32>
    %17 = arith.addi %6, %16 : vector<256x1xi32>
    %18 = arith.select %15, %17, %6 : vector<256x1xi1>, vector<256x1xi32>
    %c0_i32_5 = arith.constant 0 : i32
    %19 = vector.broadcast %c0_i32_5 : i32 to vector<256x1xi32>
    %20 = arith.cmpi ne, %18, %19 : vector<256x1xi32>
    %21 = arith.extui %20 : vector<256x1xi1> to vector<256x1xi32>
    %22 = arith.sitofp %21 : vector<256x1xi32> to vector<256x1xf32>
    %c15_i32 = arith.constant 15 : i32
    %23 = vector.broadcast %c15_i32 : i32 to vector<256x1xi32>
    %24 = arith.cmpi ne, %18, %23 : vector<256x1xi32>
    %25 = arith.extui %24 : vector<256x1xi1> to vector<256x1xi32>
    %26 = arith.sitofp %25 : vector<256x1xi32> to vector<256x1xf32>
    %27 = vector.extract_strided_slice %1 {offsets = [0, 0], sizes = [239, 4], strides = [1, 1]} : vector<256x4xf32> to vector<239x4xf32>
    %28 = vector.extract_strided_slice %22 {offsets = [17, 0], sizes = [239, 1], strides = [1, 1]} : vector<256x1xf32> to vector<239x1xf32>
    %29 = vector.broadcast %28 : vector<239x1xf32> to vector<239x4xf32>
    %30 = arith.mulf %27, %29 : vector<239x4xf32>
    %cst = arith.constant 0.000000e+00 : f32
    %31 = vector.broadcast %cst : f32 to vector<17x4xf32>
    %c0_6 = arith.constant 0 : index
    %c0_7 = arith.constant 0 : index
    %32 = vector.load %arg21[%c0_6, %c0_7] : memref<256x36xf32, #tpu.memory_space<vmem>>, vector<17x4xf32>
    tpu.vector_store %arg21[%c0_6, %c0_7], %31 {strides = array<i32>} : memref<256x36xf32, #tpu.memory_space<vmem>>, vector<17x4xf32>,
    %c17 = arith.constant 17 : index
    %c0_8 = arith.constant 0 : index
    %33 = vector.load %arg21[%c17, %c0_8] : memref<256x36xf32, #tpu.memory_space<vmem>>, vector<239x4xf32>
    tpu.vector_store %arg21[%c17, %c0_8], %30 {strides = array<i32>} : memref<256x36xf32, #tpu.memory_space<vmem>>, vector<239x4xf32>,
    %34 = vector.extract_strided_slice %1 {offsets = [0, 0], sizes = [240, 4], strides = [1, 1]} : vector<256x4xf32> to vector<240x4xf32>
    %cst_9 = arith.constant 0.000000e+00 : f32
    %35 = vector.broadcast %cst_9 : f32 to vector<16x4xf32>
    %c0_10 = arith.constant 0 : index
    %c4 = arith.constant 4 : index
    %36 = vector.load %arg21[%c0_10, %c4] : memref<256x36xf32, #tpu.memory_space<vmem>>, vector<16x4xf32>
    tpu.vector_store %arg21[%c0_10, %c4], %35 {strides = array<i32>} : memref<256x36xf32, #tpu.memory_space<vmem>>, vector<16x4xf32>,
    %c16 = arith.constant 16 : index
    %c4_11 = arith.constant 4 : index
    %37 = vector.load %arg21[%c16, %c4_11] : memref<256x36xf32, #tpu.memory_space<vmem>>, vector<240x4xf32>
    tpu.vector_store %arg21[%c16, %c4_11], %34 {strides = array<i32>} : memref<256x36xf32, #tpu.memory_space<vmem>>, vector<240x4xf32>,
    %38 = vector.extract_strided_slice %1 {offsets = [0, 0], sizes = [241, 4], strides = [1, 1]} : vector<256x4xf32> to vector<241x4xf32>
    %39 = vector.extract_strided_slice %26 {offsets = [15, 0], sizes = [241, 1], strides = [1, 1]} : vector<256x1xf32> to vector<241x1xf32>
    %40 = vector.broadcast %39 : vector<241x1xf32> to vector<241x4xf32>
    %41 = arith.mulf %38, %40 : vector<241x4xf32>
    %cst_12 = arith.constant 0.000000e+00 : f32
    %42 = vector.broadcast %cst_12 : f32 to vector<15x4xf32>
    %c0_13 = arith.constant 0 : index
    %c8 = arith.constant 8 : index
    %43 = vector.load %arg21[%c0_13, %c8] : memref<256x36xf32, #tpu.memory_space<vmem>>, vector<15x4xf32>
    tpu.vector_store %arg21[%c0_13, %c8], %42 {strides = array<i32>} : memref<256x36xf32, #tpu.memory_space<vmem>>, vector<15x4xf32>,
    %c15 = arith.constant 15 : index
    %c8_14 = arith.constant 8 : index
    %44 = vector.load %arg21[%c15, %c8_14] : memref<256x36xf32, #tpu.memory_space<vmem>>, vector<241x4xf32>
    tpu.vector_store %arg21[%c15, %c8_14], %41 {strides = array<i32>} : memref<256x36xf32, #tpu.memory_space<vmem>>, vector<241x4xf32>,
    %45 = vector.extract_strided_slice %1 {offsets = [0, 0], sizes = [255, 4], strides = [1, 1]} : vector<256x4xf32> to vector<255x4xf32>
    %46 = vector.extract_strided_slice %22 {offsets = [1, 0], sizes = [255, 1], strides = [1, 1]} : vector<256x1xf32> to vector<255x1xf32>
    %47 = vector.broadcast %46 : vector<255x1xf32> to vector<255x4xf32>
    %48 = arith.mulf %45, %47 : vector<255x4xf32>
    %cst_15 = arith.constant 0.000000e+00 : f32
    %49 = vector.broadcast %cst_15 : f32 to vector<1x4xf32>
    %c0_16 = arith.constant 0 : index
    %c12 = arith.constant 12 : index
    %50 = vector.load %arg21[%c0_16, %c12] : memref<256x36xf32, #tpu.memory_space<vmem>>, vector<1x4xf32>
    tpu.vector_store %arg21[%c0_16, %c12], %49 {strides = array<i32>} : memref<256x36xf32, #tpu.memory_space<vmem>>, vector<1x4xf32>,
    %c1 = arith.constant 1 : index
    %c12_17 = arith.constant 12 : index
    %51 = vector.load %arg21[%c1, %c12_17] : memref<256x36xf32, #tpu.memory_space<vmem>>, vector<255x4xf32>
    tpu.vector_store %arg21[%c1, %c12_17], %48 {strides = array<i32>} : memref<256x36xf32, #tpu.memory_space<vmem>>, vector<255x4xf32>,
    %c0_18 = arith.constant 0 : index
    %c16_19 = arith.constant 16 : index
    %52 = vector.load %arg21[%c0_18, %c16_19] : memref<256x36xf32, #tpu.memory_space<vmem>>, vector<256x4xf32>
    tpu.vector_store %arg21[%c0_18, %c16_19], %1 {strides = array<i32>} : memref<256x36xf32, #tpu.memory_space<vmem>>, vector<256x4xf32>,
    %53 = vector.extract_strided_slice %1 {offsets = [1, 0], sizes = [255, 4], strides = [1, 1]} : vector<256x4xf32> to vector<255x4xf32>
    %54 = vector.extract_strided_slice %26 {offsets = [0, 0], sizes = [255, 1], strides = [1, 1]} : vector<256x1xf32> to vector<255x1xf32>
    %55 = vector.broadcast %54 : vector<255x1xf32> to vector<255x4xf32>
    %56 = arith.mulf %53, %55 : vector<255x4xf32>
    %c0_20 = arith.constant 0 : index
    %c20 = arith.constant 20 : index
    %57 = vector.load %arg21[%c0_20, %c20] : memref<256x36xf32, #tpu.memory_space<vmem>>, vector<255x4xf32>
    tpu.vector_store %arg21[%c0_20, %c20], %56 {strides = array<i32>} : memref<256x36xf32, #tpu.memory_space<vmem>>, vector<255x4xf32>,
    %cst_21 = arith.constant 0.000000e+00 : f32
    %58 = vector.broadcast %cst_21 : f32 to vector<1x4xf32>
    %c255 = arith.constant 255 : index
    %c20_22 = arith.constant 20 : index
    %59 = vector.load %arg21[%c255, %c20_22] : memref<256x36xf32, #tpu.memory_space<vmem>>, vector<1x4xf32>
    tpu.vector_store %arg21[%c255, %c20_22], %58 {strides = array<i32>} : memref<256x36xf32, #tpu.memory_space<vmem>>, vector<1x4xf32>,
    %60 = vector.extract_strided_slice %1 {offsets = [15, 0], sizes = [241, 4], strides = [1, 1]} : vector<256x4xf32> to vector<241x4xf32>
    %61 = vector.extract_strided_slice %22 {offsets = [0, 0], sizes = [241, 1], strides = [1, 1]} : vector<256x1xf32> to vector<241x1xf32>
    %62 = vector.broadcast %61 : vector<241x1xf32> to vector<241x4xf32>
    %63 = arith.mulf %60, %62 : vector<241x4xf32>
    %c0_23 = arith.constant 0 : index
    %c24 = arith.constant 24 : index
    %64 = vector.load %arg21[%c0_23, %c24] : memref<256x36xf32, #tpu.memory_space<vmem>>, vector<241x4xf32>
    tpu.vector_store %arg21[%c0_23, %c24], %63 {strides = array<i32>} : memref<256x36xf32, #tpu.memory_space<vmem>>, vector<241x4xf32>,
    %cst_24 = arith.constant 0.000000e+00 : f32
    %65 = vector.broadcast %cst_24 : f32 to vector<15x4xf32>
    %c241 = arith.constant 241 : index
    %c24_25 = arith.constant 24 : index
    %66 = vector.load %arg21[%c241, %c24_25] : memref<256x36xf32, #tpu.memory_space<vmem>>, vector<15x4xf32>
    tpu.vector_store %arg21[%c241, %c24_25], %65 {strides = array<i32>} : memref<256x36xf32, #tpu.memory_space<vmem>>, vector<15x4xf32>,
    %67 = vector.extract_strided_slice %1 {offsets = [16, 0], sizes = [240, 4], strides = [1, 1]} : vector<256x4xf32> to vector<240x4xf32>
    %c0_26 = arith.constant 0 : index
    %c28 = arith.constant 28 : index
    %68 = vector.load %arg21[%c0_26, %c28] : memref<256x36xf32, #tpu.memory_space<vmem>>, vector<240x4xf32>
    tpu.vector_store %arg21[%c0_26, %c28], %67 {strides = array<i32>} : memref<256x36xf32, #tpu.memory_space<vmem>>, vector<240x4xf32>,
    %cst_27 = arith.constant 0.000000e+00 : f32
    %69 = vector.broadcast %cst_27 : f32 to vector<16x4xf32>
    %c240 = arith.constant 240 : index
    %c28_28 = arith.constant 28 : index
    %70 = vector.load %arg21[%c240, %c28_28] : memref<256x36xf32, #tpu.memory_space<vmem>>, vector<16x4xf32>
    tpu.vector_store %arg21[%c240, %c28_28], %69 {strides = array<i32>} : memref<256x36xf32, #tpu.memory_space<vmem>>, vector<16x4xf32>,
    %71 = vector.extract_strided_slice %1 {offsets = [17, 0], sizes = [239, 4], strides = [1, 1]} : vector<256x4xf32> to vector<239x4xf32>
    %72 = vector.extract_strided_slice %26 {offsets = [0, 0], sizes = [239, 1], strides = [1, 1]} : vector<256x1xf32> to vector<239x1xf32>
    %73 = vector.broadcast %72 : vector<239x1xf32> to vector<239x4xf32>
    %74 = arith.mulf %71, %73 : vector<239x4xf32>
    %c0_29 = arith.constant 0 : index
    %c32 = arith.constant 32 : index
    %75 = vector.load %arg21[%c0_29, %c32] : memref<256x36xf32, #tpu.memory_space<vmem>>, vector<239x4xf32>
    tpu.vector_store %arg21[%c0_29, %c32], %74 {strides = array<i32>} : memref<256x36xf32, #tpu.memory_space<vmem>>, vector<239x4xf32>,
    %cst_30 = arith.constant 0.000000e+00 : f32
    %76 = vector.broadcast %cst_30 : f32 to vector<17x4xf32>
    %c239 = arith.constant 239 : index
    %c32_31 = arith.constant 32 : index
    %77 = vector.load %arg21[%c239, %c32_31] : memref<256x36xf32, #tpu.memory_space<vmem>>, vector<17x4xf32>
    tpu.vector_store %arg21[%c239, %c32_31], %76 {strides = array<i32>} : memref<256x36xf32, #tpu.memory_space<vmem>>, vector<17x4xf32>,
    %c0_32 = arith.constant 0 : index
    %c0_33 = arith.constant 0 : index
    %78 = vector.load %arg21[%c0_32, %c0_33] : memref<256x36xf32, #tpu.memory_space<vmem>>, vector<256x36xf32>
    %79 = arith.truncf %78 : vector<256x36xf32> to vector<256x36xbf16>
    %c0_34 = arith.constant 0 : index
    %c0_35 = arith.constant 0 : index
    %80 = vector.load %arg2[%c0_34, %c0_35] : memref<36x8xbf16, #tpu.memory_space<vmem>>, vector<36x8xbf16>
    %cst_36 = arith.constant dense<0.000000e+00> : vector<256x8xf32>
    %81 = tpu.matmul %79, %80, %cst_36 {dimension_numbers = #tpu.dot_dimension_numbers<[1], [0], [0], [1], [0, 0, 1, 1], [], []>} : vector<256x36xbf16>, vector<36x8xbf16>, vector<256x8xf32> -> vector<256x8xf32>
    %c0_37 = arith.constant 0 : index
    %c0_38 = arith.constant 0 : index
    %82 = vector.load %arg3[%c0_37, %c0_38] : memref<1x8xf32, #tpu.memory_space<vmem>>, vector<1x8xf32>
    %83 = vector.broadcast %82 : vector<1x8xf32> to vector<256x8xf32>
    %84 = arith.mulf %81, %83 : vector<256x8xf32>
    %c0_39 = arith.constant 0 : index
    %c0_40 = arith.constant 0 : index
    %85 = vector.load %arg4[%c0_39, %c0_40] : memref<1x8xf32, #tpu.memory_space<vmem>>, vector<1x8xf32>
    %86 = vector.broadcast %85 : vector<1x8xf32> to vector<256x8xf32>
    %87 = arith.addf %84, %86 : vector<256x8xf32>
    %cst_41 = arith.constant 5.000000e-01 : f32
    %88 = vector.broadcast %cst_41 : f32 to vector<256x8xf32>
    %89 = arith.mulf %88, %87 : vector<256x8xf32>
    %cst_42 = arith.constant 0.707106769 : f32
    %90 = vector.broadcast %cst_42 : f32 to vector<256x8xf32>
    %91 = arith.mulf %87, %90 : vector<256x8xf32>
    %92 = math.absf %91 : vector<256x8xf32>
    %cst_43 = arith.constant 0.327591091 : f32
    %93 = vector.broadcast %cst_43 : f32 to vector<256x8xf32>
    %94 = arith.mulf %93, %92 : vector<256x8xf32>
    %cst_44 = arith.constant 1.000000e+00 : f32
    %95 = vector.broadcast %cst_44 : f32 to vector<256x8xf32>
    %96 = arith.addf %95, %94 : vector<256x8xf32>
    %97 = tpu.reciprocal %96 {approx = true} : vector<256x8xf32> -> vector<256x8xf32>
    %cst_45 = arith.constant 1.06140542 : f32
    %98 = vector.broadcast %cst_45 : f32 to vector<256x8xf32>
    %99 = arith.mulf %98, %97 : vector<256x8xf32>
    %cst_46 = arith.constant -1.45315206 : f32
    %100 = vector.broadcast %cst_46 : f32 to vector<256x8xf32>
    %101 = arith.addf %99, %100 : vector<256x8xf32>
    %102 = arith.mulf %101, %97 : vector<256x8xf32>
    %cst_47 = arith.constant 1.42141378 : f32
    %103 = vector.broadcast %cst_47 : f32 to vector<256x8xf32>
    %104 = arith.addf %102, %103 : vector<256x8xf32>
    %105 = arith.mulf %104, %97 : vector<256x8xf32>
    %cst_48 = arith.constant -0.284496725 : f32
    %106 = vector.broadcast %cst_48 : f32 to vector<256x8xf32>
    %107 = arith.addf %105, %106 : vector<256x8xf32>
    %108 = arith.mulf %107, %97 : vector<256x8xf32>
    %cst_49 = arith.constant 0.254829586 : f32
    %109 = vector.broadcast %cst_49 : f32 to vector<256x8xf32>
    %110 = arith.addf %108, %109 : vector<256x8xf32>
    %111 = arith.mulf %110, %97 : vector<256x8xf32>
    %cst_50 = arith.constant 0.000000e+00 : f32
    %112 = vector.broadcast %cst_50 : f32 to vector<256x8xf32>
    %113 = arith.subf %112, %92 : vector<256x8xf32>
    %114 = arith.mulf %113, %92 : vector<256x8xf32>
    %115 = math.exp %114 : vector<256x8xf32>
    %116 = arith.mulf %111, %115 : vector<256x8xf32>
    %cst_51 = arith.constant 1.000000e+00 : f32
    %117 = vector.broadcast %cst_51 : f32 to vector<256x8xf32>
    %118 = arith.subf %117, %116 : vector<256x8xf32>
    %cst_52 = arith.constant 0.000000e+00 : f32
    %119 = vector.broadcast %cst_52 : f32 to vector<256x8xf32>
    %120 = arith.cmpf oge, %91, %119 : vector<256x8xf32>
    %cst_53 = arith.constant 0.000000e+00 : f32
    %121 = vector.broadcast %cst_53 : f32 to vector<256x8xf32>
    %122 = arith.subf %121, %118 : vector<256x8xf32>
    %123 = arith.select %120, %118, %122 : vector<256x8xi1>, vector<256x8xf32>
    %cst_54 = arith.constant 1.000000e+00 : f32
    %124 = vector.broadcast %cst_54 : f32 to vector<256x8xf32>
    %125 = arith.addf %124, %123 : vector<256x8xf32>
    %126 = arith.mulf %89, %125 : vector<256x8xf32>
    %127 = vector.extract_strided_slice %126 {offsets = [0, 0], sizes = [16, 8], strides = [1, 1]} : vector<256x8xf32> to vector<16x8xf32>
    %128 = vector.extract_strided_slice %126 {offsets = [16, 0], sizes = [16, 8], strides = [1, 1]} : vector<256x8xf32> to vector<16x8xf32>
    %129 = arith.maximumf %127, %128 : vector<16x8xf32>
    %c0_55 = arith.constant 0 : index
    %c0_56 = arith.constant 0 : index
    %130 = vector.load %arg27[%c0_55, %c0_56] : memref<128x8xf32, #tpu.memory_space<vmem>>, vector<16x8xf32>
    tpu.vector_store %arg27[%c0_55, %c0_56], %129 {strides = array<i32>} : memref<128x8xf32, #tpu.memory_space<vmem>>, vector<16x8xf32>,
    %131 = vector.extract_strided_slice %126 {offsets = [32, 0], sizes = [16, 8], strides = [1, 1]} : vector<256x8xf32> to vector<16x8xf32>
    %132 = vector.extract_strided_slice %126 {offsets = [48, 0], sizes = [16, 8], strides = [1, 1]} : vector<256x8xf32> to vector<16x8xf32>
    %133 = arith.maximumf %131, %132 : vector<16x8xf32>
    %c16_57 = arith.constant 16 : index
    %c0_58 = arith.constant 0 : index
    %134 = vector.load %arg27[%c16_57, %c0_58] : memref<128x8xf32, #tpu.memory_space<vmem>>, vector<16x8xf32>
    tpu.vector_store %arg27[%c16_57, %c0_58], %133 {strides = array<i32>} : memref<128x8xf32, #tpu.memory_space<vmem>>, vector<16x8xf32>,
    %135 = vector.extract_strided_slice %126 {offsets = [64, 0], sizes = [16, 8], strides = [1, 1]} : vector<256x8xf32> to vector<16x8xf32>
    %136 = vector.extract_strided_slice %126 {offsets = [80, 0], sizes = [16, 8], strides = [1, 1]} : vector<256x8xf32> to vector<16x8xf32>
    %137 = arith.maximumf %135, %136 : vector<16x8xf32>
    %c32_59 = arith.constant 32 : index
    %c0_60 = arith.constant 0 : index
    %138 = vector.load %arg27[%c32_59, %c0_60] : memref<128x8xf32, #tpu.memory_space<vmem>>, vector<16x8xf32>
    tpu.vector_store %arg27[%c32_59, %c0_60], %137 {strides = array<i32>} : memref<128x8xf32, #tpu.memory_space<vmem>>, vector<16x8xf32>,
    %139 = vector.extract_strided_slice %126 {offsets = [96, 0], sizes = [16, 8], strides = [1, 1]} : vector<256x8xf32> to vector<16x8xf32>
    %140 = vector.extract_strided_slice %126 {offsets = [112, 0], sizes = [16, 8], strides = [1, 1]} : vector<256x8xf32> to vector<16x8xf32>
    %141 = arith.maximumf %139, %140 : vector<16x8xf32>
    %c48 = arith.constant 48 : index
    %c0_61 = arith.constant 0 : index
    %142 = vector.load %arg27[%c48, %c0_61] : memref<128x8xf32, #tpu.memory_space<vmem>>, vector<16x8xf32>
    tpu.vector_store %arg27[%c48, %c0_61], %141 {strides = array<i32>} : memref<128x8xf32, #tpu.memory_space<vmem>>, vector<16x8xf32>,
    %143 = vector.extract_strided_slice %126 {offsets = [128, 0], sizes = [16, 8], strides = [1, 1]} : vector<256x8xf32> to vector<16x8xf32>
    %144 = vector.extract_strided_slice %126 {offsets = [144, 0], sizes = [16, 8], strides = [1, 1]} : vector<256x8xf32> to vector<16x8xf32>
    %145 = arith.maximumf %143, %144 : vector<16x8xf32>
    %c64 = arith.constant 64 : index
    %c0_62 = arith.constant 0 : index
    %146 = vector.load %arg27[%c64, %c0_62] : memref<128x8xf32, #tpu.memory_space<vmem>>, vector<16x8xf32>
    tpu.vector_store %arg27[%c64, %c0_62], %145 {strides = array<i32>} : memref<128x8xf32, #tpu.memory_space<vmem>>, vector<16x8xf32>,
    %147 = vector.extract_strided_slice %126 {offsets = [160, 0], sizes = [16, 8], strides = [1, 1]} : vector<256x8xf32> to vector<16x8xf32>
    %148 = vector.extract_strided_slice %126 {offsets = [176, 0], sizes = [16, 8], strides = [1, 1]} : vector<256x8xf32> to vector<16x8xf32>
    %149 = arith.maximumf %147, %148 : vector<16x8xf32>
    %c80 = arith.constant 80 : index
    %c0_63 = arith.constant 0 : index
    %150 = vector.load %arg27[%c80, %c0_63] : memref<128x8xf32, #tpu.memory_space<vmem>>, vector<16x8xf32>
    tpu.vector_store %arg27[%c80, %c0_63], %149 {strides = array<i32>} : memref<128x8xf32, #tpu.memory_space<vmem>>, vector<16x8xf32>,
    %151 = vector.extract_strided_slice %126 {offsets = [192, 0], sizes = [16, 8], strides = [1, 1]} : vector<256x8xf32> to vector<16x8xf32>
    %152 = vector.extract_strided_slice %126 {offsets = [208, 0], sizes = [16, 8], strides = [1, 1]} : vector<256x8xf32> to vector<16x8xf32>
    %153 = arith.maximumf %151, %152 : vector<16x8xf32>
    %c96 = arith.constant 96 : index
    %c0_64 = arith.constant 0 : index
    %154 = vector.load %arg27[%c96, %c0_64] : memref<128x8xf32, #tpu.memory_space<vmem>>, vector<16x8xf32>
    tpu.vector_store %arg27[%c96, %c0_64], %153 {strides = array<i32>} : memref<128x8xf32, #tpu.memory_space<vmem>>, vector<16x8xf32>,
    %155 = vector.extract_strided_slice %126 {offsets = [224, 0], sizes = [16, 8], strides = [1, 1]} : vector<256x8xf32> to vector<16x8xf32>
    %156 = vector.extract_strided_slice %126 {offsets = [240, 0], sizes = [16, 8], strides = [1, 1]} : vector<256x8xf32> to vector<16x8xf32>
    %157 = arith.maximumf %155, %156 : vector<16x8xf32>
    %c112 = arith.constant 112 : index
    %c0_65 = arith.constant 0 : index
    %158 = vector.load %arg27[%c112, %c0_65] : memref<128x8xf32, #tpu.memory_space<vmem>>, vector<16x8xf32>
    tpu.vector_store %arg27[%c112, %c0_65], %157 {strides = array<i32>} : memref<128x8xf32, #tpu.memory_space<vmem>>, vector<16x8xf32>,
    %c0_66 = arith.constant 0 : index
    %c0_67 = arith.constant 0 : index
    %159 = tpu.strided_load %arg27[%c0_66, %c0_67] {strides = array<i32: 2, 1>} : memref<128x8xf32, #tpu.memory_space<vmem>>, vector<64x8xf32>
    %c1_68 = arith.constant 1 : index
    %c0_69 = arith.constant 0 : index
    %160 = tpu.strided_load %arg27[%c1_68, %c0_69] {strides = array<i32: 2, 1>} : memref<128x8xf32, #tpu.memory_space<vmem>>, vector<64x8xf32>
    %161 = arith.maximumf %159, %160 : vector<64x8xf32>
    %162 = tpu.iota {dimensions = array<i32: 0>} : vector<64x1xi32>
    %c8_i32 = arith.constant 8 : i32
    %c0_i32_70 = arith.constant 0 : i32
    %163 = arith.cmpi eq, %c8_i32, %c0_i32_70 : i32
    %c1_i32_71 = arith.constant 1 : i32
    %164 = arith.select %163, %c1_i32_71, %c8_i32 : i32
    %165 = vector.broadcast %164 : i32 to vector<64x1xi32>
    %166 = arith.remsi %162, %165 : vector<64x1xi32>
    %c0_i32_72 = arith.constant 0 : i32
    %167 = vector.broadcast %c0_i32_72 : i32 to vector<64x1xi32>
    %168 = arith.cmpi ne, %166, %167 : vector<64x1xi32>
    %c0_i32_73 = arith.constant 0 : i32
    %169 = vector.broadcast %c0_i32_73 : i32 to vector<64x1xi32>
    %170 = arith.cmpi slt, %166, %169 : vector<64x1xi32>
    %c0_i32_74 = arith.constant 0 : i32
    %171 = arith.cmpi slt, %164, %c0_i32_74 : i32
    %172 = vector.broadcast %171 : i1 to vector<64x1xi1>
    %173 = vector.broadcast %172 : vector<64x1xi1> to vector<64x1xi1>
    %174 = arith.xori %170, %173 : vector<64x1xi1>
    %175 = arith.andi %174, %168 : vector<64x1xi1>
    %176 = vector.broadcast %164 : i32 to vector<64x1xi32>
    %177 = arith.addi %166, %176 : vector<64x1xi32>
    %178 = arith.select %175, %177, %166 : vector<64x1xi1>, vector<64x1xi32>
    %c0_i32_75 = arith.constant 0 : i32
    %179 = vector.broadcast %c0_i32_75 : i32 to vector<64x1xi32>
    %180 = arith.cmpi ne, %178, %179 : vector<64x1xi32>
    %181 = arith.extui %180 : vector<64x1xi1> to vector<64x1xi32>
    %182 = arith.sitofp %181 : vector<64x1xi32> to vector<64x1xf32>
    %c7_i32 = arith.constant 7 : i32
    %183 = vector.broadcast %c7_i32 : i32 to vector<64x1xi32>
    %184 = arith.cmpi ne, %178, %183 : vector<64x1xi32>
    %185 = arith.extui %184 : vector<64x1xi1> to vector<64x1xi32>
    %186 = arith.sitofp %185 : vector<64x1xi32> to vector<64x1xf32>
    %187 = vector.extract_strided_slice %161 {offsets = [0, 0], sizes = [55, 8], strides = [1, 1]} : vector<64x8xf32> to vector<55x8xf32>
    %188 = vector.extract_strided_slice %182 {offsets = [9, 0], sizes = [55, 1], strides = [1, 1]} : vector<64x1xf32> to vector<55x1xf32>
    %189 = vector.broadcast %188 : vector<55x1xf32> to vector<55x8xf32>
    %190 = arith.mulf %187, %189 : vector<55x8xf32>
    %cst_76 = arith.constant 0.000000e+00 : f32
    %191 = vector.broadcast %cst_76 : f32 to vector<9x8xf32>
    %c0_77 = arith.constant 0 : index
    %c0_78 = arith.constant 0 : index
    %192 = vector.load %arg22[%c0_77, %c0_78] : memref<64x72xf32, #tpu.memory_space<vmem>>, vector<9x8xf32>
    tpu.vector_store %arg22[%c0_77, %c0_78], %191 {strides = array<i32>} : memref<64x72xf32, #tpu.memory_space<vmem>>, vector<9x8xf32>,
    %c9 = arith.constant 9 : index
    %c0_79 = arith.constant 0 : index
    %193 = vector.load %arg22[%c9, %c0_79] : memref<64x72xf32, #tpu.memory_space<vmem>>, vector<55x8xf32>
    tpu.vector_store %arg22[%c9, %c0_79], %190 {strides = array<i32>} : memref<64x72xf32, #tpu.memory_space<vmem>>, vector<55x8xf32>,
    %194 = vector.extract_strided_slice %161 {offsets = [0, 0], sizes = [56, 8], strides = [1, 1]} : vector<64x8xf32> to vector<56x8xf32>
    %cst_80 = arith.constant 0.000000e+00 : f32
    %195 = vector.broadcast %cst_80 : f32 to vector<8x8xf32>
    %c0_81 = arith.constant 0 : index
    %c8_82 = arith.constant 8 : index
    %196 = vector.load %arg22[%c0_81, %c8_82] : memref<64x72xf32, #tpu.memory_space<vmem>>, vector<8x8xf32>
    tpu.vector_store %arg22[%c0_81, %c8_82], %195 {strides = array<i32>} : memref<64x72xf32, #tpu.memory_space<vmem>>, vector<8x8xf32>,
    %c8_83 = arith.constant 8 : index
    %c8_84 = arith.constant 8 : index
    %197 = vector.load %arg22[%c8_83, %c8_84] : memref<64x72xf32, #tpu.memory_space<vmem>>, vector<56x8xf32>
    tpu.vector_store %arg22[%c8_83, %c8_84], %194 {strides = array<i32>} : memref<64x72xf32, #tpu.memory_space<vmem>>, vector<56x8xf32>,
    %198 = vector.extract_strided_slice %161 {offsets = [0, 0], sizes = [57, 8], strides = [1, 1]} : vector<64x8xf32> to vector<57x8xf32>
    %199 = vector.extract_strided_slice %186 {offsets = [7, 0], sizes = [57, 1], strides = [1, 1]} : vector<64x1xf32> to vector<57x1xf32>
    %200 = vector.broadcast %199 : vector<57x1xf32> to vector<57x8xf32>
    %201 = arith.mulf %198, %200 : vector<57x8xf32>
    %cst_85 = arith.constant 0.000000e+00 : f32
    %202 = vector.broadcast %cst_85 : f32 to vector<7x8xf32>
    %c0_86 = arith.constant 0 : index
    %c16_87 = arith.constant 16 : index
    %203 = vector.load %arg22[%c0_86, %c16_87] : memref<64x72xf32, #tpu.memory_space<vmem>>, vector<7x8xf32>
    tpu.vector_store %arg22[%c0_86, %c16_87], %202 {strides = array<i32>} : memref<64x72xf32, #tpu.memory_space<vmem>>, vector<7x8xf32>,
    %c7 = arith.constant 7 : index
    %c16_88 = arith.constant 16 : index
    %204 = vector.load %arg22[%c7, %c16_88] : memref<64x72xf32, #tpu.memory_space<vmem>>, vector<57x8xf32>
    tpu.vector_store %arg22[%c7, %c16_88], %201 {strides = array<i32>} : memref<64x72xf32, #tpu.memory_space<vmem>>, vector<57x8xf32>,
    %205 = vector.extract_strided_slice %161 {offsets = [0, 0], sizes = [63, 8], strides = [1, 1]} : vector<64x8xf32> to vector<63x8xf32>
    %206 = vector.extract_strided_slice %182 {offsets = [1, 0], sizes = [63, 1], strides = [1, 1]} : vector<64x1xf32> to vector<63x1xf32>
    %207 = vector.broadcast %206 : vector<63x1xf32> to vector<63x8xf32>
    %208 = arith.mulf %205, %207 : vector<63x8xf32>
    %cst_89 = arith.constant 0.000000e+00 : f32
    %209 = vector.broadcast %cst_89 : f32 to vector<1x8xf32>
    %c0_90 = arith.constant 0 : index
    %c24_91 = arith.constant 24 : index
    %210 = vector.load %arg22[%c0_90, %c24_91] : memref<64x72xf32, #tpu.memory_space<vmem>>, vector<1x8xf32>
    tpu.vector_store %arg22[%c0_90, %c24_91], %209 {strides = array<i32>} : memref<64x72xf32, #tpu.memory_space<vmem>>, vector<1x8xf32>,
    %c1_92 = arith.constant 1 : index
    %c24_93 = arith.constant 24 : index
    %211 = vector.load %arg22[%c1_92, %c24_93] : memref<64x72xf32, #tpu.memory_space<vmem>>, vector<63x8xf32>
    tpu.vector_store %arg22[%c1_92, %c24_93], %208 {strides = array<i32>} : memref<64x72xf32, #tpu.memory_space<vmem>>, vector<63x8xf32>,
    %c0_94 = arith.constant 0 : index
    %c32_95 = arith.constant 32 : index
    %212 = vector.load %arg22[%c0_94, %c32_95] : memref<64x72xf32, #tpu.memory_space<vmem>>, vector<64x8xf32>
    tpu.vector_store %arg22[%c0_94, %c32_95], %161 {strides = array<i32>} : memref<64x72xf32, #tpu.memory_space<vmem>>, vector<64x8xf32>,
    %213 = vector.extract_strided_slice %161 {offsets = [1, 0], sizes = [63, 8], strides = [1, 1]} : vector<64x8xf32> to vector<63x8xf32>
    %214 = vector.extract_strided_slice %186 {offsets = [0, 0], sizes = [63, 1], strides = [1, 1]} : vector<64x1xf32> to vector<63x1xf32>
    %215 = vector.broadcast %214 : vector<63x1xf32> to vector<63x8xf32>
    %216 = arith.mulf %213, %215 : vector<63x8xf32>
    %c0_96 = arith.constant 0 : index
    %c40 = arith.constant 40 : index
    %217 = vector.load %arg22[%c0_96, %c40] : memref<64x72xf32, #tpu.memory_space<vmem>>, vector<63x8xf32>
    tpu.vector_store %arg22[%c0_96, %c40], %216 {strides = array<i32>} : memref<64x72xf32, #tpu.memory_space<vmem>>, vector<63x8xf32>,
    %cst_97 = arith.constant 0.000000e+00 : f32
    %218 = vector.broadcast %cst_97 : f32 to vector<1x8xf32>
    %c63 = arith.constant 63 : index
    %c40_98 = arith.constant 40 : index
    %219 = vector.load %arg22[%c63, %c40_98] : memref<64x72xf32, #tpu.memory_space<vmem>>, vector<1x8xf32>
    tpu.vector_store %arg22[%c63, %c40_98], %218 {strides = array<i32>} : memref<64x72xf32, #tpu.memory_space<vmem>>, vector<1x8xf32>,
    %220 = vector.extract_strided_slice %161 {offsets = [7, 0], sizes = [57, 8], strides = [1, 1]} : vector<64x8xf32> to vector<57x8xf32>
    %221 = vector.extract_strided_slice %182 {offsets = [0, 0], sizes = [57, 1], strides = [1, 1]} : vector<64x1xf32> to vector<57x1xf32>
    %222 = vector.broadcast %221 : vector<57x1xf32> to vector<57x8xf32>
    %223 = arith.mulf %220, %222 : vector<57x8xf32>
    %c0_99 = arith.constant 0 : index
    %c48_100 = arith.constant 48 : index
    %224 = vector.load %arg22[%c0_99, %c48_100] : memref<64x72xf32, #tpu.memory_space<vmem>>, vector<57x8xf32>
    tpu.vector_store %arg22[%c0_99, %c48_100], %223 {strides = array<i32>} : memref<64x72xf32, #tpu.memory_space<vmem>>, vector<57x8xf32>,
    %cst_101 = arith.constant 0.000000e+00 : f32
    %225 = vector.broadcast %cst_101 : f32 to vector<7x8xf32>
    %c57 = arith.constant 57 : index
    %c48_102 = arith.constant 48 : index
    %226 = vector.load %arg22[%c57, %c48_102] : memref<64x72xf32, #tpu.memory_space<vmem>>, vector<7x8xf32>
    tpu.vector_store %arg22[%c57, %c48_102], %225 {strides = array<i32>} : memref<64x72xf32, #tpu.memory_space<vmem>>, vector<7x8xf32>,
    %227 = vector.extract_strided_slice %161 {offsets = [8, 0], sizes = [56, 8], strides = [1, 1]} : vector<64x8xf32> to vector<56x8xf32>
    %c0_103 = arith.constant 0 : index
    %c56 = arith.constant 56 : index
    %228 = vector.load %arg22[%c0_103, %c56] : memref<64x72xf32, #tpu.memory_space<vmem>>, vector<56x8xf32>
    tpu.vector_store %arg22[%c0_103, %c56], %227 {strides = array<i32>} : memref<64x72xf32, #tpu.memory_space<vmem>>, vector<56x8xf32>,
    %cst_104 = arith.constant 0.000000e+00 : f32
    %229 = vector.broadcast %cst_104 : f32 to vector<8x8xf32>
    %c56_105 = arith.constant 56 : index
    %c56_106 = arith.constant 56 : index
    %230 = vector.load %arg22[%c56_105, %c56_106] : memref<64x72xf32, #tpu.memory_space<vmem>>, vector<8x8xf32>
    tpu.vector_store %arg22[%c56_105, %c56_106], %229 {strides = array<i32>} : memref<64x72xf32, #tpu.memory_space<vmem>>, vector<8x8xf32>,
    %231 = vector.extract_strided_slice %161 {offsets = [9, 0], sizes = [55, 8], strides = [1, 1]} : vector<64x8xf32> to vector<55x8xf32>
    %232 = vector.extract_strided_slice %186 {offsets = [0, 0], sizes = [55, 1], strides = [1, 1]} : vector<64x1xf32> to vector<55x1xf32>
    %233 = vector.broadcast %232 : vector<55x1xf32> to vector<55x8xf32>
    %234 = arith.mulf %231, %233 : vector<55x8xf32>
    %c0_107 = arith.constant 0 : index
    %c64_108 = arith.constant 64 : index
    %235 = vector.load %arg22[%c0_107, %c64_108] : memref<64x72xf32, #tpu.memory_space<vmem>>, vector<55x8xf32>
    tpu.vector_store %arg22[%c0_107, %c64_108], %234 {strides = array<i32>} : memref<64x72xf32, #tpu.memory_space<vmem>>, vector<55x8xf32>,
    %cst_109 = arith.constant 0.000000e+00 : f32
    %236 = vector.broadcast %cst_109 : f32 to vector<9x8xf32>
    %c55 = arith.constant 55 : index
    %c64_110 = arith.constant 64 : index
    %237 = vector.load %arg22[%c55, %c64_110] : memref<64x72xf32, #tpu.memory_space<vmem>>, vector<9x8xf32>
    tpu.vector_store %arg22[%c55, %c64_110], %236 {strides = array<i32>} : memref<64x72xf32, #tpu.memory_space<vmem>>, vector<9x8xf32>,
    %c0_111 = arith.constant 0 : index
    %c0_112 = arith.constant 0 : index
    %238 = vector.load %arg22[%c0_111, %c0_112] : memref<64x72xf32, #tpu.memory_space<vmem>>, vector<64x72xf32>
    %239 = arith.truncf %238 : vector<64x72xf32> to vector<64x72xbf16>
    %c0_113 = arith.constant 0 : index
    %c0_114 = arith.constant 0 : index
    %240 = vector.load %arg5[%c0_113, %c0_114] : memref<72x16xbf16, #tpu.memory_space<vmem>>, vector<72x16xbf16>
    %cst_115 = arith.constant dense<0.000000e+00> : vector<64x16xf32>
    %241 = tpu.matmul %239, %240, %cst_115 {dimension_numbers = #tpu.dot_dimension_numbers<[1], [0], [0], [1], [0, 0, 1, 1], [], []>} : vector<64x72xbf16>, vector<72x16xbf16>, vector<64x16xf32> -> vector<64x16xf32>
    %c0_116 = arith.constant 0 : index
    %c0_117 = arith.constant 0 : index
    %242 = vector.load %arg6[%c0_116, %c0_117] : memref<1x16xf32, #tpu.memory_space<vmem>>, vector<1x16xf32>
    %243 = vector.broadcast %242 : vector<1x16xf32> to vector<64x16xf32>
    %244 = arith.mulf %241, %243 : vector<64x16xf32>
    %c0_118 = arith.constant 0 : index
    %c0_119 = arith.constant 0 : index
    %245 = vector.load %arg7[%c0_118, %c0_119] : memref<1x16xf32, #tpu.memory_space<vmem>>, vector<1x16xf32>
    %246 = vector.broadcast %245 : vector<1x16xf32> to vector<64x16xf32>
    %247 = arith.addf %244, %246 : vector<64x16xf32>
    %cst_120 = arith.constant 5.000000e-01 : f32
    %248 = vector.broadcast %cst_120 : f32 to vector<64x16xf32>
    %249 = arith.mulf %248, %247 : vector<64x16xf32>
    %cst_121 = arith.constant 0.707106769 : f32
    %250 = vector.broadcast %cst_121 : f32 to vector<64x16xf32>
    %251 = arith.mulf %247, %250 : vector<64x16xf32>
    %252 = math.absf %251 : vector<64x16xf32>
    %cst_122 = arith.constant 0.327591091 : f32
    %253 = vector.broadcast %cst_122 : f32 to vector<64x16xf32>
    %254 = arith.mulf %253, %252 : vector<64x16xf32>
    %cst_123 = arith.constant 1.000000e+00 : f32
    %255 = vector.broadcast %cst_123 : f32 to vector<64x16xf32>
    %256 = arith.addf %255, %254 : vector<64x16xf32>
    %257 = tpu.reciprocal %256 {approx = true} : vector<64x16xf32> -> vector<64x16xf32>
    %cst_124 = arith.constant 1.06140542 : f32
    %258 = vector.broadcast %cst_124 : f32 to vector<64x16xf32>
    %259 = arith.mulf %258, %257 : vector<64x16xf32>
    %cst_125 = arith.constant -1.45315206 : f32
    %260 = vector.broadcast %cst_125 : f32 to vector<64x16xf32>
    %261 = arith.addf %259, %260 : vector<64x16xf32>
    %262 = arith.mulf %261, %257 : vector<64x16xf32>
    %cst_126 = arith.constant 1.42141378 : f32
    %263 = vector.broadcast %cst_126 : f32 to vector<64x16xf32>
    %264 = arith.addf %262, %263 : vector<64x16xf32>
    %265 = arith.mulf %264, %257 : vector<64x16xf32>
    %cst_127 = arith.constant -0.284496725 : f32
    %266 = vector.broadcast %cst_127 : f32 to vector<64x16xf32>
    %267 = arith.addf %265, %266 : vector<64x16xf32>
    %268 = arith.mulf %267, %257 : vector<64x16xf32>
    %cst_128 = arith.constant 0.254829586 : f32
    %269 = vector.broadcast %cst_128 : f32 to vector<64x16xf32>
    %270 = arith.addf %268, %269 : vector<64x16xf32>
    %271 = arith.mulf %270, %257 : vector<64x16xf32>
    %cst_129 = arith.constant 0.000000e+00 : f32
    %272 = vector.broadcast %cst_129 : f32 to vector<64x16xf32>
    %273 = arith.subf %272, %252 : vector<64x16xf32>
    %274 = arith.mulf %273, %252 : vector<64x16xf32>
    %275 = math.exp %274 : vector<64x16xf32>
    %276 = arith.mulf %271, %275 : vector<64x16xf32>
    %cst_130 = arith.constant 1.000000e+00 : f32
    %277 = vector.broadcast %cst_130 : f32 to vector<64x16xf32>
    %278 = arith.subf %277, %276 : vector<64x16xf32>
    %cst_131 = arith.constant 0.000000e+00 : f32
    %279 = vector.broadcast %cst_131 : f32 to vector<64x16xf32>
    %280 = arith.cmpf oge, %251, %279 : vector<64x16xf32>
    %cst_132 = arith.constant 0.000000e+00 : f32
    %281 = vector.broadcast %cst_132 : f32 to vector<64x16xf32>
    %282 = arith.subf %281, %278 : vector<64x16xf32>
    %283 = arith.select %280, %278, %282 : vector<64x16xi1>, vector<64x16xf32>
    %cst_133 = arith.constant 1.000000e+00 : f32
    %284 = vector.broadcast %cst_133 : f32 to vector<64x16xf32>
    %285 = arith.addf %284, %283 : vector<64x16xf32>
    %286 = arith.mulf %249, %285 : vector<64x16xf32>
    %287 = vector.extract_strided_slice %286 {offsets = [0, 0], sizes = [8, 16], strides = [1, 1]} : vector<64x16xf32> to vector<8x16xf32>
    %288 = vector.extract_strided_slice %286 {offsets = [8, 0], sizes = [8, 16], strides = [1, 1]} : vector<64x16xf32> to vector<8x16xf32>
    %289 = arith.maximumf %287, %288 : vector<8x16xf32>
    %c0_134 = arith.constant 0 : index
    %c0_135 = arith.constant 0 : index
    %290 = vector.load %arg28[%c0_134, %c0_135] : memref<32x16xf32, #tpu.memory_space<vmem>>, vector<8x16xf32>
    tpu.vector_store %arg28[%c0_134, %c0_135], %289 {strides = array<i32>} : memref<32x16xf32, #tpu.memory_space<vmem>>, vector<8x16xf32>,
    %291 = vector.extract_strided_slice %286 {offsets = [16, 0], sizes = [8, 16], strides = [1, 1]} : vector<64x16xf32> to vector<8x16xf32>
    %292 = vector.extract_strided_slice %286 {offsets = [24, 0], sizes = [8, 16], strides = [1, 1]} : vector<64x16xf32> to vector<8x16xf32>
    %293 = arith.maximumf %291, %292 : vector<8x16xf32>
    %c8_136 = arith.constant 8 : index
    %c0_137 = arith.constant 0 : index
    %294 = vector.load %arg28[%c8_136, %c0_137] : memref<32x16xf32, #tpu.memory_space<vmem>>, vector<8x16xf32>
    tpu.vector_store %arg28[%c8_136, %c0_137], %293 {strides = array<i32>} : memref<32x16xf32, #tpu.memory_space<vmem>>, vector<8x16xf32>,
    %295 = vector.extract_strided_slice %286 {offsets = [32, 0], sizes = [8, 16], strides = [1, 1]} : vector<64x16xf32> to vector<8x16xf32>
    %296 = vector.extract_strided_slice %286 {offsets = [40, 0], sizes = [8, 16], strides = [1, 1]} : vector<64x16xf32> to vector<8x16xf32>
    %297 = arith.maximumf %295, %296 : vector<8x16xf32>
    %c16_138 = arith.constant 16 : index
    %c0_139 = arith.constant 0 : index
    %298 = vector.load %arg28[%c16_138, %c0_139] : memref<32x16xf32, #tpu.memory_space<vmem>>, vector<8x16xf32>
    tpu.vector_store %arg28[%c16_138, %c0_139], %297 {strides = array<i32>} : memref<32x16xf32, #tpu.memory_space<vmem>>, vector<8x16xf32>,
    %299 = vector.extract_strided_slice %286 {offsets = [48, 0], sizes = [8, 16], strides = [1, 1]} : vector<64x16xf32> to vector<8x16xf32>
    %300 = vector.extract_strided_slice %286 {offsets = [56, 0], sizes = [8, 16], strides = [1, 1]} : vector<64x16xf32> to vector<8x16xf32>
    %301 = arith.maximumf %299, %300 : vector<8x16xf32>
    %c24_140 = arith.constant 24 : index
    %c0_141 = arith.constant 0 : index
    %302 = vector.load %arg28[%c24_140, %c0_141] : memref<32x16xf32, #tpu.memory_space<vmem>>, vector<8x16xf32>
    tpu.vector_store %arg28[%c24_140, %c0_141], %301 {strides = array<i32>} : memref<32x16xf32, #tpu.memory_space<vmem>>, vector<8x16xf32>,
    %c0_142 = arith.constant 0 : index
    %c0_143 = arith.constant 0 : index
    %303 = tpu.strided_load %arg28[%c0_142, %c0_143] {strides = array<i32: 2, 1>} : memref<32x16xf32, #tpu.memory_space<vmem>>, vector<16x16xf32>
    %c1_144 = arith.constant 1 : index
    %c0_145 = arith.constant 0 : index
    %304 = tpu.strided_load %arg28[%c1_144, %c0_145] {strides = array<i32: 2, 1>} : memref<32x16xf32, #tpu.memory_space<vmem>>, vector<16x16xf32>
    %305 = arith.maximumf %303, %304 : vector<16x16xf32>
    %306 = tpu.iota {dimensions = array<i32: 0>} : vector<16x1xi32>
    %c4_i32 = arith.constant 4 : i32
    %c0_i32_146 = arith.constant 0 : i32
    %307 = arith.cmpi eq, %c4_i32, %c0_i32_146 : i32
    %c1_i32_147 = arith.constant 1 : i32
    %308 = arith.select %307, %c1_i32_147, %c4_i32 : i32
    %309 = vector.broadcast %308 : i32 to vector<16x1xi32>
    %310 = arith.remsi %306, %309 : vector<16x1xi32>
    %c0_i32_148 = arith.constant 0 : i32
    %311 = vector.broadcast %c0_i32_148 : i32 to vector<16x1xi32>
    %312 = arith.cmpi ne, %310, %311 : vector<16x1xi32>
    %c0_i32_149 = arith.constant 0 : i32
    %313 = vector.broadcast %c0_i32_149 : i32 to vector<16x1xi32>
    %314 = arith.cmpi slt, %310, %313 : vector<16x1xi32>
    %c0_i32_150 = arith.constant 0 : i32
    %315 = arith.cmpi slt, %308, %c0_i32_150 : i32
    %316 = vector.broadcast %315 : i1 to vector<16x1xi1>
    %317 = vector.broadcast %316 : vector<16x1xi1> to vector<16x1xi1>
    %318 = arith.xori %314, %317 : vector<16x1xi1>
    %319 = arith.andi %318, %312 : vector<16x1xi1>
    %320 = vector.broadcast %308 : i32 to vector<16x1xi32>
    %321 = arith.addi %310, %320 : vector<16x1xi32>
    %322 = arith.select %319, %321, %310 : vector<16x1xi1>, vector<16x1xi32>
    %c0_i32_151 = arith.constant 0 : i32
    %323 = vector.broadcast %c0_i32_151 : i32 to vector<16x1xi32>
    %324 = arith.cmpi ne, %322, %323 : vector<16x1xi32>
    %325 = arith.extui %324 : vector<16x1xi1> to vector<16x1xi32>
    %326 = arith.sitofp %325 : vector<16x1xi32> to vector<16x1xf32>
    %c3_i32 = arith.constant 3 : i32
    %327 = vector.broadcast %c3_i32 : i32 to vector<16x1xi32>
    %328 = arith.cmpi ne, %322, %327 : vector<16x1xi32>
    %329 = arith.extui %328 : vector<16x1xi1> to vector<16x1xi32>
    %330 = arith.sitofp %329 : vector<16x1xi32> to vector<16x1xf32>
    %331 = vector.extract_strided_slice %305 {offsets = [0, 0], sizes = [11, 16], strides = [1, 1]} : vector<16x16xf32> to vector<11x16xf32>
    %332 = vector.extract_strided_slice %326 {offsets = [5, 0], sizes = [11, 1], strides = [1, 1]} : vector<16x1xf32> to vector<11x1xf32>
    %333 = vector.broadcast %332 : vector<11x1xf32> to vector<11x16xf32>
    %334 = arith.mulf %331, %333 : vector<11x16xf32>
    %cst_152 = arith.constant 0.000000e+00 : f32
    %335 = vector.broadcast %cst_152 : f32 to vector<5x16xf32>
    %c0_153 = arith.constant 0 : index
    %c0_154 = arith.constant 0 : index
    %336 = vector.load %arg23[%c0_153, %c0_154] : memref<16x144xf32, #tpu.memory_space<vmem>>, vector<5x16xf32>
    tpu.vector_store %arg23[%c0_153, %c0_154], %335 {strides = array<i32>} : memref<16x144xf32, #tpu.memory_space<vmem>>, vector<5x16xf32>,
    %c5 = arith.constant 5 : index
    %c0_155 = arith.constant 0 : index
    %337 = vector.load %arg23[%c5, %c0_155] : memref<16x144xf32, #tpu.memory_space<vmem>>, vector<11x16xf32>
    tpu.vector_store %arg23[%c5, %c0_155], %334 {strides = array<i32>} : memref<16x144xf32, #tpu.memory_space<vmem>>, vector<11x16xf32>,
    %338 = vector.extract_strided_slice %305 {offsets = [0, 0], sizes = [12, 16], strides = [1, 1]} : vector<16x16xf32> to vector<12x16xf32>
    %cst_156 = arith.constant 0.000000e+00 : f32
    %339 = vector.broadcast %cst_156 : f32 to vector<4x16xf32>
    %c0_157 = arith.constant 0 : index
    %c16_158 = arith.constant 16 : index
    %340 = vector.load %arg23[%c0_157, %c16_158] : memref<16x144xf32, #tpu.memory_space<vmem>>, vector<4x16xf32>
    tpu.vector_store %arg23[%c0_157, %c16_158], %339 {strides = array<i32>} : memref<16x144xf32, #tpu.memory_space<vmem>>, vector<4x16xf32>,
    %c4_159 = arith.constant 4 : index
    %c16_160 = arith.constant 16 : index
    %341 = vector.load %arg23[%c4_159, %c16_160] : memref<16x144xf32, #tpu.memory_space<vmem>>, vector<12x16xf32>
    tpu.vector_store %arg23[%c4_159, %c16_160], %338 {strides = array<i32>} : memref<16x144xf32, #tpu.memory_space<vmem>>, vector<12x16xf32>,
    %342 = vector.extract_strided_slice %305 {offsets = [0, 0], sizes = [13, 16], strides = [1, 1]} : vector<16x16xf32> to vector<13x16xf32>
    %343 = vector.extract_strided_slice %330 {offsets = [3, 0], sizes = [13, 1], strides = [1, 1]} : vector<16x1xf32> to vector<13x1xf32>
    %344 = vector.broadcast %343 : vector<13x1xf32> to vector<13x16xf32>
    %345 = arith.mulf %342, %344 : vector<13x16xf32>
    %cst_161 = arith.constant 0.000000e+00 : f32
    %346 = vector.broadcast %cst_161 : f32 to vector<3x16xf32>
    %c0_162 = arith.constant 0 : index
    %c32_163 = arith.constant 32 : index
    %347 = vector.load %arg23[%c0_162, %c32_163] : memref<16x144xf32, #tpu.memory_space<vmem>>, vector<3x16xf32>
    tpu.vector_store %arg23[%c0_162, %c32_163], %346 {strides = array<i32>} : memref<16x144xf32, #tpu.memory_space<vmem>>, vector<3x16xf32>,
    %c3 = arith.constant 3 : index
    %c32_164 = arith.constant 32 : index
    %348 = vector.load %arg23[%c3, %c32_164] : memref<16x144xf32, #tpu.memory_space<vmem>>, vector<13x16xf32>
    tpu.vector_store %arg23[%c3, %c32_164], %345 {strides = array<i32>} : memref<16x144xf32, #tpu.memory_space<vmem>>, vector<13x16xf32>,
    %349 = vector.extract_strided_slice %305 {offsets = [0, 0], sizes = [15, 16], strides = [1, 1]} : vector<16x16xf32> to vector<15x16xf32>
    %350 = vector.extract_strided_slice %326 {offsets = [1, 0], sizes = [15, 1], strides = [1, 1]} : vector<16x1xf32> to vector<15x1xf32>
    %351 = vector.broadcast %350 : vector<15x1xf32> to vector<15x16xf32>
    %352 = arith.mulf %349, %351 : vector<15x16xf32>
    %cst_165 = arith.constant 0.000000e+00 : f32
    %353 = vector.broadcast %cst_165 : f32 to vector<1x16xf32>
    %c0_166 = arith.constant 0 : index
    %c48_167 = arith.constant 48 : index
    %354 = vector.load %arg23[%c0_166, %c48_167] : memref<16x144xf32, #tpu.memory_space<vmem>>, vector<1x16xf32>
    tpu.vector_store %arg23[%c0_166, %c48_167], %353 {strides = array<i32>} : memref<16x144xf32, #tpu.memory_space<vmem>>, vector<1x16xf32>,
    %c1_168 = arith.constant 1 : index
    %c48_169 = arith.constant 48 : index
    %355 = vector.load %arg23[%c1_168, %c48_169] : memref<16x144xf32, #tpu.memory_space<vmem>>, vector<15x16xf32>
    tpu.vector_store %arg23[%c1_168, %c48_169], %352 {strides = array<i32>} : memref<16x144xf32, #tpu.memory_space<vmem>>, vector<15x16xf32>,
    %c0_170 = arith.constant 0 : index
    %c64_171 = arith.constant 64 : index
    %356 = vector.load %arg23[%c0_170, %c64_171] : memref<16x144xf32, #tpu.memory_space<vmem>>, vector<16x16xf32>
    tpu.vector_store %arg23[%c0_170, %c64_171], %305 {strides = array<i32>} : memref<16x144xf32, #tpu.memory_space<vmem>>, vector<16x16xf32>,
    %357 = vector.extract_strided_slice %305 {offsets = [1, 0], sizes = [15, 16], strides = [1, 1]} : vector<16x16xf32> to vector<15x16xf32>
    %358 = vector.extract_strided_slice %330 {offsets = [0, 0], sizes = [15, 1], strides = [1, 1]} : vector<16x1xf32> to vector<15x1xf32>
    %359 = vector.broadcast %358 : vector<15x1xf32> to vector<15x16xf32>
    %360 = arith.mulf %357, %359 : vector<15x16xf32>
    %c0_172 = arith.constant 0 : index
    %c80_173 = arith.constant 80 : index
    %361 = vector.load %arg23[%c0_172, %c80_173] : memref<16x144xf32, #tpu.memory_space<vmem>>, vector<15x16xf32>
    tpu.vector_store %arg23[%c0_172, %c80_173], %360 {strides = array<i32>} : memref<16x144xf32, #tpu.memory_space<vmem>>, vector<15x16xf32>,
    %cst_174 = arith.constant 0.000000e+00 : f32
    %362 = vector.broadcast %cst_174 : f32 to vector<1x16xf32>
    %c15_175 = arith.constant 15 : index
    %c80_176 = arith.constant 80 : index
    %363 = vector.load %arg23[%c15_175, %c80_176] : memref<16x144xf32, #tpu.memory_space<vmem>>, vector<1x16xf32>
    tpu.vector_store %arg23[%c15_175, %c80_176], %362 {strides = array<i32>} : memref<16x144xf32, #tpu.memory_space<vmem>>, vector<1x16xf32>,
    %364 = vector.extract_strided_slice %305 {offsets = [3, 0], sizes = [13, 16], strides = [1, 1]} : vector<16x16xf32> to vector<13x16xf32>
    %365 = vector.extract_strided_slice %326 {offsets = [0, 0], sizes = [13, 1], strides = [1, 1]} : vector<16x1xf32> to vector<13x1xf32>
    %366 = vector.broadcast %365 : vector<13x1xf32> to vector<13x16xf32>
    %367 = arith.mulf %364, %366 : vector<13x16xf32>
    %c0_177 = arith.constant 0 : index
    %c96_178 = arith.constant 96 : index
    %368 = vector.load %arg23[%c0_177, %c96_178] : memref<16x144xf32, #tpu.memory_space<vmem>>, vector<13x16xf32>
    tpu.vector_store %arg23[%c0_177, %c96_178], %367 {strides = array<i32>} : memref<16x144xf32, #tpu.memory_space<vmem>>, vector<13x16xf32>,
    %cst_179 = arith.constant 0.000000e+00 : f32
    %369 = vector.broadcast %cst_179 : f32 to vector<3x16xf32>
    %c13 = arith.constant 13 : index
    %c96_180 = arith.constant 96 : index
    %370 = vector.load %arg23[%c13, %c96_180] : memref<16x144xf32, #tpu.memory_space<vmem>>, vector<3x16xf32>
    tpu.vector_store %arg23[%c13, %c96_180], %369 {strides = array<i32>} : memref<16x144xf32, #tpu.memory_space<vmem>>, vector<3x16xf32>,
    %371 = vector.extract_strided_slice %305 {offsets = [4, 0], sizes = [12, 16], strides = [1, 1]} : vector<16x16xf32> to vector<12x16xf32>
    %c0_181 = arith.constant 0 : index
    %c112_182 = arith.constant 112 : index
    %372 = vector.load %arg23[%c0_181, %c112_182] : memref<16x144xf32, #tpu.memory_space<vmem>>, vector<12x16xf32>
    tpu.vector_store %arg23[%c0_181, %c112_182], %371 {strides = array<i32>} : memref<16x144xf32, #tpu.memory_space<vmem>>, vector<12x16xf32>,
    %cst_183 = arith.constant 0.000000e+00 : f32
    %373 = vector.broadcast %cst_183 : f32 to vector<4x16xf32>
    %c12_184 = arith.constant 12 : index
    %c112_185 = arith.constant 112 : index
    %374 = vector.load %arg23[%c12_184, %c112_185] : memref<16x144xf32, #tpu.memory_space<vmem>>, vector<4x16xf32>
    tpu.vector_store %arg23[%c12_184, %c112_185], %373 {strides = array<i32>} : memref<16x144xf32, #tpu.memory_space<vmem>>, vector<4x16xf32>,
    %375 = vector.extract_strided_slice %305 {offsets = [5, 0], sizes = [11, 16], strides = [1, 1]} : vector<16x16xf32> to vector<11x16xf32>
    %376 = vector.extract_strided_slice %330 {offsets = [0, 0], sizes = [11, 1], strides = [1, 1]} : vector<16x1xf32> to vector<11x1xf32>
    %377 = vector.broadcast %376 : vector<11x1xf32> to vector<11x16xf32>
    %378 = arith.mulf %375, %377 : vector<11x16xf32>
    %c0_186 = arith.constant 0 : index
    %c128 = arith.constant 128 : index
    %379 = vector.load %arg23[%c0_186, %c128] : memref<16x144xf32, #tpu.memory_space<vmem>>, vector<11x16xf32>
    tpu.vector_store %arg23[%c0_186, %c128], %378 {strides = array<i32>} : memref<16x144xf32, #tpu.memory_space<vmem>>, vector<11x16xf32>,
    %cst_187 = arith.constant 0.000000e+00 : f32
    %380 = vector.broadcast %cst_187 : f32 to vector<5x16xf32>
    %c11 = arith.constant 11 : index
    %c128_188 = arith.constant 128 : index
    %381 = vector.load %arg23[%c11, %c128_188] : memref<16x144xf32, #tpu.memory_space<vmem>>, vector<5x16xf32>
    tpu.vector_store %arg23[%c11, %c128_188], %380 {strides = array<i32>} : memref<16x144xf32, #tpu.memory_space<vmem>>, vector<5x16xf32>,
    %c0_189 = arith.constant 0 : index
    %c0_190 = arith.constant 0 : index
    %382 = vector.load %arg23[%c0_189, %c0_190] : memref<16x144xf32, #tpu.memory_space<vmem>>, vector<16x144xf32>
    %383 = arith.truncf %382 : vector<16x144xf32> to vector<16x144xbf16>
    %c0_191 = arith.constant 0 : index
    %c0_192 = arith.constant 0 : index
    %384 = vector.load %arg8[%c0_191, %c0_192] : memref<144x16xbf16, #tpu.memory_space<vmem>>, vector<144x16xbf16>
    %cst_193 = arith.constant dense<0.000000e+00> : vector<16x16xf32>
    %385 = tpu.matmul %383, %384, %cst_193 {dimension_numbers = #tpu.dot_dimension_numbers<[1], [0], [0], [1], [0, 0, 1, 1], [], []>} : vector<16x144xbf16>, vector<144x16xbf16>, vector<16x16xf32> -> vector<16x16xf32>
    %c0_194 = arith.constant 0 : index
    %c0_195 = arith.constant 0 : index
    %386 = vector.load %arg9[%c0_194, %c0_195] : memref<1x16xf32, #tpu.memory_space<vmem>>, vector<1x16xf32>
    %387 = vector.broadcast %386 : vector<1x16xf32> to vector<16x16xf32>
    %388 = arith.mulf %385, %387 : vector<16x16xf32>
    %c0_196 = arith.constant 0 : index
    %c0_197 = arith.constant 0 : index
    %389 = vector.load %arg10[%c0_196, %c0_197] : memref<1x16xf32, #tpu.memory_space<vmem>>, vector<1x16xf32>
    %390 = vector.broadcast %389 : vector<1x16xf32> to vector<16x16xf32>
    %391 = arith.addf %388, %390 : vector<16x16xf32>
    %cst_198 = arith.constant 5.000000e-01 : f32
    %392 = vector.broadcast %cst_198 : f32 to vector<16x16xf32>
    %393 = arith.mulf %392, %391 : vector<16x16xf32>
    %cst_199 = arith.constant 0.707106769 : f32
    %394 = vector.broadcast %cst_199 : f32 to vector<16x16xf32>
    %395 = arith.mulf %391, %394 : vector<16x16xf32>
    %396 = math.absf %395 : vector<16x16xf32>
    %cst_200 = arith.constant 0.327591091 : f32
    %397 = vector.broadcast %cst_200 : f32 to vector<16x16xf32>
    %398 = arith.mulf %397, %396 : vector<16x16xf32>
    %cst_201 = arith.constant 1.000000e+00 : f32
    %399 = vector.broadcast %cst_201 : f32 to vector<16x16xf32>
    %400 = arith.addf %399, %398 : vector<16x16xf32>
    %401 = tpu.reciprocal %400 {approx = true} : vector<16x16xf32> -> vector<16x16xf32>
    %cst_202 = arith.constant 1.06140542 : f32
    %402 = vector.broadcast %cst_202 : f32 to vector<16x16xf32>
    %403 = arith.mulf %402, %401 : vector<16x16xf32>
    %cst_203 = arith.constant -1.45315206 : f32
    %404 = vector.broadcast %cst_203 : f32 to vector<16x16xf32>
    %405 = arith.addf %403, %404 : vector<16x16xf32>
    %406 = arith.mulf %405, %401 : vector<16x16xf32>
    %cst_204 = arith.constant 1.42141378 : f32
    %407 = vector.broadcast %cst_204 : f32 to vector<16x16xf32>
    %408 = arith.addf %406, %407 : vector<16x16xf32>
    %409 = arith.mulf %408, %401 : vector<16x16xf32>
    %cst_205 = arith.constant -0.284496725 : f32
    %410 = vector.broadcast %cst_205 : f32 to vector<16x16xf32>
    %411 = arith.addf %409, %410 : vector<16x16xf32>
    %412 = arith.mulf %411, %401 : vector<16x16xf32>
    %cst_206 = arith.constant 0.254829586 : f32
    %413 = vector.broadcast %cst_206 : f32 to vector<16x16xf32>
    %414 = arith.addf %412, %413 : vector<16x16xf32>
    %415 = arith.mulf %414, %401 : vector<16x16xf32>
    %cst_207 = arith.constant 0.000000e+00 : f32
    %416 = vector.broadcast %cst_207 : f32 to vector<16x16xf32>
    %417 = arith.subf %416, %396 : vector<16x16xf32>
    %418 = arith.mulf %417, %396 : vector<16x16xf32>
    %419 = math.exp %418 : vector<16x16xf32>
    %420 = arith.mulf %415, %419 : vector<16x16xf32>
    %cst_208 = arith.constant 1.000000e+00 : f32
    %421 = vector.broadcast %cst_208 : f32 to vector<16x16xf32>
    %422 = arith.subf %421, %420 : vector<16x16xf32>
    %cst_209 = arith.constant 0.000000e+00 : f32
    %423 = vector.broadcast %cst_209 : f32 to vector<16x16xf32>
    %424 = arith.cmpf oge, %395, %423 : vector<16x16xf32>
    %cst_210 = arith.constant 0.000000e+00 : f32
    %425 = vector.broadcast %cst_210 : f32 to vector<16x16xf32>
    %426 = arith.subf %425, %422 : vector<16x16xf32>
    %427 = arith.select %424, %422, %426 : vector<16x16xi1>, vector<16x16xf32>
    %cst_211 = arith.constant 1.000000e+00 : f32
    %428 = vector.broadcast %cst_211 : f32 to vector<16x16xf32>
    %429 = arith.addf %428, %427 : vector<16x16xf32>
    %430 = arith.mulf %393, %429 : vector<16x16xf32>
    %431 = tpu.iota {dimensions = array<i32: 0>} : vector<16x1xi32>
    %c4_i32_212 = arith.constant 4 : i32
    %c0_i32_213 = arith.constant 0 : i32
    %432 = arith.cmpi eq, %c4_i32_212, %c0_i32_213 : i32
    %c1_i32_214 = arith.constant 1 : i32
    %433 = arith.select %432, %c1_i32_214, %c4_i32_212 : i32
    %434 = vector.broadcast %433 : i32 to vector<16x1xi32>
    %435 = arith.remsi %431, %434 : vector<16x1xi32>
    %c0_i32_215 = arith.constant 0 : i32
    %436 = vector.broadcast %c0_i32_215 : i32 to vector<16x1xi32>
    %437 = arith.cmpi ne, %435, %436 : vector<16x1xi32>
    %c0_i32_216 = arith.constant 0 : i32
    %438 = vector.broadcast %c0_i32_216 : i32 to vector<16x1xi32>
    %439 = arith.cmpi slt, %435, %438 : vector<16x1xi32>
    %c0_i32_217 = arith.constant 0 : i32
    %440 = arith.cmpi slt, %433, %c0_i32_217 : i32
    %441 = vector.broadcast %440 : i1 to vector<16x1xi1>
    %442 = vector.broadcast %441 : vector<16x1xi1> to vector<16x1xi1>
    %443 = arith.xori %439, %442 : vector<16x1xi1>
    %444 = arith.andi %443, %437 : vector<16x1xi1>
    %445 = vector.broadcast %433 : i32 to vector<16x1xi32>
    %446 = arith.addi %435, %445 : vector<16x1xi32>
    %447 = arith.select %444, %446, %435 : vector<16x1xi1>, vector<16x1xi32>
    %c0_i32_218 = arith.constant 0 : i32
    %448 = vector.broadcast %c0_i32_218 : i32 to vector<16x1xi32>
    %449 = arith.cmpi ne, %447, %448 : vector<16x1xi32>
    %450 = arith.extui %449 : vector<16x1xi1> to vector<16x1xi32>
    %451 = arith.sitofp %450 : vector<16x1xi32> to vector<16x1xf32>
    %c3_i32_219 = arith.constant 3 : i32
    %452 = vector.broadcast %c3_i32_219 : i32 to vector<16x1xi32>
    %453 = arith.cmpi ne, %447, %452 : vector<16x1xi32>
    %454 = arith.extui %453 : vector<16x1xi1> to vector<16x1xi32>
    %455 = arith.sitofp %454 : vector<16x1xi32> to vector<16x1xf32>
    %456 = vector.extract_strided_slice %430 {offsets = [0, 0], sizes = [11, 16], strides = [1, 1]} : vector<16x16xf32> to vector<11x16xf32>
    %457 = vector.extract_strided_slice %451 {offsets = [5, 0], sizes = [11, 1], strides = [1, 1]} : vector<16x1xf32> to vector<11x1xf32>
    %458 = vector.broadcast %457 : vector<11x1xf32> to vector<11x16xf32>
    %459 = arith.mulf %456, %458 : vector<11x16xf32>
    %cst_220 = arith.constant 0.000000e+00 : f32
    %460 = vector.broadcast %cst_220 : f32 to vector<5x16xf32>
    %c0_221 = arith.constant 0 : index
    %c0_222 = arith.constant 0 : index
    %461 = vector.load %arg24[%c0_221, %c0_222] : memref<16x144xf32, #tpu.memory_space<vmem>>, vector<5x16xf32>
    tpu.vector_store %arg24[%c0_221, %c0_222], %460 {strides = array<i32>} : memref<16x144xf32, #tpu.memory_space<vmem>>, vector<5x16xf32>,
    %c5_223 = arith.constant 5 : index
    %c0_224 = arith.constant 0 : index
    %462 = vector.load %arg24[%c5_223, %c0_224] : memref<16x144xf32, #tpu.memory_space<vmem>>, vector<11x16xf32>
    tpu.vector_store %arg24[%c5_223, %c0_224], %459 {strides = array<i32>} : memref<16x144xf32, #tpu.memory_space<vmem>>, vector<11x16xf32>,
    %463 = vector.extract_strided_slice %430 {offsets = [0, 0], sizes = [12, 16], strides = [1, 1]} : vector<16x16xf32> to vector<12x16xf32>
    %cst_225 = arith.constant 0.000000e+00 : f32
    %464 = vector.broadcast %cst_225 : f32 to vector<4x16xf32>
    %c0_226 = arith.constant 0 : index
    %c16_227 = arith.constant 16 : index
    %465 = vector.load %arg24[%c0_226, %c16_227] : memref<16x144xf32, #tpu.memory_space<vmem>>, vector<4x16xf32>
    tpu.vector_store %arg24[%c0_226, %c16_227], %464 {strides = array<i32>} : memref<16x144xf32, #tpu.memory_space<vmem>>, vector<4x16xf32>,
    %c4_228 = arith.constant 4 : index
    %c16_229 = arith.constant 16 : index
    %466 = vector.load %arg24[%c4_228, %c16_229] : memref<16x144xf32, #tpu.memory_space<vmem>>, vector<12x16xf32>
    tpu.vector_store %arg24[%c4_228, %c16_229], %463 {strides = array<i32>} : memref<16x144xf32, #tpu.memory_space<vmem>>, vector<12x16xf32>,
    %467 = vector.extract_strided_slice %430 {offsets = [0, 0], sizes = [13, 16], strides = [1, 1]} : vector<16x16xf32> to vector<13x16xf32>
    %468 = vector.extract_strided_slice %455 {offsets = [3, 0], sizes = [13, 1], strides = [1, 1]} : vector<16x1xf32> to vector<13x1xf32>
    %469 = vector.broadcast %468 : vector<13x1xf32> to vector<13x16xf32>
    %470 = arith.mulf %467, %469 : vector<13x16xf32>
    %cst_230 = arith.constant 0.000000e+00 : f32
    %471 = vector.broadcast %cst_230 : f32 to vector<3x16xf32>
    %c0_231 = arith.constant 0 : index
    %c32_232 = arith.constant 32 : index
    %472 = vector.load %arg24[%c0_231, %c32_232] : memref<16x144xf32, #tpu.memory_space<vmem>>, vector<3x16xf32>
    tpu.vector_store %arg24[%c0_231, %c32_232], %471 {strides = array<i32>} : memref<16x144xf32, #tpu.memory_space<vmem>>, vector<3x16xf32>,
    %c3_233 = arith.constant 3 : index
    %c32_234 = arith.constant 32 : index
    %473 = vector.load %arg24[%c3_233, %c32_234] : memref<16x144xf32, #tpu.memory_space<vmem>>, vector<13x16xf32>
    tpu.vector_store %arg24[%c3_233, %c32_234], %470 {strides = array<i32>} : memref<16x144xf32, #tpu.memory_space<vmem>>, vector<13x16xf32>,
    %474 = vector.extract_strided_slice %430 {offsets = [0, 0], sizes = [15, 16], strides = [1, 1]} : vector<16x16xf32> to vector<15x16xf32>
    %475 = vector.extract_strided_slice %451 {offsets = [1, 0], sizes = [15, 1], strides = [1, 1]} : vector<16x1xf32> to vector<15x1xf32>
    %476 = vector.broadcast %475 : vector<15x1xf32> to vector<15x16xf32>
    %477 = arith.mulf %474, %476 : vector<15x16xf32>
    %cst_235 = arith.constant 0.000000e+00 : f32
    %478 = vector.broadcast %cst_235 : f32 to vector<1x16xf32>
    %c0_236 = arith.constant 0 : index
    %c48_237 = arith.constant 48 : index
    %479 = vector.load %arg24[%c0_236, %c48_237] : memref<16x144xf32, #tpu.memory_space<vmem>>, vector<1x16xf32>
    tpu.vector_store %arg24[%c0_236, %c48_237], %478 {strides = array<i32>} : memref<16x144xf32, #tpu.memory_space<vmem>>, vector<1x16xf32>,
    %c1_238 = arith.constant 1 : index
    %c48_239 = arith.constant 48 : index
    %480 = vector.load %arg24[%c1_238, %c48_239] : memref<16x144xf32, #tpu.memory_space<vmem>>, vector<15x16xf32>
    tpu.vector_store %arg24[%c1_238, %c48_239], %477 {strides = array<i32>} : memref<16x144xf32, #tpu.memory_space<vmem>>, vector<15x16xf32>,
    %c0_240 = arith.constant 0 : index
    %c64_241 = arith.constant 64 : index
    %481 = vector.load %arg24[%c0_240, %c64_241] : memref<16x144xf32, #tpu.memory_space<vmem>>, vector<16x16xf32>
    tpu.vector_store %arg24[%c0_240, %c64_241], %430 {strides = array<i32>} : memref<16x144xf32, #tpu.memory_space<vmem>>, vector<16x16xf32>,
    %482 = vector.extract_strided_slice %430 {offsets = [1, 0], sizes = [15, 16], strides = [1, 1]} : vector<16x16xf32> to vector<15x16xf32>
    %483 = vector.extract_strided_slice %455 {offsets = [0, 0], sizes = [15, 1], strides = [1, 1]} : vector<16x1xf32> to vector<15x1xf32>
    %484 = vector.broadcast %483 : vector<15x1xf32> to vector<15x16xf32>
    %485 = arith.mulf %482, %484 : vector<15x16xf32>
    %c0_242 = arith.constant 0 : index
    %c80_243 = arith.constant 80 : index
    %486 = vector.load %arg24[%c0_242, %c80_243] : memref<16x144xf32, #tpu.memory_space<vmem>>, vector<15x16xf32>
    tpu.vector_store %arg24[%c0_242, %c80_243], %485 {strides = array<i32>} : memref<16x144xf32, #tpu.memory_space<vmem>>, vector<15x16xf32>,
    %cst_244 = arith.constant 0.000000e+00 : f32
    %487 = vector.broadcast %cst_244 : f32 to vector<1x16xf32>
    %c15_245 = arith.constant 15 : index
    %c80_246 = arith.constant 80 : index
    %488 = vector.load %arg24[%c15_245, %c80_246] : memref<16x144xf32, #tpu.memory_space<vmem>>, vector<1x16xf32>
    tpu.vector_store %arg24[%c15_245, %c80_246], %487 {strides = array<i32>} : memref<16x144xf32, #tpu.memory_space<vmem>>, vector<1x16xf32>,
    %489 = vector.extract_strided_slice %430 {offsets = [3, 0], sizes = [13, 16], strides = [1, 1]} : vector<16x16xf32> to vector<13x16xf32>
    %490 = vector.extract_strided_slice %451 {offsets = [0, 0], sizes = [13, 1], strides = [1, 1]} : vector<16x1xf32> to vector<13x1xf32>
    %491 = vector.broadcast %490 : vector<13x1xf32> to vector<13x16xf32>
    %492 = arith.mulf %489, %491 : vector<13x16xf32>
    %c0_247 = arith.constant 0 : index
    %c96_248 = arith.constant 96 : index
    %493 = vector.load %arg24[%c0_247, %c96_248] : memref<16x144xf32, #tpu.memory_space<vmem>>, vector<13x16xf32>
    tpu.vector_store %arg24[%c0_247, %c96_248], %492 {strides = array<i32>} : memref<16x144xf32, #tpu.memory_space<vmem>>, vector<13x16xf32>,
    %cst_249 = arith.constant 0.000000e+00 : f32
    %494 = vector.broadcast %cst_249 : f32 to vector<3x16xf32>
    %c13_250 = arith.constant 13 : index
    %c96_251 = arith.constant 96 : index
    %495 = vector.load %arg24[%c13_250, %c96_251] : memref<16x144xf32, #tpu.memory_space<vmem>>, vector<3x16xf32>
    tpu.vector_store %arg24[%c13_250, %c96_251], %494 {strides = array<i32>} : memref<16x144xf32, #tpu.memory_space<vmem>>, vector<3x16xf32>,
    %496 = vector.extract_strided_slice %430 {offsets = [4, 0], sizes = [12, 16], strides = [1, 1]} : vector<16x16xf32> to vector<12x16xf32>
    %c0_252 = arith.constant 0 : index
    %c112_253 = arith.constant 112 : index
    %497 = vector.load %arg24[%c0_252, %c112_253] : memref<16x144xf32, #tpu.memory_space<vmem>>, vector<12x16xf32>
    tpu.vector_store %arg24[%c0_252, %c112_253], %496 {strides = array<i32>} : memref<16x144xf32, #tpu.memory_space<vmem>>, vector<12x16xf32>,
    %cst_254 = arith.constant 0.000000e+00 : f32
    %498 = vector.broadcast %cst_254 : f32 to vector<4x16xf32>
    %c12_255 = arith.constant 12 : index
    %c112_256 = arith.constant 112 : index
    %499 = vector.load %arg24[%c12_255, %c112_256] : memref<16x144xf32, #tpu.memory_space<vmem>>, vector<4x16xf32>
    tpu.vector_store %arg24[%c12_255, %c112_256], %498 {strides = array<i32>} : memref<16x144xf32, #tpu.memory_space<vmem>>, vector<4x16xf32>,
    %500 = vector.extract_strided_slice %430 {offsets = [5, 0], sizes = [11, 16], strides = [1, 1]} : vector<16x16xf32> to vector<11x16xf32>
    %501 = vector.extract_strided_slice %455 {offsets = [0, 0], sizes = [11, 1], strides = [1, 1]} : vector<16x1xf32> to vector<11x1xf32>
    %502 = vector.broadcast %501 : vector<11x1xf32> to vector<11x16xf32>
    %503 = arith.mulf %500, %502 : vector<11x16xf32>
    %c0_257 = arith.constant 0 : index
    %c128_258 = arith.constant 128 : index
    %504 = vector.load %arg24[%c0_257, %c128_258] : memref<16x144xf32, #tpu.memory_space<vmem>>, vector<11x16xf32>
    tpu.vector_store %arg24[%c0_257, %c128_258], %503 {strides = array<i32>} : memref<16x144xf32, #tpu.memory_space<vmem>>, vector<11x16xf32>,
    %cst_259 = arith.constant 0.000000e+00 : f32
    %505 = vector.broadcast %cst_259 : f32 to vector<5x16xf32>
    %c11_260 = arith.constant 11 : index
    %c128_261 = arith.constant 128 : index
    %506 = vector.load %arg24[%c11_260, %c128_261] : memref<16x144xf32, #tpu.memory_space<vmem>>, vector<5x16xf32>
    tpu.vector_store %arg24[%c11_260, %c128_261], %505 {strides = array<i32>} : memref<16x144xf32, #tpu.memory_space<vmem>>, vector<5x16xf32>,
    %c0_262 = arith.constant 0 : index
    %c0_263 = arith.constant 0 : index
    %507 = vector.load %arg24[%c0_262, %c0_263] : memref<16x144xf32, #tpu.memory_space<vmem>>, vector<16x144xf32>
    %508 = arith.truncf %507 : vector<16x144xf32> to vector<16x144xbf16>
    %c0_264 = arith.constant 0 : index
    %c0_265 = arith.constant 0 : index
    %509 = vector.load %arg11[%c0_264, %c0_265] : memref<144x16xbf16, #tpu.memory_space<vmem>>, vector<144x16xbf16>
    %cst_266 = arith.constant dense<0.000000e+00> : vector<16x16xf32>
    %510 = tpu.matmul %508, %509, %cst_266 {dimension_numbers = #tpu.dot_dimension_numbers<[1], [0], [0], [1], [0, 0, 1, 1], [], []>} : vector<16x144xbf16>, vector<144x16xbf16>, vector<16x16xf32> -> vector<16x16xf32>
    %c0_267 = arith.constant 0 : index
    %c0_268 = arith.constant 0 : index
    %511 = vector.load %arg12[%c0_267, %c0_268] : memref<1x16xf32, #tpu.memory_space<vmem>>, vector<1x16xf32>
    %512 = vector.broadcast %511 : vector<1x16xf32> to vector<16x16xf32>
    %513 = arith.mulf %510, %512 : vector<16x16xf32>
    %c0_269 = arith.constant 0 : index
    %c0_270 = arith.constant 0 : index
    %514 = vector.load %arg13[%c0_269, %c0_270] : memref<1x16xf32, #tpu.memory_space<vmem>>, vector<1x16xf32>
    %515 = vector.broadcast %514 : vector<1x16xf32> to vector<16x16xf32>
    %516 = arith.addf %513, %515 : vector<16x16xf32>
    %517 = arith.addf %516, %305 : vector<16x16xf32>
    %cst_271 = arith.constant 5.000000e-01 : f32
    %518 = vector.broadcast %cst_271 : f32 to vector<16x16xf32>
    %519 = arith.mulf %518, %517 : vector<16x16xf32>
    %cst_272 = arith.constant 0.707106769 : f32
    %520 = vector.broadcast %cst_272 : f32 to vector<16x16xf32>
    %521 = arith.mulf %517, %520 : vector<16x16xf32>
    %522 = math.absf %521 : vector<16x16xf32>
    %cst_273 = arith.constant 0.327591091 : f32
    %523 = vector.broadcast %cst_273 : f32 to vector<16x16xf32>
    %524 = arith.mulf %523, %522 : vector<16x16xf32>
    %cst_274 = arith.constant 1.000000e+00 : f32
    %525 = vector.broadcast %cst_274 : f32 to vector<16x16xf32>
    %526 = arith.addf %525, %524 : vector<16x16xf32>
    %527 = tpu.reciprocal %526 {approx = true} : vector<16x16xf32> -> vector<16x16xf32>
    %cst_275 = arith.constant 1.06140542 : f32
    %528 = vector.broadcast %cst_275 : f32 to vector<16x16xf32>
    %529 = arith.mulf %528, %527 : vector<16x16xf32>
    %cst_276 = arith.constant -1.45315206 : f32
    %530 = vector.broadcast %cst_276 : f32 to vector<16x16xf32>
    %531 = arith.addf %529, %530 : vector<16x16xf32>
    %532 = arith.mulf %531, %527 : vector<16x16xf32>
    %cst_277 = arith.constant 1.42141378 : f32
    %533 = vector.broadcast %cst_277 : f32 to vector<16x16xf32>
    %534 = arith.addf %532, %533 : vector<16x16xf32>
    %535 = arith.mulf %534, %527 : vector<16x16xf32>
    %cst_278 = arith.constant -0.284496725 : f32
    %536 = vector.broadcast %cst_278 : f32 to vector<16x16xf32>
    %537 = arith.addf %535, %536 : vector<16x16xf32>
    %538 = arith.mulf %537, %527 : vector<16x16xf32>
    %cst_279 = arith.constant 0.254829586 : f32
    %539 = vector.broadcast %cst_279 : f32 to vector<16x16xf32>
    %540 = arith.addf %538, %539 : vector<16x16xf32>
    %541 = arith.mulf %540, %527 : vector<16x16xf32>
    %cst_280 = arith.constant 0.000000e+00 : f32
    %542 = vector.broadcast %cst_280 : f32 to vector<16x16xf32>
    %543 = arith.subf %542, %522 : vector<16x16xf32>
    %544 = arith.mulf %543, %522 : vector<16x16xf32>
    %545 = math.exp %544 : vector<16x16xf32>
    %546 = arith.mulf %541, %545 : vector<16x16xf32>
    %cst_281 = arith.constant 1.000000e+00 : f32
    %547 = vector.broadcast %cst_281 : f32 to vector<16x16xf32>
    %548 = arith.subf %547, %546 : vector<16x16xf32>
    %cst_282 = arith.constant 0.000000e+00 : f32
    %549 = vector.broadcast %cst_282 : f32 to vector<16x16xf32>
    %550 = arith.cmpf oge, %521, %549 : vector<16x16xf32>
    %cst_283 = arith.constant 0.000000e+00 : f32
    %551 = vector.broadcast %cst_283 : f32 to vector<16x16xf32>
    %552 = arith.subf %551, %548 : vector<16x16xf32>
    %553 = arith.select %550, %548, %552 : vector<16x16xi1>, vector<16x16xf32>
    %cst_284 = arith.constant 1.000000e+00 : f32
    %554 = vector.broadcast %cst_284 : f32 to vector<16x16xf32>
    %555 = arith.addf %554, %553 : vector<16x16xf32>
    %556 = arith.mulf %519, %555 : vector<16x16xf32>
    %557 = arith.addf %556, %305 : vector<16x16xf32>
    %cst_285 = arith.constant 5.000000e-01 : f32
    %558 = vector.broadcast %cst_285 : f32 to vector<16x16xf32>
    %559 = arith.mulf %558, %557 : vector<16x16xf32>
    %cst_286 = arith.constant 0.707106769 : f32
    %560 = vector.broadcast %cst_286 : f32 to vector<16x16xf32>
    %561 = arith.mulf %557, %560 : vector<16x16xf32>
    %562 = math.absf %561 : vector<16x16xf32>
    %cst_287 = arith.constant 0.327591091 : f32
    %563 = vector.broadcast %cst_287 : f32 to vector<16x16xf32>
    %564 = arith.mulf %563, %562 : vector<16x16xf32>
    %cst_288 = arith.constant 1.000000e+00 : f32
    %565 = vector.broadcast %cst_288 : f32 to vector<16x16xf32>
    %566 = arith.addf %565, %564 : vector<16x16xf32>
    %567 = tpu.reciprocal %566 {approx = true} : vector<16x16xf32> -> vector<16x16xf32>
    %cst_289 = arith.constant 1.06140542 : f32
    %568 = vector.broadcast %cst_289 : f32 to vector<16x16xf32>
    %569 = arith.mulf %568, %567 : vector<16x16xf32>
    %cst_290 = arith.constant -1.45315206 : f32
    %570 = vector.broadcast %cst_290 : f32 to vector<16x16xf32>
    %571 = arith.addf %569, %570 : vector<16x16xf32>
    %572 = arith.mulf %571, %567 : vector<16x16xf32>
    %cst_291 = arith.constant 1.42141378 : f32
    %573 = vector.broadcast %cst_291 : f32 to vector<16x16xf32>
    %574 = arith.addf %572, %573 : vector<16x16xf32>
    %575 = arith.mulf %574, %567 : vector<16x16xf32>
    %cst_292 = arith.constant -0.284496725 : f32
    %576 = vector.broadcast %cst_292 : f32 to vector<16x16xf32>
    %577 = arith.addf %575, %576 : vector<16x16xf32>
    %578 = arith.mulf %577, %567 : vector<16x16xf32>
    %cst_293 = arith.constant 0.254829586 : f32
    %579 = vector.broadcast %cst_293 : f32 to vector<16x16xf32>
    %580 = arith.addf %578, %579 : vector<16x16xf32>
    %581 = arith.mulf %580, %567 : vector<16x16xf32>
    %cst_294 = arith.constant 0.000000e+00 : f32
    %582 = vector.broadcast %cst_294 : f32 to vector<16x16xf32>
    %583 = arith.subf %582, %562 : vector<16x16xf32>
    %584 = arith.mulf %583, %562 : vector<16x16xf32>
    %585 = math.exp %584 : vector<16x16xf32>
    %586 = arith.mulf %581, %585 : vector<16x16xf32>
    %cst_295 = arith.constant 1.000000e+00 : f32
    %587 = vector.broadcast %cst_295 : f32 to vector<16x16xf32>
    %588 = arith.subf %587, %586 : vector<16x16xf32>
    %cst_296 = arith.constant 0.000000e+00 : f32
    %589 = vector.broadcast %cst_296 : f32 to vector<16x16xf32>
    %590 = arith.cmpf oge, %561, %589 : vector<16x16xf32>
    %cst_297 = arith.constant 0.000000e+00 : f32
    %591 = vector.broadcast %cst_297 : f32 to vector<16x16xf32>
    %592 = arith.subf %591, %588 : vector<16x16xf32>
    %593 = arith.select %590, %588, %592 : vector<16x16xi1>, vector<16x16xf32>
    %cst_298 = arith.constant 1.000000e+00 : f32
    %594 = vector.broadcast %cst_298 : f32 to vector<16x16xf32>
    %595 = arith.addf %594, %593 : vector<16x16xf32>
    %596 = arith.mulf %559, %595 : vector<16x16xf32>
    %597 = tpu.iota {dimensions = array<i32: 0>} : vector<16x1xi32>
    %c4_i32_299 = arith.constant 4 : i32
    %c0_i32_300 = arith.constant 0 : i32
    %598 = arith.cmpi eq, %c4_i32_299, %c0_i32_300 : i32
    %c1_i32_301 = arith.constant 1 : i32
    %599 = arith.select %598, %c1_i32_301, %c4_i32_299 : i32
    %600 = vector.broadcast %599 : i32 to vector<16x1xi32>
    %601 = arith.remsi %597, %600 : vector<16x1xi32>
    %c0_i32_302 = arith.constant 0 : i32
    %602 = vector.broadcast %c0_i32_302 : i32 to vector<16x1xi32>
    %603 = arith.cmpi ne, %601, %602 : vector<16x1xi32>
    %c0_i32_303 = arith.constant 0 : i32
    %604 = vector.broadcast %c0_i32_303 : i32 to vector<16x1xi32>
    %605 = arith.cmpi slt, %601, %604 : vector<16x1xi32>
    %c0_i32_304 = arith.constant 0 : i32
    %606 = arith.cmpi slt, %599, %c0_i32_304 : i32
    %607 = vector.broadcast %606 : i1 to vector<16x1xi1>
    %608 = vector.broadcast %607 : vector<16x1xi1> to vector<16x1xi1>
    %609 = arith.xori %605, %608 : vector<16x1xi1>
    %610 = arith.andi %609, %603 : vector<16x1xi1>
    %611 = vector.broadcast %599 : i32 to vector<16x1xi32>
    %612 = arith.addi %601, %611 : vector<16x1xi32>
    %613 = arith.select %610, %612, %601 : vector<16x1xi1>, vector<16x1xi32>
    %c0_i32_305 = arith.constant 0 : i32
    %614 = vector.broadcast %c0_i32_305 : i32 to vector<16x1xi32>
    %615 = arith.cmpi ne, %613, %614 : vector<16x1xi32>
    %616 = arith.extui %615 : vector<16x1xi1> to vector<16x1xi32>
    %617 = arith.sitofp %616 : vector<16x1xi32> to vector<16x1xf32>
    %c3_i32_306 = arith.constant 3 : i32
    %618 = vector.broadcast %c3_i32_306 : i32 to vector<16x1xi32>
    %619 = arith.cmpi ne, %613, %618 : vector<16x1xi32>
    %620 = arith.extui %619 : vector<16x1xi1> to vector<16x1xi32>
    %621 = arith.sitofp %620 : vector<16x1xi32> to vector<16x1xf32>
    %622 = vector.extract_strided_slice %596 {offsets = [0, 0], sizes = [11, 16], strides = [1, 1]} : vector<16x16xf32> to vector<11x16xf32>
    %623 = vector.extract_strided_slice %617 {offsets = [5, 0], sizes = [11, 1], strides = [1, 1]} : vector<16x1xf32> to vector<11x1xf32>
    %624 = vector.broadcast %623 : vector<11x1xf32> to vector<11x16xf32>
    %625 = arith.mulf %622, %624 : vector<11x16xf32>
    %cst_307 = arith.constant 0.000000e+00 : f32
    %626 = vector.broadcast %cst_307 : f32 to vector<5x16xf32>
    %c0_308 = arith.constant 0 : index
    %c0_309 = arith.constant 0 : index
    %627 = vector.load %arg25[%c0_308, %c0_309] : memref<16x144xf32, #tpu.memory_space<vmem>>, vector<5x16xf32>
    tpu.vector_store %arg25[%c0_308, %c0_309], %626 {strides = array<i32>} : memref<16x144xf32, #tpu.memory_space<vmem>>, vector<5x16xf32>,
    %c5_310 = arith.constant 5 : index
    %c0_311 = arith.constant 0 : index
    %628 = vector.load %arg25[%c5_310, %c0_311] : memref<16x144xf32, #tpu.memory_space<vmem>>, vector<11x16xf32>
    tpu.vector_store %arg25[%c5_310, %c0_311], %625 {strides = array<i32>} : memref<16x144xf32, #tpu.memory_space<vmem>>, vector<11x16xf32>,
    %629 = vector.extract_strided_slice %596 {offsets = [0, 0], sizes = [12, 16], strides = [1, 1]} : vector<16x16xf32> to vector<12x16xf32>
    %cst_312 = arith.constant 0.000000e+00 : f32
    %630 = vector.broadcast %cst_312 : f32 to vector<4x16xf32>
    %c0_313 = arith.constant 0 : index
    %c16_314 = arith.constant 16 : index
    %631 = vector.load %arg25[%c0_313, %c16_314] : memref<16x144xf32, #tpu.memory_space<vmem>>, vector<4x16xf32>
    tpu.vector_store %arg25[%c0_313, %c16_314], %630 {strides = array<i32>} : memref<16x144xf32, #tpu.memory_space<vmem>>, vector<4x16xf32>,
    %c4_315 = arith.constant 4 : index
    %c16_316 = arith.constant 16 : index
    %632 = vector.load %arg25[%c4_315, %c16_316] : memref<16x144xf32, #tpu.memory_space<vmem>>, vector<12x16xf32>
    tpu.vector_store %arg25[%c4_315, %c16_316], %629 {strides = array<i32>} : memref<16x144xf32, #tpu.memory_space<vmem>>, vector<12x16xf32>,
    %633 = vector.extract_strided_slice %596 {offsets = [0, 0], sizes = [13, 16], strides = [1, 1]} : vector<16x16xf32> to vector<13x16xf32>
    %634 = vector.extract_strided_slice %621 {offsets = [3, 0], sizes = [13, 1], strides = [1, 1]} : vector<16x1xf32> to vector<13x1xf32>
    %635 = vector.broadcast %634 : vector<13x1xf32> to vector<13x16xf32>
    %636 = arith.mulf %633, %635 : vector<13x16xf32>
    %cst_317 = arith.constant 0.000000e+00 : f32
    %637 = vector.broadcast %cst_317 : f32 to vector<3x16xf32>
    %c0_318 = arith.constant 0 : index
    %c32_319 = arith.constant 32 : index
    %638 = vector.load %arg25[%c0_318, %c32_319] : memref<16x144xf32, #tpu.memory_space<vmem>>, vector<3x16xf32>
    tpu.vector_store %arg25[%c0_318, %c32_319], %637 {strides = array<i32>} : memref<16x144xf32, #tpu.memory_space<vmem>>, vector<3x16xf32>,
    %c3_320 = arith.constant 3 : index
    %c32_321 = arith.constant 32 : index
    %639 = vector.load %arg25[%c3_320, %c32_321] : memref<16x144xf32, #tpu.memory_space<vmem>>, vector<13x16xf32>
    tpu.vector_store %arg25[%c3_320, %c32_321], %636 {strides = array<i32>} : memref<16x144xf32, #tpu.memory_space<vmem>>, vector<13x16xf32>,
    %640 = vector.extract_strided_slice %596 {offsets = [0, 0], sizes = [15, 16], strides = [1, 1]} : vector<16x16xf32> to vector<15x16xf32>
    %641 = vector.extract_strided_slice %617 {offsets = [1, 0], sizes = [15, 1], strides = [1, 1]} : vector<16x1xf32> to vector<15x1xf32>
    %642 = vector.broadcast %641 : vector<15x1xf32> to vector<15x16xf32>
    %643 = arith.mulf %640, %642 : vector<15x16xf32>
    %cst_322 = arith.constant 0.000000e+00 : f32
    %644 = vector.broadcast %cst_322 : f32 to vector<1x16xf32>
    %c0_323 = arith.constant 0 : index
    %c48_324 = arith.constant 48 : index
    %645 = vector.load %arg25[%c0_323, %c48_324] : memref<16x144xf32, #tpu.memory_space<vmem>>, vector<1x16xf32>
    tpu.vector_store %arg25[%c0_323, %c48_324], %644 {strides = array<i32>} : memref<16x144xf32, #tpu.memory_space<vmem>>, vector<1x16xf32>,
    %c1_325 = arith.constant 1 : index
    %c48_326 = arith.constant 48 : index
    %646 = vector.load %arg25[%c1_325, %c48_326] : memref<16x144xf32, #tpu.memory_space<vmem>>, vector<15x16xf32>
    tpu.vector_store %arg25[%c1_325, %c48_326], %643 {strides = array<i32>} : memref<16x144xf32, #tpu.memory_space<vmem>>, vector<15x16xf32>,
    %c0_327 = arith.constant 0 : index
    %c64_328 = arith.constant 64 : index
    %647 = vector.load %arg25[%c0_327, %c64_328] : memref<16x144xf32, #tpu.memory_space<vmem>>, vector<16x16xf32>
    tpu.vector_store %arg25[%c0_327, %c64_328], %596 {strides = array<i32>} : memref<16x144xf32, #tpu.memory_space<vmem>>, vector<16x16xf32>,
    %648 = vector.extract_strided_slice %596 {offsets = [1, 0], sizes = [15, 16], strides = [1, 1]} : vector<16x16xf32> to vector<15x16xf32>
    %649 = vector.extract_strided_slice %621 {offsets = [0, 0], sizes = [15, 1], strides = [1, 1]} : vector<16x1xf32> to vector<15x1xf32>
    %650 = vector.broadcast %649 : vector<15x1xf32> to vector<15x16xf32>
    %651 = arith.mulf %648, %650 : vector<15x16xf32>
    %c0_329 = arith.constant 0 : index
    %c80_330 = arith.constant 80 : index
    %652 = vector.load %arg25[%c0_329, %c80_330] : memref<16x144xf32, #tpu.memory_space<vmem>>, vector<15x16xf32>
    tpu.vector_store %arg25[%c0_329, %c80_330], %651 {strides = array<i32>} : memref<16x144xf32, #tpu.memory_space<vmem>>, vector<15x16xf32>,
    %cst_331 = arith.constant 0.000000e+00 : f32
    %653 = vector.broadcast %cst_331 : f32 to vector<1x16xf32>
    %c15_332 = arith.constant 15 : index
    %c80_333 = arith.constant 80 : index
    %654 = vector.load %arg25[%c15_332, %c80_333] : memref<16x144xf32, #tpu.memory_space<vmem>>, vector<1x16xf32>
    tpu.vector_store %arg25[%c15_332, %c80_333], %653 {strides = array<i32>} : memref<16x144xf32, #tpu.memory_space<vmem>>, vector<1x16xf32>,
    %655 = vector.extract_strided_slice %596 {offsets = [3, 0], sizes = [13, 16], strides = [1, 1]} : vector<16x16xf32> to vector<13x16xf32>
    %656 = vector.extract_strided_slice %617 {offsets = [0, 0], sizes = [13, 1], strides = [1, 1]} : vector<16x1xf32> to vector<13x1xf32>
    %657 = vector.broadcast %656 : vector<13x1xf32> to vector<13x16xf32>
    %658 = arith.mulf %655, %657 : vector<13x16xf32>
    %c0_334 = arith.constant 0 : index
    %c96_335 = arith.constant 96 : index
    %659 = vector.load %arg25[%c0_334, %c96_335] : memref<16x144xf32, #tpu.memory_space<vmem>>, vector<13x16xf32>
    tpu.vector_store %arg25[%c0_334, %c96_335], %658 {strides = array<i32>} : memref<16x144xf32, #tpu.memory_space<vmem>>, vector<13x16xf32>,
    %cst_336 = arith.constant 0.000000e+00 : f32
    %660 = vector.broadcast %cst_336 : f32 to vector<3x16xf32>
    %c13_337 = arith.constant 13 : index
    %c96_338 = arith.constant 96 : index
    %661 = vector.load %arg25[%c13_337, %c96_338] : memref<16x144xf32, #tpu.memory_space<vmem>>, vector<3x16xf32>
    tpu.vector_store %arg25[%c13_337, %c96_338], %660 {strides = array<i32>} : memref<16x144xf32, #tpu.memory_space<vmem>>, vector<3x16xf32>,
    %662 = vector.extract_strided_slice %596 {offsets = [4, 0], sizes = [12, 16], strides = [1, 1]} : vector<16x16xf32> to vector<12x16xf32>
    %c0_339 = arith.constant 0 : index
    %c112_340 = arith.constant 112 : index
    %663 = vector.load %arg25[%c0_339, %c112_340] : memref<16x144xf32, #tpu.memory_space<vmem>>, vector<12x16xf32>
    tpu.vector_store %arg25[%c0_339, %c112_340], %662 {strides = array<i32>} : memref<16x144xf32, #tpu.memory_space<vmem>>, vector<12x16xf32>,
    %cst_341 = arith.constant 0.000000e+00 : f32
    %664 = vector.broadcast %cst_341 : f32 to vector<4x16xf32>
    %c12_342 = arith.constant 12 : index
    %c112_343 = arith.constant 112 : index
    %665 = vector.load %arg25[%c12_342, %c112_343] : memref<16x144xf32, #tpu.memory_space<vmem>>, vector<4x16xf32>
    tpu.vector_store %arg25[%c12_342, %c112_343], %664 {strides = array<i32>} : memref<16x144xf32, #tpu.memory_space<vmem>>, vector<4x16xf32>,
    %666 = vector.extract_strided_slice %596 {offsets = [5, 0], sizes = [11, 16], strides = [1, 1]} : vector<16x16xf32> to vector<11x16xf32>
    %667 = vector.extract_strided_slice %621 {offsets = [0, 0], sizes = [11, 1], strides = [1, 1]} : vector<16x1xf32> to vector<11x1xf32>
    %668 = vector.broadcast %667 : vector<11x1xf32> to vector<11x16xf32>
    %669 = arith.mulf %666, %668 : vector<11x16xf32>
    %c0_344 = arith.constant 0 : index
    %c128_345 = arith.constant 128 : index
    %670 = vector.load %arg25[%c0_344, %c128_345] : memref<16x144xf32, #tpu.memory_space<vmem>>, vector<11x16xf32>
    tpu.vector_store %arg25[%c0_344, %c128_345], %669 {strides = array<i32>} : memref<16x144xf32, #tpu.memory_space<vmem>>, vector<11x16xf32>,
    %cst_346 = arith.constant 0.000000e+00 : f32
    %671 = vector.broadcast %cst_346 : f32 to vector<5x16xf32>
    %c11_347 = arith.constant 11 : index
    %c128_348 = arith.constant 128 : index
    %672 = vector.load %arg25[%c11_347, %c128_348] : memref<16x144xf32, #tpu.memory_space<vmem>>, vector<5x16xf32>
    tpu.vector_store %arg25[%c11_347, %c128_348], %671 {strides = array<i32>} : memref<16x144xf32, #tpu.memory_space<vmem>>, vector<5x16xf32>,
    %c0_349 = arith.constant 0 : index
    %c0_350 = arith.constant 0 : index
    %673 = vector.load %arg25[%c0_349, %c0_350] : memref<16x144xf32, #tpu.memory_space<vmem>>, vector<16x144xf32>
    %674 = arith.truncf %673 : vector<16x144xf32> to vector<16x144xbf16>
    %c0_351 = arith.constant 0 : index
    %c0_352 = arith.constant 0 : index
    %675 = vector.load %arg14[%c0_351, %c0_352] : memref<144x8xbf16, #tpu.memory_space<vmem>>, vector<144x8xbf16>
    %cst_353 = arith.constant dense<0.000000e+00> : vector<16x8xf32>
    %676 = tpu.matmul %674, %675, %cst_353 {dimension_numbers = #tpu.dot_dimension_numbers<[1], [0], [0], [1], [0, 0, 1, 1], [], []>} : vector<16x144xbf16>, vector<144x8xbf16>, vector<16x8xf32> -> vector<16x8xf32>
    %c0_354 = arith.constant 0 : index
    %c0_355 = arith.constant 0 : index
    %677 = vector.load %arg15[%c0_354, %c0_355] : memref<1x8xf32, #tpu.memory_space<vmem>>, vector<1x8xf32>
    %678 = vector.broadcast %677 : vector<1x8xf32> to vector<16x8xf32>
    %679 = arith.mulf %676, %678 : vector<16x8xf32>
    %c0_356 = arith.constant 0 : index
    %c0_357 = arith.constant 0 : index
    %680 = vector.load %arg16[%c0_356, %c0_357] : memref<1x8xf32, #tpu.memory_space<vmem>>, vector<1x8xf32>
    %681 = vector.broadcast %680 : vector<1x8xf32> to vector<16x8xf32>
    %682 = arith.addf %679, %681 : vector<16x8xf32>
    %cst_358 = arith.constant 5.000000e-01 : f32
    %683 = vector.broadcast %cst_358 : f32 to vector<16x8xf32>
    %684 = arith.mulf %683, %682 : vector<16x8xf32>
    %cst_359 = arith.constant 0.707106769 : f32
    %685 = vector.broadcast %cst_359 : f32 to vector<16x8xf32>
    %686 = arith.mulf %682, %685 : vector<16x8xf32>
    %687 = math.absf %686 : vector<16x8xf32>
    %cst_360 = arith.constant 0.327591091 : f32
    %688 = vector.broadcast %cst_360 : f32 to vector<16x8xf32>
    %689 = arith.mulf %688, %687 : vector<16x8xf32>
    %cst_361 = arith.constant 1.000000e+00 : f32
    %690 = vector.broadcast %cst_361 : f32 to vector<16x8xf32>
    %691 = arith.addf %690, %689 : vector<16x8xf32>
    %692 = tpu.reciprocal %691 {approx = true} : vector<16x8xf32> -> vector<16x8xf32>
    %cst_362 = arith.constant 1.06140542 : f32
    %693 = vector.broadcast %cst_362 : f32 to vector<16x8xf32>
    %694 = arith.mulf %693, %692 : vector<16x8xf32>
    %cst_363 = arith.constant -1.45315206 : f32
    %695 = vector.broadcast %cst_363 : f32 to vector<16x8xf32>
    %696 = arith.addf %694, %695 : vector<16x8xf32>
    %697 = arith.mulf %696, %692 : vector<16x8xf32>
    %cst_364 = arith.constant 1.42141378 : f32
    %698 = vector.broadcast %cst_364 : f32 to vector<16x8xf32>
    %699 = arith.addf %697, %698 : vector<16x8xf32>
    %700 = arith.mulf %699, %692 : vector<16x8xf32>
    %cst_365 = arith.constant -0.284496725 : f32
    %701 = vector.broadcast %cst_365 : f32 to vector<16x8xf32>
    %702 = arith.addf %700, %701 : vector<16x8xf32>
    %703 = arith.mulf %702, %692 : vector<16x8xf32>
    %cst_366 = arith.constant 0.254829586 : f32
    %704 = vector.broadcast %cst_366 : f32 to vector<16x8xf32>
    %705 = arith.addf %703, %704 : vector<16x8xf32>
    %706 = arith.mulf %705, %692 : vector<16x8xf32>
    %cst_367 = arith.constant 0.000000e+00 : f32
    %707 = vector.broadcast %cst_367 : f32 to vector<16x8xf32>
    %708 = arith.subf %707, %687 : vector<16x8xf32>
    %709 = arith.mulf %708, %687 : vector<16x8xf32>
    %710 = math.exp %709 : vector<16x8xf32>
    %711 = arith.mulf %706, %710 : vector<16x8xf32>
    %cst_368 = arith.constant 1.000000e+00 : f32
    %712 = vector.broadcast %cst_368 : f32 to vector<16x8xf32>
    %713 = arith.subf %712, %711 : vector<16x8xf32>
    %cst_369 = arith.constant 0.000000e+00 : f32
    %714 = vector.broadcast %cst_369 : f32 to vector<16x8xf32>
    %715 = arith.cmpf oge, %686, %714 : vector<16x8xf32>
    %cst_370 = arith.constant 0.000000e+00 : f32
    %716 = vector.broadcast %cst_370 : f32 to vector<16x8xf32>
    %717 = arith.subf %716, %713 : vector<16x8xf32>
    %718 = arith.select %715, %713, %717 : vector<16x8xi1>, vector<16x8xf32>
    %cst_371 = arith.constant 1.000000e+00 : f32
    %719 = vector.broadcast %cst_371 : f32 to vector<16x8xf32>
    %720 = arith.addf %719, %718 : vector<16x8xf32>
    %721 = arith.mulf %684, %720 : vector<16x8xf32>
    %c0_372 = arith.constant 0 : index
    %c0_373 = arith.constant 0 : index
    %722 = tpu.strided_load %arg29[%c0_372, %c0_373] {strides = array<i32: 2, 1>} : memref<32x8xf32, #tpu.memory_space<vmem>>, vector<16x8xf32>
    tpu.strided_store %arg29[%c0_372, %c0_373], %721 {strides = array<i32: 2, 1>} : memref<32x8xf32, #tpu.memory_space<vmem>>, vector<16x8xf32>
    %c1_374 = arith.constant 1 : index
    %c0_375 = arith.constant 0 : index
    %723 = tpu.strided_load %arg29[%c1_374, %c0_375] {strides = array<i32: 2, 1>} : memref<32x8xf32, #tpu.memory_space<vmem>>, vector<16x8xf32>
    tpu.strided_store %arg29[%c1_374, %c0_375], %721 {strides = array<i32: 2, 1>} : memref<32x8xf32, #tpu.memory_space<vmem>>, vector<16x8xf32>
    %c0_376 = arith.constant 0 : index
    %c0_377 = arith.constant 0 : index
    %724 = vector.load %arg29[%c0_376, %c0_377] : memref<32x8xf32, #tpu.memory_space<vmem>>, vector<8x8xf32>
    %c0_378 = arith.constant 0 : index
    %c0_379 = arith.constant 0 : index
    %725 = vector.load %arg31[%c0_378, %c0_379] : memref<64x8xf32, #tpu.memory_space<vmem>>, vector<8x8xf32>
    tpu.vector_store %arg31[%c0_378, %c0_379], %724 {strides = array<i32>} : memref<64x8xf32, #tpu.memory_space<vmem>>, vector<8x8xf32>,
    %c8_380 = arith.constant 8 : index
    %c0_381 = arith.constant 0 : index
    %726 = vector.load %arg31[%c8_380, %c0_381] : memref<64x8xf32, #tpu.memory_space<vmem>>, vector<8x8xf32>
    tpu.vector_store %arg31[%c8_380, %c0_381], %724 {strides = array<i32>} : memref<64x8xf32, #tpu.memory_space<vmem>>, vector<8x8xf32>,
    %c8_382 = arith.constant 8 : index
    %c0_383 = arith.constant 0 : index
    %727 = vector.load %arg29[%c8_382, %c0_383] : memref<32x8xf32, #tpu.memory_space<vmem>>, vector<8x8xf32>
    %c16_384 = arith.constant 16 : index
    %c0_385 = arith.constant 0 : index
    %728 = vector.load %arg31[%c16_384, %c0_385] : memref<64x8xf32, #tpu.memory_space<vmem>>, vector<8x8xf32>
    tpu.vector_store %arg31[%c16_384, %c0_385], %727 {strides = array<i32>} : memref<64x8xf32, #tpu.memory_space<vmem>>, vector<8x8xf32>,
    %c24_386 = arith.constant 24 : index
    %c0_387 = arith.constant 0 : index
    %729 = vector.load %arg31[%c24_386, %c0_387] : memref<64x8xf32, #tpu.memory_space<vmem>>, vector<8x8xf32>
    tpu.vector_store %arg31[%c24_386, %c0_387], %727 {strides = array<i32>} : memref<64x8xf32, #tpu.memory_space<vmem>>, vector<8x8xf32>,
    %c16_388 = arith.constant 16 : index
    %c0_389 = arith.constant 0 : index
    %730 = vector.load %arg29[%c16_388, %c0_389] : memref<32x8xf32, #tpu.memory_space<vmem>>, vector<8x8xf32>
    %c32_390 = arith.constant 32 : index
    %c0_391 = arith.constant 0 : index
    %731 = vector.load %arg31[%c32_390, %c0_391] : memref<64x8xf32, #tpu.memory_space<vmem>>, vector<8x8xf32>
    tpu.vector_store %arg31[%c32_390, %c0_391], %730 {strides = array<i32>} : memref<64x8xf32, #tpu.memory_space<vmem>>, vector<8x8xf32>,
    %c40_392 = arith.constant 40 : index
    %c0_393 = arith.constant 0 : index
    %732 = vector.load %arg31[%c40_392, %c0_393] : memref<64x8xf32, #tpu.memory_space<vmem>>, vector<8x8xf32>
    tpu.vector_store %arg31[%c40_392, %c0_393], %730 {strides = array<i32>} : memref<64x8xf32, #tpu.memory_space<vmem>>, vector<8x8xf32>,
    %c24_394 = arith.constant 24 : index
    %c0_395 = arith.constant 0 : index
    %733 = vector.load %arg29[%c24_394, %c0_395] : memref<32x8xf32, #tpu.memory_space<vmem>>, vector<8x8xf32>
    %c48_396 = arith.constant 48 : index
    %c0_397 = arith.constant 0 : index
    %734 = vector.load %arg31[%c48_396, %c0_397] : memref<64x8xf32, #tpu.memory_space<vmem>>, vector<8x8xf32>
    tpu.vector_store %arg31[%c48_396, %c0_397], %733 {strides = array<i32>} : memref<64x8xf32, #tpu.memory_space<vmem>>, vector<8x8xf32>,
    %c56_398 = arith.constant 56 : index
    %c0_399 = arith.constant 0 : index
    %735 = vector.load %arg31[%c56_398, %c0_399] : memref<64x8xf32, #tpu.memory_space<vmem>>, vector<8x8xf32>
    tpu.vector_store %arg31[%c56_398, %c0_399], %733 {strides = array<i32>} : memref<64x8xf32, #tpu.memory_space<vmem>>, vector<8x8xf32>,
    %c0_400 = arith.constant 0 : index
    %c0_401 = arith.constant 0 : index
    %736 = vector.load %arg31[%c0_400, %c0_401] : memref<64x8xf32, #tpu.memory_space<vmem>>, vector<64x8xf32>
    %737 = arith.addf %736, %161 : vector<64x8xf32>
    %cst_402 = arith.constant 5.000000e-01 : f32
    %738 = vector.broadcast %cst_402 : f32 to vector<64x8xf32>
    %739 = arith.mulf %738, %737 : vector<64x8xf32>
    %cst_403 = arith.constant 0.707106769 : f32
    %740 = vector.broadcast %cst_403 : f32 to vector<64x8xf32>
    %741 = arith.mulf %737, %740 : vector<64x8xf32>
    %742 = math.absf %741 : vector<64x8xf32>
    %cst_404 = arith.constant 0.327591091 : f32
    %743 = vector.broadcast %cst_404 : f32 to vector<64x8xf32>
    %744 = arith.mulf %743, %742 : vector<64x8xf32>
    %cst_405 = arith.constant 1.000000e+00 : f32
    %745 = vector.broadcast %cst_405 : f32 to vector<64x8xf32>
    %746 = arith.addf %745, %744 : vector<64x8xf32>
    %747 = tpu.reciprocal %746 {approx = true} : vector<64x8xf32> -> vector<64x8xf32>
    %cst_406 = arith.constant 1.06140542 : f32
    %748 = vector.broadcast %cst_406 : f32 to vector<64x8xf32>
    %749 = arith.mulf %748, %747 : vector<64x8xf32>
    %cst_407 = arith.constant -1.45315206 : f32
    %750 = vector.broadcast %cst_407 : f32 to vector<64x8xf32>
    %751 = arith.addf %749, %750 : vector<64x8xf32>
    %752 = arith.mulf %751, %747 : vector<64x8xf32>
    %cst_408 = arith.constant 1.42141378 : f32
    %753 = vector.broadcast %cst_408 : f32 to vector<64x8xf32>
    %754 = arith.addf %752, %753 : vector<64x8xf32>
    %755 = arith.mulf %754, %747 : vector<64x8xf32>
    %cst_409 = arith.constant -0.284496725 : f32
    %756 = vector.broadcast %cst_409 : f32 to vector<64x8xf32>
    %757 = arith.addf %755, %756 : vector<64x8xf32>
    %758 = arith.mulf %757, %747 : vector<64x8xf32>
    %cst_410 = arith.constant 0.254829586 : f32
    %759 = vector.broadcast %cst_410 : f32 to vector<64x8xf32>
    %760 = arith.addf %758, %759 : vector<64x8xf32>
    %761 = arith.mulf %760, %747 : vector<64x8xf32>
    %cst_411 = arith.constant 0.000000e+00 : f32
    %762 = vector.broadcast %cst_411 : f32 to vector<64x8xf32>
    %763 = arith.subf %762, %742 : vector<64x8xf32>
    %764 = arith.mulf %763, %742 : vector<64x8xf32>
    %765 = math.exp %764 : vector<64x8xf32>
    %766 = arith.mulf %761, %765 : vector<64x8xf32>
    %cst_412 = arith.constant 1.000000e+00 : f32
    %767 = vector.broadcast %cst_412 : f32 to vector<64x8xf32>
    %768 = arith.subf %767, %766 : vector<64x8xf32>
    %cst_413 = arith.constant 0.000000e+00 : f32
    %769 = vector.broadcast %cst_413 : f32 to vector<64x8xf32>
    %770 = arith.cmpf oge, %741, %769 : vector<64x8xf32>
    %cst_414 = arith.constant 0.000000e+00 : f32
    %771 = vector.broadcast %cst_414 : f32 to vector<64x8xf32>
    %772 = arith.subf %771, %768 : vector<64x8xf32>
    %773 = arith.select %770, %768, %772 : vector<64x8xi1>, vector<64x8xf32>
    %cst_415 = arith.constant 1.000000e+00 : f32
    %774 = vector.broadcast %cst_415 : f32 to vector<64x8xf32>
    %775 = arith.addf %774, %773 : vector<64x8xf32>
    %776 = arith.mulf %739, %775 : vector<64x8xf32>
    %777 = tpu.iota {dimensions = array<i32: 0>} : vector<64x1xi32>
    %c8_i32_416 = arith.constant 8 : i32
    %c0_i32_417 = arith.constant 0 : i32
    %778 = arith.cmpi eq, %c8_i32_416, %c0_i32_417 : i32
    %c1_i32_418 = arith.constant 1 : i32
    %779 = arith.select %778, %c1_i32_418, %c8_i32_416 : i32
    %780 = vector.broadcast %779 : i32 to vector<64x1xi32>
    %781 = arith.remsi %777, %780 : vector<64x1xi32>
    %c0_i32_419 = arith.constant 0 : i32
    %782 = vector.broadcast %c0_i32_419 : i32 to vector<64x1xi32>
    %783 = arith.cmpi ne, %781, %782 : vector<64x1xi32>
    %c0_i32_420 = arith.constant 0 : i32
    %784 = vector.broadcast %c0_i32_420 : i32 to vector<64x1xi32>
    %785 = arith.cmpi slt, %781, %784 : vector<64x1xi32>
    %c0_i32_421 = arith.constant 0 : i32
    %786 = arith.cmpi slt, %779, %c0_i32_421 : i32
    %787 = vector.broadcast %786 : i1 to vector<64x1xi1>
    %788 = vector.broadcast %787 : vector<64x1xi1> to vector<64x1xi1>
    %789 = arith.xori %785, %788 : vector<64x1xi1>
    %790 = arith.andi %789, %783 : vector<64x1xi1>
    %791 = vector.broadcast %779 : i32 to vector<64x1xi32>
    %792 = arith.addi %781, %791 : vector<64x1xi32>
    %793 = arith.select %790, %792, %781 : vector<64x1xi1>, vector<64x1xi32>
    %c0_i32_422 = arith.constant 0 : i32
    %794 = vector.broadcast %c0_i32_422 : i32 to vector<64x1xi32>
    %795 = arith.cmpi ne, %793, %794 : vector<64x1xi32>
    %796 = arith.extui %795 : vector<64x1xi1> to vector<64x1xi32>
    %797 = arith.sitofp %796 : vector<64x1xi32> to vector<64x1xf32>
    %c7_i32_423 = arith.constant 7 : i32
    %798 = vector.broadcast %c7_i32_423 : i32 to vector<64x1xi32>
    %799 = arith.cmpi ne, %793, %798 : vector<64x1xi32>
    %800 = arith.extui %799 : vector<64x1xi1> to vector<64x1xi32>
    %801 = arith.sitofp %800 : vector<64x1xi32> to vector<64x1xf32>
    %802 = vector.extract_strided_slice %776 {offsets = [0, 0], sizes = [55, 8], strides = [1, 1]} : vector<64x8xf32> to vector<55x8xf32>
    %803 = vector.extract_strided_slice %797 {offsets = [9, 0], sizes = [55, 1], strides = [1, 1]} : vector<64x1xf32> to vector<55x1xf32>
    %804 = vector.broadcast %803 : vector<55x1xf32> to vector<55x8xf32>
    %805 = arith.mulf %802, %804 : vector<55x8xf32>
    %cst_424 = arith.constant 0.000000e+00 : f32
    %806 = vector.broadcast %cst_424 : f32 to vector<9x8xf32>
    %c0_425 = arith.constant 0 : index
    %c0_426 = arith.constant 0 : index
    %807 = vector.load %arg26[%c0_425, %c0_426] : memref<64x72xf32, #tpu.memory_space<vmem>>, vector<9x8xf32>
    tpu.vector_store %arg26[%c0_425, %c0_426], %806 {strides = array<i32>} : memref<64x72xf32, #tpu.memory_space<vmem>>, vector<9x8xf32>,
    %c9_427 = arith.constant 9 : index
    %c0_428 = arith.constant 0 : index
    %808 = vector.load %arg26[%c9_427, %c0_428] : memref<64x72xf32, #tpu.memory_space<vmem>>, vector<55x8xf32>
    tpu.vector_store %arg26[%c9_427, %c0_428], %805 {strides = array<i32>} : memref<64x72xf32, #tpu.memory_space<vmem>>, vector<55x8xf32>,
    %809 = vector.extract_strided_slice %776 {offsets = [0, 0], sizes = [56, 8], strides = [1, 1]} : vector<64x8xf32> to vector<56x8xf32>
    %cst_429 = arith.constant 0.000000e+00 : f32
    %810 = vector.broadcast %cst_429 : f32 to vector<8x8xf32>
    %c0_430 = arith.constant 0 : index
    %c8_431 = arith.constant 8 : index
    %811 = vector.load %arg26[%c0_430, %c8_431] : memref<64x72xf32, #tpu.memory_space<vmem>>, vector<8x8xf32>
    tpu.vector_store %arg26[%c0_430, %c8_431], %810 {strides = array<i32>} : memref<64x72xf32, #tpu.memory_space<vmem>>, vector<8x8xf32>,
    %c8_432 = arith.constant 8 : index
    %c8_433 = arith.constant 8 : index
    %812 = vector.load %arg26[%c8_432, %c8_433] : memref<64x72xf32, #tpu.memory_space<vmem>>, vector<56x8xf32>
    tpu.vector_store %arg26[%c8_432, %c8_433], %809 {strides = array<i32>} : memref<64x72xf32, #tpu.memory_space<vmem>>, vector<56x8xf32>,
    %813 = vector.extract_strided_slice %776 {offsets = [0, 0], sizes = [57, 8], strides = [1, 1]} : vector<64x8xf32> to vector<57x8xf32>
    %814 = vector.extract_strided_slice %801 {offsets = [7, 0], sizes = [57, 1], strides = [1, 1]} : vector<64x1xf32> to vector<57x1xf32>
    %815 = vector.broadcast %814 : vector<57x1xf32> to vector<57x8xf32>
    %816 = arith.mulf %813, %815 : vector<57x8xf32>
    %cst_434 = arith.constant 0.000000e+00 : f32
    %817 = vector.broadcast %cst_434 : f32 to vector<7x8xf32>
    %c0_435 = arith.constant 0 : index
    %c16_436 = arith.constant 16 : index
    %818 = vector.load %arg26[%c0_435, %c16_436] : memref<64x72xf32, #tpu.memory_space<vmem>>, vector<7x8xf32>
    tpu.vector_store %arg26[%c0_435, %c16_436], %817 {strides = array<i32>} : memref<64x72xf32, #tpu.memory_space<vmem>>, vector<7x8xf32>,
    %c7_437 = arith.constant 7 : index
    %c16_438 = arith.constant 16 : index
    %819 = vector.load %arg26[%c7_437, %c16_438] : memref<64x72xf32, #tpu.memory_space<vmem>>, vector<57x8xf32>
    tpu.vector_store %arg26[%c7_437, %c16_438], %816 {strides = array<i32>} : memref<64x72xf32, #tpu.memory_space<vmem>>, vector<57x8xf32>,
    %820 = vector.extract_strided_slice %776 {offsets = [0, 0], sizes = [63, 8], strides = [1, 1]} : vector<64x8xf32> to vector<63x8xf32>
    %821 = vector.extract_strided_slice %797 {offsets = [1, 0], sizes = [63, 1], strides = [1, 1]} : vector<64x1xf32> to vector<63x1xf32>
    %822 = vector.broadcast %821 : vector<63x1xf32> to vector<63x8xf32>
    %823 = arith.mulf %820, %822 : vector<63x8xf32>
    %cst_439 = arith.constant 0.000000e+00 : f32
    %824 = vector.broadcast %cst_439 : f32 to vector<1x8xf32>
    %c0_440 = arith.constant 0 : index
    %c24_441 = arith.constant 24 : index
    %825 = vector.load %arg26[%c0_440, %c24_441] : memref<64x72xf32, #tpu.memory_space<vmem>>, vector<1x8xf32>
    tpu.vector_store %arg26[%c0_440, %c24_441], %824 {strides = array<i32>} : memref<64x72xf32, #tpu.memory_space<vmem>>, vector<1x8xf32>,
    %c1_442 = arith.constant 1 : index
    %c24_443 = arith.constant 24 : index
    %826 = vector.load %arg26[%c1_442, %c24_443] : memref<64x72xf32, #tpu.memory_space<vmem>>, vector<63x8xf32>
    tpu.vector_store %arg26[%c1_442, %c24_443], %823 {strides = array<i32>} : memref<64x72xf32, #tpu.memory_space<vmem>>, vector<63x8xf32>,
    %c0_444 = arith.constant 0 : index
    %c32_445 = arith.constant 32 : index
    %827 = vector.load %arg26[%c0_444, %c32_445] : memref<64x72xf32, #tpu.memory_space<vmem>>, vector<64x8xf32>
    tpu.vector_store %arg26[%c0_444, %c32_445], %776 {strides = array<i32>} : memref<64x72xf32, #tpu.memory_space<vmem>>, vector<64x8xf32>,
    %828 = vector.extract_strided_slice %776 {offsets = [1, 0], sizes = [63, 8], strides = [1, 1]} : vector<64x8xf32> to vector<63x8xf32>
    %829 = vector.extract_strided_slice %801 {offsets = [0, 0], sizes = [63, 1], strides = [1, 1]} : vector<64x1xf32> to vector<63x1xf32>
    %830 = vector.broadcast %829 : vector<63x1xf32> to vector<63x8xf32>
    %831 = arith.mulf %828, %830 : vector<63x8xf32>
    %c0_446 = arith.constant 0 : index
    %c40_447 = arith.constant 40 : index
    %832 = vector.load %arg26[%c0_446, %c40_447] : memref<64x72xf32, #tpu.memory_space<vmem>>, vector<63x8xf32>
    tpu.vector_store %arg26[%c0_446, %c40_447], %831 {strides = array<i32>} : memref<64x72xf32, #tpu.memory_space<vmem>>, vector<63x8xf32>,
    %cst_448 = arith.constant 0.000000e+00 : f32
    %833 = vector.broadcast %cst_448 : f32 to vector<1x8xf32>
    %c63_449 = arith.constant 63 : index
    %c40_450 = arith.constant 40 : index
    %834 = vector.load %arg26[%c63_449, %c40_450] : memref<64x72xf32, #tpu.memory_space<vmem>>, vector<1x8xf32>
    tpu.vector_store %arg26[%c63_449, %c40_450], %833 {strides = array<i32>} : memref<64x72xf32, #tpu.memory_space<vmem>>, vector<1x8xf32>,
    %835 = vector.extract_strided_slice %776 {offsets = [7, 0], sizes = [57, 8], strides = [1, 1]} : vector<64x8xf32> to vector<57x8xf32>
    %836 = vector.extract_strided_slice %797 {offsets = [0, 0], sizes = [57, 1], strides = [1, 1]} : vector<64x1xf32> to vector<57x1xf32>
    %837 = vector.broadcast %836 : vector<57x1xf32> to vector<57x8xf32>
    %838 = arith.mulf %835, %837 : vector<57x8xf32>
    %c0_451 = arith.constant 0 : index
    %c48_452 = arith.constant 48 : index
    %839 = vector.load %arg26[%c0_451, %c48_452] : memref<64x72xf32, #tpu.memory_space<vmem>>, vector<57x8xf32>
    tpu.vector_store %arg26[%c0_451, %c48_452], %838 {strides = array<i32>} : memref<64x72xf32, #tpu.memory_space<vmem>>, vector<57x8xf32>,
    %cst_453 = arith.constant 0.000000e+00 : f32
    %840 = vector.broadcast %cst_453 : f32 to vector<7x8xf32>
    %c57_454 = arith.constant 57 : index
    %c48_455 = arith.constant 48 : index
    %841 = vector.load %arg26[%c57_454, %c48_455] : memref<64x72xf32, #tpu.memory_space<vmem>>, vector<7x8xf32>
    tpu.vector_store %arg26[%c57_454, %c48_455], %840 {strides = array<i32>} : memref<64x72xf32, #tpu.memory_space<vmem>>, vector<7x8xf32>,
    %842 = vector.extract_strided_slice %776 {offsets = [8, 0], sizes = [56, 8], strides = [1, 1]} : vector<64x8xf32> to vector<56x8xf32>
    %c0_456 = arith.constant 0 : index
    %c56_457 = arith.constant 56 : index
    %843 = vector.load %arg26[%c0_456, %c56_457] : memref<64x72xf32, #tpu.memory_space<vmem>>, vector<56x8xf32>
    tpu.vector_store %arg26[%c0_456, %c56_457], %842 {strides = array<i32>} : memref<64x72xf32, #tpu.memory_space<vmem>>, vector<56x8xf32>,
    %cst_458 = arith.constant 0.000000e+00 : f32
    %844 = vector.broadcast %cst_458 : f32 to vector<8x8xf32>
    %c56_459 = arith.constant 56 : index
    %c56_460 = arith.constant 56 : index
    %845 = vector.load %arg26[%c56_459, %c56_460] : memref<64x72xf32, #tpu.memory_space<vmem>>, vector<8x8xf32>
    tpu.vector_store %arg26[%c56_459, %c56_460], %844 {strides = array<i32>} : memref<64x72xf32, #tpu.memory_space<vmem>>, vector<8x8xf32>,
    %846 = vector.extract_strided_slice %776 {offsets = [9, 0], sizes = [55, 8], strides = [1, 1]} : vector<64x8xf32> to vector<55x8xf32>
    %847 = vector.extract_strided_slice %801 {offsets = [0, 0], sizes = [55, 1], strides = [1, 1]} : vector<64x1xf32> to vector<55x1xf32>
    %848 = vector.broadcast %847 : vector<55x1xf32> to vector<55x8xf32>
    %849 = arith.mulf %846, %848 : vector<55x8xf32>
    %c0_461 = arith.constant 0 : index
    %c64_462 = arith.constant 64 : index
    %850 = vector.load %arg26[%c0_461, %c64_462] : memref<64x72xf32, #tpu.memory_space<vmem>>, vector<55x8xf32>
    tpu.vector_store %arg26[%c0_461, %c64_462], %849 {strides = array<i32>} : memref<64x72xf32, #tpu.memory_space<vmem>>, vector<55x8xf32>,
    %cst_463 = arith.constant 0.000000e+00 : f32
    %851 = vector.broadcast %cst_463 : f32 to vector<9x8xf32>
    %c55_464 = arith.constant 55 : index
    %c64_465 = arith.constant 64 : index
    %852 = vector.load %arg26[%c55_464, %c64_465] : memref<64x72xf32, #tpu.memory_space<vmem>>, vector<9x8xf32>
    tpu.vector_store %arg26[%c55_464, %c64_465], %851 {strides = array<i32>} : memref<64x72xf32, #tpu.memory_space<vmem>>, vector<9x8xf32>,
    %c0_466 = arith.constant 0 : index
    %c0_467 = arith.constant 0 : index
    %853 = vector.load %arg26[%c0_466, %c0_467] : memref<64x72xf32, #tpu.memory_space<vmem>>, vector<64x72xf32>
    %854 = arith.truncf %853 : vector<64x72xf32> to vector<64x72xbf16>
    %c0_468 = arith.constant 0 : index
    %c0_469 = arith.constant 0 : index
    %855 = vector.load %arg17[%c0_468, %c0_469] : memref<72x4xbf16, #tpu.memory_space<vmem>>, vector<72x4xbf16>
    %cst_470 = arith.constant dense<0.000000e+00> : vector<64x4xf32>
    %856 = tpu.matmul %854, %855, %cst_470 {dimension_numbers = #tpu.dot_dimension_numbers<[1], [0], [0], [1], [0, 0, 1, 1], [], []>} : vector<64x72xbf16>, vector<72x4xbf16>, vector<64x4xf32> -> vector<64x4xf32>
    %c0_471 = arith.constant 0 : index
    %c0_472 = arith.constant 0 : index
    %857 = vector.load %arg18[%c0_471, %c0_472] : memref<1x4xf32, #tpu.memory_space<vmem>>, vector<1x4xf32>
    %858 = vector.broadcast %857 : vector<1x4xf32> to vector<64x4xf32>
    %859 = arith.mulf %856, %858 : vector<64x4xf32>
    %c0_473 = arith.constant 0 : index
    %c0_474 = arith.constant 0 : index
    %860 = vector.load %arg19[%c0_473, %c0_474] : memref<1x4xf32, #tpu.memory_space<vmem>>, vector<1x4xf32>
    %861 = vector.broadcast %860 : vector<1x4xf32> to vector<64x4xf32>
    %862 = arith.addf %859, %861 : vector<64x4xf32>
    %cst_475 = arith.constant 5.000000e-01 : f32
    %863 = vector.broadcast %cst_475 : f32 to vector<64x4xf32>
    %864 = arith.mulf %863, %862 : vector<64x4xf32>
    %cst_476 = arith.constant 0.707106769 : f32
    %865 = vector.broadcast %cst_476 : f32 to vector<64x4xf32>
    %866 = arith.mulf %862, %865 : vector<64x4xf32>
    %867 = math.absf %866 : vector<64x4xf32>
    %cst_477 = arith.constant 0.327591091 : f32
    %868 = vector.broadcast %cst_477 : f32 to vector<64x4xf32>
    %869 = arith.mulf %868, %867 : vector<64x4xf32>
    %cst_478 = arith.constant 1.000000e+00 : f32
    %870 = vector.broadcast %cst_478 : f32 to vector<64x4xf32>
    %871 = arith.addf %870, %869 : vector<64x4xf32>
    %872 = tpu.reciprocal %871 {approx = true} : vector<64x4xf32> -> vector<64x4xf32>
    %cst_479 = arith.constant 1.06140542 : f32
    %873 = vector.broadcast %cst_479 : f32 to vector<64x4xf32>
    %874 = arith.mulf %873, %872 : vector<64x4xf32>
    %cst_480 = arith.constant -1.45315206 : f32
    %875 = vector.broadcast %cst_480 : f32 to vector<64x4xf32>
    %876 = arith.addf %874, %875 : vector<64x4xf32>
    %877 = arith.mulf %876, %872 : vector<64x4xf32>
    %cst_481 = arith.constant 1.42141378 : f32
    %878 = vector.broadcast %cst_481 : f32 to vector<64x4xf32>
    %879 = arith.addf %877, %878 : vector<64x4xf32>
    %880 = arith.mulf %879, %872 : vector<64x4xf32>
    %cst_482 = arith.constant -0.284496725 : f32
    %881 = vector.broadcast %cst_482 : f32 to vector<64x4xf32>
    %882 = arith.addf %880, %881 : vector<64x4xf32>
    %883 = arith.mulf %882, %872 : vector<64x4xf32>
    %cst_483 = arith.constant 0.254829586 : f32
    %884 = vector.broadcast %cst_483 : f32 to vector<64x4xf32>
    %885 = arith.addf %883, %884 : vector<64x4xf32>
    %886 = arith.mulf %885, %872 : vector<64x4xf32>
    %cst_484 = arith.constant 0.000000e+00 : f32
    %887 = vector.broadcast %cst_484 : f32 to vector<64x4xf32>
    %888 = arith.subf %887, %867 : vector<64x4xf32>
    %889 = arith.mulf %888, %867 : vector<64x4xf32>
    %890 = math.exp %889 : vector<64x4xf32>
    %891 = arith.mulf %886, %890 : vector<64x4xf32>
    %cst_485 = arith.constant 1.000000e+00 : f32
    %892 = vector.broadcast %cst_485 : f32 to vector<64x4xf32>
    %893 = arith.subf %892, %891 : vector<64x4xf32>
    %cst_486 = arith.constant 0.000000e+00 : f32
    %894 = vector.broadcast %cst_486 : f32 to vector<64x4xf32>
    %895 = arith.cmpf oge, %866, %894 : vector<64x4xf32>
    %cst_487 = arith.constant 0.000000e+00 : f32
    %896 = vector.broadcast %cst_487 : f32 to vector<64x4xf32>
    %897 = arith.subf %896, %893 : vector<64x4xf32>
    %898 = arith.select %895, %893, %897 : vector<64x4xi1>, vector<64x4xf32>
    %cst_488 = arith.constant 1.000000e+00 : f32
    %899 = vector.broadcast %cst_488 : f32 to vector<64x4xf32>
    %900 = arith.addf %899, %898 : vector<64x4xf32>
    %901 = arith.mulf %864, %900 : vector<64x4xf32>
    %c0_489 = arith.constant 0 : index
    %c0_490 = arith.constant 0 : index
    %902 = tpu.strided_load %arg30[%c0_489, %c0_490] {strides = array<i32: 2, 1>} : memref<128x4xf32, #tpu.memory_space<vmem>>, vector<64x4xf32>
    tpu.strided_store %arg30[%c0_489, %c0_490], %901 {strides = array<i32: 2, 1>} : memref<128x4xf32, #tpu.memory_space<vmem>>, vector<64x4xf32>
    %c1_491 = arith.constant 1 : index
    %c0_492 = arith.constant 0 : index
    %903 = tpu.strided_load %arg30[%c1_491, %c0_492] {strides = array<i32: 2, 1>} : memref<128x4xf32, #tpu.memory_space<vmem>>, vector<64x4xf32>
    tpu.strided_store %arg30[%c1_491, %c0_492], %901 {strides = array<i32: 2, 1>} : memref<128x4xf32, #tpu.memory_space<vmem>>, vector<64x4xf32>
    %c0_493 = arith.constant 0 : index
    %c0_494 = arith.constant 0 : index
    %904 = vector.load %arg30[%c0_493, %c0_494] : memref<128x4xf32, #tpu.memory_space<vmem>>, vector<16x4xf32>
    %c0_495 = arith.constant 0 : index
    %c0_496 = arith.constant 0 : index
    %c0_497 = arith.constant 0 : index
    %905 = vector.load %arg20[%c0_495, %c0_496, %c0_497] : memref<1x256x4xf32, #tpu.memory_space<vmem>>, vector<1x16x4xf32>
    %906 = vector.shape_cast %905 : vector<1x16x4xf32> to vector<16x4xf32>
    %907 = vector.shape_cast %904 : vector<16x4xf32> to vector<1x16x4xf32>
    tpu.vector_store %arg20[%c0_495, %c0_496, %c0_497], %907 {strides = array<i32>} : memref<1x256x4xf32, #tpu.memory_space<vmem>>, vector<1x16x4xf32>,
    %c0_498 = arith.constant 0 : index
    %c16_499 = arith.constant 16 : index
    %c0_500 = arith.constant 0 : index
    %908 = vector.load %arg20[%c0_498, %c16_499, %c0_500] : memref<1x256x4xf32, #tpu.memory_space<vmem>>, vector<1x16x4xf32>
    %909 = vector.shape_cast %908 : vector<1x16x4xf32> to vector<16x4xf32>
    %910 = vector.shape_cast %904 : vector<16x4xf32> to vector<1x16x4xf32>
    tpu.vector_store %arg20[%c0_498, %c16_499, %c0_500], %910 {strides = array<i32>} : memref<1x256x4xf32, #tpu.memory_space<vmem>>, vector<1x16x4xf32>,
    %c16_501 = arith.constant 16 : index
    %c0_502 = arith.constant 0 : index
    %911 = vector.load %arg30[%c16_501, %c0_502] : memref<128x4xf32, #tpu.memory_space<vmem>>, vector<16x4xf32>
    %c0_503 = arith.constant 0 : index
    %c32_504 = arith.constant 32 : index
    %c0_505 = arith.constant 0 : index
    %912 = vector.load %arg20[%c0_503, %c32_504, %c0_505] : memref<1x256x4xf32, #tpu.memory_space<vmem>>, vector<1x16x4xf32>
    %913 = vector.shape_cast %912 : vector<1x16x4xf32> to vector<16x4xf32>
    %914 = vector.shape_cast %911 : vector<16x4xf32> to vector<1x16x4xf32>
    tpu.vector_store %arg20[%c0_503, %c32_504, %c0_505], %914 {strides = array<i32>} : memref<1x256x4xf32, #tpu.memory_space<vmem>>, vector<1x16x4xf32>,
    %c0_506 = arith.constant 0 : index
    %c48_507 = arith.constant 48 : index
    %c0_508 = arith.constant 0 : index
    %915 = vector.load %arg20[%c0_506, %c48_507, %c0_508] : memref<1x256x4xf32, #tpu.memory_space<vmem>>, vector<1x16x4xf32>
    %916 = vector.shape_cast %915 : vector<1x16x4xf32> to vector<16x4xf32>
    %917 = vector.shape_cast %911 : vector<16x4xf32> to vector<1x16x4xf32>
    tpu.vector_store %arg20[%c0_506, %c48_507, %c0_508], %917 {strides = array<i32>} : memref<1x256x4xf32, #tpu.memory_space<vmem>>, vector<1x16x4xf32>,
    %c32_509 = arith.constant 32 : index
    %c0_510 = arith.constant 0 : index
    %918 = vector.load %arg30[%c32_509, %c0_510] : memref<128x4xf32, #tpu.memory_space<vmem>>, vector<16x4xf32>
    %c0_511 = arith.constant 0 : index
    %c64_512 = arith.constant 64 : index
    %c0_513 = arith.constant 0 : index
    %919 = vector.load %arg20[%c0_511, %c64_512, %c0_513] : memref<1x256x4xf32, #tpu.memory_space<vmem>>, vector<1x16x4xf32>
    %920 = vector.shape_cast %919 : vector<1x16x4xf32> to vector<16x4xf32>
    %921 = vector.shape_cast %918 : vector<16x4xf32> to vector<1x16x4xf32>
    tpu.vector_store %arg20[%c0_511, %c64_512, %c0_513], %921 {strides = array<i32>} : memref<1x256x4xf32, #tpu.memory_space<vmem>>, vector<1x16x4xf32>,
    %c0_514 = arith.constant 0 : index
    %c80_515 = arith.constant 80 : index
    %c0_516 = arith.constant 0 : index
    %922 = vector.load %arg20[%c0_514, %c80_515, %c0_516] : memref<1x256x4xf32, #tpu.memory_space<vmem>>, vector<1x16x4xf32>
    %923 = vector.shape_cast %922 : vector<1x16x4xf32> to vector<16x4xf32>
    %924 = vector.shape_cast %918 : vector<16x4xf32> to vector<1x16x4xf32>
    tpu.vector_store %arg20[%c0_514, %c80_515, %c0_516], %924 {strides = array<i32>} : memref<1x256x4xf32, #tpu.memory_space<vmem>>, vector<1x16x4xf32>,
    %c48_517 = arith.constant 48 : index
    %c0_518 = arith.constant 0 : index
    %925 = vector.load %arg30[%c48_517, %c0_518] : memref<128x4xf32, #tpu.memory_space<vmem>>, vector<16x4xf32>
    %c0_519 = arith.constant 0 : index
    %c96_520 = arith.constant 96 : index
    %c0_521 = arith.constant 0 : index
    %926 = vector.load %arg20[%c0_519, %c96_520, %c0_521] : memref<1x256x4xf32, #tpu.memory_space<vmem>>, vector<1x16x4xf32>
    %927 = vector.shape_cast %926 : vector<1x16x4xf32> to vector<16x4xf32>
    %928 = vector.shape_cast %925 : vector<16x4xf32> to vector<1x16x4xf32>
    tpu.vector_store %arg20[%c0_519, %c96_520, %c0_521], %928 {strides = array<i32>} : memref<1x256x4xf32, #tpu.memory_space<vmem>>, vector<1x16x4xf32>,
    %c0_522 = arith.constant 0 : index
    %c112_523 = arith.constant 112 : index
    %c0_524 = arith.constant 0 : index
    %929 = vector.load %arg20[%c0_522, %c112_523, %c0_524] : memref<1x256x4xf32, #tpu.memory_space<vmem>>, vector<1x16x4xf32>
    %930 = vector.shape_cast %929 : vector<1x16x4xf32> to vector<16x4xf32>
    %931 = vector.shape_cast %925 : vector<16x4xf32> to vector<1x16x4xf32>
    tpu.vector_store %arg20[%c0_522, %c112_523, %c0_524], %931 {strides = array<i32>} : memref<1x256x4xf32, #tpu.memory_space<vmem>>, vector<1x16x4xf32>,
    %c64_525 = arith.constant 64 : index
    %c0_526 = arith.constant 0 : index
    %932 = vector.load %arg30[%c64_525, %c0_526] : memref<128x4xf32, #tpu.memory_space<vmem>>, vector<16x4xf32>
    %c0_527 = arith.constant 0 : index
    %c128_528 = arith.constant 128 : index
    %c0_529 = arith.constant 0 : index
    %933 = vector.load %arg20[%c0_527, %c128_528, %c0_529] : memref<1x256x4xf32, #tpu.memory_space<vmem>>, vector<1x16x4xf32>
    %934 = vector.shape_cast %933 : vector<1x16x4xf32> to vector<16x4xf32>
    %935 = vector.shape_cast %932 : vector<16x4xf32> to vector<1x16x4xf32>
    tpu.vector_store %arg20[%c0_527, %c128_528, %c0_529], %935 {strides = array<i32>} : memref<1x256x4xf32, #tpu.memory_space<vmem>>, vector<1x16x4xf32>,
    %c0_530 = arith.constant 0 : index
    %c144 = arith.constant 144 : index
    %c0_531 = arith.constant 0 : index
    %936 = vector.load %arg20[%c0_530, %c144, %c0_531] : memref<1x256x4xf32, #tpu.memory_space<vmem>>, vector<1x16x4xf32>
    %937 = vector.shape_cast %936 : vector<1x16x4xf32> to vector<16x4xf32>
    %938 = vector.shape_cast %932 : vector<16x4xf32> to vector<1x16x4xf32>
    tpu.vector_store %arg20[%c0_530, %c144, %c0_531], %938 {strides = array<i32>} : memref<1x256x4xf32, #tpu.memory_space<vmem>>, vector<1x16x4xf32>,
    %c80_532 = arith.constant 80 : index
    %c0_533 = arith.constant 0 : index
    %939 = vector.load %arg30[%c80_532, %c0_533] : memref<128x4xf32, #tpu.memory_space<vmem>>, vector<16x4xf32>
    %c0_534 = arith.constant 0 : index
    %c160 = arith.constant 160 : index
    %c0_535 = arith.constant 0 : index
    %940 = vector.load %arg20[%c0_534, %c160, %c0_535] : memref<1x256x4xf32, #tpu.memory_space<vmem>>, vector<1x16x4xf32>
    %941 = vector.shape_cast %940 : vector<1x16x4xf32> to vector<16x4xf32>
    %942 = vector.shape_cast %939 : vector<16x4xf32> to vector<1x16x4xf32>
    tpu.vector_store %arg20[%c0_534, %c160, %c0_535], %942 {strides = array<i32>} : memref<1x256x4xf32, #tpu.memory_space<vmem>>, vector<1x16x4xf32>,
    %c0_536 = arith.constant 0 : index
    %c176 = arith.constant 176 : index
    %c0_537 = arith.constant 0 : index
    %943 = vector.load %arg20[%c0_536, %c176, %c0_537] : memref<1x256x4xf32, #tpu.memory_space<vmem>>, vector<1x16x4xf32>
    %944 = vector.shape_cast %943 : vector<1x16x4xf32> to vector<16x4xf32>
    %945 = vector.shape_cast %939 : vector<16x4xf32> to vector<1x16x4xf32>
    tpu.vector_store %arg20[%c0_536, %c176, %c0_537], %945 {strides = array<i32>} : memref<1x256x4xf32, #tpu.memory_space<vmem>>, vector<1x16x4xf32>,
    %c96_538 = arith.constant 96 : index
    %c0_539 = arith.constant 0 : index
    %946 = vector.load %arg30[%c96_538, %c0_539] : memref<128x4xf32, #tpu.memory_space<vmem>>, vector<16x4xf32>
    %c0_540 = arith.constant 0 : index
    %c192 = arith.constant 192 : index
    %c0_541 = arith.constant 0 : index
    %947 = vector.load %arg20[%c0_540, %c192, %c0_541] : memref<1x256x4xf32, #tpu.memory_space<vmem>>, vector<1x16x4xf32>
    %948 = vector.shape_cast %947 : vector<1x16x4xf32> to vector<16x4xf32>
    %949 = vector.shape_cast %946 : vector<16x4xf32> to vector<1x16x4xf32>
    tpu.vector_store %arg20[%c0_540, %c192, %c0_541], %949 {strides = array<i32>} : memref<1x256x4xf32, #tpu.memory_space<vmem>>, vector<1x16x4xf32>,
    %c0_542 = arith.constant 0 : index
    %c208 = arith.constant 208 : index
    %c0_543 = arith.constant 0 : index
    %950 = vector.load %arg20[%c0_542, %c208, %c0_543] : memref<1x256x4xf32, #tpu.memory_space<vmem>>, vector<1x16x4xf32>
    %951 = vector.shape_cast %950 : vector<1x16x4xf32> to vector<16x4xf32>
    %952 = vector.shape_cast %946 : vector<16x4xf32> to vector<1x16x4xf32>
    tpu.vector_store %arg20[%c0_542, %c208, %c0_543], %952 {strides = array<i32>} : memref<1x256x4xf32, #tpu.memory_space<vmem>>, vector<1x16x4xf32>,
    %c112_544 = arith.constant 112 : index
    %c0_545 = arith.constant 0 : index
    %953 = vector.load %arg30[%c112_544, %c0_545] : memref<128x4xf32, #tpu.memory_space<vmem>>, vector<16x4xf32>
    %c0_546 = arith.constant 0 : index
    %c224 = arith.constant 224 : index
    %c0_547 = arith.constant 0 : index
    %954 = vector.load %arg20[%c0_546, %c224, %c0_547] : memref<1x256x4xf32, #tpu.memory_space<vmem>>, vector<1x16x4xf32>
    %955 = vector.shape_cast %954 : vector<1x16x4xf32> to vector<16x4xf32>
    %956 = vector.shape_cast %953 : vector<16x4xf32> to vector<1x16x4xf32>
    tpu.vector_store %arg20[%c0_546, %c224, %c0_547], %956 {strides = array<i32>} : memref<1x256x4xf32, #tpu.memory_space<vmem>>, vector<1x16x4xf32>,
    %c0_548 = arith.constant 0 : index
    %c240_549 = arith.constant 240 : index
    %c0_550 = arith.constant 0 : index
    %957 = vector.load %arg20[%c0_548, %c240_549, %c0_550] : memref<1x256x4xf32, #tpu.memory_space<vmem>>, vector<1x16x4xf32>
    %958 = vector.shape_cast %957 : vector<1x16x4xf32> to vector<16x4xf32>
    %959 = vector.shape_cast %953 : vector<16x4xf32> to vector<1x16x4xf32>
    tpu.vector_store %arg20[%c0_548, %c240_549, %c0_550], %959 {strides = array<i32>} : memref<1x256x4xf32, #tpu.memory_space<vmem>>, vector<1x16x4xf32>,
    return
  }
  func.func @transform_0(%arg0: i32) -> (i32, i32, i32) {
    %c0_i32 = arith.constant 0 : i32
    %c0_i32_0 = arith.constant 0 : i32
    %c0_i32_1 = arith.constant 0 : i32
    return %arg0, %c0_i32, %c0_i32_0 : i32, i32, i32
  }
  func.func @transform_1(%arg0: i32) -> (i32, i32) {
    %c0_i32 = arith.constant 0 : i32
    %c0_i32_0 = arith.constant 0 : i32
    %c0_i32_1 = arith.constant 0 : i32
    return %c0_i32, %c0_i32_0 : i32, i32
  }
  func.func @transform_2(%arg0: i32) -> (i32, i32) {
    %c0_i32 = arith.constant 0 : i32
    %c0_i32_0 = arith.constant 0 : i32
    %c0_i32_1 = arith.constant 0 : i32
    return %c0_i32, %c0_i32_0 : i32, i32
  }
  func.func @transform_3(%arg0: i32) -> (i32, i32) {
    %c0_i32 = arith.constant 0 : i32
    %c0_i32_0 = arith.constant 0 : i32
    %c0_i32_1 = arith.constant 0 : i32
    return %c0_i32, %c0_i32_0 : i32, i32
  }
  func.func @transform_4(%arg0: i32) -> (i32, i32) {
    %c0_i32 = arith.constant 0 : i32
    %c0_i32_0 = arith.constant 0 : i32
    %c0_i32_1 = arith.constant 0 : i32
    return %c0_i32, %c0_i32_0 : i32, i32
  }
  func.func @transform_5(%arg0: i32) -> (i32, i32) {
    %c0_i32 = arith.constant 0 : i32
    %c0_i32_0 = arith.constant 0 : i32
    %c0_i32_1 = arith.constant 0 : i32
    return %c0_i32, %c0_i32_0 : i32, i32
  }
  func.func @transform_6(%arg0: i32) -> (i32, i32) {
    %c0_i32 = arith.constant 0 : i32
    %c0_i32_0 = arith.constant 0 : i32
    %c0_i32_1 = arith.constant 0 : i32
    return %c0_i32, %c0_i32_0 : i32, i32
  }
  func.func @transform_7(%arg0: i32) -> (i32, i32) {
    %c0_i32 = arith.constant 0 : i32
    %c0_i32_0 = arith.constant 0 : i32
    %c0_i32_1 = arith.constant 0 : i32
    return %c0_i32, %c0_i32_0 : i32, i32
  }
  func.func @transform_8(%arg0: i32) -> (i32, i32) {
    %c0_i32 = arith.constant 0 : i32
    %c0_i32_0 = arith.constant 0 : i32
    %c0_i32_1 = arith.constant 0 : i32
    return %c0_i32, %c0_i32_0 : i32, i32
  }
  func.func @transform_9(%arg0: i32) -> (i32, i32) {
    %c0_i32 = arith.constant 0 : i32
    %c0_i32_0 = arith.constant 0 : i32
    %c0_i32_1 = arith.constant 0 : i32
    return %c0_i32, %c0_i32_0 : i32, i32
  }
  func.func @transform_10(%arg0: i32) -> (i32, i32) {
    %c0_i32 = arith.constant 0 : i32
    %c0_i32_0 = arith.constant 0 : i32
    %c0_i32_1 = arith.constant 0 : i32
    return %c0_i32, %c0_i32_0 : i32, i32
  }
  func.func @transform_11(%arg0: i32) -> (i32, i32) {
    %c0_i32 = arith.constant 0 : i32
    %c0_i32_0 = arith.constant 0 : i32
    %c0_i32_1 = arith.constant 0 : i32
    return %c0_i32, %c0_i32_0 : i32, i32
  }
  func.func @transform_12(%arg0: i32) -> (i32, i32) {
    %c0_i32 = arith.constant 0 : i32
    %c0_i32_0 = arith.constant 0 : i32
    %c0_i32_1 = arith.constant 0 : i32
    return %c0_i32, %c0_i32_0 : i32, i32
  }
  func.func @transform_13(%arg0: i32) -> (i32, i32) {
    %c0_i32 = arith.constant 0 : i32
    %c0_i32_0 = arith.constant 0 : i32
    %c0_i32_1 = arith.constant 0 : i32
    return %c0_i32, %c0_i32_0 : i32, i32
  }
  func.func @transform_14(%arg0: i32) -> (i32, i32) {
    %c0_i32 = arith.constant 0 : i32
    %c0_i32_0 = arith.constant 0 : i32
    %c0_i32_1 = arith.constant 0 : i32
    return %c0_i32, %c0_i32_0 : i32, i32
  }
  func.func @transform_15(%arg0: i32) -> (i32, i32) {
    %c0_i32 = arith.constant 0 : i32
    %c0_i32_0 = arith.constant 0 : i32
    %c0_i32_1 = arith.constant 0 : i32
    return %c0_i32, %c0_i32_0 : i32, i32
  }
  func.func @transform_16(%arg0: i32) -> (i32, i32) {
    %c0_i32 = arith.constant 0 : i32
    %c0_i32_0 = arith.constant 0 : i32
    %c0_i32_1 = arith.constant 0 : i32
    return %c0_i32, %c0_i32_0 : i32, i32
  }
  func.func @transform_17(%arg0: i32) -> (i32, i32) {
    %c0_i32 = arith.constant 0 : i32
    %c0_i32_0 = arith.constant 0 : i32
    %c0_i32_1 = arith.constant 0 : i32
    return %c0_i32, %c0_i32_0 : i32, i32
  }
  func.func @transform_18(%arg0: i32) -> (i32, i32) {
    %c0_i32 = arith.constant 0 : i32
    %c0_i32_0 = arith.constant 0 : i32
    %c0_i32_1 = arith.constant 0 : i32
    return %c0_i32, %c0_i32_0 : i32, i32
  }
  func.func @transform_19(%arg0: i32) -> (i32, i32, i32) {
    %c0_i32 = arith.constant 0 : i32
    %c0_i32_0 = arith.constant 0 : i32
    %c0_i32_1 = arith.constant 0 : i32
    return %arg0, %c0_i32, %c0_i32_0 : i32, i32, i32
  }
}

</mosaic_0001>

<llo_original>
// kernel: hourglass_forward.1
$region0: #{hourglass_forward.1}
  #allocation0 [shape = 'u32[]', space=smem, size = 0x4, offset = 0x4, fixed_abs, tag = 'smem constant byte address 0x4 - core index']
  #allocation1 [shape = 'u32[72,128]{1,0:T(1,128)}', space=vmem, size = 0x9000, scoped, tag = 'internal scratch']
  #allocation2 [shape = 'f32[256,36]{1,0:T(8,128)}', space=vmem, size = 0x20000, scoped, tag = 'scratch operand']
  #allocation3 [shape = 'f32[64,72]{1,0:T(8,128)}', space=vmem, size = 0x8000, scoped, tag = 'scratch operand']
  #allocation4 [shape = 'f32[16,144]{1,0:T(8,128)}', space=vmem, size = 0x4000, scoped, tag = 'scratch operand']
  #allocation5 [shape = 'f32[16,144]{1,0:T(8,128)}', space=vmem, size = 0x4000, scoped, tag = 'scratch operand']
  #allocation6 [shape = 'f32[16,144]{1,0:T(8,128)}', space=vmem, size = 0x4000, scoped, tag = 'scratch operand']
  #allocation7 [shape = 'f32[64,72]{1,0:T(8,128)}', space=vmem, size = 0x8000, scoped, tag = 'scratch operand']
  #allocation8 [shape = 'f32[128,8]{1,0:T(8,128)}', space=vmem, size = 0x10000, scoped, tag = 'scratch operand']
  #allocation9 [shape = 'f32[32,16]{1,0:T(8,128)}', space=vmem, size = 0x4000, scoped, tag = 'scratch operand']
  #allocation10 [shape = 'f32[32,8]{1,0:T(8,128)}', space=vmem, size = 0x4000, scoped, tag = 'scratch operand']
  #allocation11 [shape = 'f32[128,4]{1,0:T(8,128)}', space=vmem, size = 0x10000, scoped, tag = 'scratch operand']
  #allocation12 [shape = 'f32[64,8]{1,0:T(8,128)}', space=vmem, size = 0x8000, scoped, tag = 'scratch operand']
  %s0 = inlined_call_operand.vmem [shape: f32[2,256,4], index: 0, kind: input, shape index: {}]
  %s1 = inlined_call_operand.vmem [shape: bf16[36,8], index: 1, kind: input, shape index: {}]
  %s2 = inlined_call_operand.vmem [shape: f32[1,8], index: 2, kind: input, shape index: {}]
  %s3 = inlined_call_operand.vmem [shape: f32[1,8], index: 3, kind: input, shape index: {}]
  %s4 = inlined_call_operand.vmem [shape: bf16[72,16], index: 4, kind: input, shape index: {}]
  %s5 = inlined_call_operand.vmem [shape: f32[1,16], index: 5, kind: input, shape index: {}]
  %s6 = inlined_call_operand.vmem [shape: f32[1,16], index: 6, kind: input, shape index: {}]
  %s7 = inlined_call_operand.vmem [shape: bf16[144,16], index: 7, kind: input, shape index: {}]
  %s8 = inlined_call_operand.vmem [shape: f32[1,16], index: 8, kind: input, shape index: {}]
  %s9 = inlined_call_operand.vmem [shape: f32[1,16], index: 9, kind: input, shape index: {}]
  %s10 = inlined_call_operand.vmem [shape: bf16[144,16], index: 10, kind: input, shape index: {}]
  %s11 = inlined_call_operand.vmem [shape: f32[1,16], index: 11, kind: input, shape index: {}]
  %s12 = inlined_call_operand.vmem [shape: f32[1,16], index: 12, kind: input, shape index: {}]
  %s13 = inlined_call_operand.vmem [shape: bf16[144,8], index: 13, kind: input, shape index: {}]
  %s14 = inlined_call_operand.vmem [shape: f32[1,8], index: 14, kind: input, shape index: {}]
  %s15 = inlined_call_operand.vmem [shape: f32[1,8], index: 15, kind: input, shape index: {}]
  %s16 = inlined_call_operand.vmem [shape: bf16[72,4], index: 16, kind: input, shape index: {}]
  %s17 = inlined_call_operand.vmem [shape: f32[1,4], index: 17, kind: input, shape index: {}]
  %s18 = inlined_call_operand.vmem [shape: f32[1,4], index: 18, kind: input, shape index: {}]
  %s19 = inlined_call_operand.vmem [shape: f32[2,256,4], index: 19, kind: output, shape index: {}]
  %s20 = sld [smem:[#allocation0]]
  $region109: #{hourglass_forward.1} parent=0
    _
  %s22 = ssub.s32 1, %s20
  %s23 = scalar_select 0, %s22, %s20
  loop: start=0, step=1, limit=4
  $region2: #{hourglass_forward.1} parent=0 // loop_pre_header
    _
  $region3: #{hourglass_forward.1} parent=0 // loop_header
    %s25 = sphi 0, %s29
    %p26 = scmp.ge.s32.totalorder %s25, 4
    %s35 = sphi 0, %s37
    %s38 = sphi 0, %s35
    %s39 = sphi 0, %s38
    %s55 = sphi 0, %s39
    %s59 = sphi 0, %s59
    %s61 = sphi 0, %s59
    %s62 = sphi 0, %s61
    %s76 = sphi 0, %s62
    %s80 = sphi 0, %s80
    %s82 = sphi 0, %s80
    %s83 = sphi 0, %s82
    %s97 = sphi 0, %s83
    %s101 = sphi 0, %s101
    %s103 = sphi 0, %s101
    %s104 = sphi 0, %s103
    %s118 = sphi 0, %s104
    %s122 = sphi 0, %s122
    %s124 = sphi 0, %s122
    %s125 = sphi 0, %s124
    %s139 = sphi 0, %s125
    %s143 = sphi 0, %s143
    %s145 = sphi 0, %s143
    %s146 = sphi 0, %s145
    %s160 = sphi 0, %s146
    %s164 = sphi 0, %s164
    %s166 = sphi 0, %s164
    %s167 = sphi 0, %s166
    %s181 = sphi 0, %s167
    %s185 = sphi 0, %s185
    %s187 = sphi 0, %s185
    %s188 = sphi 0, %s187
    %s202 = sphi 0, %s188
    %s206 = sphi 0, %s206
    %s208 = sphi 0, %s206
    %s209 = sphi 0, %s208
    %s223 = sphi 0, %s209
    %s227 = sphi 0, %s227
    %s229 = sphi 0, %s227
    %s230 = sphi 0, %s229
    %s244 = sphi 0, %s230
    %s248 = sphi 0, %s248
    %s250 = sphi 0, %s248
    %s251 = sphi 0, %s250
    %s265 = sphi 0, %s251
    %s269 = sphi 0, %s269
    %s271 = sphi 0, %s269
    %s272 = sphi 0, %s271
    %s286 = sphi 0, %s272
    %s290 = sphi 0, %s290
    %s292 = sphi 0, %s290
    %s293 = sphi 0, %s292
    %s307 = sphi 0, %s293
    %s311 = sphi 0, %s311
    %s313 = sphi 0, %s311
    %s314 = sphi 0, %s313
    %s328 = sphi 0, %s314
    %s332 = sphi 0, %s332
    %s334 = sphi 0, %s332
    %s335 = sphi 0, %s334
    %s349 = sphi 0, %s335
    %s353 = sphi 0, %s353
    %s355 = sphi 0, %s353
    %s356 = sphi 0, %s355
    %s370 = sphi 0, %s356
    %s374 = sphi 0, %s374
    %s376 = sphi 0, %s374
    %s377 = sphi 0, %s376
    %s391 = sphi 0, %s377
    %s395 = sphi 0, %s395
    %s397 = sphi 0, %s395
    %s398 = sphi 0, %s397
    %s412 = sphi 0, %s398
    %s416 = sphi 0, %s416
    %s418 = sphi 0, %s416
    %s419 = sphi 0, %s418
    %s433 = sphi 0, %s419
    %s439 = sphi 0, %s441
    %s442 = sphi 0, %s439
    %s443 = sphi 0, %s442
    %s459 = sphi 0, %s443
  $region4: #{hourglass_forward.1} parent=0 // loop_header_branch
    %28 = sbr.rel (%p26) target = $region8
  $region5: #{hourglass_forward.1} parent=0 // loop_body
    %s30 = ssub.s32 %s25, 1
    %s31 = ssub.s32 %s25, 2
    %s32 = sadd.s32 %s25, 1
    %s33 = ssub.s32 %s25, %s32
    %p34 = scmp.eq.s32.totalorder %s33, 0
    %s36 = sadd.s32 %s35, 1
    %s37 = scalar_select %p34, %s35, %s36
    %p40 = pneg %p34
    %p41 = scmp.eq.s32.totalorder %s25, 1
    %p42 = por %p40, %p41
    %p43 = scmp.ne.s32.totalorder %s35, %s38
    %p44 = scmp.eq.s32.totalorder %s25, 0
    %p45 = por %p43, %p44
    %p46 = scmp.ne.s32.totalorder %s35, %s38
    %p47 = scmp.eq.s32.totalorder %s30, 1
    %p48 = por %p46, %p47
    %p49 = scmp.ne.s32.totalorder %s38, %s39
    %p50 = scmp.eq.s32.totalorder %s30, 0
    %p51 = por %p49, %p50
    %p52 = scmp.ne.s32.totalorder %s38, %s39
    %p53 = scmp.eq.s32.totalorder %s31, 1
    %p54 = por %p52, %p53
    %p56 = scmp.ne.s32.totalorder %s39, %s55
    %p57 = scmp.eq.s32.totalorder %s31, 0
    %p58 = por %p56, %p57
    %s60 = sadd.s32 %s59, 1
    %p63 = scmp.eq.s32.totalorder %s25, 1
    %p64 = scmp.ne.s32.totalorder %s59, %s61
    %p65 = scmp.eq.s32.totalorder %s25, 0
    %p66 = por %p64, %p65
    %p67 = scmp.ne.s32.totalorder %s59, %s61
    %p68 = scmp.eq.s32.totalorder %s30, 1
    %p69 = por %p67, %p68
    %p70 = scmp.ne.s32.totalorder %s61, %s62
    %p71 = scmp.eq.s32.totalorder %s30, 0
    %p72 = por %p70, %p71
    %p73 = scmp.ne.s32.totalorder %s61, %s62
    %p74 = scmp.eq.s32.totalorder %s31, 1
    %p75 = por %p73, %p74
    %p77 = scmp.ne.s32.totalorder %s62, %s76
    %p78 = scmp.eq.s32.totalorder %s31, 0
    %p79 = por %p77, %p78
    %s81 = sadd.s32 %s80, 1
    %p84 = scmp.eq.s32.totalorder %s25, 1
    %p85 = scmp.ne.s32.totalorder %s80, %s82
    %p86 = scmp.eq.s32.totalorder %s25, 0
    %p87 = por %p85, %p86
    %p88 = scmp.ne.s32.totalorder %s80, %s82
    %p89 = scmp.eq.s32.totalorder %s30, 1
    %p90 = por %p88, %p89
    %p91 = scmp.ne.s32.totalorder %s82, %s83
    %p92 = scmp.eq.s32.totalorder %s30, 0
    %p93 = por %p91, %p92
    %p94 = scmp.ne.s32.totalorder %s82, %s83
    %p95 = scmp.eq.s32.totalorder %s31, 1
    %p96 = por %p94, %p95
    %p98 = scmp.ne.s32.totalorder %s83, %s97
    %p99 = scmp.eq.s32.totalorder %s31, 0
    %p100 = por %p98, %p99
    %s102 = sadd.s32 %s101, 1
    %p105 = scmp.eq.s32.totalorder %s25, 1
    %p106 = scmp.ne.s32.totalorder %s101, %s103
    %p107 = scmp.eq.s32.totalorder %s25, 0
    %p108 = por %p106, %p107
    %p109 = scmp.ne.s32.totalorder %s101, %s103
    %p110 = scmp.eq.s32.totalorder %s30, 1
    %p111 = por %p109, %p110
    %p112 = scmp.ne.s32.totalorder %s103, %s104
    %p113 = scmp.eq.s32.totalorder %s30, 0
    %p114 = por %p112, %p113
    %p115 = scmp.ne.s32.totalorder %s103, %s104
    %p116 = scmp.eq.s32.totalorder %s31, 1
    %p117 = por %p115, %p116
    %p119 = scmp.ne.s32.totalorder %s104, %s118
    %p120 = scmp.eq.s32.totalorder %s31, 0
    %p121 = por %p119, %p120
    %s123 = sadd.s32 %s122, 1
    %p126 = scmp.eq.s32.totalorder %s25, 1
    %p127 = scmp.ne.s32.totalorder %s122, %s124
    %p128 = scmp.eq.s32.totalorder %s25, 0
    %p129 = por %p127, %p128
    %p130 = scmp.ne.s32.totalorder %s122, %s124
    %p131 = scmp.eq.s32.totalorder %s30, 1
    %p132 = por %p130, %p131
    %p133 = scmp.ne.s32.totalorder %s124, %s125
    %p134 = scmp.eq.s32.totalorder %s30, 0
    %p135 = por %p133, %p134
    %p136 = scmp.ne.s32.totalorder %s124, %s125
    %p137 = scmp.eq.s32.totalorder %s31, 1
    %p138 = por %p136, %p137
    %p140 = scmp.ne.s32.totalorder %s125, %s139
    %p141 = scmp.eq.s32.totalorder %s31, 0
    %p142 = por %p140, %p141
    %s144 = sadd.s32 %s143, 1
    %p147 = scmp.eq.s32.totalorder %s25, 1
    %p148 = scmp.ne.s32.totalorder %s143, %s145
    %p149 = scmp.eq.s32.totalorder %s25, 0
    %p150 = por %p148, %p149
    %p151 = scmp.ne.s32.totalorder %s143, %s145
    %p152 = scmp.eq.s32.totalorder %s30, 1
    %p153 = por %p151, %p152
    %p154 = scmp.ne.s32.totalorder %s145, %s146
    %p155 = scmp.eq.s32.totalorder %s30, 0
    %p156 = por %p154, %p155
    %p157 = scmp.ne.s32.totalorder %s145, %s146
    %p158 = scmp.eq.s32.totalorder %s31, 1
    %p159 = por %p157, %p158
    %p161 = scmp.ne.s32.totalorder %s146, %s160
    %p162 = scmp.eq.s32.totalorder %s31, 0
    %p163 = por %p161, %p162
    %s165 = sadd.s32 %s164, 1
    %p168 = scmp.eq.s32.totalorder %s25, 1
    %p169 = scmp.ne.s32.totalorder %s164, %s166
    %p170 = scmp.eq.s32.totalorder %s25, 0
    %p171 = por %p169, %p170
    %p172 = scmp.ne.s32.totalorder %s164, %s166
    %p173 = scmp.eq.s32.totalorder %s30, 1
    %p174 = por %p172, %p173
    %p175 = scmp.ne.s32.totalorder %s166, %s167
    %p176 = scmp.eq.s32.totalorder %s30, 0
    %p177 = por %p175, %p176
    %p178 = scmp.ne.s32.totalorder %s166, %s167
    %p179 = scmp.eq.s32.totalorder %s31, 1
    %p180 = por %p178, %p179
    %p182 = scmp.ne.s32.totalorder %s167, %s181
    %p183 = scmp.eq.s32.totalorder %s31, 0
    %p184 = por %p182, %p183
    %s186 = sadd.s32 %s185, 1
    %p189 = scmp.eq.s32.totalorder %s25, 1
    %p190 = scmp.ne.s32.totalorder %s185, %s187
    %p191 = scmp.eq.s32.totalorder %s25, 0
    %p192 = por %p190, %p191
    %p193 = scmp.ne.s32.totalorder %s185, %s187
    %p194 = scmp.eq.s32.totalorder %s30, 1
    %p195 = por %p193, %p194
    %p196 = scmp.ne.s32.totalorder %s187, %s188
    %p197 = scmp.eq.s32.totalorder %s30, 0
    %p198 = por %p196, %p197
    %p199 = scmp.ne.s32.totalorder %s187, %s188
    %p200 = scmp.eq.s32.totalorder %s31, 1
    %p201 = por %p199, %p200
    %p203 = scmp.ne.s32.totalorder %s188, %s202
    %p204 = scmp.eq.s32.totalorder %s31, 0
    %p205 = por %p203, %p204
    %s207 = sadd.s32 %s206, 1
    %p210 = scmp.eq.s32.totalorder %s25, 1
    %p211 = scmp.ne.s32.totalorder %s206, %s208
    %p212 = scmp.eq.s32.totalorder %s25, 0
    %p213 = por %p211, %p212
    %p214 = scmp.ne.s32.totalorder %s206, %s208
    %p215 = scmp.eq.s32.totalorder %s30, 1
    %p216 = por %p214, %p215
    %p217 = scmp.ne.s32.totalorder %s208, %s209
    %p218 = scmp.eq.s32.totalorder %s30, 0
    %p219 = por %p217, %p218
    %p220 = scmp.ne.s32.totalorder %s208, %s209
    %p221 = scmp.eq.s32.totalorder %s31, 1
    %p222 = por %p220, %p221
    %p224 = scmp.ne.s32.totalorder %s209, %s223
    %p225 = scmp.eq.s32.totalorder %s31, 0
    %p226 = por %p224, %p225
    %s228 = sadd.s32 %s227, 1
    %p231 = scmp.eq.s32.totalorder %s25, 1
    %p232 = scmp.ne.s32.totalorder %s227, %s229
    %p233 = scmp.eq.s32.totalorder %s25, 0
    %p234 = por %p232, %p233
    %p235 = scmp.ne.s32.totalorder %s227, %s229
    %p236 = scmp.eq.s32.totalorder %s30, 1
    %p237 = por %p235, %p236
    %p238 = scmp.ne.s32.totalorder %s229, %s230
    %p239 = scmp.eq.s32.totalorder %s30, 0
    %p240 = por %p238, %p239
    %p241 = scmp.ne.s32.totalorder %s229, %s230
    %p242 = scmp.eq.s32.totalorder %s31, 1
    %p243 = por %p241, %p242
    %p245 = scmp.ne.s32.totalorder %s230, %s244
    %p246 = scmp.eq.s32.totalorder %s31, 0
    %p247 = por %p245, %p246
    %s249 = sadd.s32 %s248, 1
    %p252 = scmp.eq.s32.totalorder %s25, 1
    %p253 = scmp.ne.s32.totalorder %s248, %s250
    %p254 = scmp.eq.s32.totalorder %s25, 0
    %p255 = por %p253, %p254
    %p256 = scmp.ne.s32.totalorder %s248, %s250
    %p257 = scmp.eq.s32.totalorder %s30, 1
    %p258 = por %p256, %p257
    %p259 = scmp.ne.s32.totalorder %s250, %s251
    %p260 = scmp.eq.s32.totalorder %s30, 0
    %p261 = por %p259, %p260
    %p262 = scmp.ne.s32.totalorder %s250, %s251
    %p263 = scmp.eq.s32.totalorder %s31, 1
    %p264 = por %p262, %p263
    %p266 = scmp.ne.s32.totalorder %s251, %s265
    %p267 = scmp.eq.s32.totalorder %s31, 0
    %p268 = por %p266, %p267
    %s270 = sadd.s32 %s269, 1
    %p273 = scmp.eq.s32.totalorder %s25, 1
    %p274 = scmp.ne.s32.totalorder %s269, %s271
    %p275 = scmp.eq.s32.totalorder %s25, 0
    %p276 = por %p274, %p275
    %p277 = scmp.ne.s32.totalorder %s269, %s271
    %p278 = scmp.eq.s32.totalorder %s30, 1
    %p279 = por %p277, %p278
    %p280 = scmp.ne.s32.totalorder %s271, %s272
    %p281 = scmp.eq.s32.totalorder %s30, 0
    %p282 = por %p280, %p281
    %p283 = scmp.ne.s32.totalorder %s271, %s272
    %p284 = scmp.eq.s32.totalorder %s31, 1
    %p285 = por %p283, %p284
    %p287 = scmp.ne.s32.totalorder %s272, %s286
    %p288 = scmp.eq.s32.totalorder %s31, 0
    %p289 = por %p287, %p288
    %s291 = sadd.s32 %s290, 1
    %p294 = scmp.eq.s32.totalorder %s25, 1
    %p295 = scmp.ne.s32.totalorder %s290, %s292
    %p296 = scmp.eq.s32.totalorder %s25, 0
    %p297 = por %p295, %p296
    %p298 = scmp.ne.s32.totalorder %s290, %s292
    %p299 = scmp.eq.s32.totalorder %s30, 1
    %p300 = por %p298, %p299
    %p301 = scmp.ne.s32.totalorder %s292, %s293
    %p302 = scmp.eq.s32.totalorder %s30, 0
    %p303 = por %p301, %p302
    %p304 = scmp.ne.s32.totalorder %s292, %s293
    %p305 = scmp.eq.s32.totalorder %s31, 1
    %p306 = por %p304, %p305
    %p308 = scmp.ne.s32.totalorder %s293, %s307
    %p309 = scmp.eq.s32.totalorder %s31, 0
    %p310 = por %p308, %p309
    %s312 = sadd.s32 %s311, 1
    %p315 = scmp.eq.s32.totalorder %s25, 1
    %p316 = scmp.ne.s32.totalorder %s311, %s313
    %p317 = scmp.eq.s32.totalorder %s25, 0
    %p318 = por %p316, %p317
    %p319 = scmp.ne.s32.totalorder %s311, %s313
    %p320 = scmp.eq.s32.totalorder %s30, 1
    %p321 = por %p319, %p320
    %p322 = scmp.ne.s32.totalorder %s313, %s314
    %p323 = scmp.eq.s32.totalorder %s30, 0
    %p324 = por %p322, %p323
    %p325 = scmp.ne.s32.totalorder %s313, %s314
    %p326 = scmp.eq.s32.totalorder %s31, 1
    %p327 = por %p325, %p326
    %p329 = scmp.ne.s32.totalorder %s314, %s328
    %p330 = scmp.eq.s32.totalorder %s31, 0
    %p331 = por %p329, %p330
    %s333 = sadd.s32 %s332, 1
    %p336 = scmp.eq.s32.totalorder %s25, 1
    %p337 = scmp.ne.s32.totalorder %s332, %s334
    %p338 = scmp.eq.s32.totalorder %s25, 0
    %p339 = por %p337, %p338
    %p340 = scmp.ne.s32.totalorder %s332, %s334
    %p341 = scmp.eq.s32.totalorder %s30, 1
    %p342 = por %p340, %p341
    %p343 = scmp.ne.s32.totalorder %s334, %s335
    %p344 = scmp.eq.s32.totalorder %s30, 0
    %p345 = por %p343, %p344
    %p346 = scmp.ne.s32.totalorder %s334, %s335
    %p347 = scmp.eq.s32.totalorder %s31, 1
    %p348 = por %p346, %p347
    %p350 = scmp.ne.s32.totalorder %s335, %s349
    %p351 = scmp.eq.s32.totalorder %s31, 0
    %p352 = por %p350, %p351
    %s354 = sadd.s32 %s353, 1
    %p357 = scmp.eq.s32.totalorder %s25, 1
    %p358 = scmp.ne.s32.totalorder %s353, %s355
    %p359 = scmp.eq.s32.totalorder %s25, 0
    %p360 = por %p358, %p359
    %p361 = scmp.ne.s32.totalorder %s353, %s355
    %p362 = scmp.eq.s32.totalorder %s30, 1
    %p363 = por %p361, %p362
    %p364 = scmp.ne.s32.totalorder %s355, %s356
    %p365 = scmp.eq.s32.totalorder %s30, 0
    %p366 = por %p364, %p365
    %p367 = scmp.ne.s32.totalorder %s355, %s356
    %p368 = scmp.eq.s32.totalorder %s31, 1
    %p369 = por %p367, %p368
    %p371 = scmp.ne.s32.totalorder %s356, %s370
    %p372 = scmp.eq.s32.totalorder %s31, 0
    %p373 = por %p371, %p372
    %s375 = sadd.s32 %s374, 1
    %p378 = scmp.eq.s32.totalorder %s25, 1
    %p379 = scmp.ne.s32.totalorder %s374, %s376
    %p380 = scmp.eq.s32.totalorder %s25, 0
    %p381 = por %p379, %p380
    %p382 = scmp.ne.s32.totalorder %s374, %s376
    %p383 = scmp.eq.s32.totalorder %s30, 1
    %p384 = por %p382, %p383
    %p385 = scmp.ne.s32.totalorder %s376, %s377
    %p386 = scmp.eq.s32.totalorder %s30, 0
    %p387 = por %p385, %p386
    %p388 = scmp.ne.s32.totalorder %s376, %s377
    %p389 = scmp.eq.s32.totalorder %s31, 1
    %p390 = por %p388, %p389
    %p392 = scmp.ne.s32.totalorder %s377, %s391
    %p393 = scmp.eq.s32.totalorder %s31, 0
    %p394 = por %p392, %p393
    %s396 = sadd.s32 %s395, 1
    %p399 = scmp.eq.s32.totalorder %s25, 1
    %p400 = scmp.ne.s32.totalorder %s395, %s397
    %p401 = scmp.eq.s32.totalorder %s25, 0
    %p402 = por %p400, %p401
    %p403 = scmp.ne.s32.totalorder %s395, %s397
    %p404 = scmp.eq.s32.totalorder %s30, 1
    %p405 = por %p403, %p404
    %p406 = scmp.ne.s32.totalorder %s397, %s398
    %p407 = scmp.eq.s32.totalorder %s30, 0
    %p408 = por %p406, %p407
    %p409 = scmp.ne.s32.totalorder %s397, %s398
    %p410 = scmp.eq.s32.totalorder %s31, 1
    %p411 = por %p409, %p410
    %p413 = scmp.ne.s32.totalorder %s398, %s412
    %p414 = scmp.eq.s32.totalorder %s31, 0
    %p415 = por %p413, %p414
    %s417 = sadd.s32 %s416, 1
    %p420 = scmp.eq.s32.totalorder %s25, 1
    %p421 = scmp.ne.s32.totalorder %s416, %s418
    %p422 = scmp.eq.s32.totalorder %s25, 0
    %p423 = por %p421, %p422
    %p424 = scmp.ne.s32.totalorder %s416, %s418
    %p425 = scmp.eq.s32.totalorder %s30, 1
    %p426 = por %p424, %p425
    %p427 = scmp.ne.s32.totalorder %s418, %s419
    %p428 = scmp.eq.s32.totalorder %s30, 0
    %p429 = por %p427, %p428
    %p430 = scmp.ne.s32.totalorder %s418, %s419
    %p431 = scmp.eq.s32.totalorder %s31, 1
    %p432 = por %p430, %p431
    %p434 = scmp.ne.s32.totalorder %s419, %s433
    %p435 = scmp.eq.s32.totalorder %s31, 0
    %p436 = por %p434, %p435
    %s437 = ssub.s32 %s25, %s32
    %p438 = scmp.eq.s32.totalorder %s437, 0
    %s440 = sadd.s32 %s439, 1
    %s441 = scalar_select %p438, %s439, %s440
    %p444 = pneg %p438
    %p445 = scmp.eq.s32.totalorder %s25, 1
    %p446 = por %p444, %p445
    %p447 = scmp.ne.s32.totalorder %s439, %s442
    %p448 = scmp.eq.s32.totalorder %s25, 0
    %p449 = por %p447, %p448
    %p450 = scmp.ne.s32.totalorder %s439, %s442
    %p451 = scmp.eq.s32.totalorder %s30, 1
    %p452 = por %p450, %p451
    %p453 = scmp.ne.s32.totalorder %s442, %s443
    %p454 = scmp.eq.s32.totalorder %s30, 0
    %p455 = por %p453, %p454
    %p456 = scmp.ne.s32.totalorder %s442, %s443
    %p457 = scmp.eq.s32.totalorder %s31, 1
    %p458 = por %p456, %p457
    %p460 = scmp.ne.s32.totalorder %s443, %s459
    %p461 = scmp.eq.s32.totalorder %s31, 0
    %p462 = por %p460, %p461
    %p463 = scmp.le.s32.totalorder 1, %s25
    %p464 = scmp.lt.s32.totalorder %s25, 3
    %p465 = pnand %p463, %p464
    %p466 = pneg %p465
    // Predicated region
    $region9: #{hourglass_forward.1} parent=5 // pred_check
      _
    $region10: #{hourglass_forward.1} parent=5 // pred_check_branch
      %468 = sbr.rel (%p465) target = $region12
    $region11: #{hourglass_forward.1} parent=5 // pred_region
      %s469 = ssub.s32 %s25, 1
      // Predicated region
      $region13: #{hourglass_forward.1} parent=11 // pred_check
        %p470 = pneg %p72
      $region14: #{hourglass_forward.1} parent=11 // pred_check_branch
        %472 = sbr.rel (%p470) target = $region16
      $region15: #{hourglass_forward.1} parent=11 // pred_region
        _
      $region16: #{hourglass_forward.1} parent=11 // pred_fallthru
        _
      // Predicated region
      $region17: #{hourglass_forward.1} parent=11 // pred_check
        %p473 = pneg %p93
      $region18: #{hourglass_forward.1} parent=11 // pred_check_branch
        %475 = sbr.rel (%p473) target = $region20
      $region19: #{hourglass_forward.1} parent=11 // pred_region
        _
      $region20: #{hourglass_forward.1} parent=11 // pred_fallthru
        _
      // Predicated region
      $region21: #{hourglass_forward.1} parent=11 // pred_check
        %p476 = pneg %p114
      $region22: #{hourglass_forward.1} parent=11 // pred_check_branch
        %478 = sbr.rel (%p476) target = $region24
      $region23: #{hourglass_forward.1} parent=11 // pred_region
        _
      $region24: #{hourglass_forward.1} parent=11 // pred_fallthru
        _
      // Predicated region
      $region25: #{hourglass_forward.1} parent=11 // pred_check
        %p479 = pneg %p135
      $region26: #{hourglass_forward.1} parent=11 // pred_check_branch
        %481 = sbr.rel (%p479) target = $region28
      $region27: #{hourglass_forward.1} parent=11 // pred_region
        _
      $region28: #{hourglass_forward.1} parent=11 // pred_fallthru
        _
      // Predicated region
      $region29: #{hourglass_forward.1} parent=11 // pred_check
        %p482 = pneg %p156
      $region30: #{hourglass_forward.1} parent=11 // pred_check_branch
        %484 = sbr.rel (%p482) target = $region32
      $region31: #{hourglass_forward.1} parent=11 // pred_region
        _
      $region32: #{hourglass_forward.1} parent=11 // pred_fallthru
        _
      // Predicated region
      $region33: #{hourglass_forward.1} parent=11 // pred_check
        %p485 = pneg %p177
      $region34: #{hourglass_forward.1} parent=11 // pred_check_branch
        %487 = sbr.rel (%p485) target = $region36
      $region35: #{hourglass_forward.1} parent=11 // pred_region
        _
      $region36: #{hourglass_forward.1} parent=11 // pred_fallthru
        _
      // Predicated region
      $region37: #{hourglass_forward.1} parent=11 // pred_check
        %p488 = pneg %p198
      $region38: #{hourglass_forward.1} parent=11 // pred_check_branch
        %490 = sbr.rel (%p488) target = $region40
      $region39: #{hourglass_forward.1} parent=11 // pred_region
        _
      $region40: #{hourglass_forward.1} parent=11 // pred_fallthru
        _
      // Predicated region
      $region41: #{hourglass_forward.1} parent=11 // pred_check
        %p491 = pneg %p219
      $region42: #{hourglass_forward.1} parent=11 // pred_check_branch
        %493 = sbr.rel (%p491) target = $region44
      $region43: #{hourglass_forward.1} parent=11 // pred_region
        _
      $region44: #{hourglass_forward.1} parent=11 // pred_fallthru
        _
      // Predicated region
      $region45: #{hourglass_forward.1} parent=11 // pred_check
        %p494 = pneg %p240
      $region46: #{hourglass_forward.1} parent=11 // pred_check_branch
        %496 = sbr.rel (%p494) target = $region48
      $region47: #{hourglass_forward.1} parent=11 // pred_region
        _
      $region48: #{hourglass_forward.1} parent=11 // pred_fallthru
        _
      // Predicated region
      $region49: #{hourglass_forward.1} parent=11 // pred_check
        %p497 = pneg %p261
      $region50: #{hourglass_forward.1} parent=11 // pred_check_branch
        %499 = sbr.rel (%p497) target = $region52
      $region51: #{hourglass_forward.1} parent=11 // pred_region
        _
      $region52: #{hourglass_forward.1} parent=11 // pred_fallthru
        _
      // Predicated region
      $region53: #{hourglass_forward.1} parent=11 // pred_check
        %p500 = pneg %p282
      $region54: #{hourglass_forward.1} parent=11 // pred_check_branch
        %502 = sbr.rel (%p500) target = $region56
      $region55: #{hourglass_forward.1} parent=11 // pred_region
        _
      $region56: #{hourglass_forward.1} parent=11 // pred_fallthru
        _
      // Predicated region
      $region57: #{hourglass_forward.1} parent=11 // pred_check
        %p503 = pneg %p303
      $region58: #{hourglass_forward.1} parent=11 // pred_check_branch
        %505 = sbr.rel (%p503) target = $region60
      $region59: #{hourglass_forward.1} parent=11 // pred_region
        _
      $region60: #{hourglass_forward.1} parent=11 // pred_fallthru
        _
      // Predicated region
      $region61: #{hourglass_forward.1} parent=11 // pred_check
        %p506 = pneg %p324
      $region62: #{hourglass_forward.1} parent=11 // pred_check_branch
        %508 = sbr.rel (%p506) target = $region64
      $region63: #{hourglass_forward.1} parent=11 // pred_region
        _
      $region64: #{hourglass_forward.1} parent=11 // pred_fallthru
        _
      // Predicated region
      $region65: #{hourglass_forward.1} parent=11 // pred_check
        %p509 = pneg %p345
      $region66: #{hourglass_forward.1} parent=11 // pred_check_branch
        %511 = sbr.rel (%p509) target = $region68
      $region67: #{hourglass_forward.1} parent=11 // pred_region
        _
      $region68: #{hourglass_forward.1} parent=11 // pred_fallthru
        _
      // Predicated region
      $region69: #{hourglass_forward.1} parent=11 // pred_check
        %p512 = pneg %p366
      $region70: #{hourglass_forward.1} parent=11 // pred_check_branch
        %514 = sbr.rel (%p512) target = $region72
      $region71: #{hourglass_forward.1} parent=11 // pred_region
        _
      $region72: #{hourglass_forward.1} parent=11 // pred_fallthru
        _
      // Predicated region
      $region73: #{hourglass_forward.1} parent=11 // pred_check
        %p515 = pneg %p387
      $region74: #{hourglass_forward.1} parent=11 // pred_check_branch
        %517 = sbr.rel (%p515) target = $region76
      $region75: #{hourglass_forward.1} parent=11 // pred_region
        _
      $region76: #{hourglass_forward.1} parent=11 // pred_fallthru
        _
      // Predicated region
      $region77: #{hourglass_forward.1} parent=11 // pred_check
        %p518 = pneg %p408
      $region78: #{hourglass_forward.1} parent=11 // pred_check_branch
        %520 = sbr.rel (%p518) target = $region80
      $region79: #{hourglass_forward.1} parent=11 // pred_region
        _
      $region80: #{hourglass_forward.1} parent=11 // pred_fallthru
        _
      // Predicated region
      $region81: #{hourglass_forward.1} parent=11 // pred_check
        %p521 = pneg %p429
      $region82: #{hourglass_forward.1} parent=11 // pred_check_branch
        %523 = sbr.rel (%p521) target = $region84
      $region83: #{hourglass_forward.1} parent=11 // pred_region
        _
      $region84: #{hourglass_forward.1} parent=11 // pred_fallthru
        _
    $region12: #{hourglass_forward.1} parent=5 // pred_fallthru
      _
    %p524 = scmp.lt.s32.totalorder %s25, 2
    // Predicated region
    $region85: #{hourglass_forward.1} parent=5 // pred_check
      %p525 = pneg %p524
    $region86: #{hourglass_forward.1} parent=5 // pred_check_branch
      %527 = sbr.rel (%p525) target = $region88
    $region87: #{hourglass_forward.1} parent=5 // pred_region
      // Predicated region
      $region89: #{hourglass_forward.1} parent=87 // pred_check
        %p528 = pneg %p45
      $region90: #{hourglass_forward.1} parent=87 // pred_check_branch
        %530 = sbr.rel (%p528) target = $region92
      $region91: #{hourglass_forward.1} parent=87 // pred_region
        %p531 = scmp.lt.s32.totalorder %s25, 1
        %s532 = scalar_select %p531, %s25, 1
        %s533 = smul.addr %s532, 32
        %s534 = smul.addr %s533, 8
        %s535 = scalar_lea.vmem %s0, %s534
      $region92: #{hourglass_forward.1} parent=87 // pred_fallthru
        _
    $region88: #{hourglass_forward.1} parent=5 // pred_fallthru
      _
    %p536 = scmp.le.s32.totalorder 1, %s25
    %p537 = scmp.lt.s32.totalorder %s25, 3
    %p538 = pnand %p536, %p537
    %p539 = pneg %p538
    // Predicated region
    $region93: #{hourglass_forward.1} parent=5 // pred_check
      _
    $region94: #{hourglass_forward.1} parent=5 // pred_check_branch
      %541 = sbr.rel (%p538) target = $region96
    $region95: #{hourglass_forward.1} parent=5 // pred_region
      %s542 = ssub.s32 %s25, 1
      %p543 = scmp.lt.s32.totalorder %s30, 1
      %s544 = scalar_select %p543, %s30, 1
      %s545 = smul.addr %s544, 32
      %s546 = smul.addr %s545, 8
      %s547 = scalar_lea.vmem %s0, %s546
      %p548 = pneg %p51
      %p549 = pneg %p48
      %p550 = pneg %p72
      %p551 = pneg %p69
      %p552 = pneg %p93
      %p553 = pneg %p90
      %p554 = pneg %p114
      %p555 = pneg %p111
      %p556 = pneg %p135
      %p557 = pneg %p132
      %p558 = pneg %p156
      %p559 = pneg %p153
      %p560 = pneg %p177
      %p561 = pneg %p174
      %p562 = pneg %p198
      %p563 = pneg %p195
      %p564 = pneg %p219
      %p565 = pneg %p216
      %p566 = pneg %p240
      %p567 = pneg %p237
      %p568 = pneg %p261
      %p569 = pneg %p258
      %p570 = pneg %p282
      %p571 = pneg %p279
      %p572 = pneg %p303
      %p573 = pneg %p300
      %p574 = pneg %p324
      %p575 = pneg %p321
      %p576 = pneg %p345
      %p577 = pneg %p342
      %p578 = pneg %p366
      %p579 = pneg %p363
      %p580 = pneg %p387
      %p581 = pneg %p384
      %p582 = pneg %p408
      %p583 = pneg %p405
      %p584 = pneg %p429
      %p585 = pneg %p426
      %p586 = pneg %p455
      %p587 = pneg %p452
      %p588 = scmp.lt.s32.totalorder %s30, 1
      %s589 = scalar_select %p588, %s30, 1
      %s590 = smul.addr %s589, 32
      %s591 = smul.addr %s590, 8
      %s592 = scalar_lea.vmem %s19, %s591
      %p593 = scmp.lt.s32.totalorder %s30, 1
      %s594 = scalar_select %p593, %s30, 1
      %s595 = smul.addr %s594, 32
      %s596 = smul.addr %s595, 8
      %s597 = scalar_lea.vmem %s0, %s596
      %p598 = scmp.lt.s32.totalorder %s30, 1
      %s599 = scalar_select %p598, %s30, 1
      %s600 = smul.addr %s599, 32
      %s601 = smul.addr %s600, 8
      %s602 = scalar_lea.vmem %s19, %s601
      %v604 = vld [vmem:[%s597] sm:$0xff]
      %v605 = vld [vmem:[%s597 + $0x8] sm:$0xff]
      %v606 = vld [vmem:[%s597 + $0x10] sm:$0xff]
      %v607 = vld [vmem:[%s597 + $0x18] sm:$0xff]
      %v608 = vld [vmem:[%s597 + $0x20] sm:$0xff]
      %v609 = vld [vmem:[%s597 + $0x28] sm:$0xff]
      %v610 = vld [vmem:[%s597 + $0x30] sm:$0xff]
      %v611 = vld [vmem:[%s597 + $0x38] sm:$0xff]
      %v612 = vld [vmem:[%s597 + $0x40] sm:$0xff]
      %v613 = vld [vmem:[%s597 + $0x48] sm:$0xff]
      %v614 = vld [vmem:[%s597 + $0x50] sm:$0xff]
      %v615 = vld [vmem:[%s597 + $0x58] sm:$0xff]
      %v616 = vld [vmem:[%s597 + $0x60] sm:$0xff]
      %v617 = vld [vmem:[%s597 + $0x68] sm:$0xff]
      %v618 = vld [vmem:[%s597 + $0x70] sm:$0xff]
      %v619 = vld [vmem:[%s597 + $0x78] sm:$0xff]
      %v620 = vld [vmem:[%s597 + $0x80] sm:$0xff]
      %v621 = vld [vmem:[%s597 + $0x88] sm:$0xff]
      %v622 = vld [vmem:[%s597 + $0x90] sm:$0xff]
      %v623 = vld [vmem:[%s597 + $0x98] sm:$0xff]
      %v624 = vld [vmem:[%s597 + $0xa0] sm:$0xff]
      %v625 = vld [vmem:[%s597 + $0xa8] sm:$0xff]
      %v626 = vld [vmem:[%s597 + $0xb0] sm:$0xff]
      %v627 = vld [vmem:[%s597 + $0xb8] sm:$0xff]
      %v628 = vld [vmem:[%s597 + $0xc0] sm:$0xff]
      %v629 = vld [vmem:[%s597 + $0xc8] sm:$0xff]
      %v630 = vld [vmem:[%s597 + $0xd0] sm:$0xff]
      %v631 = vld [vmem:[%s597 + $0xd8] sm:$0xff]
      %v632 = vld [vmem:[%s597 + $0xe0] sm:$0xff]
      %v633 = vld [vmem:[%s597 + $0xe8] sm:$0xff]
      %v634 = vld [vmem:[%s597 + $0xf0] sm:$0xff]
      %v635 = vld [vmem:[%s597 + $0xf8] sm:$0xff]
      %v636 = vlaneseq
      %v637 = vshrl.u32 %v636, 7
      %v638 = vadd.s32 %v637, 8
      %v639 = vadd.s32 %v637, 16
      %v640 = vadd.s32 %v637, 24
      %v641 = vadd.s32 %v637, 32
      %v642 = vadd.s32 %v637, 40
      %v643 = vadd.s32 %v637, 48
      %v644 = vadd.s32 %v637, 56
      %v645 = vadd.s32 %v637, 64
      %v646 = vadd.s32 %v637, 72
      %v647 = vadd.s32 %v637, 80
      %v648 = vadd.s32 %v637, 88
      %v649 = vadd.s32 %v637, 96
      %v650 = vadd.s32 %v637, 104
      %v651 = vadd.s32 %v637, 112
      %v652 = vadd.s32 %v637, 120
      %v653 = vadd.s32 %v637, 128
      %v654 = vadd.s32 %v637, 136
      %v655 = vadd.s32 %v637, 144
      %v656 = vadd.s32 %v637, 152
      %v657 = vadd.s32 %v637, 160
      %v658 = vadd.s32 %v637, 168
      %v659 = vadd.s32 %v637, 176
      %v660 = vadd.s32 %v637, 184
      %v661 = vadd.s32 %v637, 192
      %v662 = vadd.s32 %v637, 200
      %v663 = vadd.s32 %v637, 208
      %v664 = vadd.s32 %v637, 216
      %v665 = vadd.s32 %v637, 224
      %v666 = vadd.s32 %v637, 232
      %v667 = vadd.s32 %v637, 240
      %v668 = vadd.s32 %v637, 248
      %vm669 = vcmp.lt.s32.totalorder %v637, 0
      %v670 = vsub.s32 0, %v637
      %v671 = vsel %vm669, %v670, %v637
      %v672 = vshrl.u32 %v671, 4
      %v673 = vand.u32 %v671, 15
      %v674 = vsub.s32 0, %v673
      %v675 = vsel %vm669, %v674, %v673
      %vm676 = vcmp.lt.s32.totalorder %v638, 0
      %v677 = vsub.s32 0, %v638
      %v678 = vsel %vm676, %v677, %v638
      %v679 = vshrl.u32 %v678, 4
      %v680 = vand.u32 %v678, 15
      %v681 = vsub.s32 0, %v680
      %v682 = vsel %vm676, %v681, %v680
      %vm683 = vcmp.lt.s32.totalorder %v639, 0
      %v684 = vsub.s32 0, %v639
      %v685 = vsel %vm683, %v684, %v639
      %v686 = vshrl.u32 %v685, 4
      %v687 = vand.u32 %v685, 15
      %v688 = vsub.s32 0, %v687
      %v689 = vsel %vm683, %v688, %v687
      %vm690 = vcmp.lt.s32.totalorder %v640, 0
      %v691 = vsub.s32 0, %v640
      %v692 = vsel %vm690, %v691, %v640
      %v693 = vshrl.u32 %v692, 4
      %v694 = vand.u32 %v692, 15
      %v695 = vsub.s32 0, %v694
      %v696 = vsel %vm690, %v695, %v694
      %vm697 = vcmp.lt.s32.totalorder %v641, 0
      %v698 = vsub.s32 0, %v641
      %v699 = vsel %vm697, %v698, %v641
      %v700 = vshrl.u32 %v699, 4
      %v701 = vand.u32 %v699, 15
      %v702 = vsub.s32 0, %v701
      %v703 = vsel %vm697, %v702, %v701
      %vm704 = vcmp.lt.s32.totalorder %v642, 0
      %v705 = vsub.s32 0, %v642
      %v706 = vsel %vm704, %v705, %v642
      %v707 = vshrl.u32 %v706, 4
      %v708 = vand.u32 %v706, 15
      %v709 = vsub.s32 0, %v708
      %v710 = vsel %vm704, %v709, %v708
      %vm711 = vcmp.lt.s32.totalorder %v643, 0
      %v712 = vsub.s32 0, %v643
      %v713 = vsel %vm711, %v712, %v643
      %v714 = vshrl.u32 %v713, 4
      %v715 = vand.u32 %v713, 15
      %v716 = vsub.s32 0, %v715
      %v717 = vsel %vm711, %v716, %v715
      %vm718 = vcmp.lt.s32.totalorder %v644, 0
      %v719 = vsub.s32 0, %v644
      %v720 = vsel %vm718, %v719, %v644
      %v721 = vshrl.u32 %v720, 4
      %v722 = vand.u32 %v720, 15
      %v723 = vsub.s32 0, %v722
      %v724 = vsel %vm718, %v723, %v722
      %vm725 = vcmp.lt.s32.totalorder %v645, 0
      %v726 = vsub.s32 0, %v645
      %v727 = vsel %vm725, %v726, %v645
      %v728 = vshrl.u32 %v727, 4
      %v729 = vand.u32 %v727, 15
      %v730 = vsub.s32 0, %v729
      %v731 = vsel %vm725, %v730, %v729
      %vm732 = vcmp.lt.s32.totalorder %v646, 0
      %v733 = vsub.s32 0, %v646
      %v734 = vsel %vm732, %v733, %v646
      %v735 = vshrl.u32 %v734, 4
      %v736 = vand.u32 %v734, 15
      %v737 = vsub.s32 0, %v736
      %v738 = vsel %vm732, %v737, %v736
      %vm739 = vcmp.lt.s32.totalorder %v647, 0
      %v740 = vsub.s32 0, %v647
      %v741 = vsel %vm739, %v740, %v647
      %v742 = vshrl.u32 %v741, 4
      %v743 = vand.u32 %v741, 15
      %v744 = vsub.s32 0, %v743
      %v745 = vsel %vm739, %v744, %v743
      %vm746 = vcmp.lt.s32.totalorder %v648, 0
      %v747 = vsub.s32 0, %v648
      %v748 = vsel %vm746, %v747, %v648
      %v749 = vshrl.u32 %v748, 4
      %v750 = vand.u32 %v748, 15
      %v751 = vsub.s32 0, %v750
      %v752 = vsel %vm746, %v751, %v750
      %vm753 = vcmp.lt.s32.totalorder %v649, 0
      %v754 = vsub.s32 0, %v649
      %v755 = vsel %vm753, %v754, %v649
      %v756 = vshrl.u32 %v755, 4
      %v757 = vand.u32 %v755, 15
      %v758 = vsub.s32 0, %v757
      %v759 = vsel %vm753, %v758, %v757
      %vm760 = vcmp.lt.s32.totalorder %v650, 0
      %v761 = vsub.s32 0, %v650
      %v762 = vsel %vm760, %v761, %v650
      %v763 = vshrl.u32 %v762, 4
      %v764 = vand.u32 %v762, 15
      %v765 = vsub.s32 0, %v764
      %v766 = vsel %vm760, %v765, %v764
      %vm767 = vcmp.lt.s32.totalorder %v651, 0
      %v768 = vsub.s32 0, %v651
      %v769 = vsel %vm767, %v768, %v651
      %v770 = vshrl.u32 %v769, 4
      %v771 = vand.u32 %v769, 15
      %v772 = vsub.s32 0, %v771
      %v773 = vsel %vm767, %v772, %v771
      %vm774 = vcmp.lt.s32.totalorder %v652, 0
      %v775 = vsub.s32 0, %v652
      %v776 = vsel %vm774, %v775, %v652
      %v777 = vshrl.u32 %v776, 4
      %v778 = vand.u32 %v776, 15
      %v779 = vsub.s32 0, %v778
      %v780 = vsel %vm774, %v779, %v778
      %vm781 = vcmp.lt.s32.totalorder %v653, 0
      %v782 = vsub.s32 0, %v653
      %v783 = vsel %vm781, %v782, %v653
      %v784 = vshrl.u32 %v783, 4
      %v785 = vand.u32 %v783, 15
      %v786 = vsub.s32 0, %v785
      %v787 = vsel %vm781, %v786, %v785
      %vm788 = vcmp.lt.s32.totalorder %v654, 0
      %v789 = vsub.s32 0, %v654
      %v790 = vsel %vm788, %v789, %v654
      %v791 = vshrl.u32 %v790, 4
      %v792 = vand.u32 %v790, 15
      %v793 = vsub.s32 0, %v792
      %v794 = vsel %vm788, %v793, %v792
      %vm795 = vcmp.lt.s32.totalorder %v655, 0
      %v796 = vsub.s32 0, %v655
      %v797 = vsel %vm795, %v796, %v655
      %v798 = vshrl.u32 %v797, 4
      %v799 = vand.u32 %v797, 15
      %v800 = vsub.s32 0, %v799
      %v801 = vsel %vm795, %v800, %v799
      %vm802 = vcmp.lt.s32.totalorder %v656, 0
      %v803 = vsub.s32 0, %v656
      %v804 = vsel %vm802, %v803, %v656
      %v805 = vshrl.u32 %v804, 4
      %v806 = vand.u32 %v804, 15
      %v807 = vsub.s32 0, %v806
      %v808 = vsel %vm802, %v807, %v806
      %vm809 = vcmp.lt.s32.totalorder %v657, 0
      %v810 = vsub.s32 0, %v657
      %v811 = vsel %vm809, %v810, %v657
      %v812 = vshrl.u32 %v811, 4
      %v813 = vand.u32 %v811, 15
      %v814 = vsub.s32 0, %v813
      %v815 = vsel %vm809, %v814, %v813
      %vm816 = vcmp.lt.s32.totalorder %v658, 0
      %v817 = vsub.s32 0, %v658
      %v818 = vsel %vm816, %v817, %v658
      %v819 = vshrl.u32 %v818, 4
      %v820 = vand.u32 %v818, 15
      %v821 = vsub.s32 0, %v820
      %v822 = vsel %vm816, %v821, %v820
      %vm823 = vcmp.lt.s32.totalorder %v659, 0
      %v824 = vsub.s32 0, %v659
      %v825 = vsel %vm823, %v824, %v659
      %v826 = vshrl.u32 %v825, 4
      %v827 = vand.u32 %v825, 15
      %v828 = vsub.s32 0, %v827
      %v829 = vsel %vm823, %v828, %v827
      %vm830 = vcmp.lt.s32.totalorder %v660, 0
      %v831 = vsub.s32 0, %v660
      %v832 = vsel %vm830, %v831, %v660
      %v833 = vshrl.u32 %v832, 4
      %v834 = vand.u32 %v832, 15
      %v835 = vsub.s32 0, %v834
      %v836 = vsel %vm830, %v835, %v834
      %vm837 = vcmp.lt.s32.totalorder %v661, 0
      %v838 = vsub.s32 0, %v661
      %v839 = vsel %vm837, %v838, %v661
      %v840 = vshrl.u32 %v839, 4
      %v841 = vand.u32 %v839, 15
      %v842 = vsub.s32 0, %v841
      %v843 = vsel %vm837, %v842, %v841
      %vm844 = vcmp.lt.s32.totalorder %v662, 0
      %v845 = vsub.s32 0, %v662
      %v846 = vsel %vm844, %v845, %v662
      %v847 = vshrl.u32 %v846, 4
      %v848 = vand.u32 %v846, 15
      %v849 = vsub.s32 0, %v848
      %v850 = vsel %vm844, %v849, %v848
      %vm851 = vcmp.lt.s32.totalorder %v663, 0
      %v852 = vsub.s32 0, %v663
      %v853 = vsel %vm851, %v852, %v663
      %v854 = vshrl.u32 %v853, 4
      %v855 = vand.u32 %v853, 15
      %v856 = vsub.s32 0, %v855
      %v857 = vsel %vm851, %v856, %v855
      %vm858 = vcmp.lt.s32.totalorder %v664, 0
      %v859 = vsub.s32 0, %v664
      %v860 = vsel %vm858, %v859, %v664
      %v861 = vshrl.u32 %v860, 4
      %v862 = vand.u32 %v860, 15
      %v863 = vsub.s32 0, %v862
      %v864 = vsel %vm858, %v863, %v862
      %vm865 = vcmp.lt.s32.totalorder %v665, 0
      %v866 = vsub.s32 0, %v665
      %v867 = vsel %vm865, %v866, %v665
      %v868 = vshrl.u32 %v867, 4
      %v869 = vand.u32 %v867, 15
      %v870 = vsub.s32 0, %v869
      %v871 = vsel %vm865, %v870, %v869
      %vm872 = vcmp.lt.s32.totalorder %v666, 0
      %v873 = vsub.s32 0, %v666
      %v874 = vsel %vm872, %v873, %v666
      %v875 = vshrl.u32 %v874, 4
      %v876 = vand.u32 %v874, 15
      %v877 = vsub.s32 0, %v876
      %v878 = vsel %vm872, %v877, %v876
      %vm879 = vcmp.lt.s32.totalorder %v667, 0
      %v880 = vsub.s32 0, %v667
      %v881 = vsel %vm879, %v880, %v667
      %v882 = vshrl.u32 %v881, 4
      %v883 = vand.u32 %v881, 15
      %v884 = vsub.s32 0, %v883
      %v885 = vsel %vm879, %v884, %v883
      %vm886 = vcmp.lt.s32.totalorder %v668, 0
      %v887 = vsub.s32 0, %v668
      %v888 = vsel %vm886, %v887, %v668
      %v889 = vshrl.u32 %v888, 4
      %v890 = vand.u32 %v888, 15
      %v891 = vsub.s32 0, %v890
      %v892 = vsel %vm886, %v891, %v890
      %vm893 = vcmp.ne.s32.totalorder %v675, 0
      %vm894 = vcmp.ne.s32.totalorder %v682, 0
      %vm895 = vcmp.ne.s32.totalorder %v689, 0
      %vm896 = vcmp.ne.s32.totalorder %v696, 0
      %vm897 = vcmp.ne.s32.totalorder %v703, 0
      %vm898 = vcmp.ne.s32.totalorder %v710, 0
      %vm899 = vcmp.ne.s32.totalorder %v717, 0
      %vm900 = vcmp.ne.s32.totalorder %v724, 0
      %vm901 = vcmp.ne.s32.totalorder %v731, 0
      %vm902 = vcmp.ne.s32.totalorder %v738, 0
      %vm903 = vcmp.ne.s32.totalorder %v745, 0
      %vm904 = vcmp.ne.s32.totalorder %v752, 0
      %vm905 = vcmp.ne.s32.totalorder %v759, 0
      %vm906 = vcmp.ne.s32.totalorder %v766, 0
      %vm907 = vcmp.ne.s32.totalorder %v773, 0
      %vm908 = vcmp.ne.s32.totalorder %v780, 0
      %vm909 = vcmp.ne.s32.totalorder %v787, 0
      %vm910 = vcmp.ne.s32.totalorder %v794, 0
      %vm911 = vcmp.ne.s32.totalorder %v801, 0
      %vm912 = vcmp.ne.s32.totalorder %v808, 0
      %vm913 = vcmp.ne.s32.totalorder %v815, 0
      %vm914 = vcmp.ne.s32.totalorder %v822, 0
      %vm915 = vcmp.ne.s32.totalorder %v829, 0
      %vm916 = vcmp.ne.s32.totalorder %v836, 0
      %vm917 = vcmp.ne.s32.totalorder %v843, 0
      %vm918 = vcmp.ne.s32.totalorder %v850, 0
      %vm919 = vcmp.ne.s32.totalorder %v857, 0
      %vm920 = vcmp.ne.s32.totalorder %v864, 0
      %vm921 = vcmp.ne.s32.totalorder %v871, 0
      %vm922 = vcmp.ne.s32.totalorder %v878, 0
      %vm923 = vcmp.ne.s32.totalorder %v885, 0
      %vm924 = vcmp.ne.s32.totalorder %v892, 0
      %vm925 = vcmp.lt.s32.totalorder %v675, 0
      %vm926 = vcmp.lt.s32.totalorder %v682, 0
      %vm927 = vcmp.lt.s32.totalorder %v689, 0
      %vm928 = vcmp.lt.s32.totalorder %v696, 0
      %vm929 = vcmp.lt.s32.totalorder %v703, 0
      %vm930 = vcmp.lt.s32.totalorder %v710, 0
      %vm931 = vcmp.lt.s32.totalorder %v717, 0
      %vm932 = vcmp.lt.s32.totalorder %v724, 0
      %vm933 = vcmp.lt.s32.totalorder %v731, 0
      %vm934 = vcmp.lt.s32.totalorder %v738, 0
      %vm935 = vcmp.lt.s32.totalorder %v745, 0
      %vm936 = vcmp.lt.s32.totalorder %v752, 0
      %vm937 = vcmp.lt.s32.totalorder %v759, 0
      %vm938 = vcmp.lt.s32.totalorder %v766, 0
      %vm939 = vcmp.lt.s32.totalorder %v773, 0
      %vm940 = vcmp.lt.s32.totalorder %v780, 0
      %vm941 = vcmp.lt.s32.totalorder %v787, 0
      %vm942 = vcmp.lt.s32.totalorder %v794, 0
      %vm943 = vcmp.lt.s32.totalorder %v801, 0
      %vm944 = vcmp.lt.s32.totalorder %v808, 0
      %vm945 = vcmp.lt.s32.totalorder %v815, 0
      %vm946 = vcmp.lt.s32.totalorder %v822, 0
      %vm947 = vcmp.lt.s32.totalorder %v829, 0
      %vm948 = vcmp.lt.s32.totalorder %v836, 0
      %vm949 = vcmp.lt.s32.totalorder %v843, 0
      %vm950 = vcmp.lt.s32.totalorder %v850, 0
      %vm951 = vcmp.lt.s32.totalorder %v857, 0
      %vm952 = vcmp.lt.s32.totalorder %v864, 0
      %vm953 = vcmp.lt.s32.totalorder %v871, 0
      %vm954 = vcmp.lt.s32.totalorder %v878, 0
      %vm955 = vcmp.lt.s32.totalorder %v885, 0
      %vm956 = vcmp.lt.s32.totalorder %v892, 0
      %vm957 = vmand %vm925, %vm893
      %vm958 = vmand %vm926, %vm894
      %vm959 = vmand %vm927, %vm895
      %vm960 = vmand %vm928, %vm896
      %vm961 = vmand %vm929, %vm897
      %vm962 = vmand %vm930, %vm898
      %vm963 = vmand %vm931, %vm899
      %vm964 = vmand %vm932, %vm900
      %vm965 = vmand %vm933, %vm901
      %vm966 = vmand %vm934, %vm902
      %vm967 = vmand %vm935, %vm903
      %vm968 = vmand %vm936, %vm904
      %vm969 = vmand %vm937, %vm905
      %vm970 = vmand %vm938, %vm906
      %vm971 = vmand %vm939, %vm907
      %vm972 = vmand %vm940, %vm908
      %vm973 = vmand %vm941, %vm909
      %vm974 = vmand %vm942, %vm910
      %vm975 = vmand %vm943, %vm911
      %vm976 = vmand %vm944, %vm912
      %vm977 = vmand %vm945, %vm913
      %vm978 = vmand %vm946, %vm914
      %vm979 = vmand %vm947, %vm915
      %vm980 = vmand %vm948, %vm916
      %vm981 = vmand %vm949, %vm917
      %vm982 = vmand %vm950, %vm918
      %vm983 = vmand %vm951, %vm919
      %vm984 = vmand %vm952, %vm920
      %vm985 = vmand %vm953, %vm921
      %vm986 = vmand %vm954, %vm922
      %vm987 = vmand %vm955, %vm923
      %vm988 = vmand %vm956, %vm924
      %v989 = vadd.s32 %v675, 16
      %v990 = vadd.s32 %v682, 16
      %v991 = vadd.s32 %v689, 16
      %v992 = vadd.s32 %v696, 16
      %v993 = vadd.s32 %v703, 16
      %v994 = vadd.s32 %v710, 16
      %v995 = vadd.s32 %v717, 16
      %v996 = vadd.s32 %v724, 16
      %v997 = vadd.s32 %v731, 16
      %v998 = vadd.s32 %v738, 16
      %v999 = vadd.s32 %v745, 16
      %v1000 = vadd.s32 %v752, 16
      %v1001 = vadd.s32 %v759, 16
      %v1002 = vadd.s32 %v766, 16
      %v1003 = vadd.s32 %v773, 16
      %v1004 = vadd.s32 %v780, 16
      %v1005 = vadd.s32 %v787, 16
      %v1006 = vadd.s32 %v794, 16
      %v1007 = vadd.s32 %v801, 16
      %v1008 = vadd.s32 %v808, 16
      %v1009 = vadd.s32 %v815, 16
      %v1010 = vadd.s32 %v822, 16
      %v1011 = vadd.s32 %v829, 16
      %v1012 = vadd.s32 %v836, 16
      %v1013 = vadd.s32 %v843, 16
      %v1014 = vadd.s32 %v850, 16
      %v1015 = vadd.s32 %v857, 16
      %v1016 = vadd.s32 %v864, 16
      %v1017 = vadd.s32 %v871, 16
      %v1018 = vadd.s32 %v878, 16
      %v1019 = vadd.s32 %v885, 16
      %v1020 = vadd.s32 %v892, 16
      %v1021 = vsel %vm957, %v989, %v675
      %v1022 = vsel %vm958, %v990, %v682
      %v1023 = vsel %vm959, %v991, %v689
      %v1024 = vsel %vm960, %v992, %v696
      %v1025 = vsel %vm961, %v993, %v703
      %v1026 = vsel %vm962, %v994, %v710
      %v1027 = vsel %vm963, %v995, %v717
      %v1028 = vsel %vm964, %v996, %v724
      %v1029 = vsel %vm965, %v997, %v731
      %v1030 = vsel %vm966, %v998, %v738
      %v1031 = vsel %vm967, %v999, %v745
      %v1032 = vsel %vm968, %v1000, %v752
      %v1033 = vsel %vm969, %v1001, %v759
      %v1034 = vsel %vm970, %v1002, %v766
      %v1035 = vsel %vm971, %v1003, %v773
      %v1036 = vsel %vm972, %v1004, %v780
      %v1037 = vsel %vm973, %v1005, %v787
      %v1038 = vsel %vm974, %v1006, %v794
      %v1039 = vsel %vm975, %v1007, %v801
      %v1040 = vsel %vm976, %v1008, %v808
      %v1041 = vsel %vm977, %v1009, %v815
      %v1042 = vsel %vm978, %v1010, %v822
      %v1043 = vsel %vm979, %v1011, %v829
      %v1044 = vsel %vm980, %v1012, %v836
      %v1045 = vsel %vm981, %v1013, %v843
      %v1046 = vsel %vm982, %v1014, %v850
      %v1047 = vsel %vm983, %v1015, %v857
      %v1048 = vsel %vm984, %v1016, %v864
      %v1049 = vsel %vm985, %v1017, %v871
      %v1050 = vsel %vm986, %v1018, %v878
      %v1051 = vsel %vm987, %v1019, %v885
      %v1052 = vsel %vm988, %v1020, %v892
      %vm1053 = vcmp.ne.s32.totalorder %v1021, 0
      %vm1054 = vcmp.ne.s32.totalorder %v1022, 0
      %vm1055 = vcmp.ne.s32.totalorder %v1023, 0
      %vm1056 = vcmp.ne.s32.totalorder %v1024, 0
      %vm1057 = vcmp.ne.s32.totalorder %v1025, 0
      %vm1058 = vcmp.ne.s32.totalorder %v1026, 0
      %vm1059 = vcmp.ne.s32.totalorder %v1027, 0
      %vm1060 = vcmp.ne.s32.totalorder %v1028, 0
      %vm1061 = vcmp.ne.s32.totalorder %v1029, 0
      %vm1062 = vcmp.ne.s32.totalorder %v1030, 0
      %vm1063 = vcmp.ne.s32.totalorder %v1031, 0
      %vm1064 = vcmp.ne.s32.totalorder %v1032, 0
      %vm1065 = vcmp.ne.s32.totalorder %v1033, 0
      %vm1066 = vcmp.ne.s32.totalorder %v1034, 0
      %vm1067 = vcmp.ne.s32.totalorder %v1035, 0
      %vm1068 = vcmp.ne.s32.totalorder %v1036, 0
      %vm1069 = vcmp.ne.s32.totalorder %v1037, 0
      %vm1070 = vcmp.ne.s32.totalorder %v1038, 0
      %vm1071 = vcmp.ne.s32.totalorder %v1039, 0
      %vm1072 = vcmp.ne.s32.totalorder %v1040, 0
      %vm1073 = vcmp.ne.s32.totalorder %v1041, 0
      %vm1074 = vcmp.ne.s32.totalorder %v1042, 0
      %vm1075 = vcmp.ne.s32.totalorder %v1043, 0
      %vm1076 = vcmp.ne.s32.totalorder %v1044, 0
      %vm1077 = vcmp.ne.s32.totalorder %v1045, 0
      %vm1078 = vcmp.ne.s32.totalorder %v1046, 0
      %vm1079 = vcmp.ne.s32.totalorder %v1047, 0
      %vm1080 = vcmp.ne.s32.totalorder %v1048, 0
      %vm1081 = vcmp.ne.s32.totalorder %v1049, 0
      %vm1082 = vcmp.ne.s32.totalorder %v1050, 0
      %vm1083 = vcmp.ne.s32.totalorder %v1051, 0
      %vm1084 = vcmp.ne.s32.totalorder %v1052, 0
      %v1085 = vsel %vm1053, 1, 0
      %v1086 = vsel %vm1054, 1, 0
      %v1087 = vsel %vm1055, 1, 0
      %v1088 = vsel %vm1056, 1, 0
      %v1089 = vsel %vm1057, 1, 0
      %v1090 = vsel %vm1058, 1, 0
      %v1091 = vsel %vm1059, 1, 0
      %v1092 = vsel %vm1060, 1, 0
      %v1093 = vsel %vm1061, 1, 0
      %v1094 = vsel %vm1062, 1, 0
      %v1095 = vsel %vm1063, 1, 0
      %v1096 = vsel %vm1064, 1, 0
      %v1097 = vsel %vm1065, 1, 0
      %v1098 = vsel %vm1066, 1, 0
      %v1099 = vsel %vm1067, 1, 0
      %v1100 = vsel %vm1068, 1, 0
      %v1101 = vsel %vm1069, 1, 0
      %v1102 = vsel %vm1070, 1, 0
      %v1103 = vsel %vm1071, 1, 0
      %v1104 = vsel %vm1072, 1, 0
      %v1105 = vsel %vm1073, 1, 0
      %v1106 = vsel %vm1074, 1, 0
      %v1107 = vsel %vm1075, 1, 0
      %v1108 = vsel %vm1076, 1, 0
      %v1109 = vsel %vm1077, 1, 0
      %v1110 = vsel %vm1078, 1, 0
      %v1111 = vsel %vm1079, 1, 0
      %v1112 = vsel %vm1080, 1, 0
      %v1113 = vsel %vm1081, 1, 0
      %v1114 = vsel %vm1082, 1, 0
      %v1115 = vsel %vm1083, 1, 0
      %v1116 = vsel %vm1084, 1, 0
      %v1117 = vcvt.s32.f32 %v1085
      %v1118 = vcvt.s32.f32 %v1086
      %v1119 = vcvt.s32.f32 %v1087
      %v1120 = vcvt.s32.f32 %v1088
      %v1121 = vcvt.s32.f32 %v1089
      %v1122 = vcvt.s32.f32 %v1090
      %v1123 = vcvt.s32.f32 %v1091
      %v1124 = vcvt.s32.f32 %v1092
      %v1125 = vcvt.s32.f32 %v1093
      %v1126 = vcvt.s32.f32 %v1094
      %v1127 = vcvt.s32.f32 %v1095
      %v1128 = vcvt.s32.f32 %v1096
      %v1129 = vcvt.s32.f32 %v1097
      %v1130 = vcvt.s32.f32 %v1098
      %v1131 = vcvt.s32.f32 %v1099
      %v1132 = vcvt.s32.f32 %v1100
      %v1133 = vcvt.s32.f32 %v1101
      %v1134 = vcvt.s32.f32 %v1102
      %v1135 = vcvt.s32.f32 %v1103
      %v1136 = vcvt.s32.f32 %v1104
      %v1137 = vcvt.s32.f32 %v1105
      %v1138 = vcvt.s32.f32 %v1106
      %v1139 = vcvt.s32.f32 %v1107
      %v1140 = vcvt.s32.f32 %v1108
      %v1141 = vcvt.s32.f32 %v1109
      %v1142 = vcvt.s32.f32 %v1110
      %v1143 = vcvt.s32.f32 %v1111
      %v1144 = vcvt.s32.f32 %v1112
      %v1145 = vcvt.s32.f32 %v1113
      %v1146 = vcvt.s32.f32 %v1114
      %v1147 = vcvt.s32.f32 %v1115
      %v1148 = vcvt.s32.f32 %v1116
      %vm1149 = vcmp.ne.s32.totalorder %v1021, 15
      %vm1150 = vcmp.ne.s32.totalorder %v1022, 15
      %vm1151 = vcmp.ne.s32.totalorder %v1023, 15
      %vm1152 = vcmp.ne.s32.totalorder %v1024, 15
      %vm1153 = vcmp.ne.s32.totalorder %v1025, 15
      %vm1154 = vcmp.ne.s32.totalorder %v1026, 15
      %vm1155 = vcmp.ne.s32.totalorder %v1027, 15
      %vm1156 = vcmp.ne.s32.totalorder %v1028, 15
      %vm1157 = vcmp.ne.s32.totalorder %v1029, 15
      %vm1158 = vcmp.ne.s32.totalorder %v1030, 15
      %vm1159 = vcmp.ne.s32.totalorder %v1031, 15
      %vm1160 = vcmp.ne.s32.totalorder %v1032, 15
      %vm1161 = vcmp.ne.s32.totalorder %v1033, 15
      %vm1162 = vcmp.ne.s32.totalorder %v1034, 15
      %vm1163 = vcmp.ne.s32.totalorder %v1035, 15
      %vm1164 = vcmp.ne.s32.totalorder %v1036, 15
      %vm1165 = vcmp.ne.s32.totalorder %v1037, 15
      %vm1166 = vcmp.ne.s32.totalorder %v1038, 15
      %vm1167 = vcmp.ne.s32.totalorder %v1039, 15
      %vm1168 = vcmp.ne.s32.totalorder %v1040, 15
      %vm1169 = vcmp.ne.s32.totalorder %v1041, 15
      %vm1170 = vcmp.ne.s32.totalorder %v1042, 15
      %vm1171 = vcmp.ne.s32.totalorder %v1043, 15
      %vm1172 = vcmp.ne.s32.totalorder %v1044, 15
      %vm1173 = vcmp.ne.s32.totalorder %v1045, 15
      %vm1174 = vcmp.ne.s32.totalorder %v1046, 15
      %vm1175 = vcmp.ne.s32.totalorder %v1047, 15
      %vm1176 = vcmp.ne.s32.totalorder %v1048, 15
      %vm1177 = vcmp.ne.s32.totalorder %v1049, 15
      %vm1178 = vcmp.ne.s32.totalorder %v1050, 15
      %vm1179 = vcmp.ne.s32.totalorder %v1051, 15
      %vm1180 = vcmp.ne.s32.totalorder %v1052, 15
      %v1181 = vsel %vm1149, 1, 0
      %v1182 = vsel %vm1150, 1, 0
      %v1183 = vsel %vm1151, 1, 0
      %v1184 = vsel %vm1152, 1, 0
      %v1185 = vsel %vm1153, 1, 0
      %v1186 = vsel %vm1154, 1, 0
      %v1187 = vsel %vm1155, 1, 0
      %v1188 = vsel %vm1156, 1, 0
      %v1189 = vsel %vm1157, 1, 0
      %v1190 = vsel %vm1158, 1, 0
      %v1191 = vsel %vm1159, 1, 0
      %v1192 = vsel %vm1160, 1, 0
      %v1193 = vsel %vm1161, 1, 0
      %v1194 = vsel %vm1162, 1, 0
      %v1195 = vsel %vm1163, 1, 0
      %v1196 = vsel %vm1164, 1, 0
      %v1197 = vsel %vm1165, 1, 0
      %v1198 = vsel %vm1166, 1, 0
      %v1199 = vsel %vm1167, 1, 0
      %v1200 = vsel %vm1168, 1, 0
      %v1201 = vsel %vm1169, 1, 0
      %v1202 = vsel %vm1170, 1, 0
      %v1203 = vsel %vm1171, 1, 0
      %v1204 = vsel %vm1172, 1, 0
      %v1205 = vsel %vm1173, 1, 0
      %v1206 = vsel %vm1174, 1, 0
      %v1207 = vsel %vm1175, 1, 0
      %v1208 = vsel %vm1176, 1, 0
      %v1209 = vsel %vm1177, 1, 0
      %v1210 = vsel %vm1178, 1, 0
      %v1211 = vsel %vm1179, 1, 0
      %v1212 = vsel %vm1180, 1, 0
      %v1213 = vcvt.s32.f32 %v1181
      %v1214 = vcvt.s32.f32 %v1182
      %v1215 = vcvt.s32.f32 %v1183
      %v1216 = vcvt.s32.f32 %v1184
      %v1217 = vcvt.s32.f32 %v1185
      %v1218 = vcvt.s32.f32 %v1186
      %v1219 = vcvt.s32.f32 %v1187
      %v1220 = vcvt.s32.f32 %v1188
      %v1221 = vcvt.s32.f32 %v1189
      %v1222 = vcvt.s32.f32 %v1190
      %v1223 = vcvt.s32.f32 %v1191
      %v1224 = vcvt.s32.f32 %v1192
      %v1225 = vcvt.s32.f32 %v1193
      %v1226 = vcvt.s32.f32 %v1194
      %v1227 = vcvt.s32.f32 %v1195
      %v1228 = vcvt.s32.f32 %v1196
      %v1229 = vcvt.s32.f32 %v1197
      %v1230 = vcvt.s32.f32 %v1198
      %v1231 = vcvt.s32.f32 %v1199
      %v1232 = vcvt.s32.f32 %v1200
      %v1233 = vcvt.s32.f32 %v1201
      %v1234 = vcvt.s32.f32 %v1202
      %v1235 = vcvt.s32.f32 %v1203
      %v1236 = vcvt.s32.f32 %v1204
      %v1237 = vcvt.s32.f32 %v1205
      %v1238 = vcvt.s32.f32 %v1206
      %v1239 = vcvt.s32.f32 %v1207
      %v1240 = vcvt.s32.f32 %v1208
      %v1241 = vcvt.s32.f32 %v1209
      %v1242 = vcvt.s32.f32 %v1210
      %v1243 = vcvt.s32.f32 %v1211
      %v1244 = vcvt.s32.f32 %v1212
      %vm1275 = vcmask 1046528
      %v1276 = vrot.slane %v1119, 1
      %v1277 = vrot.slane %v1120, 1
      %v1278 = vsel %vm1275, %v1276, %v1277
      %v1279 = vrot.slane %v1121, 1
      %v1280 = vsel %vm1275, %v1277, %v1279
      %v1281 = vrot.slane %v1122, 1
      %v1282 = vsel %vm1275, %v1279, %v1281
      %v1283 = vrot.slane %v1123, 1
      %v1284 = vsel %vm1275, %v1281, %v1283
      %v1285 = vrot.slane %v1124, 1
      %v1286 = vsel %vm1275, %v1283, %v1285
      %v1287 = vrot.slane %v1125, 1
      %v1288 = vsel %vm1275, %v1285, %v1287
      %v1289 = vrot.slane %v1126, 1
      %v1290 = vsel %vm1275, %v1287, %v1289
      %v1291 = vrot.slane %v1127, 1
      %v1292 = vsel %vm1275, %v1289, %v1291
      %v1293 = vrot.slane %v1128, 1
      %v1294 = vsel %vm1275, %v1291, %v1293
      %v1295 = vrot.slane %v1129, 1
      %v1296 = vsel %vm1275, %v1293, %v1295
      %v1297 = vrot.slane %v1130, 1
      %v1298 = vsel %vm1275, %v1295, %v1297
      %v1299 = vrot.slane %v1131, 1
      %v1300 = vsel %vm1275, %v1297, %v1299
      %v1301 = vrot.slane %v1132, 1
      %v1302 = vsel %vm1275, %v1299, %v1301
      %v1303 = vrot.slane %v1133, 1
      %v1304 = vsel %vm1275, %v1301, %v1303
      %v1305 = vrot.slane %v1134, 1
      %v1306 = vsel %vm1275, %v1303, %v1305
      %v1307 = vrot.slane %v1135, 1
      %v1308 = vsel %vm1275, %v1305, %v1307
      %v1309 = vrot.slane %v1136, 1
      %v1310 = vsel %vm1275, %v1307, %v1309
      %v1311 = vrot.slane %v1137, 1
      %v1312 = vsel %vm1275, %v1309, %v1311
      %v1313 = vrot.slane %v1138, 1
      %v1314 = vsel %vm1275, %v1311, %v1313
      %v1315 = vrot.slane %v1139, 1
      %v1316 = vsel %vm1275, %v1313, %v1315
      %v1317 = vrot.slane %v1140, 1
      %v1318 = vsel %vm1275, %v1315, %v1317
      %v1319 = vrot.slane %v1141, 1
      %v1320 = vsel %vm1275, %v1317, %v1319
      %v1321 = vrot.slane %v1142, 1
      %v1322 = vsel %vm1275, %v1319, %v1321
      %v1323 = vrot.slane %v1143, 1
      %v1324 = vsel %vm1275, %v1321, %v1323
      %v1325 = vrot.slane %v1144, 1
      %v1326 = vsel %vm1275, %v1323, %v1325
      %v1327 = vrot.slane %v1145, 1
      %v1328 = vsel %vm1275, %v1325, %v1327
      %v1329 = vrot.slane %v1146, 1
      %v1330 = vsel %vm1275, %v1327, %v1329
      %v1331 = vrot.slane %v1147, 1
      %v1332 = vsel %vm1275, %v1329, %v1331
      %v1333 = vrot.slane %v1148, 1
      %v1334 = vsel %vm1275, %v1331, %v1333
      %v1365 = vmul.f32 %v604, %v1278
      %v1366 = vmul.f32 %v605, %v1280
      %v1367 = vmul.f32 %v606, %v1282
      %v1368 = vmul.f32 %v607, %v1284
      %v1369 = vmul.f32 %v608, %v1286
      %v1370 = vmul.f32 %v609, %v1288
      %v1371 = vmul.f32 %v610, %v1290
      %v1372 = vmul.f32 %v611, %v1292
      %v1373 = vmul.f32 %v612, %v1294
      %v1374 = vmul.f32 %v613, %v1296
      %v1375 = vmul.f32 %v614, %v1298
      %v1376 = vmul.f32 %v615, %v1300
      %v1377 = vmul.f32 %v616, %v1302
      %v1378 = vmul.f32 %v617, %v1304
      %v1379 = vmul.f32 %v618, %v1306
      %v1380 = vmul.f32 %v619, %v1308
      %v1381 = vmul.f32 %v620, %v1310
      %v1382 = vmul.f32 %v621, %v1312
      %v1383 = vmul.f32 %v622, %v1314
      %v1384 = vmul.f32 %v623, %v1316
      %v1385 = vmul.f32 %v624, %v1318
      %v1386 = vmul.f32 %v625, %v1320
      %v1387 = vmul.f32 %v626, %v1322
      %v1388 = vmul.f32 %v627, %v1324
      %v1389 = vmul.f32 %v628, %v1326
      %v1390 = vmul.f32 %v629, %v1328
      %v1391 = vmul.f32 %v630, %v1330
      %v1392 = vmul.f32 %v631, %v1332
      %v1393 = vmul.f32 %v632, %v1334
      %v1394 = vmul.f32 %v633, %v1333
      %vm1395 = vcmask 31744
      %1396 = vst.msk [vmem:[#allocation2] sm:$0xff] %vm1395, 0.0
      %1397 = vst.msk [vmem:[#allocation2 + $0x8] sm:$0xff] %vm1395, 0.0
      %vm1398 = vcmask 24576
      %1399 = vst.msk [vmem:[#allocation2 + $0x10] sm:$0x1] %vm1398, 0.0
      %1400 = vst.msk [vmem:[#allocation2 + $0x11] sm:$0xff] %vm1395, %v1365
      %1401 = vst.msk [vmem:[#allocation2 + $0x19] sm:$0xff] %vm1395, %v1366
      %1402 = vst.msk [vmem:[#allocation2 + $0x21] sm:$0xff] %vm1395, %v1367
      %1403 = vst.msk [vmem:[#allocation2 + $0x29] sm:$0xff] %vm1395, %v1368
      %1404 = vst.msk [vmem:[#allocation2 + $0x31] sm:$0xff] %vm1395, %v1369
      %1405 = vst.msk [vmem:[#allocation2 + $0x39] sm:$0xff] %vm1395, %v1370
      %1406 = vst.msk [vmem:[#allocation2 + $0x41] sm:$0xff] %vm1395, %v1371
      %1407 = vst.msk [vmem:[#allocation2 + $0x49] sm:$0xff] %vm1395, %v1372
      %1408 = vst.msk [vmem:[#allocation2 + $0x51] sm:$0xff] %vm1395, %v1373
      %1409 = vst.msk [vmem:[#allocation2 + $0x59] sm:$0xff] %vm1395, %v1374
      %1410 = vst.msk [vmem:[#allocation2 + $0x61] sm:$0xff] %vm1395, %v1375
      %1411 = vst.msk [vmem:[#allocation2 + $0x69] sm:$0xff] %vm1395, %v1376
      %1412 = vst.msk [vmem:[#allocation2 + $0x71] sm:$0xff] %vm1395, %v1377
      %1413 = vst.msk [vmem:[#allocation2 + $0x79] sm:$0xff] %vm1395, %v1378
      %1414 = vst.msk [vmem:[#allocation2 + $0x81] sm:$0xff] %vm1395, %v1379
      %1415 = vst.msk [vmem:[#allocation2 + $0x89] sm:$0xff] %vm1395, %v1380
      %1416 = vst.msk [vmem:[#allocation2 + $0x91] sm:$0xff] %vm1395, %v1381
      %1417 = vst.msk [vmem:[#allocation2 + $0x99] sm:$0xff] %vm1395, %v1382
      %1418 = vst.msk [vmem:[#allocation2 + $0xa1] sm:$0xff] %vm1395, %v1383
      %1419 = vst.msk [vmem:[#allocation2 + $0xa9] sm:$0xff] %vm1395, %v1384
      %1420 = vst.msk [vmem:[#allocation2 + $0xb1] sm:$0xff] %vm1395, %v1385
      %1421 = vst.msk [vmem:[#allocation2 + $0xb9] sm:$0xff] %vm1395, %v1386
      %1422 = vst.msk [vmem:[#allocation2 + $0xc1] sm:$0xff] %vm1395, %v1387
      %1423 = vst.msk [vmem:[#allocation2 + $0xc9] sm:$0xff] %vm1395, %v1388
      %1424 = vst.msk [vmem:[#allocation2 + $0xd1] sm:$0xff] %vm1395, %v1389
      %1425 = vst.msk [vmem:[#allocation2 + $0xd9] sm:$0xff] %vm1395, %v1390
      %1426 = vst.msk [vmem:[#allocation2 + $0xe1] sm:$0xff] %vm1395, %v1391
      %1427 = vst.msk [vmem:[#allocation2 + $0xe9] sm:$0xff] %vm1395, %v1392
      %1428 = vst.msk [vmem:[#allocation2 + $0xf1] sm:$0xff] %vm1395, %v1393
      %vm1429 = vcmask 30720
      %1430 = vst.msk [vmem:[#allocation2 + $0xf9] sm:$0x7f] %vm1429, %v1394
      %vm1431 = vcmask 64544
      %1432 = vst.msk [vmem:[#allocation2] sm:$0xff] %vm1431, 0.0
      %1433 = vst.msk [vmem:[#allocation2 + $0x8] sm:$0xff] %vm1431, 0.0
      %1464 = vrot.lane.b32.xlu0 %v604, 4
      %v1465 = vpop.permute.xlu0 %1464
      %1466 = vrot.lane.b32.xlu0 %v605, 4
      %v1467 = vpop.permute.xlu0 %1466
      %1468 = vrot.lane.b32.xlu0 %v606, 4
      %v1469 = vpop.permute.xlu0 %1468
      %1470 = vrot.lane.b32.xlu0 %v607, 4
      %v1471 = vpop.permute.xlu0 %1470
      %1472 = vrot.lane.b32.xlu0 %v608, 4
      %v1473 = vpop.permute.xlu0 %1472
      %1474 = vrot.lane.b32.xlu0 %v609, 4
      %v1475 = vpop.permute.xlu0 %1474
      %1476 = vrot.lane.b32.xlu0 %v610, 4
      %v1477 = vpop.permute.xlu0 %1476
      %1478 = vrot.lane.b32.xlu0 %v611, 4
      %v1479 = vpop.permute.xlu0 %1478
      %1480 = vrot.lane.b32.xlu0 %v612, 4
      %v1481 = vpop.permute.xlu0 %1480
      %1482 = vrot.lane.b32.xlu0 %v613, 4
      %v1483 = vpop.permute.xlu0 %1482
      %1484 = vrot.lane.b32.xlu0 %v614, 4
      %v1485 = vpop.permute.xlu0 %1484
      %1486 = vrot.lane.b32.xlu0 %v615, 4
      %v1487 = vpop.permute.xlu0 %1486
      %1488 = vrot.lane.b32.xlu0 %v616, 4
      %v1489 = vpop.permute.xlu0 %1488
      %1490 = vrot.lane.b32.xlu0 %v617, 4
      %v1491 = vpop.permute.xlu0 %1490
      %1492 = vrot.lane.b32.xlu0 %v618, 4
      %v1493 = vpop.permute.xlu0 %1492
      %1494 = vrot.lane.b32.xlu0 %v619, 4
      %v1495 = vpop.permute.xlu0 %1494
      %1496 = vrot.lane.b32.xlu0 %v620, 4
      %v1497 = vpop.permute.xlu0 %1496
      %1498 = vrot.lane.b32.xlu0 %v621, 4
      %v1499 = vpop.permute.xlu0 %1498
      %1500 = vrot.lane.b32.xlu0 %v622, 4
      %v1501 = vpop.permute.xlu0 %1500
      %1502 = vrot.lane.b32.xlu0 %v623, 4
      %v1503 = vpop.permute.xlu0 %1502
      %1504 = vrot.lane.b32.xlu0 %v624, 4
      %v1505 = vpop.permute.xlu0 %1504
      %1506 = vrot.lane.b32.xlu0 %v625, 4
      %v1507 = vpop.permute.xlu0 %1506
      %1508 = vrot.lane.b32.xlu0 %v626, 4
      %v1509 = vpop.permute.xlu0 %1508
      %1510 = vrot.lane.b32.xlu0 %v627, 4
      %v1511 = vpop.permute.xlu0 %1510
      %1512 = vrot.lane.b32.xlu0 %v628, 4
      %v1513 = vpop.permute.xlu0 %1512
      %1514 = vrot.lane.b32.xlu0 %v629, 4
      %v1515 = vpop.permute.xlu0 %1514
      %1516 = vrot.lane.b32.xlu0 %v630, 4
      %v1517 = vpop.permute.xlu0 %1516
      %1518 = vrot.lane.b32.xlu0 %v631, 4
      %v1519 = vpop.permute.xlu0 %1518
      %1520 = vrot.lane.b32.xlu0 %v632, 4
      %v1521 = vpop.permute.xlu0 %1520
      %1522 = vrot.lane.b32.xlu0 %v633, 4
      %v1523 = vpop.permute.xlu0 %1522
      %1554 = vst.msk [vmem:[#allocation2 + $0x10] sm:$0xff] %vm1431, %v1465
      %1555 = vst.msk [vmem:[#allocation2 + $0x18] sm:$0xff] %vm1431, %v1467
      %1556 = vst.msk [vmem:[#allocation2 + $0x20] sm:$0xff] %vm1431, %v1469
      %1557 = vst.msk [vmem:[#allocation2 + $0x28] sm:$0xff] %vm1431, %v1471
      %1558 = vst.msk [vmem:[#allocation2 + $0x30] sm:$0xff] %vm1431, %v1473
      %1559 = vst.msk [vmem:[#allocation2 + $0x38] sm:$0xff] %vm1431, %v1475
      %1560 = vst.msk [vmem:[#allocation2 + $0x40] sm:$0xff] %vm1431, %v1477
      %1561 = vst.msk [vmem:[#allocation2 + $0x48] sm:$0xff] %vm1431, %v1479
      %1562 = vst.msk [vmem:[#allocation2 + $0x50] sm:$0xff] %vm1431, %v1481
      %1563 = vst.msk [vmem:[#allocation2 + $0x58] sm:$0xff] %vm1431, %v1483
      %1564 = vst.msk [vmem:[#allocation2 + $0x60] sm:$0xff] %vm1431, %v1485
      %1565 = vst.msk [vmem:[#allocation2 + $0x68] sm:$0xff] %vm1431, %v1487
      %1566 = vst.msk [vmem:[#allocation2 + $0x70] sm:$0xff] %vm1431, %v1489
      %1567 = vst.msk [vmem:[#allocation2 + $0x78] sm:$0xff] %vm1431, %v1491
      %1568 = vst.msk [vmem:[#allocation2 + $0x80] sm:$0xff] %vm1431, %v1493
      %1569 = vst.msk [vmem:[#allocation2 + $0x88] sm:$0xff] %vm1431, %v1495
      %1570 = vst.msk [vmem:[#allocation2 + $0x90] sm:$0xff] %vm1431, %v1497
      %1571 = vst.msk [vmem:[#allocation2 + $0x98] sm:$0xff] %vm1431, %v1499
      %1572 = vst.msk [vmem:[#allocation2 + $0xa0] sm:$0xff] %vm1431, %v1501
      %1573 = vst.msk [vmem:[#allocation2 + $0xa8] sm:$0xff] %vm1431, %v1503
      %1574 = vst.msk [vmem:[#allocation2 + $0xb0] sm:$0xff] %vm1431, %v1505
      %1575 = vst.msk [vmem:[#allocation2 + $0xb8] sm:$0xff] %vm1431, %v1507
      %1576 = vst.msk [vmem:[#allocation2 + $0xc0] sm:$0xff] %vm1431, %v1509
      %1577 = vst.msk [vmem:[#allocation2 + $0xc8] sm:$0xff] %vm1431, %v1511
      %1578 = vst.msk [vmem:[#allocation2 + $0xd0] sm:$0xff] %vm1431, %v1513
      %1579 = vst.msk [vmem:[#allocation2 + $0xd8] sm:$0xff] %vm1431, %v1515
      %1580 = vst.msk [vmem:[#allocation2 + $0xe0] sm:$0xff] %vm1431, %v1517
      %1581 = vst.msk [vmem:[#allocation2 + $0xe8] sm:$0xff] %vm1431, %v1519
      %1582 = vst.msk [vmem:[#allocation2 + $0xf0] sm:$0xff] %vm1431, %v1521
      %1583 = vst.msk [vmem:[#allocation2 + $0xf8] sm:$0xff] %vm1431, %v1523
      %vm1615 = vcmask 1040384
      %v1616 = vrot.slane %v1214, 7
      %v1617 = vrot.slane %v1215, 7
      %v1618 = vsel %vm1615, %v1616, %v1617
      %v1619 = vrot.slane %v1216, 7
      %v1620 = vsel %vm1615, %v1617, %v1619
      %v1621 = vrot.slane %v1217, 7
      %v1622 = vsel %vm1615, %v1619, %v1621
      %v1623 = vrot.slane %v1218, 7
      %v1624 = vsel %vm1615, %v1621, %v1623
      %v1625 = vrot.slane %v1219, 7
      %v1626 = vsel %vm1615, %v1623, %v1625
      %v1627 = vrot.slane %v1220, 7
      %v1628 = vsel %vm1615, %v1625, %v1627
      %v1629 = vrot.slane %v1221, 7
      %v1630 = vsel %vm1615, %v1627, %v1629
      %v1631 = vrot.slane %v1222, 7
      %v1632 = vsel %vm1615, %v1629, %v1631
      %v1633 = vrot.slane %v1223, 7
      %v1634 = vsel %vm1615, %v1631, %v1633
      %v1635 = vrot.slane %v1224, 7
      %v1636 = vsel %vm1615, %v1633, %v1635
      %v1637 = vrot.slane %v1225, 7
      %v1638 = vsel %vm1615, %v1635, %v1637
      %v1639 = vrot.slane %v1226, 7
      %v1640 = vsel %vm1615, %v1637, %v1639
      %v1641 = vrot.slane %v1227, 7
      %v1642 = vsel %vm1615, %v1639, %v1641
      %v1643 = vrot.slane %v1228, 7
      %v1644 = vsel %vm1615, %v1641, %v1643
      %v1645 = vrot.slane %v1229, 7
      %v1646 = vsel %vm1615, %v1643, %v1645
      %v1647 = vrot.slane %v1230, 7
      %v1648 = vsel %vm1615, %v1645, %v1647
      %v1649 = vrot.slane %v1231, 7
      %v1650 = vsel %vm1615, %v1647, %v1649
      %v1651 = vrot.slane %v1232, 7
      %v1652 = vsel %vm1615, %v1649, %v1651
      %v1653 = vrot.slane %v1233, 7
      %v1654 = vsel %vm1615, %v1651, %v1653
      %v1655 = vrot.slane %v1234, 7
      %v1656 = vsel %vm1615, %v1653, %v1655
      %v1657 = vrot.slane %v1235, 7
      %v1658 = vsel %vm1615, %v1655, %v1657
      %v1659 = vrot.slane %v1236, 7
      %v1660 = vsel %vm1615, %v1657, %v1659
      %v1661 = vrot.slane %v1237, 7
      %v1662 = vsel %vm1615, %v1659, %v1661
      %v1663 = vrot.slane %v1238, 7
      %v1664 = vsel %vm1615, %v1661, %v1663
      %v1665 = vrot.slane %v1239, 7
      %v1666 = vsel %vm1615, %v1663, %v1665
      %v1667 = vrot.slane %v1240, 7
      %v1668 = vsel %vm1615, %v1665, %v1667
      %v1669 = vrot.slane %v1241, 7
      %v1670 = vsel %vm1615, %v1667, %v1669
      %v1671 = vrot.slane %v1242, 7
      %v1672 = vsel %vm1615, %v1669, %v1671
      %v1673 = vrot.slane %v1243, 7
      %v1674 = vsel %vm1615, %v1671, %v1673
      %v1675 = vrot.slane %v1244, 7
      %v1676 = vsel %vm1615, %v1673, %v1675
      %v1708 = vmul.f32 %v604, %v1618
      %v1709 = vmul.f32 %v605, %v1620
      %v1710 = vmul.f32 %v606, %v1622
      %v1711 = vmul.f32 %v607, %v1624
      %v1712 = vmul.f32 %v608, %v1626
      %v1713 = vmul.f32 %v609, %v1628
      %v1714 = vmul.f32 %v610, %v1630
      %v1715 = vmul.f32 %v611, %v1632
      %v1716 = vmul.f32 %v612, %v1634
      %v1717 = vmul.f32 %v613, %v1636
      %v1718 = vmul.f32 %v614, %v1638
      %v1719 = vmul.f32 %v615, %v1640
      %v1720 = vmul.f32 %v616, %v1642
      %v1721 = vmul.f32 %v617, %v1644
      %v1722 = vmul.f32 %v618, %v1646
      %v1723 = vmul.f32 %v619, %v1648
      %v1724 = vmul.f32 %v620, %v1650
      %v1725 = vmul.f32 %v621, %v1652
      %v1726 = vmul.f32 %v622, %v1654
      %v1727 = vmul.f32 %v623, %v1656
      %v1728 = vmul.f32 %v624, %v1658
      %v1729 = vmul.f32 %v625, %v1660
      %v1730 = vmul.f32 %v626, %v1662
      %v1731 = vmul.f32 %v627, %v1664
      %v1732 = vmul.f32 %v628, %v1666
      %v1733 = vmul.f32 %v629, %v1668
      %v1734 = vmul.f32 %v630, %v1670
      %v1735 = vmul.f32 %v631, %v1672
      %v1736 = vmul.f32 %v632, %v1674
      %v1737 = vmul.f32 %v633, %v1676
      %v1738 = vmul.f32 %v634, %v1675
      %vm1739 = vcmask 97344
      %1740 = vst.msk [vmem:[#allocation2] sm:$0xff] %vm1739, 0.0
      %vm1741 = vcmask 96320
      %1742 = vst.msk [vmem:[#allocation2 + $0x8] sm:$0x7f] %vm1741, 0.0
      %1774 = vrot.lane.b32.xlu0 %v1708, 8
      %v1775 = vpop.permute.xlu0 %1774
      %1776 = vrot.lane.b32.xlu0 %v1709, 8
      %v1777 = vpop.permute.xlu0 %1776
      %1778 = vrot.lane.b32.xlu0 %v1710, 8
      %v1779 = vpop.permute.xlu0 %1778
      %1780 = vrot.lane.b32.xlu0 %v1711, 8
      %v1781 = vpop.permute.xlu0 %1780
      %1782 = vrot.lane.b32.xlu0 %v1712, 8
      %v1783 = vpop.permute.xlu0 %1782
      %1784 = vrot.lane.b32.xlu0 %v1713, 8
      %v1785 = vpop.permute.xlu0 %1784
      %1786 = vrot.lane.b32.xlu0 %v1714, 8
      %v1787 = vpop.permute.xlu0 %1786
      %1788 = vrot.lane.b32.xlu0 %v1715, 8
      %v1789 = vpop.permute.xlu0 %1788
      %1790 = vrot.lane.b32.xlu0 %v1716, 8
      %v1791 = vpop.permute.xlu0 %1790
      %1792 = vrot.lane.b32.xlu0 %v1717, 8
      %v1793 = vpop.permute.xlu0 %1792
      %1794 = vrot.lane.b32.xlu0 %v1718, 8
      %v1795 = vpop.permute.xlu0 %1794
      %1796 = vrot.lane.b32.xlu0 %v1719, 8
      %v1797 = vpop.permute.xlu0 %1796
      %1798 = vrot.lane.b32.xlu0 %v1720, 8
      %v1799 = vpop.permute.xlu0 %1798
      %1800 = vrot.lane.b32.xlu0 %v1721, 8
      %v1801 = vpop.permute.xlu0 %1800
      %1802 = vrot.lane.b32.xlu0 %v1722, 8
      %v1803 = vpop.permute.xlu0 %1802
      %1804 = vrot.lane.b32.xlu0 %v1723, 8
      %v1805 = vpop.permute.xlu0 %1804
      %1806 = vrot.lane.b32.xlu0 %v1724, 8
      %v1807 = vpop.permute.xlu0 %1806
      %1808 = vrot.lane.b32.xlu0 %v1725, 8
      %v1809 = vpop.permute.xlu0 %1808
      %1810 = vrot.lane.b32.xlu0 %v1726, 8
      %v1811 = vpop.permute.xlu0 %1810
      %1812 = vrot.lane.b32.xlu0 %v1727, 8
      %v1813 = vpop.permute.xlu0 %1812
      %1814 = vrot.lane.b32.xlu0 %v1728, 8
      %v1815 = vpop.permute.xlu0 %1814
      %1816 = vrot.lane.b32.xlu0 %v1729, 8
      %v1817 = vpop.permute.xlu0 %1816
      %1818 = vrot.lane.b32.xlu0 %v1730, 8
      %v1819 = vpop.permute.xlu0 %1818
      %1820 = vrot.lane.b32.xlu0 %v1731, 8
      %v1821 = vpop.permute.xlu0 %1820
      %1822 = vrot.lane.b32.xlu0 %v1732, 8
      %v1823 = vpop.permute.xlu0 %1822
      %1824 = vrot.lane.b32.xlu0 %v1733, 8
      %v1825 = vpop.permute.xlu0 %1824
      %1826 = vrot.lane.b32.xlu0 %v1734, 8
      %v1827 = vpop.permute.xlu0 %1826
      %1828 = vrot.lane.b32.xlu0 %v1735, 8
      %v1829 = vpop.permute.xlu0 %1828
      %1830 = vrot.lane.b32.xlu0 %v1736, 8
      %v1831 = vpop.permute.xlu0 %1830
      %1832 = vrot.lane.b32.xlu0 %v1737, 8
      %v1833 = vpop.permute.xlu0 %1832
      %1834 = vrot.lane.b32.xlu0 %v1738, 8
      %v1835 = vpop.permute.xlu0 %1834
      %1867 = vst.msk [vmem:[#allocation2 + $0xf] sm:$0xff] %vm1739, %v1775
      %1868 = vst.msk [vmem:[#allocation2 + $0x17] sm:$0xff] %vm1739, %v1777
      %1869 = vst.msk [vmem:[#allocation2 + $0x1f] sm:$0xff] %vm1739, %v1779
      %1870 = vst.msk [vmem:[#allocation2 + $0x27] sm:$0xff] %vm1739, %v1781
      %1871 = vst.msk [vmem:[#allocation2 + $0x2f] sm:$0xff] %vm1739, %v1783
      %1872 = vst.msk [vmem:[#allocation2 + $0x37] sm:$0xff] %vm1739, %v1785
      %1873 = vst.msk [vmem:[#allocation2 + $0x3f] sm:$0xff] %vm1739, %v1787
      %1874 = vst.msk [vmem:[#allocation2 + $0x47] sm:$0xff] %vm1739, %v1789
      %1875 = vst.msk [vmem:[#allocation2 + $0x4f] sm:$0xff] %vm1739, %v1791
      %1876 = vst.msk [vmem:[#allocation2 + $0x57] sm:$0xff] %vm1739, %v1793
      %1877 = vst.msk [vmem:[#allocation2 + $0x5f] sm:$0xff] %vm1739, %v1795
      %1878 = vst.msk [vmem:[#allocation2 + $0x67] sm:$0xff] %vm1739, %v1797
      %1879 = vst.msk [vmem:[#allocation2 + $0x6f] sm:$0xff] %vm1739, %v1799
      %1880 = vst.msk [vmem:[#allocation2 + $0x77] sm:$0xff] %vm1739, %v1801
      %1881 = vst.msk [vmem:[#allocation2 + $0x7f] sm:$0xff] %vm1739, %v1803
      %1882 = vst.msk [vmem:[#allocation2 + $0x87] sm:$0xff] %vm1739, %v1805
      %1883 = vst.msk [vmem:[#allocation2 + $0x8f] sm:$0xff] %vm1739, %v1807
      %1884 = vst.msk [vmem:[#allocation2 + $0x97] sm:$0xff] %vm1739, %v1809
      %1885 = vst.msk [vmem:[#allocation2 + $0x9f] sm:$0xff] %vm1739, %v1811
      %1886 = vst.msk [vmem:[#allocation2 + $0xa7] sm:$0xff] %vm1739, %v1813
      %1887 = vst.msk [vmem:[#allocation2 + $0xaf] sm:$0xff] %vm1739, %v1815
      %1888 = vst.msk [vmem:[#allocation2 + $0xb7] sm:$0xff] %vm1739, %v1817
      %1889 = vst.msk [vmem:[#allocation2 + $0xbf] sm:$0xff] %vm1739, %v1819
      %1890 = vst.msk [vmem:[#allocation2 + $0xc7] sm:$0xff] %vm1739, %v1821
      %1891 = vst.msk [vmem:[#allocation2 + $0xcf] sm:$0xff] %vm1739, %v1823
      %1892 = vst.msk [vmem:[#allocation2 + $0xd7] sm:$0xff] %vm1739, %v1825
      %1893 = vst.msk [vmem:[#allocation2 + $0xdf] sm:$0xff] %vm1739, %v1827
      %1894 = vst.msk [vmem:[#allocation2 + $0xe7] sm:$0xff] %vm1739, %v1829
      %1895 = vst.msk [vmem:[#allocation2 + $0xef] sm:$0xff] %vm1739, %v1831
      %1896 = vst.msk [vmem:[#allocation2 + $0xf7] sm:$0xff] %vm1739, %v1833
      %vm1897 = vcmask 90176
      %1898 = vst.msk [vmem:[#allocation2 + $0xff] sm:$0x1] %vm1897, %v1835
      %v1901 = vrot.slane %v1117, 1
      %v1902 = vrot.slane %v1118, 1
      %v1903 = vsel %vm1275, %v1901, %v1902
      %v1904 = vsel %vm1275, %v1902, %v1276
      %v1907 = vmul.f32 %v604, %v1903
      %v1908 = vmul.f32 %v605, %v1904
      %v1909 = vmul.f32 %v606, %v1278
      %v1910 = vmul.f32 %v607, %v1280
      %v1911 = vmul.f32 %v608, %v1282
      %v1912 = vmul.f32 %v609, %v1284
      %v1913 = vmul.f32 %v610, %v1286
      %v1914 = vmul.f32 %v611, %v1288
      %v1915 = vmul.f32 %v612, %v1290
      %v1916 = vmul.f32 %v613, %v1292
      %v1917 = vmul.f32 %v614, %v1294
      %v1918 = vmul.f32 %v615, %v1296
      %v1919 = vmul.f32 %v616, %v1298
      %v1920 = vmul.f32 %v617, %v1300
      %v1921 = vmul.f32 %v618, %v1302
      %v1922 = vmul.f32 %v619, %v1304
      %v1923 = vmul.f32 %v620, %v1306
      %v1924 = vmul.f32 %v621, %v1308
      %v1925 = vmul.f32 %v622, %v1310
      %v1926 = vmul.f32 %v623, %v1312
      %v1927 = vmul.f32 %v624, %v1314
      %v1928 = vmul.f32 %v625, %v1316
      %v1929 = vmul.f32 %v626, %v1318
      %v1930 = vmul.f32 %v627, %v1320
      %v1931 = vmul.f32 %v628, %v1322
      %v1932 = vmul.f32 %v629, %v1324
      %v1933 = vmul.f32 %v630, %v1326
      %v1934 = vmul.f32 %v631, %v1328
      %v1935 = vmul.f32 %v632, %v1330
      %v1936 = vmul.f32 %v633, %v1332
      %v1937 = vmul.f32 %v634, %v1334
      %v1938 = vmul.f32 %v635, %v1333
      %vm1939 = vcmask 122976
      %1940 = vst.msk [vmem:[#allocation2] sm:$0x1] %vm1939, 0.0
      %1973 = vrot.lane.b32.xlu0 %v1907, 12
      %v1974 = vpop.permute.xlu0 %1973
      %1975 = vrot.lane.b32.xlu0 %v1908, 12
      %v1976 = vpop.permute.xlu0 %1975
      %1977 = vrot.lane.b32.xlu0 %v1909, 12
      %v1978 = vpop.permute.xlu0 %1977
      %1979 = vrot.lane.b32.xlu0 %v1910, 12
      %v1980 = vpop.permute.xlu0 %1979
      %1981 = vrot.lane.b32.xlu0 %v1911, 12
      %v1982 = vpop.permute.xlu0 %1981
      %1983 = vrot.lane.b32.xlu0 %v1912, 12
      %v1984 = vpop.permute.xlu0 %1983
      %1985 = vrot.lane.b32.xlu0 %v1913, 12
      %v1986 = vpop.permute.xlu0 %1985
      %1987 = vrot.lane.b32.xlu0 %v1914, 12
      %v1988 = vpop.permute.xlu0 %1987
      %1989 = vrot.lane.b32.xlu0 %v1915, 12
      %v1990 = vpop.permute.xlu0 %1989
      %1991 = vrot.lane.b32.xlu0 %v1916, 12
      %v1992 = vpop.permute.xlu0 %1991
      %1993 = vrot.lane.b32.xlu0 %v1917, 12
      %v1994 = vpop.permute.xlu0 %1993
      %1995 = vrot.lane.b32.xlu0 %v1918, 12
      %v1996 = vpop.permute.xlu0 %1995
      %1997 = vrot.lane.b32.xlu0 %v1919, 12
      %v1998 = vpop.permute.xlu0 %1997
      %1999 = vrot.lane.b32.xlu0 %v1920, 12
      %v2000 = vpop.permute.xlu0 %1999
      %2001 = vrot.lane.b32.xlu0 %v1921, 12
      %v2002 = vpop.permute.xlu0 %2001
      %2003 = vrot.lane.b32.xlu0 %v1922, 12
      %v2004 = vpop.permute.xlu0 %2003
      %2005 = vrot.lane.b32.xlu0 %v1923, 12
      %v2006 = vpop.permute.xlu0 %2005
      %2007 = vrot.lane.b32.xlu0 %v1924, 12
      %v2008 = vpop.permute.xlu0 %2007
      %2009 = vrot.lane.b32.xlu0 %v1925, 12
      %v2010 = vpop.permute.xlu0 %2009
      %2011 = vrot.lane.b32.xlu0 %v1926, 12
      %v2012 = vpop.permute.xlu0 %2011
      %2013 = vrot.lane.b32.xlu0 %v1927, 12
      %v2014 = vpop.permute.xlu0 %2013
      %2015 = vrot.lane.b32.xlu0 %v1928, 12
      %v2016 = vpop.permute.xlu0 %2015
      %2017 = vrot.lane.b32.xlu0 %v1929, 12
      %v2018 = vpop.permute.xlu0 %2017
      %2019 = vrot.lane.b32.xlu0 %v1930, 12
      %v2020 = vpop.permute.xlu0 %2019
      %2021 = vrot.lane.b32.xlu0 %v1931, 12
      %v2022 = vpop.permute.xlu0 %2021
      %2023 = vrot.lane.b32.xlu0 %v1932, 12
      %v2024 = vpop.permute.xlu0 %2023
      %2025 = vrot.lane.b32.xlu0 %v1933, 12
      %v2026 = vpop.permute.xlu0 %2025
      %2027 = vrot.lane.b32.xlu0 %v1934, 12
      %v2028 = vpop.permute.xlu0 %2027
      %2029 = vrot.lane.b32.xlu0 %v1935, 12
      %v2030 = vpop.permute.xlu0 %2029
      %2031 = vrot.lane.b32.xlu0 %v1936, 12
      %v2032 = vpop.permute.xlu0 %2031
      %2033 = vrot.lane.b32.xlu0 %v1937, 12
      %v2034 = vpop.permute.xlu0 %2033
      %2035 = vrot.lane.b32.xlu0 %v1938, 12
      %v2036 = vpop.permute.xlu0 %2035
      %vm2069 = vcmask 130144
      %2070 = vst.msk [vmem:[#allocation2 + $0x1] sm:$0xff] %vm2069, %v1974
      %2071 = vst.msk [vmem:[#allocation2 + $0x9] sm:$0xff] %vm2069, %v1976
      %2072 = vst.msk [vmem:[#allocation2 + $0x11] sm:$0xff] %vm2069, %v1978
      %2073 = vst.msk [vmem:[#allocation2 + $0x19] sm:$0xff] %vm2069, %v1980
      %2074 = vst.msk [vmem:[#allocation2 + $0x21] sm:$0xff] %vm2069, %v1982
      %2075 = vst.msk [vmem:[#allocation2 + $0x29] sm:$0xff] %vm2069, %v1984
      %2076 = vst.msk [vmem:[#allocation2 + $0x31] sm:$0xff] %vm2069, %v1986
      %2077 = vst.msk [vmem:[#allocation2 + $0x39] sm:$0xff] %vm2069, %v1988
      %2078 = vst.msk [vmem:[#allocation2 + $0x41] sm:$0xff] %vm2069, %v1990
      %2079 = vst.msk [vmem:[#allocation2 + $0x49] sm:$0xff] %vm2069, %v1992
      %2080 = vst.msk [vmem:[#allocation2 + $0x51] sm:$0xff] %vm2069, %v1994
      %2081 = vst.msk [vmem:[#allocation2 + $0x59] sm:$0xff] %vm2069, %v1996
      %2082 = vst.msk [vmem:[#allocation2 + $0x61] sm:$0xff] %vm2069, %v1998
      %2083 = vst.msk [vmem:[#allocation2 + $0x69] sm:$0xff] %vm2069, %v2000
      %2084 = vst.msk [vmem:[#allocation2 + $0x71] sm:$0xff] %vm2069, %v2002
      %2085 = vst.msk [vmem:[#allocation2 + $0x79] sm:$0xff] %vm2069, %v2004
      %2086 = vst.msk [vmem:[#allocation2 + $0x81] sm:$0xff] %vm2069, %v2006
      %2087 = vst.msk [vmem:[#allocation2 + $0x89] sm:$0xff] %vm2069, %v2008
      %2088 = vst.msk [vmem:[#allocation2 + $0x91] sm:$0xff] %vm2069, %v2010
      %2089 = vst.msk [vmem:[#allocation2 + $0x99] sm:$0xff] %vm2069, %v2012
      %2090 = vst.msk [vmem:[#allocation2 + $0xa1] sm:$0xff] %vm2069, %v2014
      %2091 = vst.msk [vmem:[#allocation2 + $0xa9] sm:$0xff] %vm2069, %v2016
      %2092 = vst.msk [vmem:[#allocation2 + $0xb1] sm:$0xff] %vm2069, %v2018
      %2093 = vst.msk [vmem:[#allocation2 + $0xb9] sm:$0xff] %vm2069, %v2020
      %2094 = vst.msk [vmem:[#allocation2 + $0xc1] sm:$0xff] %vm2069, %v2022
      %2095 = vst.msk [vmem:[#allocation2 + $0xc9] sm:$0xff] %vm2069, %v2024
      %2096 = vst.msk [vmem:[#allocation2 + $0xd1] sm:$0xff] %vm2069, %v2026
      %2097 = vst.msk [vmem:[#allocation2 + $0xd9] sm:$0xff] %vm2069, %v2028
      %2098 = vst.msk [vmem:[#allocation2 + $0xe1] sm:$0xff] %vm2069, %v2030
      %2099 = vst.msk [vmem:[#allocation2 + $0xe9] sm:$0xff] %vm2069, %v2032
      %2100 = vst.msk [vmem:[#allocation2 + $0xf1] sm:$0xff] %vm2069, %v2034
      %vm2101 = vcmask 129120
      %2102 = vst.msk [vmem:[#allocation2 + $0xf9] sm:$0x7f] %vm2101, %v2036
      %2105 = vrot.lane.b32.xlu0 %v604, 16
      %v2106 = vpop.permute.xlu0 %2105
      %2107 = vrot.lane.b32.xlu0 %v605, 16
      %v2108 = vpop.permute.xlu0 %2107
      %2109 = vrot.lane.b32.xlu0 %v606, 16
      %v2110 = vpop.permute.xlu0 %2109
      %2111 = vrot.lane.b32.xlu0 %v607, 16
      %v2112 = vpop.permute.xlu0 %2111
      %2113 = vrot.lane.b32.xlu0 %v608, 16
      %v2114 = vpop.permute.xlu0 %2113
      %2115 = vrot.lane.b32.xlu0 %v609, 16
      %v2116 = vpop.permute.xlu0 %2115
      %2117 = vrot.lane.b32.xlu0 %v610, 16
      %v2118 = vpop.permute.xlu0 %2117
      %2119 = vrot.lane.b32.xlu0 %v611, 16
      %v2120 = vpop.permute.xlu0 %2119
      %2121 = vrot.lane.b32.xlu0 %v612, 16
      %v2122 = vpop.permute.xlu0 %2121
      %2123 = vrot.lane.b32.xlu0 %v613, 16
      %v2124 = vpop.permute.xlu0 %2123
      %2125 = vrot.lane.b32.xlu0 %v614, 16
      %v2126 = vpop.permute.xlu0 %2125
      %2127 = vrot.lane.b32.xlu0 %v615, 16
      %v2128 = vpop.permute.xlu0 %2127
      %2129 = vrot.lane.b32.xlu0 %v616, 16
      %v2130 = vpop.permute.xlu0 %2129
      %2131 = vrot.lane.b32.xlu0 %v617, 16
      %v2132 = vpop.permute.xlu0 %2131
      %2133 = vrot.lane.b32.xlu0 %v618, 16
      %v2134 = vpop.permute.xlu0 %2133
      %2135 = vrot.lane.b32.xlu0 %v619, 16
      %v2136 = vpop.permute.xlu0 %2135
      %2137 = vrot.lane.b32.xlu0 %v620, 16
      %v2138 = vpop.permute.xlu0 %2137
      %2139 = vrot.lane.b32.xlu0 %v621, 16
      %v2140 = vpop.permute.xlu0 %2139
      %2141 = vrot.lane.b32.xlu0 %v622, 16
      %v2142 = vpop.permute.xlu0 %2141
      %2143 = vrot.lane.b32.xlu0 %v623, 16
      %v2144 = vpop.permute.xlu0 %2143
      %2145 = vrot.lane.b32.xlu0 %v624, 16
      %v2146 = vpop.permute.xlu0 %2145
      %2147 = vrot.lane.b32.xlu0 %v625, 16
      %v2148 = vpop.permute.xlu0 %2147
      %2149 = vrot.lane.b32.xlu0 %v626, 16
      %v2150 = vpop.permute.xlu0 %2149
      %2151 = vrot.lane.b32.xlu0 %v627, 16
      %v2152 = vpop.permute.xlu0 %2151
      %2153 = vrot.lane.b32.xlu0 %v628, 16
      %v2154 = vpop.permute.xlu0 %2153
      %2155 = vrot.lane.b32.xlu0 %v629, 16
      %v2156 = vpop.permute.xlu0 %2155
      %2157 = vrot.lane.b32.xlu0 %v630, 16
      %v2158 = vpop.permute.xlu0 %2157
      %2159 = vrot.lane.b32.xlu0 %v631, 16
      %v2160 = vpop.permute.xlu0 %2159
      %2161 = vrot.lane.b32.xlu0 %v632, 16
      %v2162 = vpop.permute.xlu0 %2161
      %2163 = vrot.lane.b32.xlu0 %v633, 16
      %v2164 = vpop.permute.xlu0 %2163
      %2165 = vrot.lane.b32.xlu0 %v634, 16
      %v2166 = vpop.permute.xlu0 %2165
      %2167 = vrot.lane.b32.xlu0 %v635, 16
      %v2168 = vpop.permute.xlu0 %2167
      %vm2201 = vcmask 162944
      %2202 = vst.msk [vmem:[#allocation2] sm:$0xff] %vm2201, %v2106
      %2203 = vst.msk [vmem:[#allocation2 + $0x8] sm:$0xff] %vm2201, %v2108
      %2204 = vst.msk [vmem:[#allocation2 + $0x10] sm:$0xff] %vm2201, %v2110
      %2205 = vst.msk [vmem:[#allocation2 + $0x18] sm:$0xff] %vm2201, %v2112
      %2206 = vst.msk [vmem:[#allocation2 + $0x20] sm:$0xff] %vm2201, %v2114
      %2207 = vst.msk [vmem:[#allocation2 + $0x28] sm:$0xff] %vm2201, %v2116
      %2208 = vst.msk [vmem:[#allocation2 + $0x30] sm:$0xff] %vm2201, %v2118
      %2209 = vst.msk [vmem:[#allocation2 + $0x38] sm:$0xff] %vm2201, %v2120
      %2210 = vst.msk [vmem:[#allocation2 + $0x40] sm:$0xff] %vm2201, %v2122
      %2211 = vst.msk [vmem:[#allocation2 + $0x48] sm:$0xff] %vm2201, %v2124
      %2212 = vst.msk [vmem:[#allocation2 + $0x50] sm:$0xff] %vm2201, %v2126
      %2213 = vst.msk [vmem:[#allocation2 + $0x58] sm:$0xff] %vm2201, %v2128
      %2214 = vst.msk [vmem:[#allocation2 + $0x60] sm:$0xff] %vm2201, %v2130
      %2215 = vst.msk [vmem:[#allocation2 + $0x68] sm:$0xff] %vm2201, %v2132
      %2216 = vst.msk [vmem:[#allocation2 + $0x70] sm:$0xff] %vm2201, %v2134
      %2217 = vst.msk [vmem:[#allocation2 + $0x78] sm:$0xff] %vm2201, %v2136
      %2218 = vst.msk [vmem:[#allocation2 + $0x80] sm:$0xff] %vm2201, %v2138
      %2219 = vst.msk [vmem:[#allocation2 + $0x88] sm:$0xff] %vm2201, %v2140
      %2220 = vst.msk [vmem:[#allocation2 + $0x90] sm:$0xff] %vm2201, %v2142
      %2221 = vst.msk [vmem:[#allocation2 + $0x98] sm:$0xff] %vm2201, %v2144
      %2222 = vst.msk [vmem:[#allocation2 + $0xa0] sm:$0xff] %vm2201, %v2146
      %2223 = vst.msk [vmem:[#allocation2 + $0xa8] sm:$0xff] %vm2201, %v2148
      %2224 = vst.msk [vmem:[#allocation2 + $0xb0] sm:$0xff] %vm2201, %v2150
      %2225 = vst.msk [vmem:[#allocation2 + $0xb8] sm:$0xff] %vm2201, %v2152
      %2226 = vst.msk [vmem:[#allocation2 + $0xc0] sm:$0xff] %vm2201, %v2154
      %2227 = vst.msk [vmem:[#allocation2 + $0xc8] sm:$0xff] %vm2201, %v2156
      %2228 = vst.msk [vmem:[#allocation2 + $0xd0] sm:$0xff] %vm2201, %v2158
      %2229 = vst.msk [vmem:[#allocation2 + $0xd8] sm:$0xff] %vm2201, %v2160
      %2230 = vst.msk [vmem:[#allocation2 + $0xe0] sm:$0xff] %vm2201, %v2162
      %2231 = vst.msk [vmem:[#allocation2 + $0xe8] sm:$0xff] %vm2201, %v2164
      %2232 = vst.msk [vmem:[#allocation2 + $0xf0] sm:$0xff] %vm2201, %v2166
      %2233 = vst.msk [vmem:[#allocation2 + $0xf8] sm:$0xff] %vm2201, %v2168
      %v2235 = vrot.slane %v1213, 7
      %v2236 = vsel %vm1615, %v2235, %v1616
      %v2239 = vmul.f32 %v604, %v2235
      %v2240 = vmul.f32 %v605, %v2236
      %v2241 = vmul.f32 %v606, %v1618
      %v2242 = vmul.f32 %v607, %v1620
      %v2243 = vmul.f32 %v608, %v1622
      %v2244 = vmul.f32 %v609, %v1624
      %v2245 = vmul.f32 %v610, %v1626
      %v2246 = vmul.f32 %v611, %v1628
      %v2247 = vmul.f32 %v612, %v1630
      %v2248 = vmul.f32 %v613, %v1632
      %v2249 = vmul.f32 %v614, %v1634
      %v2250 = vmul.f32 %v615, %v1636
      %v2251 = vmul.f32 %v616, %v1638
      %v2252 = vmul.f32 %v617, %v1640
      %v2253 = vmul.f32 %v618, %v1642
      %v2254 = vmul.f32 %v619, %v1644
      %v2255 = vmul.f32 %v620, %v1646
      %v2256 = vmul.f32 %v621, %v1648
      %v2257 = vmul.f32 %v622, %v1650
      %v2258 = vmul.f32 %v623, %v1652
      %v2259 = vmul.f32 %v624, %v1654
      %v2260 = vmul.f32 %v625, %v1656
      %v2261 = vmul.f32 %v626, %v1658
      %v2262 = vmul.f32 %v627, %v1660
      %v2263 = vmul.f32 %v628, %v1662
      %v2264 = vmul.f32 %v629, %v1664
      %v2265 = vmul.f32 %v630, %v1666
      %v2266 = vmul.f32 %v631, %v1668
      %v2267 = vmul.f32 %v632, %v1670
      %v2268 = vmul.f32 %v633, %v1672
      %v2269 = vmul.f32 %v634, %v1674
      %v2270 = vmul.f32 %v635, %v1676
      %2303 = vrot.lane.b32.xlu0 %v2239, 20
      %v2304 = vpop.permute.xlu0 %2303
      %2305 = vrot.lane.b32.xlu0 %v2240, 20
      %v2306 = vpop.permute.xlu0 %2305
      %2307 = vrot.lane.b32.xlu0 %v2241, 20
      %v2308 = vpop.permute.xlu0 %2307
      %2309 = vrot.lane.b32.xlu0 %v2242, 20
      %v2310 = vpop.permute.xlu0 %2309
      %2311 = vrot.lane.b32.xlu0 %v2243, 20
      %v2312 = vpop.permute.xlu0 %2311
      %2313 = vrot.lane.b32.xlu0 %v2244, 20
      %v2314 = vpop.permute.xlu0 %2313
      %2315 = vrot.lane.b32.xlu0 %v2245, 20
      %v2316 = vpop.permute.xlu0 %2315
      %2317 = vrot.lane.b32.xlu0 %v2246, 20
      %v2318 = vpop.permute.xlu0 %2317
      %2319 = vrot.lane.b32.xlu0 %v2247, 20
      %v2320 = vpop.permute.xlu0 %2319
      %2321 = vrot.lane.b32.xlu0 %v2248, 20
      %v2322 = vpop.permute.xlu0 %2321
      %2323 = vrot.lane.b32.xlu0 %v2249, 20
      %v2324 = vpop.permute.xlu0 %2323
      %2325 = vrot.lane.b32.xlu0 %v2250, 20
      %v2326 = vpop.permute.xlu0 %2325
      %2327 = vrot.lane.b32.xlu0 %v2251, 20
      %v2328 = vpop.permute.xlu0 %2327
      %2329 = vrot.lane.b32.xlu0 %v2252, 20
      %v2330 = vpop.permute.xlu0 %2329
      %2331 = vrot.lane.b32.xlu0 %v2253, 20
      %v2332 = vpop.permute.xlu0 %2331
      %2333 = vrot.lane.b32.xlu0 %v2254, 20
      %v2334 = vpop.permute.xlu0 %2333
      %2335 = vrot.lane.b32.xlu0 %v2255, 20
      %v2336 = vpop.permute.xlu0 %2335
      %2337 = vrot.lane.b32.xlu0 %v2256, 20
      %v2338 = vpop.permute.xlu0 %2337
      %2339 = vrot.lane.b32.xlu0 %v2257, 20
      %v2340 = vpop.permute.xlu0 %2339
      %2341 = vrot.lane.b32.xlu0 %v2258, 20
      %v2342 = vpop.permute.xlu0 %2341
      %2343 = vrot.lane.b32.xlu0 %v2259, 20
      %v2344 = vpop.permute.xlu0 %2343
      %2345 = vrot.lane.b32.xlu0 %v2260, 20
      %v2346 = vpop.permute.xlu0 %2345
      %2347 = vrot.lane.b32.xlu0 %v2261, 20
      %v2348 = vpop.permute.xlu0 %2347
      %2349 = vrot.lane.b32.xlu0 %v2262, 20
      %v2350 = vpop.permute.xlu0 %2349
      %2351 = vrot.lane.b32.xlu0 %v2263, 20
      %v2352 = vpop.permute.xlu0 %2351
      %2353 = vrot.lane.b32.xlu0 %v2264, 20
      %v2354 = vpop.permute.xlu0 %2353
      %2355 = vrot.lane.b32.xlu0 %v2265, 20
      %v2356 = vpop.permute.xlu0 %2355
      %2357 = vrot.lane.b32.xlu0 %v2266, 20
      %v2358 = vpop.permute.xlu0 %2357
      %2359 = vrot.lane.b32.xlu0 %v2267, 20
      %v2360 = vpop.permute.xlu0 %2359
      %2361 = vrot.lane.b32.xlu0 %v2268, 20
      %v2362 = vpop.permute.xlu0 %2361
      %2363 = vrot.lane.b32.xlu0 %v2269, 20
      %v2364 = vpop.permute.xlu0 %2363
      %2365 = vrot.lane.b32.xlu0 %v2270, 20
      %v2366 = vpop.permute.xlu0 %2365
      %vm2399 = vcmask 195745
      %2400 = vst.msk [vmem:[#allocation2 - $0x1] sm:$0xfe] %vm2399, %v2304
      %vm2401 = vcmask 195744
      %2402 = vst.msk [vmem:[#allocation2 + $0x7] sm:$0xff] %vm2401, %v2306
      %2403 = vst.msk [vmem:[#allocation2 + $0xf] sm:$0xff] %vm2401, %v2308
      %2404 = vst.msk [vmem:[#allocation2 + $0x17] sm:$0xff] %vm2401, %v2310
      %2405 = vst.msk [vmem:[#allocation2 + $0x1f] sm:$0xff] %vm2401, %v2312
      %2406 = vst.msk [vmem:[#allocation2 + $0x27] sm:$0xff] %vm2401, %v2314
      %2407 = vst.msk [vmem:[#allocation2 + $0x2f] sm:$0xff] %vm2401, %v2316
      %2408 = vst.msk [vmem:[#allocation2 + $0x37] sm:$0xff] %vm2401, %v2318
      %2409 = vst.msk [vmem:[#allocation2 + $0x3f] sm:$0xff] %vm2401, %v2320
      %2410 = vst.msk [vmem:[#allocation2 + $0x47] sm:$0xff] %vm2401, %v2322
      %2411 = vst.msk [vmem:[#allocation2 + $0x4f] sm:$0xff] %vm2401, %v2324
      %2412 = vst.msk [vmem:[#allocation2 + $0x57] sm:$0xff] %vm2401, %v2326
      %2413 = vst.msk [vmem:[#allocation2 + $0x5f] sm:$0xff] %vm2401, %v2328
      %2414 = vst.msk [vmem:[#allocation2 + $0x67] sm:$0xff] %vm2401, %v2330
      %2415 = vst.msk [vmem:[#allocation2 + $0x6f] sm:$0xff] %vm2401, %v2332
      %2416 = vst.msk [vmem:[#allocation2 + $0x77] sm:$0xff] %vm2401, %v2334
      %2417 = vst.msk [vmem:[#allocation2 + $0x7f] sm:$0xff] %vm2401, %v2336
      %2418 = vst.msk [vmem:[#allocation2 + $0x87] sm:$0xff] %vm2401, %v2338
      %2419 = vst.msk [vmem:[#allocation2 + $0x8f] sm:$0xff] %vm2401, %v2340
      %2420 = vst.msk [vmem:[#allocation2 + $0x97] sm:$0xff] %vm2401, %v2342
      %2421 = vst.msk [vmem:[#allocation2 + $0x9f] sm:$0xff] %vm2401, %v2344
      %2422 = vst.msk [vmem:[#allocation2 + $0xa7] sm:$0xff] %vm2401, %v2346
      %2423 = vst.msk [vmem:[#allocation2 + $0xaf] sm:$0xff] %vm2401, %v2348
      %2424 = vst.msk [vmem:[#allocation2 + $0xb7] sm:$0xff] %vm2401, %v2350
      %2425 = vst.msk [vmem:[#allocation2 + $0xbf] sm:$0xff] %vm2401, %v2352
      %2426 = vst.msk [vmem:[#allocation2 + $0xc7] sm:$0xff] %vm2401, %v2354
      %2427 = vst.msk [vmem:[#allocation2 + $0xcf] sm:$0xff] %vm2401, %v2356
      %2428 = vst.msk [vmem:[#allocation2 + $0xd7] sm:$0xff] %vm2401, %v2358
      %2429 = vst.msk [vmem:[#allocation2 + $0xdf] sm:$0xff] %vm2401, %v2360
      %2430 = vst.msk [vmem:[#allocation2 + $0xe7] sm:$0xff] %vm2401, %v2362
      %2431 = vst.msk [vmem:[#allocation2 + $0xef] sm:$0xff] %vm2401, %v2364
      %2432 = vst.msk [vmem:[#allocation2 + $0xf7] sm:$0xff] %vm2401, %v2366
      %vm2433 = vcmask 188576
      %2434 = vst.msk [vmem:[#allocation2 + $0xff] sm:$0x1] %vm2433, 0.0
      %v2436 = vmul.f32 %v605, %v1901
      %v2437 = vmul.f32 %v606, %v1903
      %v2438 = vmul.f32 %v607, %v1904
      %v2439 = vmul.f32 %v608, %v1278
      %v2440 = vmul.f32 %v609, %v1280
      %v2441 = vmul.f32 %v610, %v1282
      %v2442 = vmul.f32 %v611, %v1284
      %v2443 = vmul.f32 %v612, %v1286
      %v2444 = vmul.f32 %v613, %v1288
      %v2445 = vmul.f32 %v614, %v1290
      %v2446 = vmul.f32 %v615, %v1292
      %v2447 = vmul.f32 %v616, %v1294
      %v2448 = vmul.f32 %v617, %v1296
      %v2449 = vmul.f32 %v618, %v1298
      %v2450 = vmul.f32 %v619, %v1300
      %v2451 = vmul.f32 %v620, %v1302
      %v2452 = vmul.f32 %v621, %v1304
      %v2453 = vmul.f32 %v622, %v1306
      %v2454 = vmul.f32 %v623, %v1308
      %v2455 = vmul.f32 %v624, %v1310
      %v2456 = vmul.f32 %v625, %v1312
      %v2457 = vmul.f32 %v626, %v1314
      %v2458 = vmul.f32 %v627, %v1316
      %v2459 = vmul.f32 %v628, %v1318
      %v2460 = vmul.f32 %v629, %v1320
      %v2461 = vmul.f32 %v630, %v1322
      %v2462 = vmul.f32 %v631, %v1324
      %v2463 = vmul.f32 %v632, %v1326
      %v2464 = vmul.f32 %v633, %v1328
      %v2465 = vmul.f32 %v634, %v1330
      %v2466 = vmul.f32 %v635, %v1332
      %2498 = vrot.lane.b32.xlu0 %v2436, 24
      %v2499 = vpop.permute.xlu0 %2498
      %2500 = vrot.lane.b32.xlu0 %v2437, 24
      %v2501 = vpop.permute.xlu0 %2500
      %2502 = vrot.lane.b32.xlu0 %v2438, 24
      %v2503 = vpop.permute.xlu0 %2502
      %2504 = vrot.lane.b32.xlu0 %v2439, 24
      %v2505 = vpop.permute.xlu0 %2504
      %2506 = vrot.lane.b32.xlu0 %v2440, 24
      %v2507 = vpop.permute.xlu0 %2506
      %2508 = vrot.lane.b32.xlu0 %v2441, 24
      %v2509 = vpop.permute.xlu0 %2508
      %2510 = vrot.lane.b32.xlu0 %v2442, 24
      %v2511 = vpop.permute.xlu0 %2510
      %2512 = vrot.lane.b32.xlu0 %v2443, 24
      %v2513 = vpop.permute.xlu0 %2512
      %2514 = vrot.lane.b32.xlu0 %v2444, 24
      %v2515 = vpop.permute.xlu0 %2514
      %2516 = vrot.lane.b32.xlu0 %v2445, 24
      %v2517 = vpop.permute.xlu0 %2516
      %2518 = vrot.lane.b32.xlu0 %v2446, 24
      %v2519 = vpop.permute.xlu0 %2518
      %2520 = vrot.lane.b32.xlu0 %v2447, 24
      %v2521 = vpop.permute.xlu0 %2520
      %2522 = vrot.lane.b32.xlu0 %v2448, 24
      %v2523 = vpop.permute.xlu0 %2522
      %2524 = vrot.lane.b32.xlu0 %v2449, 24
      %v2525 = vpop.permute.xlu0 %2524
      %2526 = vrot.lane.b32.xlu0 %v2450, 24
      %v2527 = vpop.permute.xlu0 %2526
      %2528 = vrot.lane.b32.xlu0 %v2451, 24
      %v2529 = vpop.permute.xlu0 %2528
      %2530 = vrot.lane.b32.xlu0 %v2452, 24
      %v2531 = vpop.permute.xlu0 %2530
      %2532 = vrot.lane.b32.xlu0 %v2453, 24
      %v2533 = vpop.permute.xlu0 %2532
      %2534 = vrot.lane.b32.xlu0 %v2454, 24
      %v2535 = vpop.permute.xlu0 %2534
      %2536 = vrot.lane.b32.xlu0 %v2455, 24
      %v2537 = vpop.permute.xlu0 %2536
      %2538 = vrot.lane.b32.xlu0 %v2456, 24
      %v2539 = vpop.permute.xlu0 %2538
      %2540 = vrot.lane.b32.xlu0 %v2457, 24
      %v2541 = vpop.permute.xlu0 %2540
      %2542 = vrot.lane.b32.xlu0 %v2458, 24
      %v2543 = vpop.permute.xlu0 %2542
      %2544 = vrot.lane.b32.xlu0 %v2459, 24
      %v2545 = vpop.permute.xlu0 %2544
      %2546 = vrot.lane.b32.xlu0 %v2460, 24
      %v2547 = vpop.permute.xlu0 %2546
      %2548 = vrot.lane.b32.xlu0 %v2461, 24
      %v2549 = vpop.permute.xlu0 %2548
      %2550 = vrot.lane.b32.xlu0 %v2462, 24
      %v2551 = vpop.permute.xlu0 %2550
      %2552 = vrot.lane.b32.xlu0 %v2463, 24
      %v2553 = vpop.permute.xlu0 %2552
      %2554 = vrot.lane.b32.xlu0 %v2464, 24
      %v2555 = vpop.permute.xlu0 %2554
      %2556 = vrot.lane.b32.xlu0 %v2465, 24
      %v2557 = vpop.permute.xlu0 %2556
      %2558 = vrot.lane.b32.xlu0 %v2466, 24
      %v2559 = vpop.permute.xlu0 %2558
      %vm2591 = vcmask 228551
      %2592 = vst.msk [vmem:[#allocation2 - $0x7] sm:$0x80] %vm2591, %v2499
      %vm2593 = vcmask 228544
      %2594 = vst.msk [vmem:[#allocation2 + $0x1] sm:$0xff] %vm2593, %v2501
      %2595 = vst.msk [vmem:[#allocation2 + $0x9] sm:$0xff] %vm2593, %v2503
      %2596 = vst.msk [vmem:[#allocation2 + $0x11] sm:$0xff] %vm2593, %v2505
      %2597 = vst.msk [vmem:[#allocation2 + $0x19] sm:$0xff] %vm2593, %v2507
      %2598 = vst.msk [vmem:[#allocation2 + $0x21] sm:$0xff] %vm2593, %v2509
      %2599 = vst.msk [vmem:[#allocation2 + $0x29] sm:$0xff] %vm2593, %v2511
      %2600 = vst.msk [vmem:[#allocation2 + $0x31] sm:$0xff] %vm2593, %v2513
      %2601 = vst.msk [vmem:[#allocation2 + $0x39] sm:$0xff] %vm2593, %v2515
      %2602 = vst.msk [vmem:[#allocation2 + $0x41] sm:$0xff] %vm2593, %v2517
      %2603 = vst.msk [vmem:[#allocation2 + $0x49] sm:$0xff] %vm2593, %v2519
      %2604 = vst.msk [vmem:[#allocation2 + $0x51] sm:$0xff] %vm2593, %v2521
      %2605 = vst.msk [vmem:[#allocation2 + $0x59] sm:$0xff] %vm2593, %v2523
      %2606 = vst.msk [vmem:[#allocation2 + $0x61] sm:$0xff] %vm2593, %v2525
      %2607 = vst.msk [vmem:[#allocation2 + $0x69] sm:$0xff] %vm2593, %v2527
      %2608 = vst.msk [vmem:[#allocation2 + $0x71] sm:$0xff] %vm2593, %v2529
      %2609 = vst.msk [vmem:[#allocation2 + $0x79] sm:$0xff] %vm2593, %v2531
      %2610 = vst.msk [vmem:[#allocation2 + $0x81] sm:$0xff] %vm2593, %v2533
      %2611 = vst.msk [vmem:[#allocation2 + $0x89] sm:$0xff] %vm2593, %v2535
      %2612 = vst.msk [vmem:[#allocation2 + $0x91] sm:$0xff] %vm2593, %v2537
      %2613 = vst.msk [vmem:[#allocation2 + $0x99] sm:$0xff] %vm2593, %v2539
      %2614 = vst.msk [vmem:[#allocation2 + $0xa1] sm:$0xff] %vm2593, %v2541
      %2615 = vst.msk [vmem:[#allocation2 + $0xa9] sm:$0xff] %vm2593, %v2543
      %2616 = vst.msk [vmem:[#allocation2 + $0xb1] sm:$0xff] %vm2593, %v2545
      %2617 = vst.msk [vmem:[#allocation2 + $0xb9] sm:$0xff] %vm2593, %v2547
      %2618 = vst.msk [vmem:[#allocation2 + $0xc1] sm:$0xff] %vm2593, %v2549
      %2619 = vst.msk [vmem:[#allocation2 + $0xc9] sm:$0xff] %vm2593, %v2551
      %2620 = vst.msk [vmem:[#allocation2 + $0xd1] sm:$0xff] %vm2593, %v2553
      %2621 = vst.msk [vmem:[#allocation2 + $0xd9] sm:$0xff] %vm2593, %v2555
      %2622 = vst.msk [vmem:[#allocation2 + $0xe1] sm:$0xff] %vm2593, %v2557
      %2623 = vst.msk [vmem:[#allocation2 + $0xe9] sm:$0xff] %vm2593, %v2559
      %2624 = vst.msk [vmem:[#allocation2 + $0xf1] sm:$0xff] %vm2593, 0.0
      %vm2625 = vcmask 227520
      %2626 = vst.msk [vmem:[#allocation2 + $0xf9] sm:$0x7f] %vm2625, 0.0
      %2627 = vrot.lane.b32.xlu0 %v606, 28
      %v2628 = vpop.permute.xlu0 %2627
      %2629 = vrot.lane.b32.xlu0 %v607, 28
      %v2630 = vpop.permute.xlu0 %2629
      %2631 = vrot.lane.b32.xlu0 %v608, 28
      %v2632 = vpop.permute.xlu0 %2631
      %2633 = vrot.lane.b32.xlu0 %v609, 28
      %v2634 = vpop.permute.xlu0 %2633
      %2635 = vrot.lane.b32.xlu0 %v610, 28
      %v2636 = vpop.permute.xlu0 %2635
      %2637 = vrot.lane.b32.xlu0 %v611, 28
      %v2638 = vpop.permute.xlu0 %2637
      %2639 = vrot.lane.b32.xlu0 %v612, 28
      %v2640 = vpop.permute.xlu0 %2639
      %2641 = vrot.lane.b32.xlu0 %v613, 28
      %v2642 = vpop.permute.xlu0 %2641
      %2643 = vrot.lane.b32.xlu0 %v614, 28
      %v2644 = vpop.permute.xlu0 %2643
      %2645 = vrot.lane.b32.xlu0 %v615, 28
      %v2646 = vpop.permute.xlu0 %2645
      %2647 = vrot.lane.b32.xlu0 %v616, 28
      %v2648 = vpop.permute.xlu0 %2647
      %2649 = vrot.lane.b32.xlu0 %v617, 28
      %v2650 = vpop.permute.xlu0 %2649
      %2651 = vrot.lane.b32.xlu0 %v618, 28
      %v2652 = vpop.permute.xlu0 %2651
      %2653 = vrot.lane.b32.xlu0 %v619, 28
      %v2654 = vpop.permute.xlu0 %2653
      %2655 = vrot.lane.b32.xlu0 %v620, 28
      %v2656 = vpop.permute.xlu0 %2655
      %2657 = vrot.lane.b32.xlu0 %v621, 28
      %v2658 = vpop.permute.xlu0 %2657
      %2659 = vrot.lane.b32.xlu0 %v622, 28
      %v2660 = vpop.permute.xlu0 %2659
      %2661 = vrot.lane.b32.xlu0 %v623, 28
      %v2662 = vpop.permute.xlu0 %2661
      %2663 = vrot.lane.b32.xlu0 %v624, 28
      %v2664 = vpop.permute.xlu0 %2663
      %2665 = vrot.lane.b32.xlu0 %v625, 28
      %v2666 = vpop.permute.xlu0 %2665
      %2667 = vrot.lane.b32.xlu0 %v626, 28
      %v2668 = vpop.permute.xlu0 %2667
      %2669 = vrot.lane.b32.xlu0 %v627, 28
      %v2670 = vpop.permute.xlu0 %2669
      %2671 = vrot.lane.b32.xlu0 %v628, 28
      %v2672 = vpop.permute.xlu0 %2671
      %2673 = vrot.lane.b32.xlu0 %v629, 28
      %v2674 = vpop.permute.xlu0 %2673
      %2675 = vrot.lane.b32.xlu0 %v630, 28
      %v2676 = vpop.permute.xlu0 %2675
      %2677 = vrot.lane.b32.xlu0 %v631, 28
      %v2678 = vpop.permute.xlu0 %2677
      %2679 = vrot.lane.b32.xlu0 %v632, 28
      %v2680 = vpop.permute.xlu0 %2679
      %2681 = vrot.lane.b32.xlu0 %v633, 28
      %v2682 = vpop.permute.xlu0 %2681
      %2683 = vrot.lane.b32.xlu0 %v634, 28
      %v2684 = vpop.permute.xlu0 %2683
      %2685 = vrot.lane.b32.xlu0 %v635, 28
      %v2686 = vpop.permute.xlu0 %2685
      %vm2717 = vcmask 261344
      %2718 = vst.msk [vmem:[#allocation2] sm:$0xff] %vm2717, %v2628
      %2719 = vst.msk [vmem:[#allocation2 + $0x8] sm:$0xff] %vm2717, %v2630
      %2720 = vst.msk [vmem:[#allocation2 + $0x10] sm:$0xff] %vm2717, %v2632
      %2721 = vst.msk [vmem:[#allocation2 + $0x18] sm:$0xff] %vm2717, %v2634
      %2722 = vst.msk [vmem:[#allocation2 + $0x20] sm:$0xff] %vm2717, %v2636
      %2723 = vst.msk [vmem:[#allocation2 + $0x28] sm:$0xff] %vm2717, %v2638
      %2724 = vst.msk [vmem:[#allocation2 + $0x30] sm:$0xff] %vm2717, %v2640
      %2725 = vst.msk [vmem:[#allocation2 + $0x38] sm:$0xff] %vm2717, %v2642
      %2726 = vst.msk [vmem:[#allocation2 + $0x40] sm:$0xff] %vm2717, %v2644
      %2727 = vst.msk [vmem:[#allocation2 + $0x48] sm:$0xff] %vm2717, %v2646
      %2728 = vst.msk [vmem:[#allocation2 + $0x50] sm:$0xff] %vm2717, %v2648
      %2729 = vst.msk [vmem:[#allocation2 + $0x58] sm:$0xff] %vm2717, %v2650
      %2730 = vst.msk [vmem:[#allocation2 + $0x60] sm:$0xff] %vm2717, %v2652
      %2731 = vst.msk [vmem:[#allocation2 + $0x68] sm:$0xff] %vm2717, %v2654
      %2732 = vst.msk [vmem:[#allocation2 + $0x70] sm:$0xff] %vm2717, %v2656
      %2733 = vst.msk [vmem:[#allocation2 + $0x78] sm:$0xff] %vm2717, %v2658
      %2734 = vst.msk [vmem:[#allocation2 + $0x80] sm:$0xff] %vm2717, %v2660
      %2735 = vst.msk [vmem:[#allocation2 + $0x88] sm:$0xff] %vm2717, %v2662
      %2736 = vst.msk [vmem:[#allocation2 + $0x90] sm:$0xff] %vm2717, %v2664
      %2737 = vst.msk [vmem:[#allocation2 + $0x98] sm:$0xff] %vm2717, %v2666
      %2738 = vst.msk [vmem:[#allocation2 + $0xa0] sm:$0xff] %vm2717, %v2668
      %2739 = vst.msk [vmem:[#allocation2 + $0xa8] sm:$0xff] %vm2717, %v2670
      %2740 = vst.msk [vmem:[#allocation2 + $0xb0] sm:$0xff] %vm2717, %v2672
      %2741 = vst.msk [vmem:[#allocation2 + $0xb8] sm:$0xff] %vm2717, %v2674
      %2742 = vst.msk [vmem:[#allocation2 + $0xc0] sm:$0xff] %vm2717, %v2676
      %2743 = vst.msk [vmem:[#allocation2 + $0xc8] sm:$0xff] %vm2717, %v2678
      %2744 = vst.msk [vmem:[#allocation2 + $0xd0] sm:$0xff] %vm2717, %v2680
      %2745 = vst.msk [vmem:[#allocation2 + $0xd8] sm:$0xff] %vm2717, %v2682
      %2746 = vst.msk [vmem:[#allocation2 + $0xe0] sm:$0xff] %vm2717, %v2684
      %2747 = vst.msk [vmem:[#allocation2 + $0xe8] sm:$0xff] %vm2717, %v2686
      %2748 = vst.msk [vmem:[#allocation2 + $0xf0] sm:$0xff] %vm2717, 0.0
      %2749 = vst.msk [vmem:[#allocation2 + $0xf8] sm:$0xff] %vm2717, 0.0
      %v2750 = vmul.f32 %v606, %v2235
      %v2751 = vmul.f32 %v607, %v2236
      %v2752 = vmul.f32 %v608, %v1618
      %v2753 = vmul.f32 %v609, %v1620
      %v2754 = vmul.f32 %v610, %v1622
      %v2755 = vmul.f32 %v611, %v1624
      %v2756 = vmul.f32 %v612, %v1626
      %v2757 = vmul.f32 %v613, %v1628
      %v2758 = vmul.f32 %v614, %v1630
      %v2759 = vmul.f32 %v615, %v1632
      %v2760 = vmul.f32 %v616, %v1634
      %v2761 = vmul.f32 %v617, %v1636
      %v2762 = vmul.f32 %v618, %v1638
      %v2763 = vmul.f32 %v619, %v1640
      %v2764 = vmul.f32 %v620, %v1642
      %v2765 = vmul.f32 %v621, %v1644
      %v2766 = vmul.f32 %v622, %v1646
      %v2767 = vmul.f32 %v623, %v1648
      %v2768 = vmul.f32 %v624, %v1650
      %v2769 = vmul.f32 %v625, %v1652
      %v2770 = vmul.f32 %v626, %v1654
      %v2771 = vmul.f32 %v627, %v1656
      %v2772 = vmul.f32 %v628, %v1658
      %v2773 = vmul.f32 %v629, %v1660
      %v2774 = vmul.f32 %v630, %v1662
      %v2775 = vmul.f32 %v631, %v1664
      %v2776 = vmul.f32 %v632, %v1666
      %v2777 = vmul.f32 %v633, %v1668
      %v2778 = vmul.f32 %v634, %v1670
      %v2779 = vmul.f32 %v635, %v1672
      %2810 = vrot.lane.b32.xlu0 %v2750, 32
      %v2811 = vpop.permute.xlu0 %2810
      %2812 = vrot.lane.b32.xlu0 %v2751, 32
      %v2813 = vpop.permute.xlu0 %2812
      %2814 = vrot.lane.b32.xlu0 %v2752, 32
      %v2815 = vpop.permute.xlu0 %2814
      %2816 = vrot.lane.b32.xlu0 %v2753, 32
      %v2817 = vpop.permute.xlu0 %2816
      %2818 = vrot.lane.b32.xlu0 %v2754, 32
      %v2819 = vpop.permute.xlu0 %2818
      %2820 = vrot.lane.b32.xlu0 %v2755, 32
      %v2821 = vpop.permute.xlu0 %2820
      %2822 = vrot.lane.b32.xlu0 %v2756, 32
      %v2823 = vpop.permute.xlu0 %2822
      %2824 = vrot.lane.b32.xlu0 %v2757, 32
      %v2825 = vpop.permute.xlu0 %2824
      %2826 = vrot.lane.b32.xlu0 %v2758, 32
      %v2827 = vpop.permute.xlu0 %2826
      %2828 = vrot.lane.b32.xlu0 %v2759, 32
      %v2829 = vpop.permute.xlu0 %2828
      %2830 = vrot.lane.b32.xlu0 %v2760, 32
      %v2831 = vpop.permute.xlu0 %2830
      %2832 = vrot.lane.b32.xlu0 %v2761, 32
      %v2833 = vpop.permute.xlu0 %2832
      %2834 = vrot.lane.b32.xlu0 %v2762, 32
      %v2835 = vpop.permute.xlu0 %2834
      %2836 = vrot.lane.b32.xlu0 %v2763, 32
      %v2837 = vpop.permute.xlu0 %2836
      %2838 = vrot.lane.b32.xlu0 %v2764, 32
      %v2839 = vpop.permute.xlu0 %2838
      %2840 = vrot.lane.b32.xlu0 %v2765, 32
      %v2841 = vpop.permute.xlu0 %2840
      %2842 = vrot.lane.b32.xlu0 %v2766, 32
      %v2843 = vpop.permute.xlu0 %2842
      %2844 = vrot.lane.b32.xlu0 %v2767, 32
      %v2845 = vpop.permute.xlu0 %2844
      %2846 = vrot.lane.b32.xlu0 %v2768, 32
      %v2847 = vpop.permute.xlu0 %2846
      %2848 = vrot.lane.b32.xlu0 %v2769, 32
      %v2849 = vpop.permute.xlu0 %2848
      %2850 = vrot.lane.b32.xlu0 %v2770, 32
      %v2851 = vpop.permute.xlu0 %2850
      %2852 = vrot.lane.b32.xlu0 %v2771, 32
      %v2853 = vpop.permute.xlu0 %2852
      %2854 = vrot.lane.b32.xlu0 %v2772, 32
      %v2855 = vpop.permute.xlu0 %2854
      %2856 = vrot.lane.b32.xlu0 %v2773, 32
      %v2857 = vpop.permute.xlu0 %2856
      %2858 = vrot.lane.b32.xlu0 %v2774, 32
      %v2859 = vpop.permute.xlu0 %2858
      %2860 = vrot.lane.b32.xlu0 %v2775, 32
      %v2861 = vpop.permute.xlu0 %2860
      %2862 = vrot.lane.b32.xlu0 %v2776, 32
      %v2863 = vpop.permute.xlu0 %2862
      %2864 = vrot.lane.b32.xlu0 %v2777, 32
      %v2865 = vpop.permute.xlu0 %2864
      %2866 = vrot.lane.b32.xlu0 %v2778, 32
      %v2867 = vpop.permute.xlu0 %2866
      %2868 = vrot.lane.b32.xlu0 %v2779, 32
      %v2869 = vpop.permute.xlu0 %2868
      %vm2900 = vcmask 294145
      %2901 = vst.msk [vmem:[#allocation2 - $0x1] sm:$0xfe] %vm2900, %v2811
      %vm2902 = vcmask 294144
      %2903 = vst.msk [vmem:[#allocation2 + $0x7] sm:$0xff] %vm2902, %v2813
      %2904 = vst.msk [vmem:[#allocation2 + $0xf] sm:$0xff] %vm2902, %v2815
      %2905 = vst.msk [vmem:[#allocation2 + $0x17] sm:$0xff] %vm2902, %v2817
      %2906 = vst.msk [vmem:[#allocation2 + $0x1f] sm:$0xff] %vm2902, %v2819
      %2907 = vst.msk [vmem:[#allocation2 + $0x27] sm:$0xff] %vm2902, %v2821
      %2908 = vst.msk [vmem:[#allocation2 + $0x2f] sm:$0xff] %vm2902, %v2823
      %2909 = vst.msk [vmem:[#allocation2 + $0x37] sm:$0xff] %vm2902, %v2825
      %2910 = vst.msk [vmem:[#allocation2 + $0x3f] sm:$0xff] %vm2902, %v2827
      %2911 = vst.msk [vmem:[#allocation2 + $0x47] sm:$0xff] %vm2902, %v2829
      %2912 = vst.msk [vmem:[#allocation2 + $0x4f] sm:$0xff] %vm2902, %v2831
      %2913 = vst.msk [vmem:[#allocation2 + $0x57] sm:$0xff] %vm2902, %v2833
      %2914 = vst.msk [vmem:[#allocation2 + $0x5f] sm:$0xff] %vm2902, %v2835
      %2915 = vst.msk [vmem:[#allocation2 + $0x67] sm:$0xff] %vm2902, %v2837
      %2916 = vst.msk [vmem:[#allocation2 + $0x6f] sm:$0xff] %vm2902, %v2839
      %2917 = vst.msk [vmem:[#allocation2 + $0x77] sm:$0xff] %vm2902, %v2841
      %2918 = vst.msk [vmem:[#allocation2 + $0x7f] sm:$0xff] %vm2902, %v2843
      %2919 = vst.msk [vmem:[#allocation2 + $0x87] sm:$0xff] %vm2902, %v2845
      %2920 = vst.msk [vmem:[#allocation2 + $0x8f] sm:$0xff] %vm2902, %v2847
      %2921 = vst.msk [vmem:[#allocation2 + $0x97] sm:$0xff] %vm2902, %v2849
      %2922 = vst.msk [vmem:[#allocation2 + $0x9f] sm:$0xff] %vm2902, %v2851
      %2923 = vst.msk [vmem:[#allocation2 + $0xa7] sm:$0xff] %vm2902, %v2853
      %2924 = vst.msk [vmem:[#allocation2 + $0xaf] sm:$0xff] %vm2902, %v2855
      %2925 = vst.msk [vmem:[#allocation2 + $0xb7] sm:$0xff] %vm2902, %v2857
      %2926 = vst.msk [vmem:[#allocation2 + $0xbf] sm:$0xff] %vm2902, %v2859
      %2927 = vst.msk [vmem:[#allocation2 + $0xc7] sm:$0xff] %vm2902, %v2861
      %2928 = vst.msk [vmem:[#allocation2 + $0xcf] sm:$0xff] %vm2902, %v2863
      %2929 = vst.msk [vmem:[#allocation2 + $0xd7] sm:$0xff] %vm2902, %v2865
      %2930 = vst.msk [vmem:[#allocation2 + $0xdf] sm:$0xff] %vm2902, %v2867
      %2931 = vst.msk [vmem:[#allocation2 + $0xe7] sm:$0xff] %vm2902, %v2869
      %2932 = vst.msk [vmem:[#allocation2 + $0xef] sm:$0xff] %vm2902, 0.0
      %2933 = vst.msk [vmem:[#allocation2 + $0xf7] sm:$0xff] %vm2902, 0.0
      %vm2934 = vcmask 286976
      %2935 = vst.msk [vmem:[#allocation2 + $0xff] sm:$0x1] %vm2934, 0.0
      %v2936 = vld [vmem:[#allocation2] sm:$0xff]
      %v2937 = vld [vmem:[#allocation2 + $0x8] sm:$0xff]
      %v2938 = vld [vmem:[#allocation2 + $0x10] sm:$0xff]
      %v2939 = vld [vmem:[#allocation2 + $0x18] sm:$0xff]
      %v2940 = vld [vmem:[#allocation2 + $0x20] sm:$0xff]
      %v2941 = vld [vmem:[#allocation2 + $0x28] sm:$0xff]
      %v2942 = vld [vmem:[#allocation2 + $0x30] sm:$0xff]
      %v2943 = vld [vmem:[#allocation2 + $0x38] sm:$0xff]
      %v2944 = vld [vmem:[#allocation2 + $0x40] sm:$0xff]
      %v2945 = vld [vmem:[#allocation2 + $0x48] sm:$0xff]
      %v2946 = vld [vmem:[#allocation2 + $0x50] sm:$0xff]
      %v2947 = vld [vmem:[#allocation2 + $0x58] sm:$0xff]
      %v2948 = vld [vmem:[#allocation2 + $0x60] sm:$0xff]
      %v2949 = vld [vmem:[#allocation2 + $0x68] sm:$0xff]
      %v2950 = vld [vmem:[#allocation2 + $0x70] sm:$0xff]
      %v2951 = vld [vmem:[#allocation2 + $0x78] sm:$0xff]
      %v2952 = vld [vmem:[#allocation2 + $0x80] sm:$0xff]
      %v2953 = vld [vmem:[#allocation2 + $0x88] sm:$0xff]
      %v2954 = vld [vmem:[#allocation2 + $0x90] sm:$0xff]
      %v2955 = vld [vmem:[#allocation2 + $0x98] sm:$0xff]
      %v2956 = vld [vmem:[#allocation2 + $0xa0] sm:$0xff]
      %v2957 = vld [vmem:[#allocation2 + $0xa8] sm:$0xff]
      %v2958 = vld [vmem:[#allocation2 + $0xb0] sm:$0xff]
      %v2959 = vld [vmem:[#allocation2 + $0xb8] sm:$0xff]
      %v2960 = vld [vmem:[#allocation2 + $0xc0] sm:$0xff]
      %v2961 = vld [vmem:[#allocation2 + $0xc8] sm:$0xff]
      %v2962 = vld [vmem:[#allocation2 + $0xd0] sm:$0xff]
      %v2963 = vld [vmem:[#allocation2 + $0xd8] sm:$0xff]
      %v2964 = vld [vmem:[#allocation2 + $0xe0] sm:$0xff]
      %v2965 = vld [vmem:[#allocation2 + $0xe8] sm:$0xff]
      %v2966 = vld [vmem:[#allocation2 + $0xf0] sm:$0xff]
      %v2967 = vld [vmem:[#allocation2 + $0xf8] sm:$0xff]
      %v2968 = vpack.c.bf16 %v2937, %v2936
      %v2969 = vpack.c.bf16 %v2939, %v2938
      %v2970 = vpack.c.bf16 %v2941, %v2940
      %v2971 = vpack.c.bf16 %v2943, %v2942
      %v2972 = vpack.c.bf16 %v2945, %v2944
      %v2973 = vpack.c.bf16 %v2947, %v2946
      %v2974 = vpack.c.bf16 %v2949, %v2948
      %v2975 = vpack.c.bf16 %v2951, %v2950
      %v2976 = vpack.c.bf16 %v2953, %v2952
      %v2977 = vpack.c.bf16 %v2955, %v2954
      %v2978 = vpack.c.bf16 %v2957, %v2956
      %v2979 = vpack.c.bf16 %v2959, %v2958
      %v2980 = vpack.c.bf16 %v2961, %v2960
      %v2981 = vpack.c.bf16 %v2963, %v2962
      %v2982 = vpack.c.bf16 %v2965, %v2964
      %v2983 = vpack.c.bf16 %v2967, %v2966
      %v2984 = vld [vmem:[%s1] sm:$0xf]
      %v2985 = vld [vmem:[%s1 + $0x4] sm:$0xf]
      %v2986 = vld [vmem:[%s1 + $0x8] sm:$0xf]
      %v2987 = vld [vmem:[%s1 + $0xc] sm:$0xf]
      %v2988 = vld [vmem:[%s1 + $0x10] sm:$0x3]
      %v2994 = vunpack.c.l.b16 %v2984
      %v2995 = vunpack.c.l.b16 %v2985
      %v2996 = vunpack.c.l.b16 %v2986
      %v2997 = vunpack.c.l.b16 %v2987
      %v2998 = vunpack.c.l.b16 %v2988
      %v2999 = vpack.c.b16 %v2995, %v2994
      %v3000 = vpack.c.b16 %v2997, %v2996
      %v3001 = vpack.c.b16 %v2998, %v2998
      %vm3004 = vcmask 293888
      %v3006 = vsel %vm3004, %v2968, 0
      %v3009 = vsel %vm3004, %v2969, 0
      %v3012 = vsel %vm3004, %v2970, 0
      %v3015 = vsel %vm3004, %v2971, 0
      %v3018 = vsel %vm3004, %v2972, 0
      %v3021 = vsel %vm3004, %v2973, 0
      %v3024 = vsel %vm3004, %v2974, 0
      %v3027 = vsel %vm3004, %v2975, 0
      %v3030 = vsel %vm3004, %v2976, 0
      %v3033 = vsel %vm3004, %v2977, 0
      %v3036 = vsel %vm3004, %v2978, 0
      %v3039 = vsel %vm3004, %v2979, 0
      %v3042 = vsel %vm3004, %v2980, 0
      %v3045 = vsel %vm3004, %v2981, 0
      %v3048 = vsel %vm3004, %v2982, 0
      %v3051 = vsel %vm3004, %v2983, 0
      %vm3053 = vcmask 1041408
      %v3055 = vsel %vm3053, %v3001, 0
      %3057 = vmatpush.bf16.msra.mxu0 0
      %3058 = vmatpush.bf16.msra.mxu0 0
      %3059 = vmatpush.bf16.msra.mxu0 0
      %3060 = vmatpush.bf16.msra.mxu0 0
      %3061 = vmatpush.bf16.msra.mxu0 0
      %3062 = vmatpush.bf16.msra.mxu0 %v3055
      %3063 = vmatpush.bf16.msra.mxu0 %v3000
      %3064 = vmatpush.bf16.msra.mxu0 %v2999
      %3065 = vmatmul.bf16.gmra.mxu0 %v3006
      %v3066 = vpop.f32.mrf.mxu0
      %v3067 = vadd.f32 0.0, %v3066
      %v3068 = vpop.f32.mrf.mxu0
      %v3069 = vadd.f32 0.0, %v3068
      %3070 = vmatmul.bf16.gmra.mxu0 %v3009
      %v3071 = vpop.f32.mrf.mxu0
      %v3072 = vadd.f32 0.0, %v3071
      %v3073 = vpop.f32.mrf.mxu0
      %v3074 = vadd.f32 0.0, %v3073
      %3075 = vmatmul.bf16.gmra.mxu0 %v3012
      %v3076 = vpop.f32.mrf.mxu0
      %v3077 = vadd.f32 0.0, %v3076
      %v3078 = vpop.f32.mrf.mxu0
      %v3079 = vadd.f32 0.0, %v3078
      %3080 = vmatmul.bf16.gmra.mxu0 %v3015
      %v3081 = vpop.f32.mrf.mxu0
      %v3082 = vadd.f32 0.0, %v3081
      %v3083 = vpop.f32.mrf.mxu0
      %v3084 = vadd.f32 0.0, %v3083
      %3085 = vmatmul.bf16.gmra.mxu0 %v3018
      %v3086 = vpop.f32.mrf.mxu0
      %v3087 = vadd.f32 0.0, %v3086
      %v3088 = vpop.f32.mrf.mxu0
      %v3089 = vadd.f32 0.0, %v3088
      %3090 = vmatmul.bf16.gmra.mxu0 %v3021
      %v3091 = vpop.f32.mrf.mxu0
      %v3092 = vadd.f32 0.0, %v3091
      %v3093 = vpop.f32.mrf.mxu0
      %v3094 = vadd.f32 0.0, %v3093
      %3095 = vmatmul.bf16.gmra.mxu0 %v3024
      %v3096 = vpop.f32.mrf.mxu0
      %v3097 = vadd.f32 0.0, %v3096
      %v3098 = vpop.f32.mrf.mxu0
      %v3099 = vadd.f32 0.0, %v3098
      %3100 = vmatmul.bf16.gmra.mxu0 %v3027
      %v3101 = vpop.f32.mrf.mxu0
      %v3102 = vadd.f32 0.0, %v3101
      %v3103 = vpop.f32.mrf.mxu0
      %v3104 = vadd.f32 0.0, %v3103
      %3105 = vmatmul.bf16.gmra.mxu0 %v3030
      %v3106 = vpop.f32.mrf.mxu0
      %v3107 = vadd.f32 0.0, %v3106
      %v3108 = vpop.f32.mrf.mxu0
      %v3109 = vadd.f32 0.0, %v3108
      %3110 = vmatmul.bf16.gmra.mxu0 %v3033
      %v3111 = vpop.f32.mrf.mxu0
      %v3112 = vadd.f32 0.0, %v3111
      %v3113 = vpop.f32.mrf.mxu0
      %v3114 = vadd.f32 0.0, %v3113
      %3115 = vmatmul.bf16.gmra.mxu0 %v3036
      %v3116 = vpop.f32.mrf.mxu0
      %v3117 = vadd.f32 0.0, %v3116
      %v3118 = vpop.f32.mrf.mxu0
      %v3119 = vadd.f32 0.0, %v3118
      %3120 = vmatmul.bf16.gmra.mxu0 %v3039
      %v3121 = vpop.f32.mrf.mxu0
      %v3122 = vadd.f32 0.0, %v3121
      %v3123 = vpop.f32.mrf.mxu0
      %v3124 = vadd.f32 0.0, %v3123
      %3125 = vmatmul.bf16.gmra.mxu0 %v3042
      %v3126 = vpop.f32.mrf.mxu0
      %v3127 = vadd.f32 0.0, %v3126
      %v3128 = vpop.f32.mrf.mxu0
      %v3129 = vadd.f32 0.0, %v3128
      %3130 = vmatmul.bf16.gmra.mxu0 %v3045
      %v3131 = vpop.f32.mrf.mxu0
      %v3132 = vadd.f32 0.0, %v3131
      %v3133 = vpop.f32.mrf.mxu0
      %v3134 = vadd.f32 0.0, %v3133
      %3135 = vmatmul.bf16.gmra.mxu0 %v3048
      %v3136 = vpop.f32.mrf.mxu0
      %v3137 = vadd.f32 0.0, %v3136
      %v3138 = vpop.f32.mrf.mxu0
      %v3139 = vadd.f32 0.0, %v3138
      %3140 = vmatmul.bf16.gmra.mxu0 %v3051
      %v3141 = vpop.f32.mrf.mxu0
      %v3142 = vadd.f32 0.0, %v3141
      %v3143 = vpop.f32.mrf.mxu0
      %v3144 = vadd.f32 0.0, %v3143
      %3145 = vdwg.mxu0
      %v3146 = vld [vmem:[%s2] sm:$0x1]
      %v3148 = vperm.slane %v3146, 0
      %v3150 = vmul.f32 %v3067, %v3148
      %v3151 = vmul.f32 %v3069, %v3148
      %v3152 = vmul.f32 %v3072, %v3148
      %v3153 = vmul.f32 %v3074, %v3148
      %v3154 = vmul.f32 %v3077, %v3148
      %v3155 = vmul.f32 %v3079, %v3148
      %v3156 = vmul.f32 %v3082, %v3148
      %v3157 = vmul.f32 %v3084, %v3148
      %v3158 = vmul.f32 %v3087, %v3148
      %v3159 = vmul.f32 %v3089, %v3148
      %v3160 = vmul.f32 %v3092, %v3148
      %v3161 = vmul.f32 %v3094, %v3148
      %v3162 = vmul.f32 %v3097, %v3148
      %v3163 = vmul.f32 %v3099, %v3148
      %v3164 = vmul.f32 %v3102, %v3148
      %v3165 = vmul.f32 %v3104, %v3148
      %v3166 = vmul.f32 %v3107, %v3148
      %v3167 = vmul.f32 %v3109, %v3148
      %v3168 = vmul.f32 %v3112, %v3148
      %v3169 = vmul.f32 %v3114, %v3148
      %v3170 = vmul.f32 %v3117, %v3148
      %v3171 = vmul.f32 %v3119, %v3148
      %v3172 = vmul.f32 %v3122, %v3148
      %v3173 = vmul.f32 %v3124, %v3148
      %v3174 = vmul.f32 %v3127, %v3148
      %v3175 = vmul.f32 %v3129, %v3148
      %v3176 = vmul.f32 %v3132, %v3148
      %v3177 = vmul.f32 %v3134, %v3148
      %v3178 = vmul.f32 %v3137, %v3148
      %v3179 = vmul.f32 %v3139, %v3148
      %v3180 = vmul.f32 %v3142, %v3148
      %v3181 = vmul.f32 %v3144, %v3148
      %v3182 = vld [vmem:[%s3] sm:$0x1]
      %v3184 = vperm.slane %v3182, 0
      %v3186 = vadd.f32 %v3150, %v3184
      %v3187 = vadd.f32 %v3151, %v3184
      %v3188 = vadd.f32 %v3152, %v3184
      %v3189 = vadd.f32 %v3153, %v3184
      %v3190 = vadd.f32 %v3154, %v3184
      %v3191 = vadd.f32 %v3155, %v3184
      %v3192 = vadd.f32 %v3156, %v3184
      %v3193 = vadd.f32 %v3157, %v3184
      %v3194 = vadd.f32 %v3158, %v3184
      %v3195 = vadd.f32 %v3159, %v3184
      %v3196 = vadd.f32 %v3160, %v3184
      %v3197 = vadd.f32 %v3161, %v3184
      %v3198 = vadd.f32 %v3162, %v3184
      %v3199 = vadd.f32 %v3163, %v3184
      %v3200 = vadd.f32 %v3164, %v3184
      %v3201 = vadd.f32 %v3165, %v3184
      %v3202 = vadd.f32 %v3166, %v3184
      %v3203 = vadd.f32 %v3167, %v3184
      %v3204 = vadd.f32 %v3168, %v3184
      %v3205 = vadd.f32 %v3169, %v3184
      %v3206 = vadd.f32 %v3170, %v3184
      %v3207 = vadd.f32 %v3171, %v3184
      %v3208 = vadd.f32 %v3172, %v3184
      %v3209 = vadd.f32 %v3173, %v3184
      %v3210 = vadd.f32 %v3174, %v3184
      %v3211 = vadd.f32 %v3175, %v3184
      %v3212 = vadd.f32 %v3176, %v3184
      %v3213 = vadd.f32 %v3177, %v3184
      %v3214 = vadd.f32 %v3178, %v3184
      %v3215 = vadd.f32 %v3179, %v3184
      %v3216 = vadd.f32 %v3180, %v3184
      %v3217 = vadd.f32 %v3181, %v3184
      %v3218 = vmul.f32 %v3186, 0.5
      %v3219 = vmul.f32 %v3187, 0.5
      %v3220 = vmul.f32 %v3188, 0.5
      %v3221 = vmul.f32 %v3189, 0.5
      %v3222 = vmul.f32 %v3190, 0.5
      %v3223 = vmul.f32 %v3191, 0.5
      %v3224 = vmul.f32 %v3192, 0.5
      %v3225 = vmul.f32 %v3193, 0.5
      %v3226 = vmul.f32 %v3194, 0.5
      %v3227 = vmul.f32 %v3195, 0.5
      %v3228 = vmul.f32 %v3196, 0.5
      %v3229 = vmul.f32 %v3197, 0.5
      %v3230 = vmul.f32 %v3198, 0.5
      %v3231 = vmul.f32 %v3199, 0.5
      %v3232 = vmul.f32 %v3200, 0.5
      %v3233 = vmul.f32 %v3201, 0.5
      %v3234 = vmul.f32 %v3202, 0.5
      %v3235 = vmul.f32 %v3203, 0.5
      %v3236 = vmul.f32 %v3204, 0.5
      %v3237 = vmul.f32 %v3205, 0.5
      %v3238 = vmul.f32 %v3206, 0.5
      %v3239 = vmul.f32 %v3207, 0.5
      %v3240 = vmul.f32 %v3208, 0.5
      %v3241 = vmul.f32 %v3209, 0.5
      %v3242 = vmul.f32 %v3210, 0.5
      %v3243 = vmul.f32 %v3211, 0.5
      %v3244 = vmul.f32 %v3212, 0.5
      %v3245 = vmul.f32 %v3213, 0.5
      %v3246 = vmul.f32 %v3214, 0.5
      %v3247 = vmul.f32 %v3215, 0.5
      %v3248 = vmul.f32 %v3216, 0.5
      %v3249 = vmul.f32 %v3217, 0.5
      %v3250 = vmul.f32 %v3186, 0.70710677
      %v3251 = vmul.f32 %v3187, 0.70710677
      %v3252 = vmul.f32 %v3188, 0.70710677
      %v3253 = vmul.f32 %v3189, 0.70710677
      %v3254 = vmul.f32 %v3190, 0.70710677
      %v3255 = vmul.f32 %v3191, 0.70710677
      %v3256 = vmul.f32 %v3192, 0.70710677
      %v3257 = vmul.f32 %v3193, 0.70710677
      %v3258 = vmul.f32 %v3194, 0.70710677
      %v3259 = vmul.f32 %v3195, 0.70710677
      %v3260 = vmul.f32 %v3196, 0.70710677
      %v3261 = vmul.f32 %v3197, 0.70710677
      %v3262 = vmul.f32 %v3198, 0.70710677
      %v3263 = vmul.f32 %v3199, 0.70710677
      %v3264 = vmul.f32 %v3200, 0.70710677
      %v3265 = vmul.f32 %v3201, 0.70710677
      %v3266 = vmul.f32 %v3202, 0.70710677
      %v3267 = vmul.f32 %v3203, 0.70710677
      %v3268 = vmul.f32 %v3204, 0.70710677
      %v3269 = vmul.f32 %v3205, 0.70710677
      %v3270 = vmul.f32 %v3206, 0.70710677
      %v3271 = vmul.f32 %v3207, 0.70710677
      %v3272 = vmul.f32 %v3208, 0.70710677
      %v3273 = vmul.f32 %v3209, 0.70710677
      %v3274 = vmul.f32 %v3210, 0.70710677
      %v3275 = vmul.f32 %v3211, 0.70710677
      %v3276 = vmul.f32 %v3212, 0.70710677
      %v3277 = vmul.f32 %v3213, 0.70710677
      %v3278 = vmul.f32 %v3214, 0.70710677
      %v3279 = vmul.f32 %v3215, 0.70710677
      %v3280 = vmul.f32 %v3216, 0.70710677
      %v3281 = vmul.f32 %v3217, 0.70710677
      %v3282 = vand.u32 2147483647, %v3250
      %v3283 = vand.u32 2147483647, %v3251
      %v3284 = vand.u32 2147483647, %v3252
      %v3285 = vand.u32 2147483647, %v3253
      %v3286 = vand.u32 2147483647, %v3254
      %v3287 = vand.u32 2147483647, %v3255
      %v3288 = vand.u32 2147483647, %v3256
      %v3289 = vand.u32 2147483647, %v3257
      %v3290 = vand.u32 2147483647, %v3258
      %v3291 = vand.u32 2147483647, %v3259
      %v3292 = vand.u32 2147483647, %v3260
      %v3293 = vand.u32 2147483647, %v3261
      %v3294 = vand.u32 2147483647, %v3262
      %v3295 = vand.u32 2147483647, %v3263
      %v3296 = vand.u32 2147483647, %v3264
      %v3297 = vand.u32 2147483647, %v3265
      %v3298 = vand.u32 2147483647, %v3266
      %v3299 = vand.u32 2147483647, %v3267
      %v3300 = vand.u32 2147483647, %v3268
      %v3301 = vand.u32 2147483647, %v3269
      %v3302 = vand.u32 2147483647, %v3270
      %v3303 = vand.u32 2147483647, %v3271
      %v3304 = vand.u32 2147483647, %v3272
      %v3305 = vand.u32 2147483647, %v3273
      %v3306 = vand.u32 2147483647, %v3274
      %v3307 = vand.u32 2147483647, %v3275
      %v3308 = vand.u32 2147483647, %v3276
      %v3309 = vand.u32 2147483647, %v3277
      %v3310 = vand.u32 2147483647, %v3278
      %v3311 = vand.u32 2147483647, %v3279
      %v3312 = vand.u32 2147483647, %v3280
      %v3313 = vand.u32 2147483647, %v3281
      %v3314 = vmul.f32 %v3282, 0.3275911
      %v3315 = vmul.f32 %v3283, 0.3275911
      %v3316 = vmul.f32 %v3284, 0.3275911
      %v3317 = vmul.f32 %v3285, 0.3275911
      %v3318 = vmul.f32 %v3286, 0.3275911
      %v3319 = vmul.f32 %v3287, 0.3275911
      %v3320 = vmul.f32 %v3288, 0.3275911
      %v3321 = vmul.f32 %v3289, 0.3275911
      %v3322 = vmul.f32 %v3290, 0.3275911
      %v3323 = vmul.f32 %v3291, 0.3275911
      %v3324 = vmul.f32 %v3292, 0.3275911
      %v3325 = vmul.f32 %v3293, 0.3275911
      %v3326 = vmul.f32 %v3294, 0.3275911
      %v3327 = vmul.f32 %v3295, 0.3275911
      %v3328 = vmul.f32 %v3296, 0.3275911
      %v3329 = vmul.f32 %v3297, 0.3275911
      %v3330 = vmul.f32 %v3298, 0.3275911
      %v3331 = vmul.f32 %v3299, 0.3275911
      %v3332 = vmul.f32 %v3300, 0.3275911
      %v3333 = vmul.f32 %v3301, 0.3275911
      %v3334 = vmul.f32 %v3302, 0.3275911
      %v3335 = vmul.f32 %v3303, 0.3275911
      %v3336 = vmul.f32 %v3304, 0.3275911
      %v3337 = vmul.f32 %v3305, 0.3275911
      %v3338 = vmul.f32 %v3306, 0.3275911
      %v3339 = vmul.f32 %v3307, 0.3275911
      %v3340 = vmul.f32 %v3308, 0.3275911
      %v3341 = vmul.f32 %v3309, 0.3275911
      %v3342 = vmul.f32 %v3310, 0.3275911
      %v3343 = vmul.f32 %v3311, 0.3275911
      %v3344 = vmul.f32 %v3312, 0.3275911
      %v3345 = vmul.f32 %v3313, 0.3275911
      %v3346 = vadd.f32 %v3314, 1.0
      %v3347 = vadd.f32 %v3315, 1.0
      %v3348 = vadd.f32 %v3316, 1.0
      %v3349 = vadd.f32 %v3317, 1.0
      %v3350 = vadd.f32 %v3318, 1.0
      %v3351 = vadd.f32 %v3319, 1.0
      %v3352 = vadd.f32 %v3320, 1.0
      %v3353 = vadd.f32 %v3321, 1.0
      %v3354 = vadd.f32 %v3322, 1.0
      %v3355 = vadd.f32 %v3323, 1.0
      %v3356 = vadd.f32 %v3324, 1.0
      %v3357 = vadd.f32 %v3325, 1.0
      %v3358 = vadd.f32 %v3326, 1.0
      %v3359 = vadd.f32 %v3327, 1.0
      %v3360 = vadd.f32 %v3328, 1.0
      %v3361 = vadd.f32 %v3329, 1.0
      %v3362 = vadd.f32 %v3330, 1.0
      %v3363 = vadd.f32 %v3331, 1.0
      %v3364 = vadd.f32 %v3332, 1.0
      %v3365 = vadd.f32 %v3333, 1.0
      %v3366 = vadd.f32 %v3334, 1.0
      %v3367 = vadd.f32 %v3335, 1.0
      %v3368 = vadd.f32 %v3336, 1.0
      %v3369 = vadd.f32 %v3337, 1.0
      %v3370 = vadd.f32 %v3338, 1.0
      %v3371 = vadd.f32 %v3339, 1.0
      %v3372 = vadd.f32 %v3340, 1.0
      %v3373 = vadd.f32 %v3341, 1.0
      %v3374 = vadd.f32 %v3342, 1.0
      %v3375 = vadd.f32 %v3343, 1.0
      %v3376 = vadd.f32 %v3344, 1.0
      %v3377 = vadd.f32 %v3345, 1.0
      %v3378 = vrcp.pop %v3346
      %v3379 = vrcp.pop %v3347
      %v3380 = vrcp.pop %v3348
      %v3381 = vrcp.pop %v3349
      %v3382 = vrcp.pop %v3350
      %v3383 = vrcp.pop %v3351
      %v3384 = vrcp.pop %v3352
      %v3385 = vrcp.pop %v3353
      %v3386 = vrcp.pop %v3354
      %v3387 = vrcp.pop %v3355
      %v3388 = vrcp.pop %v3356
      %v3389 = vrcp.pop %v3357
      %v3390 = vrcp.pop %v3358
      %v3391 = vrcp.pop %v3359
      %v3392 = vrcp.pop %v3360
      %v3393 = vrcp.pop %v3361
      %v3394 = vrcp.pop %v3362
      %v3395 = vrcp.pop %v3363
      %v3396 = vrcp.pop %v3364
      %v3397 = vrcp.pop %v3365
      %v3398 = vrcp.pop %v3366
      %v3399 = vrcp.pop %v3367
      %v3400 = vrcp.pop %v3368
      %v3401 = vrcp.pop %v3369
      %v3402 = vrcp.pop %v3370
      %v3403 = vrcp.pop %v3371
      %v3404 = vrcp.pop %v3372
      %v3405 = vrcp.pop %v3373
      %v3406 = vrcp.pop %v3374
      %v3407 = vrcp.pop %v3375
      %v3408 = vrcp.pop %v3376
      %v3409 = vrcp.pop %v3377
      %v3410 = vmul.f32 %v3378, 1.0614054
      %v3411 = vmul.f32 %v3379, 1.0614054
      %v3412 = vmul.f32 %v3380, 1.0614054
      %v3413 = vmul.f32 %v3381, 1.0614054
      %v3414 = vmul.f32 %v3382, 1.0614054
      %v3415 = vmul.f32 %v3383, 1.0614054
      %v3416 = vmul.f32 %v3384, 1.0614054
      %v3417 = vmul.f32 %v3385, 1.0614054
      %v3418 = vmul.f32 %v3386, 1.0614054
      %v3419 = vmul.f32 %v3387, 1.0614054
      %v3420 = vmul.f32 %v3388, 1.0614054
      %v3421 = vmul.f32 %v3389, 1.0614054
      %v3422 = vmul.f32 %v3390, 1.0614054
      %v3423 = vmul.f32 %v3391, 1.0614054
      %v3424 = vmul.f32 %v3392, 1.0614054
      %v3425 = vmul.f32 %v3393, 1.0614054
      %v3426 = vmul.f32 %v3394, 1.0614054
      %v3427 = vmul.f32 %v3395, 1.0614054
      %v3428 = vmul.f32 %v3396, 1.0614054
      %v3429 = vmul.f32 %v3397, 1.0614054
      %v3430 = vmul.f32 %v3398, 1.0614054
      %v3431 = vmul.f32 %v3399, 1.0614054
      %v3432 = vmul.f32 %v3400, 1.0614054
      %v3433 = vmul.f32 %v3401, 1.0614054
      %v3434 = vmul.f32 %v3402, 1.0614054
      %v3435 = vmul.f32 %v3403, 1.0614054
      %v3436 = vmul.f32 %v3404, 1.0614054
      %v3437 = vmul.f32 %v3405, 1.0614054
      %v3438 = vmul.f32 %v3406, 1.0614054
      %v3439 = vmul.f32 %v3407, 1.0614054
      %v3440 = vmul.f32 %v3408, 1.0614054
      %v3441 = vmul.f32 %v3409, 1.0614054
      %v3442 = vadd.f32 %v3410, -1.4531521
      %v3443 = vadd.f32 %v3411, -1.4531521
      %v3444 = vadd.f32 %v3412, -1.4531521
      %v3445 = vadd.f32 %v3413, -1.4531521
      %v3446 = vadd.f32 %v3414, -1.4531521
      %v3447 = vadd.f32 %v3415, -1.4531521
      %v3448 = vadd.f32 %v3416, -1.4531521
      %v3449 = vadd.f32 %v3417, -1.4531521
      %v3450 = vadd.f32 %v3418, -1.4531521
      %v3451 = vadd.f32 %v3419, -1.4531521
      %v3452 = vadd.f32 %v3420, -1.4531521
      %v3453 = vadd.f32 %v3421, -1.4531521
      %v3454 = vadd.f32 %v3422, -1.4531521
      %v3455 = vadd.f32 %v3423, -1.4531521
      %v3456 = vadd.f32 %v3424, -1.4531521
      %v3457 = vadd.f32 %v3425, -1.4531521
      %v3458 = vadd.f32 %v3426, -1.4531521
      %v3459 = vadd.f32 %v3427, -1.4531521
      %v3460 = vadd.f32 %v3428, -1.4531521
      %v3461 = vadd.f32 %v3429, -1.4531521
      %v3462 = vadd.f32 %v3430, -1.4531521
      %v3463 = vadd.f32 %v3431, -1.4531521
      %v3464 = vadd.f32 %v3432, -1.4531521
      %v3465 = vadd.f32 %v3433, -1.4531521
      %v3466 = vadd.f32 %v3434, -1.4531521
      %v3467 = vadd.f32 %v3435, -1.4531521
      %v3468 = vadd.f32 %v3436, -1.4531521
      %v3469 = vadd.f32 %v3437, -1.4531521
      %v3470 = vadd.f32 %v3438, -1.4531521
      %v3471 = vadd.f32 %v3439, -1.4531521
      %v3472 = vadd.f32 %v3440, -1.4531521
      %v3473 = vadd.f32 %v3441, -1.4531521
      %v3474 = vmul.f32 %v3442, %v3378
      %v3475 = vmul.f32 %v3443, %v3379
      %v3476 = vmul.f32 %v3444, %v3380
      %v3477 = vmul.f32 %v3445, %v3381
      %v3478 = vmul.f32 %v3446, %v3382
      %v3479 = vmul.f32 %v3447, %v3383
      %v3480 = vmul.f32 %v3448, %v3384
      %v3481 = vmul.f32 %v3449, %v3385
      %v3482 = vmul.f32 %v3450, %v3386
      %v3483 = vmul.f32 %v3451, %v3387
      %v3484 = vmul.f32 %v3452, %v3388
      %v3485 = vmul.f32 %v3453, %v3389
      %v3486 = vmul.f32 %v3454, %v3390
      %v3487 = vmul.f32 %v3455, %v3391
      %v3488 = vmul.f32 %v3456, %v3392
      %v3489 = vmul.f32 %v3457, %v3393
      %v3490 = vmul.f32 %v3458, %v3394
      %v3491 = vmul.f32 %v3459, %v3395
      %v3492 = vmul.f32 %v3460, %v3396
      %v3493 = vmul.f32 %v3461, %v3397
      %v3494 = vmul.f32 %v3462, %v3398
      %v3495 = vmul.f32 %v3463, %v3399
      %v3496 = vmul.f32 %v3464, %v3400
      %v3497 = vmul.f32 %v3465, %v3401
      %v3498 = vmul.f32 %v3466, %v3402
      %v3499 = vmul.f32 %v3467, %v3403
      %v3500 = vmul.f32 %v3468, %v3404
      %v3501 = vmul.f32 %v3469, %v3405
      %v3502 = vmul.f32 %v3470, %v3406
      %v3503 = vmul.f32 %v3471, %v3407
      %v3504 = vmul.f32 %v3472, %v3408
      %v3505 = vmul.f32 %v3473, %v3409
      %v3506 = vadd.f32 %v3474, 1.4214138
      %v3507 = vadd.f32 %v3475, 1.4214138
      %v3508 = vadd.f32 %v3476, 1.4214138
      %v3509 = vadd.f32 %v3477, 1.4214138
      %v3510 = vadd.f32 %v3478, 1.4214138
      %v3511 = vadd.f32 %v3479, 1.4214138
      %v3512 = vadd.f32 %v3480, 1.4214138
      %v3513 = vadd.f32 %v3481, 1.4214138
      %v3514 = vadd.f32 %v3482, 1.4214138
      %v3515 = vadd.f32 %v3483, 1.4214138
      %v3516 = vadd.f32 %v3484, 1.4214138
      %v3517 = vadd.f32 %v3485, 1.4214138
      %v3518 = vadd.f32 %v3486, 1.4214138
      %v3519 = vadd.f32 %v3487, 1.4214138
      %v3520 = vadd.f32 %v3488, 1.4214138
      %v3521 = vadd.f32 %v3489, 1.4214138
      %v3522 = vadd.f32 %v3490, 1.4214138
      %v3523 = vadd.f32 %v3491, 1.4214138
      %v3524 = vadd.f32 %v3492, 1.4214138
      %v3525 = vadd.f32 %v3493, 1.4214138
      %v3526 = vadd.f32 %v3494, 1.4214138
      %v3527 = vadd.f32 %v3495, 1.4214138
      %v3528 = vadd.f32 %v3496, 1.4214138
      %v3529 = vadd.f32 %v3497, 1.4214138
      %v3530 = vadd.f32 %v3498, 1.4214138
      %v3531 = vadd.f32 %v3499, 1.4214138
      %v3532 = vadd.f32 %v3500, 1.4214138
      %v3533 = vadd.f32 %v3501, 1.4214138
      %v3534 = vadd.f32 %v3502, 1.4214138
      %v3535 = vadd.f32 %v3503, 1.4214138
      %v3536 = vadd.f32 %v3504, 1.4214138
      %v3537 = vadd.f32 %v3505, 1.4214138
      %v3538 = vmul.f32 %v3506, %v3378
      %v3539 = vmul.f32 %v3507, %v3379
      %v3540 = vmul.f32 %v3508, %v3380
      %v3541 = vmul.f32 %v3509, %v3381
      %v3542 = vmul.f32 %v3510, %v3382
      %v3543 = vmul.f32 %v3511, %v3383
      %v3544 = vmul.f32 %v3512, %v3384
      %v3545 = vmul.f32 %v3513, %v3385
      %v3546 = vmul.f32 %v3514, %v3386
      %v3547 = vmul.f32 %v3515, %v3387
      %v3548 = vmul.f32 %v3516, %v3388
      %v3549 = vmul.f32 %v3517, %v3389
      %v3550 = vmul.f32 %v3518, %v3390
      %v3551 = vmul.f32 %v3519, %v3391
      %v3552 = vmul.f32 %v3520, %v3392
      %v3553 = vmul.f32 %v3521, %v3393
      %v3554 = vmul.f32 %v3522, %v3394
      %v3555 = vmul.f32 %v3523, %v3395
      %v3556 = vmul.f32 %v3524, %v3396
      %v3557 = vmul.f32 %v3525, %v3397
      %v3558 = vmul.f32 %v3526, %v3398
      %v3559 = vmul.f32 %v3527, %v3399
      %v3560 = vmul.f32 %v3528, %v3400
      %v3561 = vmul.f32 %v3529, %v3401
      %v3562 = vmul.f32 %v3530, %v3402
      %v3563 = vmul.f32 %v3531, %v3403
      %v3564 = vmul.f32 %v3532, %v3404
      %v3565 = vmul.f32 %v3533, %v3405
      %v3566 = vmul.f32 %v3534, %v3406
      %v3567 = vmul.f32 %v3535, %v3407
      %v3568 = vmul.f32 %v3536, %v3408
      %v3569 = vmul.f32 %v3537, %v3409
      %v3570 = vadd.f32 %v3538, -0.28449672
      %v3571 = vadd.f32 %v3539, -0.28449672
      %v3572 = vadd.f32 %v3540, -0.28449672
      %v3573 = vadd.f32 %v3541, -0.28449672
      %v3574 = vadd.f32 %v3542, -0.28449672
      %v3575 = vadd.f32 %v3543, -0.28449672
      %v3576 = vadd.f32 %v3544, -0.28449672
      %v3577 = vadd.f32 %v3545, -0.28449672
      %v3578 = vadd.f32 %v3546, -0.28449672
      %v3579 = vadd.f32 %v3547, -0.28449672
      %v3580 = vadd.f32 %v3548, -0.28449672
      %v3581 = vadd.f32 %v3549, -0.28449672
      %v3582 = vadd.f32 %v3550, -0.28449672
      %v3583 = vadd.f32 %v3551, -0.28449672
      %v3584 = vadd.f32 %v3552, -0.28449672
      %v3585 = vadd.f32 %v3553, -0.28449672
      %v3586 = vadd.f32 %v3554, -0.28449672
      %v3587 = vadd.f32 %v3555, -0.28449672
      %v3588 = vadd.f32 %v3556, -0.28449672
      %v3589 = vadd.f32 %v3557, -0.28449672
      %v3590 = vadd.f32 %v3558, -0.28449672
      %v3591 = vadd.f32 %v3559, -0.28449672
      %v3592 = vadd.f32 %v3560, -0.28449672
      %v3593 = vadd.f32 %v3561, -0.28449672
      %v3594 = vadd.f32 %v3562, -0.28449672
      %v3595 = vadd.f32 %v3563, -0.28449672
      %v3596 = vadd.f32 %v3564, -0.28449672
      %v3597 = vadd.f32 %v3565, -0.28449672
      %v3598 = vadd.f32 %v3566, -0.28449672
      %v3599 = vadd.f32 %v3567, -0.28449672
      %v3600 = vadd.f32 %v3568, -0.28449672
      %v3601 = vadd.f32 %v3569, -0.28449672
      %v3602 = vmul.f32 %v3570, %v3378
      %v3603 = vmul.f32 %v3571, %v3379
      %v3604 = vmul.f32 %v3572, %v3380
      %v3605 = vmul.f32 %v3573, %v3381
      %v3606 = vmul.f32 %v3574, %v3382
      %v3607 = vmul.f32 %v3575, %v3383
      %v3608 = vmul.f32 %v3576, %v3384
      %v3609 = vmul.f32 %v3577, %v3385
      %v3610 = vmul.f32 %v3578, %v3386
      %v3611 = vmul.f32 %v3579, %v3387
      %v3612 = vmul.f32 %v3580, %v3388
      %v3613 = vmul.f32 %v3581, %v3389
      %v3614 = vmul.f32 %v3582, %v3390
      %v3615 = vmul.f32 %v3583, %v3391
      %v3616 = vmul.f32 %v3584, %v3392
      %v3617 = vmul.f32 %v3585, %v3393
      %v3618 = vmul.f32 %v3586, %v3394
      %v3619 = vmul.f32 %v3587, %v3395
      %v3620 = vmul.f32 %v3588, %v3396
      %v3621 = vmul.f32 %v3589, %v3397
      %v3622 = vmul.f32 %v3590, %v3398
      %v3623 = vmul.f32 %v3591, %v3399
      %v3624 = vmul.f32 %v3592, %v3400
      %v3625 = vmul.f32 %v3593, %v3401
      %v3626 = vmul.f32 %v3594, %v3402
      %v3627 = vmul.f32 %v3595, %v3403
      %v3628 = vmul.f32 %v3596, %v3404
      %v3629 = vmul.f32 %v3597, %v3405
      %v3630 = vmul.f32 %v3598, %v3406
      %v3631 = vmul.f32 %v3599, %v3407
      %v3632 = vmul.f32 %v3600, %v3408
      %v3633 = vmul.f32 %v3601, %v3409
      %v3634 = vadd.f32 %v3602, 0.2548296
      %v3635 = vadd.f32 %v3603, 0.2548296
      %v3636 = vadd.f32 %v3604, 0.2548296
      %v3637 = vadd.f32 %v3605, 0.2548296
      %v3638 = vadd.f32 %v3606, 0.2548296
      %v3639 = vadd.f32 %v3607, 0.2548296
      %v3640 = vadd.f32 %v3608, 0.2548296
      %v3641 = vadd.f32 %v3609, 0.2548296
      %v3642 = vadd.f32 %v3610, 0.2548296
      %v3643 = vadd.f32 %v3611, 0.2548296
      %v3644 = vadd.f32 %v3612, 0.2548296
      %v3645 = vadd.f32 %v3613, 0.2548296
      %v3646 = vadd.f32 %v3614, 0.2548296
      %v3647 = vadd.f32 %v3615, 0.2548296
      %v3648 = vadd.f32 %v3616, 0.2548296
      %v3649 = vadd.f32 %v3617, 0.2548296
      %v3650 = vadd.f32 %v3618, 0.2548296
      %v3651 = vadd.f32 %v3619, 0.2548296
      %v3652 = vadd.f32 %v3620, 0.2548296
      %v3653 = vadd.f32 %v3621, 0.2548296
      %v3654 = vadd.f32 %v3622, 0.2548296
      %v3655 = vadd.f32 %v3623, 0.2548296
      %v3656 = vadd.f32 %v3624, 0.2548296
      %v3657 = vadd.f32 %v3625, 0.2548296
      %v3658 = vadd.f32 %v3626, 0.2548296
      %v3659 = vadd.f32 %v3627, 0.2548296
      %v3660 = vadd.f32 %v3628, 0.2548296
      %v3661 = vadd.f32 %v3629, 0.2548296
      %v3662 = vadd.f32 %v3630, 0.2548296
      %v3663 = vadd.f32 %v3631, 0.2548296
      %v3664 = vadd.f32 %v3632, 0.2548296
      %v3665 = vadd.f32 %v3633, 0.2548296
      %v3666 = vmul.f32 %v3634, %v3378
      %v3667 = vmul.f32 %v3635, %v3379
      %v3668 = vmul.f32 %v3636, %v3380
      %v3669 = vmul.f32 %v3637, %v3381
      %v3670 = vmul.f32 %v3638, %v3382
      %v3671 = vmul.f32 %v3639, %v3383
      %v3672 = vmul.f32 %v3640, %v3384
      %v3673 = vmul.f32 %v3641, %v3385
      %v3674 = vmul.f32 %v3642, %v3386
      %v3675 = vmul.f32 %v3643, %v3387
      %v3676 = vmul.f32 %v3644, %v3388
      %v3677 = vmul.f32 %v3645, %v3389
      %v3678 = vmul.f32 %v3646, %v3390
      %v3679 = vmul.f32 %v3647, %v3391
      %v3680 = vmul.f32 %v3648, %v3392
      %v3681 = vmul.f32 %v3649, %v3393
      %v3682 = vmul.f32 %v3650, %v3394
      %v3683 = vmul.f32 %v3651, %v3395
      %v3684 = vmul.f32 %v3652, %v3396
      %v3685 = vmul.f32 %v3653, %v3397
      %v3686 = vmul.f32 %v3654, %v3398
      %v3687 = vmul.f32 %v3655, %v3399
      %v3688 = vmul.f32 %v3656, %v3400
      %v3689 = vmul.f32 %v3657, %v3401
      %v3690 = vmul.f32 %v3658, %v3402
      %v3691 = vmul.f32 %v3659, %v3403
      %v3692 = vmul.f32 %v3660, %v3404
      %v3693 = vmul.f32 %v3661, %v3405
      %v3694 = vmul.f32 %v3662, %v3406
      %v3695 = vmul.f32 %v3663, %v3407
      %v3696 = vmul.f32 %v3664, %v3408
      %v3697 = vmul.f32 %v3665, %v3409
      %v3698 = vsub.f32 0.0, %v3282
      %v3699 = vsub.f32 0.0, %v3283
      %v3700 = vsub.f32 0.0, %v3284
      %v3701 = vsub.f32 0.0, %v3285
      %v3702 = vsub.f32 0.0, %v3286
      %v3703 = vsub.f32 0.0, %v3287
      %v3704 = vsub.f32 0.0, %v3288
      %v3705 = vsub.f32 0.0, %v3289
      %v3706 = vsub.f32 0.0, %v3290
      %v3707 = vsub.f32 0.0, %v3291
      %v3708 = vsub.f32 0.0, %v3292
      %v3709 = vsub.f32 0.0, %v3293
      %v3710 = vsub.f32 0.0, %v3294
      %v3711 = vsub.f32 0.0, %v3295
      %v3712 = vsub.f32 0.0, %v3296
      %v3713 = vsub.f32 0.0, %v3297
      %v3714 = vsub.f32 0.0, %v3298
      %v3715 = vsub.f32 0.0, %v3299
      %v3716 = vsub.f32 0.0, %v3300
      %v3717 = vsub.f32 0.0, %v3301
      %v3718 = vsub.f32 0.0, %v3302
      %v3719 = vsub.f32 0.0, %v3303
      %v3720 = vsub.f32 0.0, %v3304
      %v3721 = vsub.f32 0.0, %v3305
      %v3722 = vsub.f32 0.0, %v3306
      %v3723 = vsub.f32 0.0, %v3307
      %v3724 = vsub.f32 0.0, %v3308
      %v3725 = vsub.f32 0.0, %v3309
      %v3726 = vsub.f32 0.0, %v3310
      %v3727 = vsub.f32 0.0, %v3311
      %v3728 = vsub.f32 0.0, %v3312
      %v3729 = vsub.f32 0.0, %v3313
      %v3730 = vmul.f32 %v3698, %v3282
      %v3731 = vmul.f32 %v3699, %v3283
      %v3732 = vmul.f32 %v3700, %v3284
      %v3733 = vmul.f32 %v3701, %v3285
      %v3734 = vmul.f32 %v3702, %v3286
      %v3735 = vmul.f32 %v3703, %v3287
      %v3736 = vmul.f32 %v3704, %v3288
      %v3737 = vmul.f32 %v3705, %v3289
      %v3738 = vmul.f32 %v3706, %v3290
      %v3739 = vmul.f32 %v3707, %v3291
      %v3740 = vmul.f32 %v3708, %v3292
      %v3741 = vmul.f32 %v3709, %v3293
      %v3742 = vmul.f32 %v3710, %v3294
      %v3743 = vmul.f32 %v3711, %v3295
      %v3744 = vmul.f32 %v3712, %v3296
      %v3745 = vmul.f32 %v3713, %v3297
      %v3746 = vmul.f32 %v3714, %v3298
      %v3747 = vmul.f32 %v3715, %v3299
      %v3748 = vmul.f32 %v3716, %v3300
      %v3749 = vmul.f32 %v3717, %v3301
      %v3750 = vmul.f32 %v3718, %v3302
      %v3751 = vmul.f32 %v3719, %v3303
      %v3752 = vmul.f32 %v3720, %v3304
      %v3753 = vmul.f32 %v3721, %v3305
      %v3754 = vmul.f32 %v3722, %v3306
      %v3755 = vmul.f32 %v3723, %v3307
      %v3756 = vmul.f32 %v3724, %v3308
      %v3757 = vmul.f32 %v3725, %v3309
      %v3758 = vmul.f32 %v3726, %v3310
      %v3759 = vmul.f32 %v3727, %v3311
      %v3760 = vmul.f32 %v3728, %v3312
      %v3761 = vmul.f32 %v3729, %v3313
      %v3762 = vmul.f32 %v3730, 1.442695
      %v3763 = vpow.pop %v3762
      %v3764 = vmul.f32 %v3731, 1.442695
      %v3765 = vpow.pop %v3764
      %v3766 = vmul.f32 %v3732, 1.442695
      %v3767 = vpow.pop %v3766
      %v3768 = vmul.f32 %v3733, 1.442695
      %v3769 = vpow.pop %v3768
      %v3770 = vmul.f32 %v3734, 1.442695
      %v3771 = vpow.pop %v3770
      %v3772 = vmul.f32 %v3735, 1.442695
      %v3773 = vpow.pop %v3772
      %v3774 = vmul.f32 %v3736, 1.442695
      %v3775 = vpow.pop %v3774
      %v3776 = vmul.f32 %v3737, 1.442695
      %v3777 = vpow.pop %v3776
      %v3778 = vmul.f32 %v3738, 1.442695
      %v3779 = vpow.pop %v3778
      %v3780 = vmul.f32 %v3739, 1.442695
      %v3781 = vpow.pop %v3780
      %v3782 = vmul.f32 %v3740, 1.442695
      %v3783 = vpow.pop %v3782
      %v3784 = vmul.f32 %v3741, 1.442695
      %v3785 = vpow.pop %v3784
      %v3786 = vmul.f32 %v3742, 1.442695
      %v3787 = vpow.pop %v3786
      %v3788 = vmul.f32 %v3743, 1.442695
      %v3789 = vpow.pop %v3788
      %v3790 = vmul.f32 %v3744, 1.442695
      %v3791 = vpow.pop %v3790
      %v3792 = vmul.f32 %v3745, 1.442695
      %v3793 = vpow.pop %v3792
      %v3794 = vmul.f32 %v3746, 1.442695
      %v3795 = vpow.pop %v3794
      %v3796 = vmul.f32 %v3747, 1.442695
      %v3797 = vpow.pop %v3796
      %v3798 = vmul.f32 %v3748, 1.442695
      %v3799 = vpow.pop %v3798
      %v3800 = vmul.f32 %v3749, 1.442695
      %v3801 = vpow.pop %v3800
      %v3802 = vmul.f32 %v3750, 1.442695
      %v3803 = vpow.pop %v3802
      %v3804 = vmul.f32 %v3751, 1.442695
      %v3805 = vpow.pop %v3804
      %v3806 = vmul.f32 %v3752, 1.442695
      %v3807 = vpow.pop %v3806
      %v3808 = vmul.f32 %v3753, 1.442695
      %v3809 = vpow.pop %v3808
      %v3810 = vmul.f32 %v3754, 1.442695
      %v3811 = vpow.pop %v3810
      %v3812 = vmul.f32 %v3755, 1.442695
      %v3813 = vpow.pop %v3812
      %v3814 = vmul.f32 %v3756, 1.442695
      %v3815 = vpow.pop %v3814
      %v3816 = vmul.f32 %v3757, 1.442695
      %v3817 = vpow.pop %v3816
      %v3818 = vmul.f32 %v3758, 1.442695
      %v3819 = vpow.pop %v3818
      %v3820 = vmul.f32 %v3759, 1.442695
      %v3821 = vpow.pop %v3820
      %v3822 = vmul.f32 %v3760, 1.442695
      %v3823 = vpow.pop %v3822
      %v3824 = vmul.f32 %v3761, 1.442695
      %v3825 = vpow.pop %v3824
      %v3826 = vmul.f32 %v3666, %v3763
      %v3827 = vmul.f32 %v3667, %v3765
      %v3828 = vmul.f32 %v3668, %v3767
      %v3829 = vmul.f32 %v3669, %v3769
      %v3830 = vmul.f32 %v3670, %v3771
      %v3831 = vmul.f32 %v3671, %v3773
      %v3832 = vmul.f32 %v3672, %v3775
      %v3833 = vmul.f32 %v3673, %v3777
      %v3834 = vmul.f32 %v3674, %v3779
      %v3835 = vmul.f32 %v3675, %v3781
      %v3836 = vmul.f32 %v3676, %v3783
      %v3837 = vmul.f32 %v3677, %v3785
      %v3838 = vmul.f32 %v3678, %v3787
      %v3839 = vmul.f32 %v3679, %v3789
      %v3840 = vmul.f32 %v3680, %v3791
      %v3841 = vmul.f32 %v3681, %v3793
      %v3842 = vmul.f32 %v3682, %v3795
      %v3843 = vmul.f32 %v3683, %v3797
      %v3844 = vmul.f32 %v3684, %v3799
      %v3845 = vmul.f32 %v3685, %v3801
      %v3846 = vmul.f32 %v3686, %v3803
      %v3847 = vmul.f32 %v3687, %v3805
      %v3848 = vmul.f32 %v3688, %v3807
      %v3849 = vmul.f32 %v3689, %v3809
      %v3850 = vmul.f32 %v3690, %v3811
      %v3851 = vmul.f32 %v3691, %v3813
      %v3852 = vmul.f32 %v3692, %v3815
      %v3853 = vmul.f32 %v3693, %v3817
      %v3854 = vmul.f32 %v3694, %v3819
      %v3855 = vmul.f32 %v3695, %v3821
      %v3856 = vmul.f32 %v3696, %v3823
      %v3857 = vmul.f32 %v3697, %v3825
      %v3858 = vsub.f32 1.0, %v3826
      %v3859 = vsub.f32 1.0, %v3827
      %v3860 = vsub.f32 1.0, %v3828
      %v3861 = vsub.f32 1.0, %v3829
      %v3862 = vsub.f32 1.0, %v3830
      %v3863 = vsub.f32 1.0, %v3831
      %v3864 = vsub.f32 1.0, %v3832
      %v3865 = vsub.f32 1.0, %v3833
      %v3866 = vsub.f32 1.0, %v3834
      %v3867 = vsub.f32 1.0, %v3835
      %v3868 = vsub.f32 1.0, %v3836
      %v3869 = vsub.f32 1.0, %v3837
      %v3870 = vsub.f32 1.0, %v3838
      %v3871 = vsub.f32 1.0, %v3839
      %v3872 = vsub.f32 1.0, %v3840
      %v3873 = vsub.f32 1.0, %v3841
      %v3874 = vsub.f32 1.0, %v3842
      %v3875 = vsub.f32 1.0, %v3843
      %v3876 = vsub.f32 1.0, %v3844
      %v3877 = vsub.f32 1.0, %v3845
      %v3878 = vsub.f32 1.0, %v3846
      %v3879 = vsub.f32 1.0, %v3847
      %v3880 = vsub.f32 1.0, %v3848
      %v3881 = vsub.f32 1.0, %v3849
      %v3882 = vsub.f32 1.0, %v3850
      %v3883 = vsub.f32 1.0, %v3851
      %v3884 = vsub.f32 1.0, %v3852
      %v3885 = vsub.f32 1.0, %v3853
      %v3886 = vsub.f32 1.0, %v3854
      %v3887 = vsub.f32 1.0, %v3855
      %v3888 = vsub.f32 1.0, %v3856
      %v3889 = vsub.f32 1.0, %v3857
      %vm3890 = vcmp.ge.f32.partialorder %v3250, 0.0
      %vm3891 = vcmp.ge.f32.partialorder %v3251, 0.0
      %vm3892 = vcmp.ge.f32.partialorder %v3252, 0.0
      %vm3893 = vcmp.ge.f32.partialorder %v3253, 0.0
      %vm3894 = vcmp.ge.f32.partialorder %v3254, 0.0
      %vm3895 = vcmp.ge.f32.partialorder %v3255, 0.0
      %vm3896 = vcmp.ge.f32.partialorder %v3256, 0.0
      %vm3897 = vcmp.ge.f32.partialorder %v3257, 0.0
      %vm3898 = vcmp.ge.f32.partialorder %v3258, 0.0
      %vm3899 = vcmp.ge.f32.partialorder %v3259, 0.0
      %vm3900 = vcmp.ge.f32.partialorder %v3260, 0.0
      %vm3901 = vcmp.ge.f32.partialorder %v3261, 0.0
      %vm3902 = vcmp.ge.f32.partialorder %v3262, 0.0
      %vm3903 = vcmp.ge.f32.partialorder %v3263, 0.0
      %vm3904 = vcmp.ge.f32.partialorder %v3264, 0.0
      %vm3905 = vcmp.ge.f32.partialorder %v3265, 0.0
      %vm3906 = vcmp.ge.f32.partialorder %v3266, 0.0
      %vm3907 = vcmp.ge.f32.partialorder %v3267, 0.0
      %vm3908 = vcmp.ge.f32.partialorder %v3268, 0.0
      %vm3909 = vcmp.ge.f32.partialorder %v3269, 0.0
      %vm3910 = vcmp.ge.f32.partialorder %v3270, 0.0
      %vm3911 = vcmp.ge.f32.partialorder %v3271, 0.0
      %vm3912 = vcmp.ge.f32.partialorder %v3272, 0.0
      %vm3913 = vcmp.ge.f32.partialorder %v3273, 0.0
      %vm3914 = vcmp.ge.f32.partialorder %v3274, 0.0
      %vm3915 = vcmp.ge.f32.partialorder %v3275, 0.0
      %vm3916 = vcmp.ge.f32.partialorder %v3276, 0.0
      %vm3917 = vcmp.ge.f32.partialorder %v3277, 0.0
      %vm3918 = vcmp.ge.f32.partialorder %v3278, 0.0
      %vm3919 = vcmp.ge.f32.partialorder %v3279, 0.0
      %vm3920 = vcmp.ge.f32.partialorder %v3280, 0.0
      %vm3921 = vcmp.ge.f32.partialorder %v3281, 0.0
      %v3922 = vsub.f32 0.0, %v3858
      %v3923 = vsub.f32 0.0, %v3859
      %v3924 = vsub.f32 0.0, %v3860
      %v3925 = vsub.f32 0.0, %v3861
      %v3926 = vsub.f32 0.0, %v3862
      %v3927 = vsub.f32 0.0, %v3863
      %v3928 = vsub.f32 0.0, %v3864
      %v3929 = vsub.f32 0.0, %v3865
      %v3930 = vsub.f32 0.0, %v3866
      %v3931 = vsub.f32 0.0, %v3867
      %v3932 = vsub.f32 0.0, %v3868
      %v3933 = vsub.f32 0.0, %v3869
      %v3934 = vsub.f32 0.0, %v3870
      %v3935 = vsub.f32 0.0, %v3871
      %v3936 = vsub.f32 0.0, %v3872
      %v3937 = vsub.f32 0.0, %v3873
      %v3938 = vsub.f32 0.0, %v3874
      %v3939 = vsub.f32 0.0, %v3875
      %v3940 = vsub.f32 0.0, %v3876
      %v3941 = vsub.f32 0.0, %v3877
      %v3942 = vsub.f32 0.0, %v3878
      %v3943 = vsub.f32 0.0, %v3879
      %v3944 = vsub.f32 0.0, %v3880
      %v3945 = vsub.f32 0.0, %v3881
      %v3946 = vsub.f32 0.0, %v3882
      %v3947 = vsub.f32 0.0, %v3883
      %v3948 = vsub.f32 0.0, %v3884
      %v3949 = vsub.f32 0.0, %v3885
      %v3950 = vsub.f32 0.0, %v3886
      %v3951 = vsub.f32 0.0, %v3887
      %v3952 = vsub.f32 0.0, %v3888
      %v3953 = vsub.f32 0.0, %v3889
      %v3954 = vsel %vm3890, %v3858, %v3922
      %v3955 = vsel %vm3891, %v3859, %v3923
      %v3956 = vsel %vm3892, %v3860, %v3924
      %v3957 = vsel %vm3893, %v3861, %v3925
      %v3958 = vsel %vm3894, %v3862, %v3926
      %v3959 = vsel %vm3895, %v3863, %v3927
      %v3960 = vsel %vm3896, %v3864, %v3928
      %v3961 = vsel %vm3897, %v3865, %v3929
      %v3962 = vsel %vm3898, %v3866, %v3930
      %v3963 = vsel %vm3899, %v3867, %v3931
      %v3964 = vsel %vm3900, %v3868, %v3932
      %v3965 = vsel %vm3901, %v3869, %v3933
      %v3966 = vsel %vm3902, %v3870, %v3934
      %v3967 = vsel %vm3903, %v3871, %v3935
      %v3968 = vsel %vm3904, %v3872, %v3936
      %v3969 = vsel %vm3905, %v3873, %v3937
      %v3970 = vsel %vm3906, %v3874, %v3938
      %v3971 = vsel %vm3907, %v3875, %v3939
      %v3972 = vsel %vm3908, %v3876, %v3940
      %v3973 = vsel %vm3909, %v3877, %v3941
      %v3974 = vsel %vm3910, %v3878, %v3942
      %v3975 = vsel %vm3911, %v3879, %v3943
      %v3976 = vsel %vm3912, %v3880, %v3944
      %v3977 = vsel %vm3913, %v3881, %v3945
      %v3978 = vsel %vm3914, %v3882, %v3946
      %v3979 = vsel %vm3915, %v3883, %v3947
      %v3980 = vsel %vm3916, %v3884, %v3948
      %v3981 = vsel %vm3917, %v3885, %v3949
      %v3982 = vsel %vm3918, %v3886, %v3950
      %v3983 = vsel %vm3919, %v3887, %v3951
      %v3984 = vsel %vm3920, %v3888, %v3952
      %v3985 = vsel %vm3921, %v3889, %v3953
      %v3986 = vadd.f32 %v3954, 1.0
      %v3987 = vadd.f32 %v3955, 1.0
      %v3988 = vadd.f32 %v3956, 1.0
      %v3989 = vadd.f32 %v3957, 1.0
      %v3990 = vadd.f32 %v3958, 1.0
      %v3991 = vadd.f32 %v3959, 1.0
      %v3992 = vadd.f32 %v3960, 1.0
      %v3993 = vadd.f32 %v3961, 1.0
      %v3994 = vadd.f32 %v3962, 1.0
      %v3995 = vadd.f32 %v3963, 1.0
      %v3996 = vadd.f32 %v3964, 1.0
      %v3997 = vadd.f32 %v3965, 1.0
      %v3998 = vadd.f32 %v3966, 1.0
      %v3999 = vadd.f32 %v3967, 1.0
      %v4000 = vadd.f32 %v3968, 1.0
      %v4001 = vadd.f32 %v3969, 1.0
      %v4002 = vadd.f32 %v3970, 1.0
      %v4003 = vadd.f32 %v3971, 1.0
      %v4004 = vadd.f32 %v3972, 1.0
      %v4005 = vadd.f32 %v3973, 1.0
      %v4006 = vadd.f32 %v3974, 1.0
      %v4007 = vadd.f32 %v3975, 1.0
      %v4008 = vadd.f32 %v3976, 1.0
      %v4009 = vadd.f32 %v3977, 1.0
      %v4010 = vadd.f32 %v3978, 1.0
      %v4011 = vadd.f32 %v3979, 1.0
      %v4012 = vadd.f32 %v3980, 1.0
      %v4013 = vadd.f32 %v3981, 1.0
      %v4014 = vadd.f32 %v3982, 1.0
      %v4015 = vadd.f32 %v3983, 1.0
      %v4016 = vadd.f32 %v3984, 1.0
      %v4017 = vadd.f32 %v3985, 1.0
      %v4018 = vmul.f32 %v3218, %v3986
      %v4019 = vmul.f32 %v3219, %v3987
      %v4020 = vmul.f32 %v3220, %v3988
      %v4021 = vmul.f32 %v3221, %v3989
      %v4022 = vmul.f32 %v3222, %v3990
      %v4023 = vmul.f32 %v3223, %v3991
      %v4024 = vmul.f32 %v3224, %v3992
      %v4025 = vmul.f32 %v3225, %v3993
      %v4026 = vmul.f32 %v3226, %v3994
      %v4027 = vmul.f32 %v3227, %v3995
      %v4028 = vmul.f32 %v3228, %v3996
      %v4029 = vmul.f32 %v3229, %v3997
      %v4030 = vmul.f32 %v3230, %v3998
      %v4031 = vmul.f32 %v3231, %v3999
      %v4032 = vmul.f32 %v3232, %v4000
      %v4033 = vmul.f32 %v3233, %v4001
      %v4034 = vmul.f32 %v3234, %v4002
      %v4035 = vmul.f32 %v3235, %v4003
      %v4036 = vmul.f32 %v3236, %v4004
      %v4037 = vmul.f32 %v3237, %v4005
      %v4038 = vmul.f32 %v3238, %v4006
      %v4039 = vmul.f32 %v3239, %v4007
      %v4040 = vmul.f32 %v3240, %v4008
      %v4041 = vmul.f32 %v3241, %v4009
      %v4042 = vmul.f32 %v3242, %v4010
      %v4043 = vmul.f32 %v3243, %v4011
      %v4044 = vmul.f32 %v3244, %v4012
      %v4045 = vmul.f32 %v3245, %v4013
      %v4046 = vmul.f32 %v3246, %v4014
      %v4047 = vmul.f32 %v3247, %v4015
      %v4048 = vmul.f32 %v3248, %v4016
      %v4049 = vmul.f32 %v3249, %v4017
      %v4050 = vmax.f32 %v4018, %v4020
      %v4051 = vmax.f32 %v4019, %v4021
      %vm4052 = vcmask 64512
      %4053 = vst.msk [vmem:[#allocation8] sm:$0xff] %vm4052, %v4050
      %4054 = vst.msk [vmem:[#allocation8 + $0x8] sm:$0xff] %vm4052, %v4051
      %v4055 = vmax.f32 %v4022, %v4024
      %v4056 = vmax.f32 %v4023, %v4025
      %4057 = vst.msk [vmem:[#allocation8 + $0x10] sm:$0xff] %vm4052, %v4055
      %4058 = vst.msk [vmem:[#allocation8 + $0x18] sm:$0xff] %vm4052, %v4056
      %v4059 = vmax.f32 %v4026, %v4028
      %v4060 = vmax.f32 %v4027, %v4029
      %4061 = vst.msk [vmem:[#allocation8 + $0x20] sm:$0xff] %vm4052, %v4059
      %4062 = vst.msk [vmem:[#allocation8 + $0x28] sm:$0xff] %vm4052, %v4060
      %v4063 = vmax.f32 %v4030, %v4032
      %v4064 = vmax.f32 %v4031, %v4033
      %4065 = vst.msk [vmem:[#allocation8 + $0x30] sm:$0xff] %vm4052, %v4063
      %4066 = vst.msk [vmem:[#allocation8 + $0x38] sm:$0xff] %vm4052, %v4064
      %v4067 = vmax.f32 %v4034, %v4036
      %v4068 = vmax.f32 %v4035, %v4037
      %4069 = vst.msk [vmem:[#allocation8 + $0x40] sm:$0xff] %vm4052, %v4067
      %4070 = vst.msk [vmem:[#allocation8 + $0x48] sm:$0xff] %vm4052, %v4068
      %v4071 = vmax.f32 %v4038, %v4040
      %v4072 = vmax.f32 %v4039, %v4041
      %4073 = vst.msk [vmem:[#allocation8 + $0x50] sm:$0xff] %vm4052, %v4071
      %4074 = vst.msk [vmem:[#allocation8 + $0x58] sm:$0xff] %vm4052, %v4072
      %v4075 = vmax.f32 %v4042, %v4044
      %v4076 = vmax.f32 %v4043, %v4045
      %4077 = vst.msk [vmem:[#allocation8 + $0x60] sm:$0xff] %vm4052, %v4075
      %4078 = vst.msk [vmem:[#allocation8 + $0x68] sm:$0xff] %vm4052, %v4076
      %v4079 = vmax.f32 %v4046, %v4048
      %v4080 = vmax.f32 %v4047, %v4049
      %4081 = vst.msk [vmem:[#allocation8 + $0x70] sm:$0xff] %vm4052, %v4079
      %4082 = vst.msk [vmem:[#allocation8 + $0x78] sm:$0xff] %vm4052, %v4080
      %v4083 = vld [vmem:[#allocation8] ss:$2 sm:$0xff]
      %s4084 = scalar_lea.vmem [#allocation8], 16
      %v4085 = vld [vmem:[%s4084] ss:$2 sm:$0xff]
      %s4086 = scalar_lea.vmem [#allocation8], 32
      %v4087 = vld [vmem:[%s4086] ss:$2 sm:$0xff]
      %s4088 = scalar_lea.vmem [#allocation8], 48
      %v4089 = vld [vmem:[%s4088] ss:$2 sm:$0xff]
      %s4090 = scalar_lea.vmem [#allocation8], 64
      %v4091 = vld [vmem:[%s4090] ss:$2 sm:$0xff]
      %s4092 = scalar_lea.vmem [#allocation8], 80
      %v4093 = vld [vmem:[%s4092] ss:$2 sm:$0xff]
      %s4094 = scalar_lea.vmem [#allocation8], 96
      %v4095 = vld [vmem:[%s4094] ss:$2 sm:$0xff]
      %s4096 = scalar_lea.vmem [#allocation8], 112
      %v4097 = vld [vmem:[%s4096] ss:$2 sm:$0xff]
      %s4098 = scalar_lea.vmem [#allocation8], 1
      %v4099 = vld [vmem:[%s4098] ss:$2 sm:$0xff]
      %s4100 = scalar_lea.vmem [#allocation8], 17
      %v4101 = vld [vmem:[%s4100] ss:$2 sm:$0xff]
      %s4102 = scalar_lea.vmem [#allocation8], 33
      %v4103 = vld [vmem:[%s4102] ss:$2 sm:$0xff]
      %s4104 = scalar_lea.vmem [#allocation8], 49
      %v4105 = vld [vmem:[%s4104] ss:$2 sm:$0xff]
      %s4106 = scalar_lea.vmem [#allocation8], 65
      %v4107 = vld [vmem:[%s4106] ss:$2 sm:$0xff]
      %s4108 = scalar_lea.vmem [#allocation8], 81
      %v4109 = vld [vmem:[%s4108] ss:$2 sm:$0xff]
      %s4110 = scalar_lea.vmem [#allocation8], 97
      %v4111 = vld [vmem:[%s4110] ss:$2 sm:$0xff]
      %s4112 = scalar_lea.vmem [#allocation8], 113
      %v4113 = vld [vmem:[%s4112] ss:$2 sm:$0xff]
      %v4114 = vmax.f32 %v4083, %v4099
      %v4115 = vmax.f32 %v4085, %v4101
      %v4116 = vmax.f32 %v4087, %v4103
      %v4117 = vmax.f32 %v4089, %v4105
      %v4118 = vmax.f32 %v4091, %v4107
      %v4119 = vmax.f32 %v4093, %v4109
      %v4120 = vmax.f32 %v4095, %v4111
      %v4121 = vmax.f32 %v4097, %v4113
      %vm4122 = vcmp.lt.s32.totalorder %v637, 0
      %v4123 = vsub.s32 0, %v637
      %v4124 = vsel %vm4122, %v4123, %v637
      %v4125 = vshrl.u32 %v4124, 3
      %v4126 = vand.u32 %v4124, 7
      %v4127 = vsub.s32 0, %v4126
      %v4128 = vsel %vm4122, %v4127, %v4126
      %vm4129 = vcmp.lt.s32.totalorder %v638, 0
      %v4130 = vsub.s32 0, %v638
      %v4131 = vsel %vm4129, %v4130, %v638
      %v4132 = vshrl.u32 %v4131, 3
      %v4133 = vand.u32 %v4131, 7
      %v4134 = vsub.s32 0, %v4133
      %v4135 = vsel %vm4129, %v4134, %v4133
      %vm4136 = vcmp.lt.s32.totalorder %v639, 0
      %v4137 = vsub.s32 0, %v639
      %v4138 = vsel %vm4136, %v4137, %v639
      %v4139 = vshrl.u32 %v4138, 3
      %v4140 = vand.u32 %v4138, 7
      %v4141 = vsub.s32 0, %v4140
      %v4142 = vsel %vm4136, %v4141, %v4140
      %vm4143 = vcmp.lt.s32.totalorder %v640, 0
      %v4144 = vsub.s32 0, %v640
      %v4145 = vsel %vm4143, %v4144, %v640
      %v4146 = vshrl.u32 %v4145, 3
      %v4147 = vand.u32 %v4145, 7
      %v4148 = vsub.s32 0, %v4147
      %v4149 = vsel %vm4143, %v4148, %v4147
      %vm4150 = vcmp.lt.s32.totalorder %v641, 0
      %v4151 = vsub.s32 0, %v641
      %v4152 = vsel %vm4150, %v4151, %v641
      %v4153 = vshrl.u32 %v4152, 3
      %v4154 = vand.u32 %v4152, 7
      %v4155 = vsub.s32 0, %v4154
      %v4156 = vsel %vm4150, %v4155, %v4154
      %vm4157 = vcmp.lt.s32.totalorder %v642, 0
      %v4158 = vsub.s32 0, %v642
      %v4159 = vsel %vm4157, %v4158, %v642
      %v4160 = vshrl.u32 %v4159, 3
      %v4161 = vand.u32 %v4159, 7
      %v4162 = vsub.s32 0, %v4161
      %v4163 = vsel %vm4157, %v4162, %v4161
      %vm4164 = vcmp.lt.s32.totalorder %v643, 0
      %v4165 = vsub.s32 0, %v643
      %v4166 = vsel %vm4164, %v4165, %v643
      %v4167 = vshrl.u32 %v4166, 3
      %v4168 = vand.u32 %v4166, 7
      %v4169 = vsub.s32 0, %v4168
      %v4170 = vsel %vm4164, %v4169, %v4168
      %vm4171 = vcmp.lt.s32.totalorder %v644, 0
      %v4172 = vsub.s32 0, %v644
      %v4173 = vsel %vm4171, %v4172, %v644
      %v4174 = vshrl.u32 %v4173, 3
      %v4175 = vand.u32 %v4173, 7
      %v4176 = vsub.s32 0, %v4175
      %v4177 = vsel %vm4171, %v4176, %v4175
      %vm4178 = vcmp.ne.s32.totalorder %v4128, 0
      %vm4179 = vcmp.ne.s32.totalorder %v4135, 0
      %vm4180 = vcmp.ne.s32.totalorder %v4142, 0
      %vm4181 = vcmp.ne.s32.totalorder %v4149, 0
      %vm4182 = vcmp.ne.s32.totalorder %v4156, 0
      %vm4183 = vcmp.ne.s32.totalorder %v4163, 0
      %vm4184 = vcmp.ne.s32.totalorder %v4170, 0
      %vm4185 = vcmp.ne.s32.totalorder %v4177, 0
      %vm4186 = vcmp.lt.s32.totalorder %v4128, 0
      %vm4187 = vcmp.lt.s32.totalorder %v4135, 0
      %vm4188 = vcmp.lt.s32.totalorder %v4142, 0
      %vm4189 = vcmp.lt.s32.totalorder %v4149, 0
      %vm4190 = vcmp.lt.s32.totalorder %v4156, 0
      %vm4191 = vcmp.lt.s32.totalorder %v4163, 0
      %vm4192 = vcmp.lt.s32.totalorder %v4170, 0
      %vm4193 = vcmp.lt.s32.totalorder %v4177, 0
      %vm4194 = vmand %vm4186, %vm4178
      %vm4195 = vmand %vm4187, %vm4179
      %vm4196 = vmand %vm4188, %vm4180
      %vm4197 = vmand %vm4189, %vm4181
      %vm4198 = vmand %vm4190, %vm4182
      %vm4199 = vmand %vm4191, %vm4183
      %vm4200 = vmand %vm4192, %vm4184
      %vm4201 = vmand %vm4193, %vm4185
      %v4202 = vadd.s32 %v4128, 8
      %v4203 = vadd.s32 %v4135, 8
      %v4204 = vadd.s32 %v4142, 8
      %v4205 = vadd.s32 %v4149, 8
      %v4206 = vadd.s32 %v4156, 8
      %v4207 = vadd.s32 %v4163, 8
      %v4208 = vadd.s32 %v4170, 8
      %v4209 = vadd.s32 %v4177, 8
      %v4210 = vsel %vm4194, %v4202, %v4128
      %v4211 = vsel %vm4195, %v4203, %v4135
      %v4212 = vsel %vm4196, %v4204, %v4142
      %v4213 = vsel %vm4197, %v4205, %v4149
      %v4214 = vsel %vm4198, %v4206, %v4156
      %v4215 = vsel %vm4199, %v4207, %v4163
      %v4216 = vsel %vm4200, %v4208, %v4170
      %v4217 = vsel %vm4201, %v4209, %v4177
      %vm4218 = vcmp.ne.s32.totalorder %v4210, 0
      %vm4219 = vcmp.ne.s32.totalorder %v4211, 0
      %vm4220 = vcmp.ne.s32.totalorder %v4212, 0
      %vm4221 = vcmp.ne.s32.totalorder %v4213, 0
      %vm4222 = vcmp.ne.s32.totalorder %v4214, 0
      %vm4223 = vcmp.ne.s32.totalorder %v4215, 0
      %vm4224 = vcmp.ne.s32.totalorder %v4216, 0
      %vm4225 = vcmp.ne.s32.totalorder %v4217, 0
      %v4226 = vsel %vm4218, 1, 0
      %v4227 = vsel %vm4219, 1, 0
      %v4228 = vsel %vm4220, 1, 0
      %v4229 = vsel %vm4221, 1, 0
      %v4230 = vsel %vm4222, 1, 0
      %v4231 = vsel %vm4223, 1, 0
      %v4232 = vsel %vm4224, 1, 0
      %v4233 = vsel %vm4225, 1, 0
      %v4234 = vcvt.s32.f32 %v4226
      %v4235 = vcvt.s32.f32 %v4227
      %v4236 = vcvt.s32.f32 %v4228
      %v4237 = vcvt.s32.f32 %v4229
      %v4238 = vcvt.s32.f32 %v4230
      %v4239 = vcvt.s32.f32 %v4231
      %v4240 = vcvt.s32.f32 %v4232
      %v4241 = vcvt.s32.f32 %v4233
      %vm4242 = vcmp.ne.s32.totalorder %v4210, 7
      %vm4243 = vcmp.ne.s32.totalorder %v4211, 7
      %vm4244 = vcmp.ne.s32.totalorder %v4212, 7
      %vm4245 = vcmp.ne.s32.totalorder %v4213, 7
      %vm4246 = vcmp.ne.s32.totalorder %v4214, 7
      %vm4247 = vcmp.ne.s32.totalorder %v4215, 7
      %vm4248 = vcmp.ne.s32.totalorder %v4216, 7
      %vm4249 = vcmp.ne.s32.totalorder %v4217, 7
      %v4250 = vsel %vm4242, 1, 0
      %v4251 = vsel %vm4243, 1, 0
      %v4252 = vsel %vm4244, 1, 0
      %v4253 = vsel %vm4245, 1, 0
      %v4254 = vsel %vm4246, 1, 0
      %v4255 = vsel %vm4247, 1, 0
      %v4256 = vsel %vm4248, 1, 0
      %v4257 = vsel %vm4249, 1, 0
      %v4258 = vcvt.s32.f32 %v4250
      %v4259 = vcvt.s32.f32 %v4251
      %v4260 = vcvt.s32.f32 %v4252
      %v4261 = vcvt.s32.f32 %v4253
      %v4262 = vcvt.s32.f32 %v4254
      %v4263 = vcvt.s32.f32 %v4255
      %v4264 = vcvt.s32.f32 %v4256
      %v4265 = vcvt.s32.f32 %v4257
      %v4273 = vrot.slane %v4235, 1
      %v4274 = vrot.slane %v4236, 1
      %v4275 = vsel %vm1275, %v4273, %v4274
      %v4276 = vrot.slane %v4237, 1
      %v4277 = vsel %vm1275, %v4274, %v4276
      %v4278 = vrot.slane %v4238, 1
      %v4279 = vsel %vm1275, %v4276, %v4278
      %v4280 = vrot.slane %v4239, 1
      %v4281 = vsel %vm1275, %v4278, %v4280
      %v4282 = vrot.slane %v4240, 1
      %v4283 = vsel %vm1275, %v4280, %v4282
      %v4284 = vrot.slane %v4241, 1
      %v4285 = vsel %vm1275, %v4282, %v4284
      %v4293 = vmul.f32 %v4114, %v4275
      %v4294 = vmul.f32 %v4115, %v4277
      %v4295 = vmul.f32 %v4116, %v4279
      %v4296 = vmul.f32 %v4117, %v4281
      %v4297 = vmul.f32 %v4118, %v4283
      %v4298 = vmul.f32 %v4119, %v4285
      %v4299 = vmul.f32 %v4120, %v4284
      %4300 = vst.msk [vmem:[#allocation3] sm:$0xff] %vm4052, 0.0
      %vm4301 = vcmask 57344
      %4302 = vst.msk [vmem:[#allocation3 + $0x8] sm:$0x1] %vm4301, 0.0
      %4303 = vst.msk [vmem:[#allocation3 + $0x9] sm:$0xff] %vm4052, %v4293
      %4304 = vst.msk [vmem:[#allocation3 + $0x11] sm:$0xff] %vm4052, %v4294
      %4305 = vst.msk [vmem:[#allocation3 + $0x19] sm:$0xff] %vm4052, %v4295
      %4306 = vst.msk [vmem:[#allocation3 + $0x21] sm:$0xff] %vm4052, %v4296
      %4307 = vst.msk [vmem:[#allocation3 + $0x29] sm:$0xff] %vm4052, %v4297
      %4308 = vst.msk [vmem:[#allocation3 + $0x31] sm:$0xff] %vm4052, %v4298
      %vm4309 = vcmask 63488
      %4310 = vst.msk [vmem:[#allocation3 + $0x39] sm:$0x7f] %vm4309, %v4299
      %vm4311 = vcmask 130112
      %4312 = vst.msk [vmem:[#allocation3] sm:$0xff] %vm4311, 0.0
      %4320 = vrot.lane.b32.xlu0 %v4114, 8
      %v4321 = vpop.permute.xlu0 %4320
      %4322 = vrot.lane.b32.xlu0 %v4115, 8
      %v4323 = vpop.permute.xlu0 %4322
      %4324 = vrot.lane.b32.xlu0 %v4116, 8
      %v4325 = vpop.permute.xlu0 %4324
      %4326 = vrot.lane.b32.xlu0 %v4117, 8
      %v4327 = vpop.permute.xlu0 %4326
      %4328 = vrot.lane.b32.xlu0 %v4118, 8
      %v4329 = vpop.permute.xlu0 %4328
      %4330 = vrot.lane.b32.xlu0 %v4119, 8
      %v4331 = vpop.permute.xlu0 %4330
      %4332 = vrot.lane.b32.xlu0 %v4120, 8
      %v4333 = vpop.permute.xlu0 %4332
      %4341 = vst.msk [vmem:[#allocation3 + $0x8] sm:$0xff] %vm4311, %v4321
      %4342 = vst.msk [vmem:[#allocation3 + $0x10] sm:$0xff] %vm4311, %v4323
      %4343 = vst.msk [vmem:[#allocation3 + $0x18] sm:$0xff] %vm4311, %v4325
      %4344 = vst.msk [vmem:[#allocation3 + $0x20] sm:$0xff] %vm4311, %v4327
      %4345 = vst.msk [vmem:[#allocation3 + $0x28] sm:$0xff] %vm4311, %v4329
      %4346 = vst.msk [vmem:[#allocation3 + $0x30] sm:$0xff] %vm4311, %v4331
      %4347 = vst.msk [vmem:[#allocation3 + $0x38] sm:$0xff] %vm4311, %v4333
      %v4356 = vrot.slane %v4258, 7
      %v4357 = vrot.slane %v4259, 7
      %v4358 = vsel %vm1615, %v4356, %v4357
      %v4359 = vrot.slane %v4260, 7
      %v4360 = vsel %vm1615, %v4357, %v4359
      %v4361 = vrot.slane %v4261, 7
      %v4362 = vsel %vm1615, %v4359, %v4361
      %v4363 = vrot.slane %v4262, 7
      %v4364 = vsel %vm1615, %v4361, %v4363
      %v4365 = vrot.slane %v4263, 7
      %v4366 = vsel %vm1615, %v4363, %v4365
      %v4367 = vrot.slane %v4264, 7
      %v4368 = vsel %vm1615, %v4365, %v4367
      %v4369 = vrot.slane %v4265, 7
      %v4370 = vsel %vm1615, %v4367, %v4369
      %v4379 = vmul.f32 %v4114, %v4358
      %v4380 = vmul.f32 %v4115, %v4360
      %v4381 = vmul.f32 %v4116, %v4362
      %v4382 = vmul.f32 %v4117, %v4364
      %v4383 = vmul.f32 %v4118, %v4366
      %v4384 = vmul.f32 %v4119, %v4368
      %v4385 = vmul.f32 %v4120, %v4370
      %v4386 = vmul.f32 %v4121, %v4369
      %vm4387 = vcmask 194688
      %4388 = vst.msk [vmem:[#allocation3] sm:$0x7f] %vm4387, 0.0
      %4397 = vrot.lane.b32.xlu0 %v4379, 16
      %v4398 = vpop.permute.xlu0 %4397
      %4399 = vrot.lane.b32.xlu0 %v4380, 16
      %v4400 = vpop.permute.xlu0 %4399
      %4401 = vrot.lane.b32.xlu0 %v4381, 16
      %v4402 = vpop.permute.xlu0 %4401
      %4403 = vrot.lane.b32.xlu0 %v4382, 16
      %v4404 = vpop.permute.xlu0 %4403
      %4405 = vrot.lane.b32.xlu0 %v4383, 16
      %v4406 = vpop.permute.xlu0 %4405
      %4407 = vrot.lane.b32.xlu0 %v4384, 16
      %v4408 = vpop.permute.xlu0 %4407
      %4409 = vrot.lane.b32.xlu0 %v4385, 16
      %v4410 = vpop.permute.xlu0 %4409
      %4411 = vrot.lane.b32.xlu0 %v4386, 16
      %v4412 = vpop.permute.xlu0 %4411
      %vm4421 = vcmask 195712
      %4422 = vst.msk [vmem:[#allocation3 + $0x7] sm:$0xff] %vm4421, %v4398
      %4423 = vst.msk [vmem:[#allocation3 + $0xf] sm:$0xff] %vm4421, %v4400
      %4424 = vst.msk [vmem:[#allocation3 + $0x17] sm:$0xff] %vm4421, %v4402
      %4425 = vst.msk [vmem:[#allocation3 + $0x1f] sm:$0xff] %vm4421, %v4404
      %4426 = vst.msk [vmem:[#allocation3 + $0x27] sm:$0xff] %vm4421, %v4406
      %4427 = vst.msk [vmem:[#allocation3 + $0x2f] sm:$0xff] %vm4421, %v4408
      %4428 = vst.msk [vmem:[#allocation3 + $0x37] sm:$0xff] %vm4421, %v4410
      %vm4429 = vcmask 188544
      %4430 = vst.msk [vmem:[#allocation3 + $0x3f] sm:$0x1] %vm4429, %v4412
      %v4432 = vrot.slane %v4234, 1
      %v4433 = vsel %vm1275, %v4432, %v4273
      %v4435 = vmul.f32 %v4114, %v4433
      %v4436 = vmul.f32 %v4115, %v4275
      %v4437 = vmul.f32 %v4116, %v4277
      %v4438 = vmul.f32 %v4117, %v4279
      %v4439 = vmul.f32 %v4118, %v4281
      %v4440 = vmul.f32 %v4119, %v4283
      %v4441 = vmul.f32 %v4120, %v4285
      %v4442 = vmul.f32 %v4121, %v4284
      %vm4443 = vcmask 254144
      %4444 = vst.msk [vmem:[#allocation3] sm:$0x1] %vm4443, 0.0
      %4453 = vrot.lane.b32.xlu0 %v4435, 24
      %v4454 = vpop.permute.xlu0 %4453
      %4455 = vrot.lane.b32.xlu0 %v4436, 24
      %v4456 = vpop.permute.xlu0 %4455
      %4457 = vrot.lane.b32.xlu0 %v4437, 24
      %v4458 = vpop.permute.xlu0 %4457
      %4459 = vrot.lane.b32.xlu0 %v4438, 24
      %v4460 = vpop.permute.xlu0 %4459
      %4461 = vrot.lane.b32.xlu0 %v4439, 24
      %v4462 = vpop.permute.xlu0 %4461
      %4463 = vrot.lane.b32.xlu0 %v4440, 24
      %v4464 = vpop.permute.xlu0 %4463
      %4465 = vrot.lane.b32.xlu0 %v4441, 24
      %v4466 = vpop.permute.xlu0 %4465
      %4467 = vrot.lane.b32.xlu0 %v4442, 24
      %v4468 = vpop.permute.xlu0 %4467
      %vm4477 = vcmask 261312
      %4478 = vst.msk [vmem:[#allocation3 + $0x1] sm:$0xff] %vm4477, %v4454
      %4479 = vst.msk [vmem:[#allocation3 + $0x9] sm:$0xff] %vm4477, %v4456
      %4480 = vst.msk [vmem:[#allocation3 + $0x11] sm:$0xff] %vm4477, %v4458
      %4481 = vst.msk [vmem:[#allocation3 + $0x19] sm:$0xff] %vm4477, %v4460
      %4482 = vst.msk [vmem:[#allocation3 + $0x21] sm:$0xff] %vm4477, %v4462
      %4483 = vst.msk [vmem:[#allocation3 + $0x29] sm:$0xff] %vm4477, %v4464
      %4484 = vst.msk [vmem:[#allocation3 + $0x31] sm:$0xff] %vm4477, %v4466
      %vm4485 = vcmask 260288
      %4486 = vst.msk [vmem:[#allocation3 + $0x39] sm:$0x7f] %vm4485, %v4468
      %4488 = vrot.lane.b32.xlu0 %v4114, 32
      %v4489 = vpop.permute.xlu0 %4488
      %4490 = vrot.lane.b32.xlu0 %v4115, 32
      %v4491 = vpop.permute.xlu0 %4490
      %4492 = vrot.lane.b32.xlu0 %v4116, 32
      %v4493 = vpop.permute.xlu0 %4492
      %4494 = vrot.lane.b32.xlu0 %v4117, 32
      %v4495 = vpop.permute.xlu0 %4494
      %4496 = vrot.lane.b32.xlu0 %v4118, 32
      %v4497 = vpop.permute.xlu0 %4496
      %4498 = vrot.lane.b32.xlu0 %v4119, 32
      %v4499 = vpop.permute.xlu0 %4498
      %4500 = vrot.lane.b32.xlu0 %v4120, 32
      %v4501 = vpop.permute.xlu0 %4500
      %4502 = vrot.lane.b32.xlu0 %v4121, 32
      %v4503 = vpop.permute.xlu0 %4502
      %vm4512 = vcmask 326912
      %4513 = vst.msk [vmem:[#allocation3] sm:$0xff] %vm4512, %v4489
      %4514 = vst.msk [vmem:[#allocation3 + $0x8] sm:$0xff] %vm4512, %v4491
      %4515 = vst.msk [vmem:[#allocation3 + $0x10] sm:$0xff] %vm4512, %v4493
      %4516 = vst.msk [vmem:[#allocation3 + $0x18] sm:$0xff] %vm4512, %v4495
      %4517 = vst.msk [vmem:[#allocation3 + $0x20] sm:$0xff] %vm4512, %v4497
      %4518 = vst.msk [vmem:[#allocation3 + $0x28] sm:$0xff] %vm4512, %v4499
      %4519 = vst.msk [vmem:[#allocation3 + $0x30] sm:$0xff] %vm4512, %v4501
      %4520 = vst.msk [vmem:[#allocation3 + $0x38] sm:$0xff] %vm4512, %v4503
      %v4522 = vmul.f32 %v4114, %v4356
      %v4523 = vmul.f32 %v4115, %v4358
      %v4524 = vmul.f32 %v4116, %v4360
      %v4525 = vmul.f32 %v4117, %v4362
      %v4526 = vmul.f32 %v4118, %v4364
      %v4527 = vmul.f32 %v4119, %v4366
      %v4528 = vmul.f32 %v4120, %v4368
      %v4529 = vmul.f32 %v4121, %v4370
      %4538 = vrot.lane.b32.xlu0 %v4522, 40
      %v4539 = vpop.permute.xlu0 %4538
      %4540 = vrot.lane.b32.xlu0 %v4523, 40
      %v4541 = vpop.permute.xlu0 %4540
      %4542 = vrot.lane.b32.xlu0 %v4524, 40
      %v4543 = vpop.permute.xlu0 %4542
      %4544 = vrot.lane.b32.xlu0 %v4525, 40
      %v4545 = vpop.permute.xlu0 %4544
      %4546 = vrot.lane.b32.xlu0 %v4526, 40
      %v4547 = vpop.permute.xlu0 %4546
      %4548 = vrot.lane.b32.xlu0 %v4527, 40
      %v4549 = vpop.permute.xlu0 %4548
      %4550 = vrot.lane.b32.xlu0 %v4528, 40
      %v4551 = vpop.permute.xlu0 %4550
      %4552 = vrot.lane.b32.xlu0 %v4529, 40
      %v4553 = vpop.permute.xlu0 %4552
      %vm4562 = vcmask 392513
      %4563 = vst.msk [vmem:[#allocation3 - $0x1] sm:$0xfe] %vm4562, %v4539
      %vm4564 = vcmask 392512
      %4565 = vst.msk [vmem:[#allocation3 + $0x7] sm:$0xff] %vm4564, %v4541
      %4566 = vst.msk [vmem:[#allocation3 + $0xf] sm:$0xff] %vm4564, %v4543
      %4567 = vst.msk [vmem:[#allocation3 + $0x17] sm:$0xff] %vm4564, %v4545
      %4568 = vst.msk [vmem:[#allocation3 + $0x1f] sm:$0xff] %vm4564, %v4547
      %4569 = vst.msk [vmem:[#allocation3 + $0x27] sm:$0xff] %vm4564, %v4549
      %4570 = vst.msk [vmem:[#allocation3 + $0x2f] sm:$0xff] %vm4564, %v4551
      %4571 = vst.msk [vmem:[#allocation3 + $0x37] sm:$0xff] %vm4564, %v4553
      %vm4572 = vcmask 385344
      %4573 = vst.msk [vmem:[#allocation3 + $0x3f] sm:$0x1] %vm4572, 0.0
      %v4575 = vmul.f32 %v4114, %v4432
      %v4576 = vmul.f32 %v4115, %v4433
      %v4577 = vmul.f32 %v4116, %v4275
      %v4578 = vmul.f32 %v4117, %v4277
      %v4579 = vmul.f32 %v4118, %v4279
      %v4580 = vmul.f32 %v4119, %v4281
      %v4581 = vmul.f32 %v4120, %v4283
      %v4582 = vmul.f32 %v4121, %v4285
      %4591 = vrot.lane.b32.xlu0 %v4575, 48
      %v4592 = vpop.permute.xlu0 %4591
      %4593 = vrot.lane.b32.xlu0 %v4576, 48
      %v4594 = vpop.permute.xlu0 %4593
      %4595 = vrot.lane.b32.xlu0 %v4577, 48
      %v4596 = vpop.permute.xlu0 %4595
      %4597 = vrot.lane.b32.xlu0 %v4578, 48
      %v4598 = vpop.permute.xlu0 %4597
      %4599 = vrot.lane.b32.xlu0 %v4579, 48
      %v4600 = vpop.permute.xlu0 %4599
      %4601 = vrot.lane.b32.xlu0 %v4580, 48
      %v4602 = vpop.permute.xlu0 %4601
      %4603 = vrot.lane.b32.xlu0 %v4581, 48
      %v4604 = vpop.permute.xlu0 %4603
      %4605 = vrot.lane.b32.xlu0 %v4582, 48
      %v4606 = vpop.permute.xlu0 %4605
      %vm4615 = vcmask 458119
      %4616 = vst.msk [vmem:[#allocation3 - $0x7] sm:$0x80] %vm4615, %v4592
      %vm4617 = vcmask 458112
      %4618 = vst.msk [vmem:[#allocation3 + $0x1] sm:$0xff] %vm4617, %v4594
      %4619 = vst.msk [vmem:[#allocation3 + $0x9] sm:$0xff] %vm4617, %v4596
      %4620 = vst.msk [vmem:[#allocation3 + $0x11] sm:$0xff] %vm4617, %v4598
      %4621 = vst.msk [vmem:[#allocation3 + $0x19] sm:$0xff] %vm4617, %v4600
      %4622 = vst.msk [vmem:[#allocation3 + $0x21] sm:$0xff] %vm4617, %v4602
      %4623 = vst.msk [vmem:[#allocation3 + $0x29] sm:$0xff] %vm4617, %v4604
      %4624 = vst.msk [vmem:[#allocation3 + $0x31] sm:$0xff] %vm4617, %v4606
      %vm4625 = vcmask 457088
      %4626 = vst.msk [vmem:[#allocation3 + $0x39] sm:$0x7f] %vm4625, 0.0
      %4627 = vrot.lane.b32.xlu0 %v4115, 56
      %v4628 = vpop.permute.xlu0 %4627
      %4629 = vrot.lane.b32.xlu0 %v4116, 56
      %v4630 = vpop.permute.xlu0 %4629
      %4631 = vrot.lane.b32.xlu0 %v4117, 56
      %v4632 = vpop.permute.xlu0 %4631
      %4633 = vrot.lane.b32.xlu0 %v4118, 56
      %v4634 = vpop.permute.xlu0 %4633
      %4635 = vrot.lane.b32.xlu0 %v4119, 56
      %v4636 = vpop.permute.xlu0 %4635
      %4637 = vrot.lane.b32.xlu0 %v4120, 56
      %v4638 = vpop.permute.xlu0 %4637
      %4639 = vrot.lane.b32.xlu0 %v4121, 56
      %v4640 = vpop.permute.xlu0 %4639
      %vm4648 = vcmask 523712
      %4649 = vst.msk [vmem:[#allocation3] sm:$0xff] %vm4648, %v4628
      %4650 = vst.msk [vmem:[#allocation3 + $0x8] sm:$0xff] %vm4648, %v4630
      %4651 = vst.msk [vmem:[#allocation3 + $0x10] sm:$0xff] %vm4648, %v4632
      %4652 = vst.msk [vmem:[#allocation3 + $0x18] sm:$0xff] %vm4648, %v4634
      %4653 = vst.msk [vmem:[#allocation3 + $0x20] sm:$0xff] %vm4648, %v4636
      %4654 = vst.msk [vmem:[#allocation3 + $0x28] sm:$0xff] %vm4648, %v4638
      %4655 = vst.msk [vmem:[#allocation3 + $0x30] sm:$0xff] %vm4648, %v4640
      %4656 = vst.msk [vmem:[#allocation3 + $0x38] sm:$0xff] %vm4648, 0.0
      %v4657 = vmul.f32 %v4115, %v4356
      %v4658 = vmul.f32 %v4116, %v4358
      %v4659 = vmul.f32 %v4117, %v4360
      %v4660 = vmul.f32 %v4118, %v4362
      %v4661 = vmul.f32 %v4119, %v4364
      %v4662 = vmul.f32 %v4120, %v4366
      %v4663 = vmul.f32 %v4121, %v4368
      %4671 = vrot.lane.b32.xlu0 %v4657, 64
      %v4672 = vpop.permute.xlu0 %4671
      %4673 = vrot.lane.b32.xlu0 %v4658, 64
      %v4674 = vpop.permute.xlu0 %4673
      %4675 = vrot.lane.b32.xlu0 %v4659, 64
      %v4676 = vpop.permute.xlu0 %4675
      %4677 = vrot.lane.b32.xlu0 %v4660, 64
      %v4678 = vpop.permute.xlu0 %4677
      %4679 = vrot.lane.b32.xlu0 %v4661, 64
      %v4680 = vpop.permute.xlu0 %4679
      %4681 = vrot.lane.b32.xlu0 %v4662, 64
      %v4682 = vpop.permute.xlu0 %4681
      %4683 = vrot.lane.b32.xlu0 %v4663, 64
      %v4684 = vpop.permute.xlu0 %4683
      %vm4692 = vcmask 589313
      %4693 = vst.msk [vmem:[#allocation3 - $0x1] sm:$0xfe] %vm4692, %v4672
      %vm4694 = vcmask 589312
      %4695 = vst.msk [vmem:[#allocation3 + $0x7] sm:$0xff] %vm4694, %v4674
      %4696 = vst.msk [vmem:[#allocation3 + $0xf] sm:$0xff] %vm4694, %v4676
      %4697 = vst.msk [vmem:[#allocation3 + $0x17] sm:$0xff] %vm4694, %v4678
      %4698 = vst.msk [vmem:[#allocation3 + $0x1f] sm:$0xff] %vm4694, %v4680
      %4699 = vst.msk [vmem:[#allocation3 + $0x27] sm:$0xff] %vm4694, %v4682
      %4700 = vst.msk [vmem:[#allocation3 + $0x2f] sm:$0xff] %vm4694, %v4684
      %4701 = vst.msk [vmem:[#allocation3 + $0x37] sm:$0xff] %vm4694, 0.0
      %vm4702 = vcmask 582144
      %4703 = vst.msk [vmem:[#allocation3 + $0x3f] sm:$0x1] %vm4702, 0.0
      %v4704 = vld [vmem:[#allocation3] sm:$0xff]
      %v4705 = vld [vmem:[#allocation3 + $0x8] sm:$0xff]
      %v4706 = vld [vmem:[#allocation3 + $0x10] sm:$0xff]
      %v4707 = vld [vmem:[#allocation3 + $0x18] sm:$0xff]
      %v4708 = vld [vmem:[#allocation3 + $0x20] sm:$0xff]
      %v4709 = vld [vmem:[#allocation3 + $0x28] sm:$0xff]
      %v4710 = vld [vmem:[#allocation3 + $0x30] sm:$0xff]
      %v4711 = vld [vmem:[#allocation3 + $0x38] sm:$0xff]
      %v4712 = vpack.c.bf16 %v4705, %v4704
      %v4713 = vpack.c.bf16 %v4707, %v4706
      %v4714 = vpack.c.bf16 %v4709, %v4708
      %v4715 = vpack.c.bf16 %v4711, %v4710
      %v4716 = vld [vmem:[%s4] sm:$0xf]
      %v4717 = vld [vmem:[%s4 + $0x4] sm:$0xf]
      %v4718 = vld [vmem:[%s4 + $0x8] sm:$0xf]
      %v4719 = vld [vmem:[%s4 + $0xc] sm:$0xf]
      %v4720 = vld [vmem:[%s4 + $0x10] sm:$0xf]
      %v4721 = vld [vmem:[%s4 + $0x14] sm:$0xf]
      %v4722 = vld [vmem:[%s4 + $0x18] sm:$0xf]
      %v4723 = vld [vmem:[%s4 + $0x1c] sm:$0xf]
      %v4724 = vld [vmem:[%s4 + $0x20] sm:$0xf]
      %v4734 = vunpack.c.l.b16 %v4716
      %v4735 = vunpack.c.l.b16 %v4717
      %v4736 = vunpack.c.l.b16 %v4718
      %v4737 = vunpack.c.l.b16 %v4719
      %v4738 = vunpack.c.l.b16 %v4720
      %v4739 = vunpack.c.l.b16 %v4721
      %v4740 = vunpack.c.l.b16 %v4722
      %v4741 = vunpack.c.l.b16 %v4723
      %v4742 = vunpack.c.l.b16 %v4724
      %v4743 = vpack.c.b16 %v4735, %v4734
      %v4744 = vpack.c.b16 %v4737, %v4736
      %v4745 = vpack.c.b16 %v4739, %v4738
      %v4746 = vpack.c.b16 %v4741, %v4740
      %v4747 = vpack.c.b16 %v4742, %v4742
      %vm4752 = vcmask 588800
      %v4754 = vsel %vm4752, %v4712, 0
      %v4757 = vsel %vm4752, %v4713, 0
      %v4760 = vsel %vm4752, %v4714, 0
      %v4763 = vsel %vm4752, %v4715, 0
      %vm4765 = vcmask 1043456
      %v4767 = vsel %vm4765, %v4747, 0
      %4769 = vmatpush.bf16.msra.mxu0 0
      %4770 = vmatpush.bf16.msra.mxu0 0
      %4771 = vmatpush.bf16.msra.mxu0 0
      %4772 = vmatpush.bf16.msra.mxu0 %v4767
      %4773 = vmatpush.bf16.msra.mxu0 %v4746
      %4774 = vmatpush.bf16.msra.mxu0 %v4745
      %4775 = vmatpush.bf16.msra.mxu0 %v4744
      %4776 = vmatpush.bf16.msra.mxu0 %v4743
      %4777 = vmatmul.bf16.gmra.mxu0 %v4754
      %v4778 = vpop.f32.mrf.mxu0
      %v4779 = vadd.f32 0.0, %v4778
      %v4780 = vpop.f32.mrf.mxu0
      %v4781 = vadd.f32 0.0, %v4780
      %4782 = vmatmul.bf16.gmra.mxu0 %v4757
      %v4783 = vpop.f32.mrf.mxu0
      %v4784 = vadd.f32 0.0, %v4783
      %v4785 = vpop.f32.mrf.mxu0
      %v4786 = vadd.f32 0.0, %v4785
      %4787 = vmatmul.bf16.gmra.mxu0 %v4760
      %v4788 = vpop.f32.mrf.mxu0
      %v4789 = vadd.f32 0.0, %v4788
      %v4790 = vpop.f32.mrf.mxu0
      %v4791 = vadd.f32 0.0, %v4790
      %4792 = vmatmul.bf16.gmra.mxu0 %v4763
      %v4793 = vpop.f32.mrf.mxu0
      %v4794 = vadd.f32 0.0, %v4793
      %v4795 = vpop.f32.mrf.mxu0
      %v4796 = vadd.f32 0.0, %v4795
      %4797 = vdwg.mxu0
      %v4798 = vld [vmem:[%s5] sm:$0x1]
      %v4800 = vperm.slane %v4798, 0
      %v4802 = vmul.f32 %v4779, %v4800
      %v4803 = vmul.f32 %v4781, %v4800
      %v4804 = vmul.f32 %v4784, %v4800
      %v4805 = vmul.f32 %v4786, %v4800
      %v4806 = vmul.f32 %v4789, %v4800
      %v4807 = vmul.f32 %v4791, %v4800
      %v4808 = vmul.f32 %v4794, %v4800
      %v4809 = vmul.f32 %v4796, %v4800
      %v4810 = vld [vmem:[%s6] sm:$0x1]
      %v4812 = vperm.slane %v4810, 0
      %v4814 = vadd.f32 %v4802, %v4812
      %v4815 = vadd.f32 %v4803, %v4812
      %v4816 = vadd.f32 %v4804, %v4812
      %v4817 = vadd.f32 %v4805, %v4812
      %v4818 = vadd.f32 %v4806, %v4812
      %v4819 = vadd.f32 %v4807, %v4812
      %v4820 = vadd.f32 %v4808, %v4812
      %v4821 = vadd.f32 %v4809, %v4812
      %v4822 = vmul.f32 %v4814, 0.5
      %v4823 = vmul.f32 %v4815, 0.5
      %v4824 = vmul.f32 %v4816, 0.5
      %v4825 = vmul.f32 %v4817, 0.5
      %v4826 = vmul.f32 %v4818, 0.5
      %v4827 = vmul.f32 %v4819, 0.5
      %v4828 = vmul.f32 %v4820, 0.5
      %v4829 = vmul.f32 %v4821, 0.5
      %v4830 = vmul.f32 %v4814, 0.70710677
      %v4831 = vmul.f32 %v4815, 0.70710677
      %v4832 = vmul.f32 %v4816, 0.70710677
      %v4833 = vmul.f32 %v4817, 0.70710677
      %v4834 = vmul.f32 %v4818, 0.70710677
      %v4835 = vmul.f32 %v4819, 0.70710677
      %v4836 = vmul.f32 %v4820, 0.70710677
      %v4837 = vmul.f32 %v4821, 0.70710677
      %v4838 = vand.u32 2147483647, %v4830
      %v4839 = vand.u32 2147483647, %v4831
      %v4840 = vand.u32 2147483647, %v4832
      %v4841 = vand.u32 2147483647, %v4833
      %v4842 = vand.u32 2147483647, %v4834
      %v4843 = vand.u32 2147483647, %v4835
      %v4844 = vand.u32 2147483647, %v4836
      %v4845 = vand.u32 2147483647, %v4837
      %v4846 = vmul.f32 %v4838, 0.3275911
      %v4847 = vmul.f32 %v4839, 0.3275911
      %v4848 = vmul.f32 %v4840, 0.3275911
      %v4849 = vmul.f32 %v4841, 0.3275911
      %v4850 = vmul.f32 %v4842, 0.3275911
      %v4851 = vmul.f32 %v4843, 0.3275911
      %v4852 = vmul.f32 %v4844, 0.3275911
      %v4853 = vmul.f32 %v4845, 0.3275911
      %v4854 = vadd.f32 %v4846, 1.0
      %v4855 = vadd.f32 %v4847, 1.0
      %v4856 = vadd.f32 %v4848, 1.0
      %v4857 = vadd.f32 %v4849, 1.0
      %v4858 = vadd.f32 %v4850, 1.0
      %v4859 = vadd.f32 %v4851, 1.0
      %v4860 = vadd.f32 %v4852, 1.0
      %v4861 = vadd.f32 %v4853, 1.0
      %v4862 = vrcp.pop %v4854
      %v4863 = vrcp.pop %v4855
      %v4864 = vrcp.pop %v4856
      %v4865 = vrcp.pop %v4857
      %v4866 = vrcp.pop %v4858
      %v4867 = vrcp.pop %v4859
      %v4868 = vrcp.pop %v4860
      %v4869 = vrcp.pop %v4861
      %v4870 = vmul.f32 %v4862, 1.0614054
      %v4871 = vmul.f32 %v4863, 1.0614054
      %v4872 = vmul.f32 %v4864, 1.0614054
      %v4873 = vmul.f32 %v4865, 1.0614054
      %v4874 = vmul.f32 %v4866, 1.0614054
      %v4875 = vmul.f32 %v4867, 1.0614054
      %v4876 = vmul.f32 %v4868, 1.0614054
      %v4877 = vmul.f32 %v4869, 1.0614054
      %v4878 = vadd.f32 %v4870, -1.4531521
      %v4879 = vadd.f32 %v4871, -1.4531521
      %v4880 = vadd.f32 %v4872, -1.4531521
      %v4881 = vadd.f32 %v4873, -1.4531521
      %v4882 = vadd.f32 %v4874, -1.4531521
      %v4883 = vadd.f32 %v4875, -1.4531521
      %v4884 = vadd.f32 %v4876, -1.4531521
      %v4885 = vadd.f32 %v4877, -1.4531521
      %v4886 = vmul.f32 %v4878, %v4862
      %v4887 = vmul.f32 %v4879, %v4863
      %v4888 = vmul.f32 %v4880, %v4864
      %v4889 = vmul.f32 %v4881, %v4865
      %v4890 = vmul.f32 %v4882, %v4866
      %v4891 = vmul.f32 %v4883, %v4867
      %v4892 = vmul.f32 %v4884, %v4868
      %v4893 = vmul.f32 %v4885, %v4869
      %v4894 = vadd.f32 %v4886, 1.4214138
      %v4895 = vadd.f32 %v4887, 1.4214138
      %v4896 = vadd.f32 %v4888, 1.4214138
      %v4897 = vadd.f32 %v4889, 1.4214138
      %v4898 = vadd.f32 %v4890, 1.4214138
      %v4899 = vadd.f32 %v4891, 1.4214138
      %v4900 = vadd.f32 %v4892, 1.4214138
      %v4901 = vadd.f32 %v4893, 1.4214138
      %v4902 = vmul.f32 %v4894, %v4862
      %v4903 = vmul.f32 %v4895, %v4863
      %v4904 = vmul.f32 %v4896, %v4864
      %v4905 = vmul.f32 %v4897, %v4865
      %v4906 = vmul.f32 %v4898, %v4866
      %v4907 = vmul.f32 %v4899, %v4867
      %v4908 = vmul.f32 %v4900, %v4868
      %v4909 = vmul.f32 %v4901, %v4869
      %v4910 = vadd.f32 %v4902, -0.28449672
      %v4911 = vadd.f32 %v4903, -0.28449672
      %v4912 = vadd.f32 %v4904, -0.28449672
      %v4913 = vadd.f32 %v4905, -0.28449672
      %v4914 = vadd.f32 %v4906, -0.28449672
      %v4915 = vadd.f32 %v4907, -0.28449672
      %v4916 = vadd.f32 %v4908, -0.28449672
      %v4917 = vadd.f32 %v4909, -0.28449672
      %v4918 = vmul.f32 %v4910, %v4862
      %v4919 = vmul.f32 %v4911, %v4863
      %v4920 = vmul.f32 %v4912, %v4864
      %v4921 = vmul.f32 %v4913, %v4865
      %v4922 = vmul.f32 %v4914, %v4866
      %v4923 = vmul.f32 %v4915, %v4867
      %v4924 = vmul.f32 %v4916, %v4868
      %v4925 = vmul.f32 %v4917, %v4869
      %v4926 = vadd.f32 %v4918, 0.2548296
      %v4927 = vadd.f32 %v4919, 0.2548296
      %v4928 = vadd.f32 %v4920, 0.2548296
      %v4929 = vadd.f32 %v4921, 0.2548296
      %v4930 = vadd.f32 %v4922, 0.2548296
      %v4931 = vadd.f32 %v4923, 0.2548296
      %v4932 = vadd.f32 %v4924, 0.2548296
      %v4933 = vadd.f32 %v4925, 0.2548296
      %v4934 = vmul.f32 %v4926, %v4862
      %v4935 = vmul.f32 %v4927, %v4863
      %v4936 = vmul.f32 %v4928, %v4864
      %v4937 = vmul.f32 %v4929, %v4865
      %v4938 = vmul.f32 %v4930, %v4866
      %v4939 = vmul.f32 %v4931, %v4867
      %v4940 = vmul.f32 %v4932, %v4868
      %v4941 = vmul.f32 %v4933, %v4869
      %v4942 = vsub.f32 0.0, %v4838
      %v4943 = vsub.f32 0.0, %v4839
      %v4944 = vsub.f32 0.0, %v4840
      %v4945 = vsub.f32 0.0, %v4841
      %v4946 = vsub.f32 0.0, %v4842
      %v4947 = vsub.f32 0.0, %v4843
      %v4948 = vsub.f32 0.0, %v4844
      %v4949 = vsub.f32 0.0, %v4845
      %v4950 = vmul.f32 %v4942, %v4838
      %v4951 = vmul.f32 %v4943, %v4839
      %v4952 = vmul.f32 %v4944, %v4840
      %v4953 = vmul.f32 %v4945, %v4841
      %v4954 = vmul.f32 %v4946, %v4842
      %v4955 = vmul.f32 %v4947, %v4843
      %v4956 = vmul.f32 %v4948, %v4844
      %v4957 = vmul.f32 %v4949, %v4845
      %v4958 = vmul.f32 %v4950, 1.442695
      %v4959 = vpow.pop %v4958
      %v4960 = vmul.f32 %v4951, 1.442695
      %v4961 = vpow.pop %v4960
      %v4962 = vmul.f32 %v4952, 1.442695
      %v4963 = vpow.pop %v4962
      %v4964 = vmul.f32 %v4953, 1.442695
      %v4965 = vpow.pop %v4964
      %v4966 = vmul.f32 %v4954, 1.442695
      %v4967 = vpow.pop %v4966
      %v4968 = vmul.f32 %v4955, 1.442695
      %v4969 = vpow.pop %v4968
      %v4970 = vmul.f32 %v4956, 1.442695
      %v4971 = vpow.pop %v4970
      %v4972 = vmul.f32 %v4957, 1.442695
      %v4973 = vpow.pop %v4972
      %v4974 = vmul.f32 %v4934, %v4959
      %v4975 = vmul.f32 %v4935, %v4961
      %v4976 = vmul.f32 %v4936, %v4963
      %v4977 = vmul.f32 %v4937, %v4965
      %v4978 = vmul.f32 %v4938, %v4967
      %v4979 = vmul.f32 %v4939, %v4969
      %v4980 = vmul.f32 %v4940, %v4971
      %v4981 = vmul.f32 %v4941, %v4973
      %v4982 = vsub.f32 1.0, %v4974
      %v4983 = vsub.f32 1.0, %v4975
      %v4984 = vsub.f32 1.0, %v4976
      %v4985 = vsub.f32 1.0, %v4977
      %v4986 = vsub.f32 1.0, %v4978
      %v4987 = vsub.f32 1.0, %v4979
      %v4988 = vsub.f32 1.0, %v4980
      %v4989 = vsub.f32 1.0, %v4981
      %vm4990 = vcmp.ge.f32.partialorder %v4830, 0.0
      %vm4991 = vcmp.ge.f32.partialorder %v4831, 0.0
      %vm4992 = vcmp.ge.f32.partialorder %v4832, 0.0
      %vm4993 = vcmp.ge.f32.partialorder %v4833, 0.0
      %vm4994 = vcmp.ge.f32.partialorder %v4834, 0.0
      %vm4995 = vcmp.ge.f32.partialorder %v4835, 0.0
      %vm4996 = vcmp.ge.f32.partialorder %v4836, 0.0
      %vm4997 = vcmp.ge.f32.partialorder %v4837, 0.0
      %v4998 = vsub.f32 0.0, %v4982
      %v4999 = vsub.f32 0.0, %v4983
      %v5000 = vsub.f32 0.0, %v4984
      %v5001 = vsub.f32 0.0, %v4985
      %v5002 = vsub.f32 0.0, %v4986
      %v5003 = vsub.f32 0.0, %v4987
      %v5004 = vsub.f32 0.0, %v4988
      %v5005 = vsub.f32 0.0, %v4989
      %v5006 = vsel %vm4990, %v4982, %v4998
      %v5007 = vsel %vm4991, %v4983, %v4999
      %v5008 = vsel %vm4992, %v4984, %v5000
      %v5009 = vsel %vm4993, %v4985, %v5001
      %v5010 = vsel %vm4994, %v4986, %v5002
      %v5011 = vsel %vm4995, %v4987, %v5003
      %v5012 = vsel %vm4996, %v4988, %v5004
      %v5013 = vsel %vm4997, %v4989, %v5005
      %v5014 = vadd.f32 %v5006, 1.0
      %v5015 = vadd.f32 %v5007, 1.0
      %v5016 = vadd.f32 %v5008, 1.0
      %v5017 = vadd.f32 %v5009, 1.0
      %v5018 = vadd.f32 %v5010, 1.0
      %v5019 = vadd.f32 %v5011, 1.0
      %v5020 = vadd.f32 %v5012, 1.0
      %v5021 = vadd.f32 %v5013, 1.0
      %v5022 = vmul.f32 %v4822, %v5014
      %v5023 = vmul.f32 %v4823, %v5015
      %v5024 = vmul.f32 %v4824, %v5016
      %v5025 = vmul.f32 %v4825, %v5017
      %v5026 = vmul.f32 %v4826, %v5018
      %v5027 = vmul.f32 %v4827, %v5019
      %v5028 = vmul.f32 %v4828, %v5020
      %v5029 = vmul.f32 %v4829, %v5021
      %v5030 = vmax.f32 %v5022, %v5023
      %vm5031 = vcmask 130048
      %5032 = vst.msk [vmem:[#allocation9] sm:$0xff] %vm5031, %v5030
      %v5033 = vmax.f32 %v5024, %v5025
      %5034 = vst.msk [vmem:[#allocation9 + $0x8] sm:$0xff] %vm5031, %v5033
      %v5035 = vmax.f32 %v5026, %v5027
      %5036 = vst.msk [vmem:[#allocation9 + $0x10] sm:$0xff] %vm5031, %v5035
      %v5037 = vmax.f32 %v5028, %v5029
      %5038 = vst.msk [vmem:[#allocation9 + $0x18] sm:$0xff] %vm5031, %v5037
      %v5039 = vld [vmem:[#allocation9] ss:$2 sm:$0xff]
      %s5040 = scalar_lea.vmem [#allocation9], 16
      %v5041 = vld [vmem:[%s5040] ss:$2 sm:$0xff]
      %s5042 = scalar_lea.vmem [#allocation9], 1
      %v5043 = vld [vmem:[%s5042] ss:$2 sm:$0xff]
      %s5044 = scalar_lea.vmem [#allocation9], 17
      %v5045 = vld [vmem:[%s5044] ss:$2 sm:$0xff]
      %v5046 = vmax.f32 %v5039, %v5043
      %v5047 = vmax.f32 %v5041, %v5045
      %vm5048 = vcmp.lt.s32.totalorder %v637, 0
      %v5049 = vsub.s32 0, %v637
      %v5050 = vsel %vm5048, %v5049, %v637
      %v5051 = vshrl.u32 %v5050, 2
      %v5052 = vand.u32 %v5050, 3
      %v5053 = vsub.s32 0, %v5052
      %v5054 = vsel %vm5048, %v5053, %v5052
      %vm5055 = vcmp.lt.s32.totalorder %v638, 0
      %v5056 = vsub.s32 0, %v638
      %v5057 = vsel %vm5055, %v5056, %v638
      %v5058 = vshrl.u32 %v5057, 2
      %v5059 = vand.u32 %v5057, 3
      %v5060 = vsub.s32 0, %v5059
      %v5061 = vsel %vm5055, %v5060, %v5059
      %vm5062 = vcmp.ne.s32.totalorder %v5054, 0
      %vm5063 = vcmp.ne.s32.totalorder %v5061, 0
      %vm5064 = vcmp.lt.s32.totalorder %v5054, 0
      %vm5065 = vcmp.lt.s32.totalorder %v5061, 0
      %vm5066 = vmand %vm5064, %vm5062
      %vm5067 = vmand %vm5065, %vm5063
      %v5068 = vadd.s32 %v5054, 4
      %v5069 = vadd.s32 %v5061, 4
      %v5070 = vsel %vm5066, %v5068, %v5054
      %v5071 = vsel %vm5067, %v5069, %v5061
      %vm5072 = vcmp.ne.s32.totalorder %v5070, 0
      %vm5073 = vcmp.ne.s32.totalorder %v5071, 0
      %v5074 = vsel %vm5072, 1, 0
      %v5075 = vsel %vm5073, 1, 0
      %v5076 = vcvt.s32.f32 %v5074
      %v5077 = vcvt.s32.f32 %v5075
      %vm5078 = vcmp.ne.s32.totalorder %v5070, 3
      %vm5079 = vcmp.ne.s32.totalorder %v5071, 3
      %v5080 = vsel %vm5078, 1, 0
      %v5081 = vsel %vm5079, 1, 0
      %v5082 = vcvt.s32.f32 %v5080
      %v5083 = vcvt.s32.f32 %v5081
      %vm5086 = vcmask 1042432
      %v5087 = vrot.slane %v5076, 5
      %v5088 = vrot.slane %v5077, 5
      %v5089 = vsel %vm5086, %v5087, %v5088
      %v5092 = vmul.f32 %v5046, %v5089
      %v5093 = vmul.f32 %v5047, %v5088
      %vm5094 = vcmask 126976
      %5095 = vst.msk [vmem:[#allocation4] sm:$0x1f] %vm5094, 0.0
      %vm5098 = vcmask 1044480
      %v5099 = vrot.slane %v5092, 3
      %v5100 = vrot.slane %v5093, 3
      %v5101 = vsel %vm5098, %v5099, %v5100
      %vm5104 = vcmask 130053
      %5105 = vst.msk [vmem:[#allocation4] sm:$0xe0] %vm5104, %v5099
      %5106 = vst.msk [vmem:[#allocation4 + $0x10] sm:$0xff] %vm5031, %v5101
      %vm5107 = vcmask 257152
      %5108 = vst.msk [vmem:[#allocation4] sm:$0xf] %vm5107, 0.0
      %v5111 = vrot.slane %v5046, 4
      %v5112 = vrot.slane %v5047, 4
      %v5113 = vsel %vm4765, %v5111, %v5112
      %5114 = vrot.lane.b32.xlu0 %v5111, 16
      %v5115 = vpop.permute.xlu0 %5114
      %5116 = vrot.lane.b32.xlu0 %v5113, 16
      %v5117 = vpop.permute.xlu0 %5116
      %vm5120 = vcmask 261252
      %5121 = vst.msk [vmem:[#allocation4] sm:$0xf0] %vm5120, %v5115
      %vm5122 = vcmask 261248
      %5123 = vst.msk [vmem:[#allocation4 + $0x10] sm:$0xff] %vm5122, %v5117
      %v5126 = vrot.slane %v5082, 3
      %v5127 = vrot.slane %v5083, 3
      %v5128 = vsel %vm5098, %v5126, %v5127
      %v5131 = vmul.f32 %v5046, %v5128
      %v5132 = vmul.f32 %v5047, %v5127
      %vm5133 = vcmask 387328
      %5134 = vst.msk [vmem:[#allocation4] sm:$0x7] %vm5133, 0.0
      %v5137 = vrot.slane %v5131, 5
      %v5138 = vrot.slane %v5132, 5
      %v5139 = vsel %vm5086, %v5137, %v5138
      %5140 = vrot.lane.b32.xlu0 %v5137, 32
      %v5141 = vpop.permute.xlu0 %5140
      %5142 = vrot.lane.b32.xlu0 %v5139, 32
      %v5143 = vpop.permute.xlu0 %5142
      %vm5146 = vcmask 392451
      %5147 = vst.msk [vmem:[#allocation4] sm:$0xf8] %vm5146, %v5141
      %vm5148 = vcmask 392448
      %5149 = vst.msk [vmem:[#allocation4 + $0x10] sm:$0xff] %vm5148, %v5143
      %v5150 = vrot.slane %v5076, 1
      %v5151 = vrot.slane %v5077, 1
      %v5152 = vsel %vm1275, %v5150, %v5151
      %v5155 = vmul.f32 %v5046, %v5152
      %v5156 = vmul.f32 %v5047, %v5151
      %vm5157 = vcmask 516480
      %5158 = vst.msk [vmem:[#allocation4] sm:$0x1] %vm5157, 0.0
      %v5161 = vrot.slane %v5155, 7
      %v5162 = vrot.slane %v5156, 7
      %v5163 = vsel %vm1615, %v5161, %v5162
      %5164 = vrot.lane.b32.xlu0 %v5161, 48
      %v5165 = vpop.permute.xlu0 %5164
      %5166 = vrot.lane.b32.xlu0 %v5163, 48
      %v5167 = vpop.permute.xlu0 %5166
      %vm5170 = vcmask 523649
      %5171 = vst.msk [vmem:[#allocation4] sm:$0xfe] %vm5170, %v5165
      %vm5172 = vcmask 523648
      %5173 = vst.msk [vmem:[#allocation4 + $0x10] sm:$0xff] %vm5172, %v5167
      %5174 = vrot.lane.b32.xlu0 %v5046, 64
      %v5175 = vpop.permute.xlu0 %5174
      %5176 = vrot.lane.b32.xlu0 %v5047, 64
      %v5177 = vpop.permute.xlu0 %5176
      %vm5180 = vcmask 654848
      %5181 = vst.msk [vmem:[#allocation4] sm:$0xff] %vm5180, %v5175
      %5182 = vst.msk [vmem:[#allocation4 + $0x10] sm:$0xff] %vm5180, %v5177
      %v5183 = vrot.slane %v5082, 7
      %v5184 = vrot.slane %v5083, 7
      %v5185 = vsel %vm1615, %v5183, %v5184
      %v5188 = vmul.f32 %v5046, %v5183
      %v5189 = vmul.f32 %v5047, %v5185
      %v5192 = vrot.slane %v5188, 1
      %v5193 = vrot.slane %v5189, 1
      %v5194 = vsel %vm1275, %v5192, %v5193
      %5195 = vrot.lane.b32.xlu0 %v5194, 80
      %v5196 = vpop.permute.xlu0 %5195
      %5197 = vrot.lane.b32.xlu0 %v5193, 80
      %v5198 = vpop.permute.xlu0 %5197
      %vm5201 = vcmask 786048
      %5202 = vst.msk [vmem:[#allocation4] sm:$0xff] %vm5201, %v5196
      %vm5203 = vcmask 785024
      %5204 = vst.msk [vmem:[#allocation4 + $0x10] sm:$0x7f] %vm5203, %v5198
      %vm5205 = vcmask 778880
      %5206 = vst.msk [vmem:[#allocation4 + $0x17] sm:$0x1] %vm5205, 0.0
      %v5208 = vmul.f32 %v5046, %v5087
      %v5209 = vmul.f32 %v5047, %v5089
      %v5212 = vrot.slane %v5208, 3
      %v5213 = vrot.slane %v5209, 3
      %v5214 = vsel %vm5098, %v5212, %v5213
      %5215 = vrot.lane.b32.xlu0 %v5214, 96
      %v5216 = vpop.permute.xlu0 %5215
      %5217 = vrot.lane.b32.xlu0 %v5213, 96
      %v5218 = vpop.permute.xlu0 %5217
      %vm5221 = vcmask 917248
      %5222 = vst.msk [vmem:[#allocation4] sm:$0xff] %vm5221, %v5216
      %vm5223 = vcmask 914176
      %5224 = vst.msk [vmem:[#allocation4 + $0x10] sm:$0x1f] %vm5223, %v5218
      %vm5225 = vcmask 917253
      %5226 = vst.msk [vmem:[#allocation4 + $0x10] sm:$0xe0] %vm5225, 0.0
      %5227 = vrot.lane.b32.xlu0 %v5113, 112
      %v5228 = vpop.permute.xlu0 %5227
      %5229 = vrot.lane.b32.xlu0 %v5112, 112
      %v5230 = vpop.permute.xlu0 %5229
      %vm5233 = vcmask 1048448
      %5234 = vst.msk [vmem:[#allocation4] sm:$0xff] %vm5233, %v5228
      %vm5235 = vcmask 1044352
      %5236 = vst.msk [vmem:[#allocation4 + $0x10] sm:$0xf] %vm5235, %v5230
      %vm5237 = vcmask 1048452
      %5238 = vst.msk [vmem:[#allocation4 + $0x10] sm:$0xf0] %vm5237, 0.0
      %v5240 = vmul.f32 %v5046, %v5126
      %v5241 = vmul.f32 %v5047, %v5128
      %v5244 = vrot.slane %v5240, 5
      %v5245 = vrot.slane %v5241, 5
      %v5246 = vsel %vm5086, %v5244, %v5245
      %5249 = vst.msk [vmem:[#allocation4 + $0x8] sm:$0xff] %vm5031, %v5246
      %vm5250 = vcmask 124928
      %5251 = vst.msk [vmem:[#allocation4 + $0x18] sm:$0x7] %vm5250, %v5245
      %vm5252 = vcmask 130051
      %5253 = vst.msk [vmem:[#allocation4 + $0x18] sm:$0xf8] %vm5252, 0.0
      %v5254 = vld [vmem:[#allocation4] sm:$0xff]
      %v5255 = vld [vmem:[#allocation4 + $0x8] sm:$0xff]
      %v5256 = vld [vmem:[#allocation4 + $0x10] sm:$0xff]
      %v5257 = vld [vmem:[#allocation4 + $0x18] sm:$0xff]
      %v5258 = vpack.c.bf16 %v5256, %v5254
      %v5259 = vpack.c.bf16 %v5257, %v5255
      %v5260 = vld [vmem:[%s7] sm:$0xf]
      %v5261 = vld [vmem:[%s7 + $0x4] sm:$0xf]
      %v5262 = vld [vmem:[%s7 + $0x8] sm:$0xf]
      %v5263 = vld [vmem:[%s7 + $0xc] sm:$0xf]
      %v5264 = vld [vmem:[%s7 + $0x10] sm:$0xf]
      %v5265 = vld [vmem:[%s7 + $0x14] sm:$0xf]
      %v5266 = vld [vmem:[%s7 + $0x18] sm:$0xf]
      %v5267 = vld [vmem:[%s7 + $0x1c] sm:$0xf]
      %v5268 = vld [vmem:[%s7 + $0x20] sm:$0xf]
      %v5269 = vld [vmem:[%s7 + $0x24] sm:$0xf]
      %v5270 = vld [vmem:[%s7 + $0x28] sm:$0xf]
      %v5271 = vld [vmem:[%s7 + $0x2c] sm:$0xf]
      %v5272 = vld [vmem:[%s7 + $0x30] sm:$0xf]
      %v5273 = vld [vmem:[%s7 + $0x34] sm:$0xf]
      %v5274 = vld [vmem:[%s7 + $0x38] sm:$0xf]
      %v5275 = vld [vmem:[%s7 + $0x3c] sm:$0xf]
      %v5276 = vld [vmem:[%s7 + $0x40] sm:$0xf]
      %v5277 = vld [vmem:[%s7 + $0x44] sm:$0xf]
      %v5296 = vunpack.c.l.b16 %v5260
      %v5297 = vunpack.c.l.b16 %v5261
      %v5298 = vunpack.c.l.b16 %v5262
      %v5299 = vunpack.c.l.b16 %v5263
      %v5300 = vunpack.c.l.b16 %v5264
      %v5301 = vunpack.c.l.b16 %v5265
      %v5302 = vunpack.c.l.b16 %v5266
      %v5303 = vunpack.c.l.b16 %v5267
      %v5304 = vunpack.c.l.b16 %v5268
      %v5305 = vunpack.c.l.b16 %v5269
      %v5306 = vunpack.c.l.b16 %v5270
      %v5307 = vunpack.c.l.b16 %v5271
      %v5308 = vunpack.c.l.b16 %v5272
      %v5309 = vunpack.c.l.b16 %v5273
      %v5310 = vunpack.c.l.b16 %v5274
      %v5311 = vunpack.c.l.b16 %v5275
      %v5312 = vunpack.c.l.b16 %v5276
      %v5313 = vunpack.c.l.b16 %v5277
      %v5314 = vpack.c.b16 %v5297, %v5296
      %v5315 = vpack.c.b16 %v5299, %v5298
      %v5316 = vpack.c.b16 %v5301, %v5300
      %v5317 = vpack.c.b16 %v5303, %v5302
      %v5318 = vpack.c.b16 %v5305, %v5304
      %v5319 = vpack.c.b16 %v5307, %v5306
      %v5320 = vpack.c.b16 %v5309, %v5308
      %v5321 = vpack.c.b16 %v5311, %v5310
      %v5322 = vpack.c.b16 %v5313, %v5312
      %v5333 = vsel %vm5031, %v5259, 0
      %5335 = vmatpush.bf16.msra.mxu0 %v5321
      %5336 = vmatpush.bf16.msra.mxu0 %v5320
      %5337 = vmatpush.bf16.msra.mxu0 %v5319
      %5338 = vmatpush.bf16.msra.mxu0 %v5318
      %5339 = vmatpush.bf16.msra.mxu0 %v5317
      %5340 = vmatpush.bf16.msra.mxu0 %v5316
      %5341 = vmatpush.bf16.msra.mxu0 %v5315
      %5342 = vmatpush.bf16.msra.mxu0 %v5314
      %5343 = vmatmul.bf16.gmra.mxu0 %v5258
      %v5344 = vpop.f32.mrf.mxu0
      %v5345 = vadd.f32 0.0, %v5344
      %v5346 = vpop.f32.mrf.mxu0
      %v5347 = vadd.f32 0.0, %v5346
      %5348 = vdwg.mxu0
      %5349 = vmatpush.bf16.msra.mxu0 0
      %5350 = vmatpush.bf16.msra.mxu0 0
      %5351 = vmatpush.bf16.msra.mxu0 0
      %5352 = vmatpush.bf16.msra.mxu0 0
      %5353 = vmatpush.bf16.msra.mxu0 0
      %5354 = vmatpush.bf16.msra.mxu0 0
      %5355 = vmatpush.bf16.msra.mxu0 0
      %5356 = vmatpush.bf16.msra.mxu0 %v5322
      %5357 = vmatmul.bf16.gmra.mxu0 %v5333
      %v5358 = vpop.f32.mrf.mxu0
      %v5359 = vadd.f32 %v5345, %v5358
      %v5360 = vpop.f32.mrf.mxu0
      %v5361 = vadd.f32 %v5347, %v5360
      %5362 = vdwg.mxu0
      %v5363 = vld [vmem:[%s8] sm:$0x1]
      %v5365 = vperm.slane %v5363, 0
      %v5367 = vmul.f32 %v5359, %v5365
      %v5368 = vmul.f32 %v5361, %v5365
      %v5369 = vld [vmem:[%s9] sm:$0x1]
      %v5371 = vperm.slane %v5369, 0
      %v5373 = vadd.f32 %v5367, %v5371
      %v5374 = vadd.f32 %v5368, %v5371
      %v5375 = vmul.f32 %v5373, 0.5
      %v5376 = vmul.f32 %v5374, 0.5
      %v5377 = vmul.f32 %v5373, 0.70710677
      %v5378 = vmul.f32 %v5374, 0.70710677
      %v5379 = vand.u32 2147483647, %v5377
      %v5380 = vand.u32 2147483647, %v5378
      %v5381 = vmul.f32 %v5379, 0.3275911
      %v5382 = vmul.f32 %v5380, 0.3275911
      %v5383 = vadd.f32 %v5381, 1.0
      %v5384 = vadd.f32 %v5382, 1.0
      %v5385 = vrcp.pop %v5383
      %v5386 = vrcp.pop %v5384
      %v5387 = vmul.f32 %v5385, 1.0614054
      %v5388 = vmul.f32 %v5386, 1.0614054
      %v5389 = vadd.f32 %v5387, -1.4531521
      %v5390 = vadd.f32 %v5388, -1.4531521
      %v5391 = vmul.f32 %v5389, %v5385
      %v5392 = vmul.f32 %v5390, %v5386
      %v5393 = vadd.f32 %v5391, 1.4214138
      %v5394 = vadd.f32 %v5392, 1.4214138
      %v5395 = vmul.f32 %v5393, %v5385
      %v5396 = vmul.f32 %v5394, %v5386
      %v5397 = vadd.f32 %v5395, -0.28449672
      %v5398 = vadd.f32 %v5396, -0.28449672
      %v5399 = vmul.f32 %v5397, %v5385
      %v5400 = vmul.f32 %v5398, %v5386
      %v5401 = vadd.f32 %v5399, 0.2548296
      %v5402 = vadd.f32 %v5400, 0.2548296
      %v5403 = vmul.f32 %v5401, %v5385
      %v5404 = vmul.f32 %v5402, %v5386
      %v5405 = vsub.f32 0.0, %v5379
      %v5406 = vsub.f32 0.0, %v5380
      %v5407 = vmul.f32 %v5405, %v5379
      %v5408 = vmul.f32 %v5406, %v5380
      %v5409 = vmul.f32 %v5407, 1.442695
      %v5410 = vpow.pop %v5409
      %v5411 = vmul.f32 %v5408, 1.442695
      %v5412 = vpow.pop %v5411
      %v5413 = vmul.f32 %v5403, %v5410
      %v5414 = vmul.f32 %v5404, %v5412
      %v5415 = vsub.f32 1.0, %v5413
      %v5416 = vsub.f32 1.0, %v5414
      %vm5417 = vcmp.ge.f32.partialorder %v5377, 0.0
      %vm5418 = vcmp.ge.f32.partialorder %v5378, 0.0
      %v5419 = vsub.f32 0.0, %v5415
      %v5420 = vsub.f32 0.0, %v5416
      %v5421 = vsel %vm5417, %v5415, %v5419
      %v5422 = vsel %vm5418, %v5416, %v5420
      %v5423 = vadd.f32 %v5421, 1.0
      %v5424 = vadd.f32 %v5422, 1.0
      %v5425 = vmul.f32 %v5375, %v5423
      %v5426 = vmul.f32 %v5376, %v5424
      %v5427 = vmul.f32 %v5425, %v5089
      %v5428 = vmul.f32 %v5426, %v5088
      %5429 = vst.msk [vmem:[#allocation5] sm:$0x1f] %vm5094, 0.0
      %v5432 = vrot.slane %v5427, 3
      %v5433 = vrot.slane %v5428, 3
      %v5434 = vsel %vm5098, %v5432, %v5433
      %5437 = vst.msk [vmem:[#allocation5] sm:$0xe0] %vm5104, %v5432
      %5438 = vst.msk [vmem:[#allocation5 + $0x10] sm:$0xff] %vm5031, %v5434
      %5439 = vst.msk [vmem:[#allocation5] sm:$0xf] %vm5107, 0.0
      %v5442 = vrot.slane %v5425, 4
      %v5443 = vrot.slane %v5426, 4
      %v5444 = vsel %vm4765, %v5442, %v5443
      %5445 = vrot.lane.b32.xlu0 %v5442, 16
      %v5446 = vpop.permute.xlu0 %5445
      %5447 = vrot.lane.b32.xlu0 %v5444, 16
      %v5448 = vpop.permute.xlu0 %5447
      %5451 = vst.msk [vmem:[#allocation5] sm:$0xf0] %vm5120, %v5446
      %5452 = vst.msk [vmem:[#allocation5 + $0x10] sm:$0xff] %vm5122, %v5448
      %v5453 = vmul.f32 %v5425, %v5128
      %v5454 = vmul.f32 %v5426, %v5127
      %5455 = vst.msk [vmem:[#allocation5] sm:$0x7] %vm5133, 0.0
      %v5458 = vrot.slane %v5453, 5
      %v5459 = vrot.slane %v5454, 5
      %v5460 = vsel %vm5086, %v5458, %v5459
      %5461 = vrot.lane.b32.xlu0 %v5458, 32
      %v5462 = vpop.permute.xlu0 %5461
      %5463 = vrot.lane.b32.xlu0 %v5460, 32
      %v5464 = vpop.permute.xlu0 %5463
      %5467 = vst.msk [vmem:[#allocation5] sm:$0xf8] %vm5146, %v5462
      %5468 = vst.msk [vmem:[#allocation5 + $0x10] sm:$0xff] %vm5148, %v5464
      %v5469 = vmul.f32 %v5425, %v5152
      %v5470 = vmul.f32 %v5426, %v5151
      %5471 = vst.msk [vmem:[#allocation5] sm:$0x1] %vm5157, 0.0
      %v5474 = vrot.slane %v5469, 7
      %v5475 = vrot.slane %v5470, 7
      %v5476 = vsel %vm1615, %v5474, %v5475
      %5477 = vrot.lane.b32.xlu0 %v5474, 48
      %v5478 = vpop.permute.xlu0 %5477
      %5479 = vrot.lane.b32.xlu0 %v5476, 48
      %v5480 = vpop.permute.xlu0 %5479
      %5483 = vst.msk [vmem:[#allocation5] sm:$0xfe] %vm5170, %v5478
      %5484 = vst.msk [vmem:[#allocation5 + $0x10] sm:$0xff] %vm5172, %v5480
      %5485 = vrot.lane.b32.xlu0 %v5425, 64
      %v5486 = vpop.permute.xlu0 %5485
      %5487 = vrot.lane.b32.xlu0 %v5426, 64
      %v5488 = vpop.permute.xlu0 %5487
      %5491 = vst.msk [vmem:[#allocation5] sm:$0xff] %vm5180, %v5486
      %5492 = vst.msk [vmem:[#allocation5 + $0x10] sm:$0xff] %vm5180, %v5488
      %v5493 = vmul.f32 %v5425, %v5183
      %v5494 = vmul.f32 %v5426, %v5185
      %v5497 = vrot.slane %v5493, 1
      %v5498 = vrot.slane %v5494, 1
      %v5499 = vsel %vm1275, %v5497, %v5498
      %5500 = vrot.lane.b32.xlu0 %v5499, 80
      %v5501 = vpop.permute.xlu0 %5500
      %5502 = vrot.lane.b32.xlu0 %v5498, 80
      %v5503 = vpop.permute.xlu0 %5502
      %5506 = vst.msk [vmem:[#allocation5] sm:$0xff] %vm5201, %v5501
      %5507 = vst.msk [vmem:[#allocation5 + $0x10] sm:$0x7f] %vm5203, %v5503
      %5508 = vst.msk [vmem:[#allocation5 + $0x17] sm:$0x1] %vm5205, 0.0
      %v5509 = vmul.f32 %v5425, %v5087
      %v5510 = vmul.f32 %v5426, %v5089
      %v5513 = vrot.slane %v5509, 3
      %v5514 = vrot.slane %v5510, 3
      %v5515 = vsel %vm5098, %v5513, %v5514
      %5516 = vrot.lane.b32.xlu0 %v5515, 96
      %v5517 = vpop.permute.xlu0 %5516
      %5518 = vrot.lane.b32.xlu0 %v5514, 96
      %v5519 = vpop.permute.xlu0 %5518
      %5522 = vst.msk [vmem:[#allocation5] sm:$0xff] %vm5221, %v5517
      %5523 = vst.msk [vmem:[#allocation5 + $0x10] sm:$0x1f] %vm5223, %v5519
      %5524 = vst.msk [vmem:[#allocation5 + $0x10] sm:$0xe0] %vm5225, 0.0
      %5525 = vrot.lane.b32.xlu0 %v5444, 112
      %v5526 = vpop.permute.xlu0 %5525
      %5527 = vrot.lane.b32.xlu0 %v5443, 112
      %v5528 = vpop.permute.xlu0 %5527
      %5531 = vst.msk [vmem:[#allocation5] sm:$0xff] %vm5233, %v5526
      %5532 = vst.msk [vmem:[#allocation5 + $0x10] sm:$0xf] %vm5235, %v5528
      %5533 = vst.msk [vmem:[#allocation5 + $0x10] sm:$0xf0] %vm5237, 0.0
      %v5534 = vmul.f32 %v5425, %v5126
      %v5535 = vmul.f32 %v5426, %v5128
      %v5538 = vrot.slane %v5534, 5
      %v5539 = vrot.slane %v5535, 5
      %v5540 = vsel %vm5086, %v5538, %v5539
      %5543 = vst.msk [vmem:[#allocation5 + $0x8] sm:$0xff] %vm5031, %v5540
      %5544 = vst.msk [vmem:[#allocation5 + $0x18] sm:$0x7] %vm5250, %v5539
      %5545 = vst.msk [vmem:[#allocation5 + $0x18] sm:$0xf8] %vm5252, 0.0
      %v5546 = vld [vmem:[#allocation5] sm:$0xff]
      %v5547 = vld [vmem:[#allocation5 + $0x8] sm:$0xff]
      %v5548 = vld [vmem:[#allocation5 + $0x10] sm:$0xff]
      %v5549 = vld [vmem:[#allocation5 + $0x18] sm:$0xff]
      %v5550 = vpack.c.bf16 %v5548, %v5546
      %v5551 = vpack.c.bf16 %v5549, %v5547
      %v5552 = vld [vmem:[%s10] sm:$0xf]
      %v5553 = vld [vmem:[%s10 + $0x4] sm:$0xf]
      %v5554 = vld [vmem:[%s10 + $0x8] sm:$0xf]
      %v5555 = vld [vmem:[%s10 + $0xc] sm:$0xf]
      %v5556 = vld [vmem:[%s10 + $0x10] sm:$0xf]
      %v5557 = vld [vmem:[%s10 + $0x14] sm:$0xf]
      %v5558 = vld [vmem:[%s10 + $0x18] sm:$0xf]
      %v5559 = vld [vmem:[%s10 + $0x1c] sm:$0xf]
      %v5560 = vld [vmem:[%s10 + $0x20] sm:$0xf]
      %v5561 = vld [vmem:[%s10 + $0x24] sm:$0xf]
      %v5562 = vld [vmem:[%s10 + $0x28] sm:$0xf]
      %v5563 = vld [vmem:[%s10 + $0x2c] sm:$0xf]
      %v5564 = vld [vmem:[%s10 + $0x30] sm:$0xf]
      %v5565 = vld [vmem:[%s10 + $0x34] sm:$0xf]
      %v5566 = vld [vmem:[%s10 + $0x38] sm:$0xf]
      %v5567 = vld [vmem:[%s10 + $0x3c] sm:$0xf]
      %v5568 = vld [vmem:[%s10 + $0x40] sm:$0xf]
      %v5569 = vld [vmem:[%s10 + $0x44] sm:$0xf]
      %v5588 = vunpack.c.l.b16 %v5552
      %v5589 = vunpack.c.l.b16 %v5553
      %v5590 = vunpack.c.l.b16 %v5554
      %v5591 = vunpack.c.l.b16 %v5555
      %v5592 = vunpack.c.l.b16 %v5556
      %v5593 = vunpack.c.l.b16 %v5557
      %v5594 = vunpack.c.l.b16 %v5558
      %v5595 = vunpack.c.l.b16 %v5559
      %v5596 = vunpack.c.l.b16 %v5560
      %v5597 = vunpack.c.l.b16 %v5561
      %v5598 = vunpack.c.l.b16 %v5562
      %v5599 = vunpack.c.l.b16 %v5563
      %v5600 = vunpack.c.l.b16 %v5564
      %v5601 = vunpack.c.l.b16 %v5565
      %v5602 = vunpack.c.l.b16 %v5566
      %v5603 = vunpack.c.l.b16 %v5567
      %v5604 = vunpack.c.l.b16 %v5568
      %v5605 = vunpack.c.l.b16 %v5569
      %v5606 = vpack.c.b16 %v5589, %v5588
      %v5607 = vpack.c.b16 %v5591, %v5590
      %v5608 = vpack.c.b16 %v5593, %v5592
      %v5609 = vpack.c.b16 %v5595, %v5594
      %v5610 = vpack.c.b16 %v5597, %v5596
      %v5611 = vpack.c.b16 %v5599, %v5598
      %v5612 = vpack.c.b16 %v5601, %v5600
      %v5613 = vpack.c.b16 %v5603, %v5602
      %v5614 = vpack.c.b16 %v5605, %v5604
      %v5625 = vsel %vm5031, %v5551, 0
      %5627 = vmatpush.bf16.msra.mxu0 %v5613
      %5628 = vmatpush.bf16.msra.mxu0 %v5612
      %5629 = vmatpush.bf16.msra.mxu0 %v5611
      %5630 = vmatpush.bf16.msra.mxu0 %v5610
      %5631 = vmatpush.bf16.msra.mxu0 %v5609
      %5632 = vmatpush.bf16.msra.mxu0 %v5608
      %5633 = vmatpush.bf16.msra.mxu0 %v5607
      %5634 = vmatpush.bf16.msra.mxu0 %v5606
      %5635 = vmatmul.bf16.gmra.mxu0 %v5550
      %v5636 = vpop.f32.mrf.mxu0
      %v5637 = vadd.f32 0.0, %v5636
      %v5638 = vpop.f32.mrf.mxu0
      %v5639 = vadd.f32 0.0, %v5638
      %5640 = vdwg.mxu0
      %5641 = vmatpush.bf16.msra.mxu0 0
      %5642 = vmatpush.bf16.msra.mxu0 0
      %5643 = vmatpush.bf16.msra.mxu0 0
      %5644 = vmatpush.bf16.msra.mxu0 0
      %5645 = vmatpush.bf16.msra.mxu0 0
      %5646 = vmatpush.bf16.msra.mxu0 0
      %5647 = vmatpush.bf16.msra.mxu0 0
      %5648 = vmatpush.bf16.msra.mxu0 %v5614
      %5649 = vmatmul.bf16.gmra.mxu0 %v5625
      %v5650 = vpop.f32.mrf.mxu0
      %v5651 = vadd.f32 %v5637, %v5650
      %v5652 = vpop.f32.mrf.mxu0
      %v5653 = vadd.f32 %v5639, %v5652
      %5654 = vdwg.mxu0
      %v5655 = vld [vmem:[%s11] sm:$0x1]
      %v5657 = vperm.slane %v5655, 0
      %v5659 = vmul.f32 %v5651, %v5657
      %v5660 = vmul.f32 %v5653, %v5657
      %v5661 = vld [vmem:[%s12] sm:$0x1]
      %v5663 = vperm.slane %v5661, 0
      %v5665 = vadd.f32 %v5659, %v5663
      %v5666 = vadd.f32 %v5660, %v5663
      %v5667 = vadd.f32 %v5665, %v5046
      %v5668 = vadd.f32 %v5666, %v5047
      %v5669 = vmul.f32 %v5667, 0.5
      %v5670 = vmul.f32 %v5668, 0.5
      %v5671 = vmul.f32 %v5667, 0.70710677
      %v5672 = vmul.f32 %v5668, 0.70710677
      %v5673 = vand.u32 2147483647, %v5671
      %v5674 = vand.u32 2147483647, %v5672
      %v5675 = vmul.f32 %v5673, 0.3275911
      %v5676 = vmul.f32 %v5674, 0.3275911
      %v5677 = vadd.f32 %v5675, 1.0
      %v5678 = vadd.f32 %v5676, 1.0
      %v5679 = vrcp.pop %v5677
      %v5680 = vrcp.pop %v5678
      %v5681 = vmul.f32 %v5679, 1.0614054
      %v5682 = vmul.f32 %v5680, 1.0614054
      %v5683 = vadd.f32 %v5681, -1.4531521
      %v5684 = vadd.f32 %v5682, -1.4531521
      %v5685 = vmul.f32 %v5683, %v5679
      %v5686 = vmul.f32 %v5684, %v5680
      %v5687 = vadd.f32 %v5685, 1.4214138
      %v5688 = vadd.f32 %v5686, 1.4214138
      %v5689 = vmul.f32 %v5687, %v5679
      %v5690 = vmul.f32 %v5688, %v5680
      %v5691 = vadd.f32 %v5689, -0.28449672
      %v5692 = vadd.f32 %v5690, -0.28449672
      %v5693 = vmul.f32 %v5691, %v5679
      %v5694 = vmul.f32 %v5692, %v5680
      %v5695 = vadd.f32 %v5693, 0.2548296
      %v5696 = vadd.f32 %v5694, 0.2548296
      %v5697 = vmul.f32 %v5695, %v5679
      %v5698 = vmul.f32 %v5696, %v5680
      %v5699 = vsub.f32 0.0, %v5673
      %v5700 = vsub.f32 0.0, %v5674
      %v5701 = vmul.f32 %v5699, %v5673
      %v5702 = vmul.f32 %v5700, %v5674
      %v5703 = vmul.f32 %v5701, 1.442695
      %v5704 = vpow.pop %v5703
      %v5705 = vmul.f32 %v5702, 1.442695
      %v5706 = vpow.pop %v5705
      %v5707 = vmul.f32 %v5697, %v5704
      %v5708 = vmul.f32 %v5698, %v5706
      %v5709 = vsub.f32 1.0, %v5707
      %v5710 = vsub.f32 1.0, %v5708
      %vm5711 = vcmp.ge.f32.partialorder %v5671, 0.0
      %vm5712 = vcmp.ge.f32.partialorder %v5672, 0.0
      %v5713 = vsub.f32 0.0, %v5709
      %v5714 = vsub.f32 0.0, %v5710
      %v5715 = vsel %vm5711, %v5709, %v5713
      %v5716 = vsel %vm5712, %v5710, %v5714
      %v5717 = vadd.f32 %v5715, 1.0
      %v5718 = vadd.f32 %v5716, 1.0
      %v5719 = vmul.f32 %v5669, %v5717
      %v5720 = vmul.f32 %v5670, %v5718
      %v5721 = vadd.f32 %v5719, %v5046
      %v5722 = vadd.f32 %v5720, %v5047
      %v5723 = vmul.f32 %v5721, 0.5
      %v5724 = vmul.f32 %v5722, 0.5
      %v5725 = vmul.f32 %v5721, 0.70710677
      %v5726 = vmul.f32 %v5722, 0.70710677
      %v5727 = vand.u32 2147483647, %v5725
      %v5728 = vand.u32 2147483647, %v5726
      %v5729 = vmul.f32 %v5727, 0.3275911
      %v5730 = vmul.f32 %v5728, 0.3275911
      %v5731 = vadd.f32 %v5729, 1.0
      %v5732 = vadd.f32 %v5730, 1.0
      %v5733 = vrcp.pop %v5731
      %v5734 = vrcp.pop %v5732
      %v5735 = vmul.f32 %v5733, 1.0614054
      %v5736 = vmul.f32 %v5734, 1.0614054
      %v5737 = vadd.f32 %v5735, -1.4531521
      %v5738 = vadd.f32 %v5736, -1.4531521
      %v5739 = vmul.f32 %v5737, %v5733
      %v5740 = vmul.f32 %v5738, %v5734
      %v5741 = vadd.f32 %v5739, 1.4214138
      %v5742 = vadd.f32 %v5740, 1.4214138
      %v5743 = vmul.f32 %v5741, %v5733
      %v5744 = vmul.f32 %v5742, %v5734
      %v5745 = vadd.f32 %v5743, -0.28449672
      %v5746 = vadd.f32 %v5744, -0.28449672
      %v5747 = vmul.f32 %v5745, %v5733
      %v5748 = vmul.f32 %v5746, %v5734
      %v5749 = vadd.f32 %v5747, 0.2548296
      %v5750 = vadd.f32 %v5748, 0.2548296
      %v5751 = vmul.f32 %v5749, %v5733
      %v5752 = vmul.f32 %v5750, %v5734
      %v5753 = vsub.f32 0.0, %v5727
      %v5754 = vsub.f32 0.0, %v5728
      %v5755 = vmul.f32 %v5753, %v5727
      %v5756 = vmul.f32 %v5754, %v5728
      %v5757 = vmul.f32 %v5755, 1.442695
      %v5758 = vpow.pop %v5757
      %v5759 = vmul.f32 %v5756, 1.442695
      %v5760 = vpow.pop %v5759
      %v5761 = vmul.f32 %v5751, %v5758
      %v5762 = vmul.f32 %v5752, %v5760
      %v5763 = vsub.f32 1.0, %v5761
      %v5764 = vsub.f32 1.0, %v5762
      %vm5765 = vcmp.ge.f32.partialorder %v5725, 0.0
      %vm5766 = vcmp.ge.f32.partialorder %v5726, 0.0
      %v5767 = vsub.f32 0.0, %v5763
      %v5768 = vsub.f32 0.0, %v5764
      %v5769 = vsel %vm5765, %v5763, %v5767
      %v5770 = vsel %vm5766, %v5764, %v5768
      %v5771 = vadd.f32 %v5769, 1.0
      %v5772 = vadd.f32 %v5770, 1.0
      %v5773 = vmul.f32 %v5723, %v5771
      %v5774 = vmul.f32 %v5724, %v5772
      %v5775 = vmul.f32 %v5773, %v5089
      %v5776 = vmul.f32 %v5774, %v5088
      %5777 = vst.msk [vmem:[#allocation6] sm:$0x1f] %vm5094, 0.0
      %v5780 = vrot.slane %v5775, 3
      %v5781 = vrot.slane %v5776, 3
      %v5782 = vsel %vm5098, %v5780, %v5781
      %5785 = vst.msk [vmem:[#allocation6] sm:$0xe0] %vm5104, %v5780
      %5786 = vst.msk [vmem:[#allocation6 + $0x10] sm:$0xff] %vm5031, %v5782
      %5787 = vst.msk [vmem:[#allocation6] sm:$0xf] %vm5107, 0.0
      %v5790 = vrot.slane %v5773, 4
      %v5791 = vrot.slane %v5774, 4
      %v5792 = vsel %vm4765, %v5790, %v5791
      %5793 = vrot.lane.b32.xlu0 %v5790, 16
      %v5794 = vpop.permute.xlu0 %5793
      %5795 = vrot.lane.b32.xlu0 %v5792, 16
      %v5796 = vpop.permute.xlu0 %5795
      %5799 = vst.msk [vmem:[#allocation6] sm:$0xf0] %vm5120, %v5794
      %5800 = vst.msk [vmem:[#allocation6 + $0x10] sm:$0xff] %vm5122, %v5796
      %v5801 = vmul.f32 %v5773, %v5128
      %v5802 = vmul.f32 %v5774, %v5127
      %5803 = vst.msk [vmem:[#allocation6] sm:$0x7] %vm5133, 0.0
      %v5806 = vrot.slane %v5801, 5
      %v5807 = vrot.slane %v5802, 5
      %v5808 = vsel %vm5086, %v5806, %v5807
      %5809 = vrot.lane.b32.xlu0 %v5806, 32
      %v5810 = vpop.permute.xlu0 %5809
      %5811 = vrot.lane.b32.xlu0 %v5808, 32
      %v5812 = vpop.permute.xlu0 %5811
      %5815 = vst.msk [vmem:[#allocation6] sm:$0xf8] %vm5146, %v5810
      %5816 = vst.msk [vmem:[#allocation6 + $0x10] sm:$0xff] %vm5148, %v5812
      %v5817 = vmul.f32 %v5773, %v5152
      %v5818 = vmul.f32 %v5774, %v5151
      %5819 = vst.msk [vmem:[#allocation6] sm:$0x1] %vm5157, 0.0
      %v5822 = vrot.slane %v5817, 7
      %v5823 = vrot.slane %v5818, 7
      %v5824 = vsel %vm1615, %v5822, %v5823
      %5825 = vrot.lane.b32.xlu0 %v5822, 48
      %v5826 = vpop.permute.xlu0 %5825
      %5827 = vrot.lane.b32.xlu0 %v5824, 48
      %v5828 = vpop.permute.xlu0 %5827
      %5831 = vst.msk [vmem:[#allocation6] sm:$0xfe] %vm5170, %v5826
      %5832 = vst.msk [vmem:[#allocation6 + $0x10] sm:$0xff] %vm5172, %v5828
      %5833 = vrot.lane.b32.xlu0 %v5773, 64
      %v5834 = vpop.permute.xlu0 %5833
      %5835 = vrot.lane.b32.xlu0 %v5774, 64
      %v5836 = vpop.permute.xlu0 %5835
      %5839 = vst.msk [vmem:[#allocation6] sm:$0xff] %vm5180, %v5834
      %5840 = vst.msk [vmem:[#allocation6 + $0x10] sm:$0xff] %vm5180, %v5836
      %v5841 = vmul.f32 %v5773, %v5183
      %v5842 = vmul.f32 %v5774, %v5185
      %v5845 = vrot.slane %v5841, 1
      %v5846 = vrot.slane %v5842, 1
      %v5847 = vsel %vm1275, %v5845, %v5846
      %5848 = vrot.lane.b32.xlu0 %v5847, 80
      %v5849 = vpop.permute.xlu0 %5848
      %5850 = vrot.lane.b32.xlu0 %v5846, 80
      %v5851 = vpop.permute.xlu0 %5850
      %5854 = vst.msk [vmem:[#allocation6] sm:$0xff] %vm5201, %v5849
      %5855 = vst.msk [vmem:[#allocation6 + $0x10] sm:$0x7f] %vm5203, %v5851
      %5856 = vst.msk [vmem:[#allocation6 + $0x17] sm:$0x1] %vm5205, 0.0
      %v5857 = vmul.f32 %v5773, %v5087
      %v5858 = vmul.f32 %v5774, %v5089
      %v5861 = vrot.slane %v5857, 3
      %v5862 = vrot.slane %v5858, 3
      %v5863 = vsel %vm5098, %v5861, %v5862
      %5864 = vrot.lane.b32.xlu0 %v5863, 96
      %v5865 = vpop.permute.xlu0 %5864
      %5866 = vrot.lane.b32.xlu0 %v5862, 96
      %v5867 = vpop.permute.xlu0 %5866
      %5870 = vst.msk [vmem:[#allocation6] sm:$0xff] %vm5221, %v5865
      %5871 = vst.msk [vmem:[#allocation6 + $0x10] sm:$0x1f] %vm5223, %v5867
      %5872 = vst.msk [vmem:[#allocation6 + $0x10] sm:$0xe0] %vm5225, 0.0
      %5873 = vrot.lane.b32.xlu0 %v5792, 112
      %v5874 = vpop.permute.xlu0 %5873
      %5875 = vrot.lane.b32.xlu0 %v5791, 112
      %v5876 = vpop.permute.xlu0 %5875
      %5879 = vst.msk [vmem:[#allocation6] sm:$0xff] %vm5233, %v5874
      %5880 = vst.msk [vmem:[#allocation6 + $0x10] sm:$0xf] %vm5235, %v5876
      %5881 = vst.msk [vmem:[#allocation6 + $0x10] sm:$0xf0] %vm5237, 0.0
      %v5882 = vmul.f32 %v5773, %v5126
      %v5883 = vmul.f32 %v5774, %v5128
      %v5886 = vrot.slane %v5882, 5
      %v5887 = vrot.slane %v5883, 5
      %v5888 = vsel %vm5086, %v5886, %v5887
      %5891 = vst.msk [vmem:[#allocation6 + $0x8] sm:$0xff] %vm5031, %v5888
      %5892 = vst.msk [vmem:[#allocation6 + $0x18] sm:$0x7] %vm5250, %v5887
      %5893 = vst.msk [vmem:[#allocation6 + $0x18] sm:$0xf8] %vm5252, 0.0
      %v5894 = vld [vmem:[#allocation6] sm:$0xff]
      %v5895 = vld [vmem:[#allocation6 + $0x8] sm:$0xff]
      %v5896 = vld [vmem:[#allocation6 + $0x10] sm:$0xff]
      %v5897 = vld [vmem:[#allocation6 + $0x18] sm:$0xff]
      %v5898 = vpack.c.bf16 %v5896, %v5894
      %v5899 = vpack.c.bf16 %v5897, %v5895
      %v5900 = vld [vmem:[%s13] sm:$0xf]
      %v5901 = vld [vmem:[%s13 + $0x4] sm:$0xf]
      %v5902 = vld [vmem:[%s13 + $0x8] sm:$0xf]
      %v5903 = vld [vmem:[%s13 + $0xc] sm:$0xf]
      %v5904 = vld [vmem:[%s13 + $0x10] sm:$0xf]
      %v5905 = vld [vmem:[%s13 + $0x14] sm:$0xf]
      %v5906 = vld [vmem:[%s13 + $0x18] sm:$0xf]
      %v5907 = vld [vmem:[%s13 + $0x1c] sm:$0xf]
      %v5908 = vld [vmem:[%s13 + $0x20] sm:$0xf]
      %v5909 = vld [vmem:[%s13 + $0x24] sm:$0xf]
      %v5910 = vld [vmem:[%s13 + $0x28] sm:$0xf]
      %v5911 = vld [vmem:[%s13 + $0x2c] sm:$0xf]
      %v5912 = vld [vmem:[%s13 + $0x30] sm:$0xf]
      %v5913 = vld [vmem:[%s13 + $0x34] sm:$0xf]
      %v5914 = vld [vmem:[%s13 + $0x38] sm:$0xf]
      %v5915 = vld [vmem:[%s13 + $0x3c] sm:$0xf]
      %v5916 = vld [vmem:[%s13 + $0x40] sm:$0xf]
      %v5917 = vld [vmem:[%s13 + $0x44] sm:$0xf]
      %v5936 = vunpack.c.l.b16 %v5900
      %v5937 = vunpack.c.l.b16 %v5901
      %v5938 = vunpack.c.l.b16 %v5902
      %v5939 = vunpack.c.l.b16 %v5903
      %v5940 = vunpack.c.l.b16 %v5904
      %v5941 = vunpack.c.l.b16 %v5905
      %v5942 = vunpack.c.l.b16 %v5906
      %v5943 = vunpack.c.l.b16 %v5907
      %v5944 = vunpack.c.l.b16 %v5908
      %v5945 = vunpack.c.l.b16 %v5909
      %v5946 = vunpack.c.l.b16 %v5910
      %v5947 = vunpack.c.l.b16 %v5911
      %v5948 = vunpack.c.l.b16 %v5912
      %v5949 = vunpack.c.l.b16 %v5913
      %v5950 = vunpack.c.l.b16 %v5914
      %v5951 = vunpack.c.l.b16 %v5915
      %v5952 = vunpack.c.l.b16 %v5916
      %v5953 = vunpack.c.l.b16 %v5917
      %v5954 = vpack.c.b16 %v5937, %v5936
      %v5955 = vpack.c.b16 %v5939, %v5938
      %v5956 = vpack.c.b16 %v5941, %v5940
      %v5957 = vpack.c.b16 %v5943, %v5942
      %v5958 = vpack.c.b16 %v5945, %v5944
      %v5959 = vpack.c.b16 %v5947, %v5946
      %v5960 = vpack.c.b16 %v5949, %v5948
      %v5961 = vpack.c.b16 %v5951, %v5950
      %v5962 = vpack.c.b16 %v5953, %v5952
      %v5973 = vsel %vm5031, %v5899, 0
      %5975 = vmatpush.bf16.msra.mxu0 %v5961
      %5976 = vmatpush.bf16.msra.mxu0 %v5960
      %5977 = vmatpush.bf16.msra.mxu0 %v5959
      %5978 = vmatpush.bf16.msra.mxu0 %v5958
      %5979 = vmatpush.bf16.msra.mxu0 %v5957
      %5980 = vmatpush.bf16.msra.mxu0 %v5956
      %5981 = vmatpush.bf16.msra.mxu0 %v5955
      %5982 = vmatpush.bf16.msra.mxu0 %v5954
      %5983 = vmatmul.bf16.gmra.mxu0 %v5898
      %v5984 = vpop.f32.mrf.mxu0
      %v5985 = vadd.f32 0.0, %v5984
      %v5986 = vpop.f32.mrf.mxu0
      %v5987 = vadd.f32 0.0, %v5986
      %5988 = vdwg.mxu0
      %5989 = vmatpush.bf16.msra.mxu0 0
      %5990 = vmatpush.bf16.msra.mxu0 0
      %5991 = vmatpush.bf16.msra.mxu0 0
      %5992 = vmatpush.bf16.msra.mxu0 0
      %5993 = vmatpush.bf16.msra.mxu0 0
      %5994 = vmatpush.bf16.msra.mxu0 0
      %5995 = vmatpush.bf16.msra.mxu0 0
      %5996 = vmatpush.bf16.msra.mxu0 %v5962
      %5997 = vmatmul.bf16.gmra.mxu0 %v5973
      %v5998 = vpop.f32.mrf.mxu0
      %v5999 = vadd.f32 %v5985, %v5998
      %v6000 = vpop.f32.mrf.mxu0
      %v6001 = vadd.f32 %v5987, %v6000
      %6002 = vdwg.mxu0
      %v6003 = vld [vmem:[%s14] sm:$0x1]
      %v6005 = vperm.slane %v6003, 0
      %v6007 = vmul.f32 %v5999, %v6005
      %v6008 = vmul.f32 %v6001, %v6005
      %v6009 = vld [vmem:[%s15] sm:$0x1]
      %v6011 = vperm.slane %v6009, 0
      %v6013 = vadd.f32 %v6007, %v6011
      %v6014 = vadd.f32 %v6008, %v6011
      %v6015 = vmul.f32 %v6013, 0.5
      %v6016 = vmul.f32 %v6014, 0.5
      %v6017 = vmul.f32 %v6013, 0.70710677
      %v6018 = vmul.f32 %v6014, 0.70710677
      %v6019 = vand.u32 2147483647, %v6017
      %v6020 = vand.u32 2147483647, %v6018
      %v6021 = vmul.f32 %v6019, 0.3275911
      %v6022 = vmul.f32 %v6020, 0.3275911
      %v6023 = vadd.f32 %v6021, 1.0
      %v6024 = vadd.f32 %v6022, 1.0
      %v6025 = vrcp.pop %v6023
      %v6026 = vrcp.pop %v6024
      %v6027 = vmul.f32 %v6025, 1.0614054
      %v6028 = vmul.f32 %v6026, 1.0614054
      %v6029 = vadd.f32 %v6027, -1.4531521
      %v6030 = vadd.f32 %v6028, -1.4531521
      %v6031 = vmul.f32 %v6029, %v6025
      %v6032 = vmul.f32 %v6030, %v6026
      %v6033 = vadd.f32 %v6031, 1.4214138
      %v6034 = vadd.f32 %v6032, 1.4214138
      %v6035 = vmul.f32 %v6033, %v6025
      %v6036 = vmul.f32 %v6034, %v6026
      %v6037 = vadd.f32 %v6035, -0.28449672
      %v6038 = vadd.f32 %v6036, -0.28449672
      %v6039 = vmul.f32 %v6037, %v6025
      %v6040 = vmul.f32 %v6038, %v6026
      %v6041 = vadd.f32 %v6039, 0.2548296
      %v6042 = vadd.f32 %v6040, 0.2548296
      %v6043 = vmul.f32 %v6041, %v6025
      %v6044 = vmul.f32 %v6042, %v6026
      %v6045 = vsub.f32 0.0, %v6019
      %v6046 = vsub.f32 0.0, %v6020
      %v6047 = vmul.f32 %v6045, %v6019
      %v6048 = vmul.f32 %v6046, %v6020
      %v6049 = vmul.f32 %v6047, 1.442695
      %v6050 = vpow.pop %v6049
      %v6051 = vmul.f32 %v6048, 1.442695
      %v6052 = vpow.pop %v6051
      %v6053 = vmul.f32 %v6043, %v6050
      %v6054 = vmul.f32 %v6044, %v6052
      %v6055 = vsub.f32 1.0, %v6053
      %v6056 = vsub.f32 1.0, %v6054
      %vm6057 = vcmp.ge.f32.partialorder %v6017, 0.0
      %vm6058 = vcmp.ge.f32.partialorder %v6018, 0.0
      %v6059 = vsub.f32 0.0, %v6055
      %v6060 = vsub.f32 0.0, %v6056
      %v6061 = vsel %vm6057, %v6055, %v6059
      %v6062 = vsel %vm6058, %v6056, %v6060
      %v6063 = vadd.f32 %v6061, 1.0
      %v6064 = vadd.f32 %v6062, 1.0
      %v6065 = vmul.f32 %v6015, %v6063
      %v6066 = vmul.f32 %v6016, %v6064
      %6067 = vst [vmem:[#allocation10] ss:$2 sm:$0xff] %v6065
      %s6068 = scalar_lea.vmem [#allocation10], 16
      %6069 = vst [vmem:[%s6068] ss:$2 sm:$0xff] %v6066
      %s6070 = scalar_lea.vmem [#allocation10], 1
      %6071 = vst [vmem:[%s6070] ss:$2 sm:$0xff] %v6065
      %s6072 = scalar_lea.vmem [#allocation10], 17
      %6073 = vst [vmem:[%s6072] ss:$2 sm:$0xff] %v6066
      %v6074 = vld [vmem:[#allocation10] sm:$0xff]
      %6075 = vst.msk [vmem:[#allocation12] sm:$0xff] %vm4052, %v6074
      %6076 = vst.msk [vmem:[#allocation12 + $0x8] sm:$0xff] %vm4052, %v6074
      %v6077 = vld [vmem:[#allocation10 + $0x8] sm:$0xff]
      %6078 = vst.msk [vmem:[#allocation12 + $0x10] sm:$0xff] %vm4052, %v6077
      %6079 = vst.msk [vmem:[#allocation12 + $0x18] sm:$0xff] %vm4052, %v6077
      %v6080 = vld [vmem:[#allocation10 + $0x10] sm:$0xff]
      %6081 = vst.msk [vmem:[#allocation12 + $0x20] sm:$0xff] %vm4052, %v6080
      %6082 = vst.msk [vmem:[#allocation12 + $0x28] sm:$0xff] %vm4052, %v6080
      %v6083 = vld [vmem:[#allocation10 + $0x18] sm:$0xff]
      %6084 = vst.msk [vmem:[#allocation12 + $0x30] sm:$0xff] %vm4052, %v6083
      %6085 = vst.msk [vmem:[#allocation12 + $0x38] sm:$0xff] %vm4052, %v6083
      %v6086 = vld [vmem:[#allocation12] sm:$0xff]
      %v6087 = vld [vmem:[#allocation12 + $0x8] sm:$0xff]
      %v6088 = vld [vmem:[#allocation12 + $0x10] sm:$0xff]
      %v6089 = vld [vmem:[#allocation12 + $0x18] sm:$0xff]
      %v6090 = vld [vmem:[#allocation12 + $0x20] sm:$0xff]
      %v6091 = vld [vmem:[#allocation12 + $0x28] sm:$0xff]
      %v6092 = vld [vmem:[#allocation12 + $0x30] sm:$0xff]
      %v6093 = vld [vmem:[#allocation12 + $0x38] sm:$0xff]
      %v6094 = vadd.f32 %v6086, %v4114
      %v6095 = vadd.f32 %v6087, %v4115
      %v6096 = vadd.f32 %v6088, %v4116
      %v6097 = vadd.f32 %v6089, %v4117
      %v6098 = vadd.f32 %v6090, %v4118
      %v6099 = vadd.f32 %v6091, %v4119
      %v6100 = vadd.f32 %v6092, %v4120
      %v6101 = vadd.f32 %v6093, %v4121
      %v6102 = vmul.f32 %v6094, 0.5
      %v6103 = vmul.f32 %v6095, 0.5
      %v6104 = vmul.f32 %v6096, 0.5
      %v6105 = vmul.f32 %v6097, 0.5
      %v6106 = vmul.f32 %v6098, 0.5
      %v6107 = vmul.f32 %v6099, 0.5
      %v6108 = vmul.f32 %v6100, 0.5
      %v6109 = vmul.f32 %v6101, 0.5
      %v6110 = vmul.f32 %v6094, 0.70710677
      %v6111 = vmul.f32 %v6095, 0.70710677
      %v6112 = vmul.f32 %v6096, 0.70710677
      %v6113 = vmul.f32 %v6097, 0.70710677
      %v6114 = vmul.f32 %v6098, 0.70710677
      %v6115 = vmul.f32 %v6099, 0.70710677
      %v6116 = vmul.f32 %v6100, 0.70710677
      %v6117 = vmul.f32 %v6101, 0.70710677
      %v6118 = vand.u32 2147483647, %v6110
      %v6119 = vand.u32 2147483647, %v6111
      %v6120 = vand.u32 2147483647, %v6112
      %v6121 = vand.u32 2147483647, %v6113
      %v6122 = vand.u32 2147483647, %v6114
      %v6123 = vand.u32 2147483647, %v6115
      %v6124 = vand.u32 2147483647, %v6116
      %v6125 = vand.u32 2147483647, %v6117
      %v6126 = vmul.f32 %v6118, 0.3275911
      %v6127 = vmul.f32 %v6119, 0.3275911
      %v6128 = vmul.f32 %v6120, 0.3275911
      %v6129 = vmul.f32 %v6121, 0.3275911
      %v6130 = vmul.f32 %v6122, 0.3275911
      %v6131 = vmul.f32 %v6123, 0.3275911
      %v6132 = vmul.f32 %v6124, 0.3275911
      %v6133 = vmul.f32 %v6125, 0.3275911
      %v6134 = vadd.f32 %v6126, 1.0
      %v6135 = vadd.f32 %v6127, 1.0
      %v6136 = vadd.f32 %v6128, 1.0
      %v6137 = vadd.f32 %v6129, 1.0
      %v6138 = vadd.f32 %v6130, 1.0
      %v6139 = vadd.f32 %v6131, 1.0
      %v6140 = vadd.f32 %v6132, 1.0
      %v6141 = vadd.f32 %v6133, 1.0
      %v6142 = vrcp.pop %v6134
      %v6143 = vrcp.pop %v6135
      %v6144 = vrcp.pop %v6136
      %v6145 = vrcp.pop %v6137
      %v6146 = vrcp.pop %v6138
      %v6147 = vrcp.pop %v6139
      %v6148 = vrcp.pop %v6140
      %v6149 = vrcp.pop %v6141
      %v6150 = vmul.f32 %v6142, 1.0614054
      %v6151 = vmul.f32 %v6143, 1.0614054
      %v6152 = vmul.f32 %v6144, 1.0614054
      %v6153 = vmul.f32 %v6145, 1.0614054
      %v6154 = vmul.f32 %v6146, 1.0614054
      %v6155 = vmul.f32 %v6147, 1.0614054
      %v6156 = vmul.f32 %v6148, 1.0614054
      %v6157 = vmul.f32 %v6149, 1.0614054
      %v6158 = vadd.f32 %v6150, -1.4531521
      %v6159 = vadd.f32 %v6151, -1.4531521
      %v6160 = vadd.f32 %v6152, -1.4531521
      %v6161 = vadd.f32 %v6153, -1.4531521
      %v6162 = vadd.f32 %v6154, -1.4531521
      %v6163 = vadd.f32 %v6155, -1.4531521
      %v6164 = vadd.f32 %v6156, -1.4531521
      %v6165 = vadd.f32 %v6157, -1.4531521
      %v6166 = vmul.f32 %v6158, %v6142
      %v6167 = vmul.f32 %v6159, %v6143
      %v6168 = vmul.f32 %v6160, %v6144
      %v6169 = vmul.f32 %v6161, %v6145
      %v6170 = vmul.f32 %v6162, %v6146
      %v6171 = vmul.f32 %v6163, %v6147
      %v6172 = vmul.f32 %v6164, %v6148
      %v6173 = vmul.f32 %v6165, %v6149
      %v6174 = vadd.f32 %v6166, 1.4214138
      %v6175 = vadd.f32 %v6167, 1.4214138
      %v6176 = vadd.f32 %v6168, 1.4214138
      %v6177 = vadd.f32 %v6169, 1.4214138
      %v6178 = vadd.f32 %v6170, 1.4214138
      %v6179 = vadd.f32 %v6171, 1.4214138
      %v6180 = vadd.f32 %v6172, 1.4214138
      %v6181 = vadd.f32 %v6173, 1.4214138
      %v6182 = vmul.f32 %v6174, %v6142
      %v6183 = vmul.f32 %v6175, %v6143
      %v6184 = vmul.f32 %v6176, %v6144
      %v6185 = vmul.f32 %v6177, %v6145
      %v6186 = vmul.f32 %v6178, %v6146
      %v6187 = vmul.f32 %v6179, %v6147
      %v6188 = vmul.f32 %v6180, %v6148
      %v6189 = vmul.f32 %v6181, %v6149
      %v6190 = vadd.f32 %v6182, -0.28449672
      %v6191 = vadd.f32 %v6183, -0.28449672
      %v6192 = vadd.f32 %v6184, -0.28449672
      %v6193 = vadd.f32 %v6185, -0.28449672
      %v6194 = vadd.f32 %v6186, -0.28449672
      %v6195 = vadd.f32 %v6187, -0.28449672
      %v6196 = vadd.f32 %v6188, -0.28449672
      %v6197 = vadd.f32 %v6189, -0.28449672
      %v6198 = vmul.f32 %v6190, %v6142
      %v6199 = vmul.f32 %v6191, %v6143
      %v6200 = vmul.f32 %v6192, %v6144
      %v6201 = vmul.f32 %v6193, %v6145
      %v6202 = vmul.f32 %v6194, %v6146
      %v6203 = vmul.f32 %v6195, %v6147
      %v6204 = vmul.f32 %v6196, %v6148
      %v6205 = vmul.f32 %v6197, %v6149
      %v6206 = vadd.f32 %v6198, 0.2548296
      %v6207 = vadd.f32 %v6199, 0.2548296
      %v6208 = vadd.f32 %v6200, 0.2548296
      %v6209 = vadd.f32 %v6201, 0.2548296
      %v6210 = vadd.f32 %v6202, 0.2548296
      %v6211 = vadd.f32 %v6203, 0.2548296
      %v6212 = vadd.f32 %v6204, 0.2548296
      %v6213 = vadd.f32 %v6205, 0.2548296
      %v6214 = vmul.f32 %v6206, %v6142
      %v6215 = vmul.f32 %v6207, %v6143
      %v6216 = vmul.f32 %v6208, %v6144
      %v6217 = vmul.f32 %v6209, %v6145
      %v6218 = vmul.f32 %v6210, %v6146
      %v6219 = vmul.f32 %v6211, %v6147
      %v6220 = vmul.f32 %v6212, %v6148
      %v6221 = vmul.f32 %v6213, %v6149
      %v6222 = vsub.f32 0.0, %v6118
      %v6223 = vsub.f32 0.0, %v6119
      %v6224 = vsub.f32 0.0, %v6120
      %v6225 = vsub.f32 0.0, %v6121
      %v6226 = vsub.f32 0.0, %v6122
      %v6227 = vsub.f32 0.0, %v6123
      %v6228 = vsub.f32 0.0, %v6124
      %v6229 = vsub.f32 0.0, %v6125
      %v6230 = vmul.f32 %v6222, %v6118
      %v6231 = vmul.f32 %v6223, %v6119
      %v6232 = vmul.f32 %v6224, %v6120
      %v6233 = vmul.f32 %v6225, %v6121
      %v6234 = vmul.f32 %v6226, %v6122
      %v6235 = vmul.f32 %v6227, %v6123
      %v6236 = vmul.f32 %v6228, %v6124
      %v6237 = vmul.f32 %v6229, %v6125
      %v6238 = vmul.f32 %v6230, 1.442695
      %v6239 = vpow.pop %v6238
      %v6240 = vmul.f32 %v6231, 1.442695
      %v6241 = vpow.pop %v6240
      %v6242 = vmul.f32 %v6232, 1.442695
      %v6243 = vpow.pop %v6242
      %v6244 = vmul.f32 %v6233, 1.442695
      %v6245 = vpow.pop %v6244
      %v6246 = vmul.f32 %v6234, 1.442695
      %v6247 = vpow.pop %v6246
      %v6248 = vmul.f32 %v6235, 1.442695
      %v6249 = vpow.pop %v6248
      %v6250 = vmul.f32 %v6236, 1.442695
      %v6251 = vpow.pop %v6250
      %v6252 = vmul.f32 %v6237, 1.442695
      %v6253 = vpow.pop %v6252
      %v6254 = vmul.f32 %v6214, %v6239
      %v6255 = vmul.f32 %v6215, %v6241
      %v6256 = vmul.f32 %v6216, %v6243
      %v6257 = vmul.f32 %v6217, %v6245
      %v6258 = vmul.f32 %v6218, %v6247
      %v6259 = vmul.f32 %v6219, %v6249
      %v6260 = vmul.f32 %v6220, %v6251
      %v6261 = vmul.f32 %v6221, %v6253
      %v6262 = vsub.f32 1.0, %v6254
      %v6263 = vsub.f32 1.0, %v6255
      %v6264 = vsub.f32 1.0, %v6256
      %v6265 = vsub.f32 1.0, %v6257
      %v6266 = vsub.f32 1.0, %v6258
      %v6267 = vsub.f32 1.0, %v6259
      %v6268 = vsub.f32 1.0, %v6260
      %v6269 = vsub.f32 1.0, %v6261
      %vm6270 = vcmp.ge.f32.partialorder %v6110, 0.0
      %vm6271 = vcmp.ge.f32.partialorder %v6111, 0.0
      %vm6272 = vcmp.ge.f32.partialorder %v6112, 0.0
      %vm6273 = vcmp.ge.f32.partialorder %v6113, 0.0
      %vm6274 = vcmp.ge.f32.partialorder %v6114, 0.0
      %vm6275 = vcmp.ge.f32.partialorder %v6115, 0.0
      %vm6276 = vcmp.ge.f32.partialorder %v6116, 0.0
      %vm6277 = vcmp.ge.f32.partialorder %v6117, 0.0
      %v6278 = vsub.f32 0.0, %v6262
      %v6279 = vsub.f32 0.0, %v6263
      %v6280 = vsub.f32 0.0, %v6264
      %v6281 = vsub.f32 0.0, %v6265
      %v6282 = vsub.f32 0.0, %v6266
      %v6283 = vsub.f32 0.0, %v6267
      %v6284 = vsub.f32 0.0, %v6268
      %v6285 = vsub.f32 0.0, %v6269
      %v6286 = vsel %vm6270, %v6262, %v6278
      %v6287 = vsel %vm6271, %v6263, %v6279
      %v6288 = vsel %vm6272, %v6264, %v6280
      %v6289 = vsel %vm6273, %v6265, %v6281
      %v6290 = vsel %vm6274, %v6266, %v6282
      %v6291 = vsel %vm6275, %v6267, %v6283
      %v6292 = vsel %vm6276, %v6268, %v6284
      %v6293 = vsel %vm6277, %v6269, %v6285
      %v6294 = vadd.f32 %v6286, 1.0
      %v6295 = vadd.f32 %v6287, 1.0
      %v6296 = vadd.f32 %v6288, 1.0
      %v6297 = vadd.f32 %v6289, 1.0
      %v6298 = vadd.f32 %v6290, 1.0
      %v6299 = vadd.f32 %v6291, 1.0
      %v6300 = vadd.f32 %v6292, 1.0
      %v6301 = vadd.f32 %v6293, 1.0
      %v6302 = vmul.f32 %v6102, %v6294
      %v6303 = vmul.f32 %v6103, %v6295
      %v6304 = vmul.f32 %v6104, %v6296
      %v6305 = vmul.f32 %v6105, %v6297
      %v6306 = vmul.f32 %v6106, %v6298
      %v6307 = vmul.f32 %v6107, %v6299
      %v6308 = vmul.f32 %v6108, %v6300
      %v6309 = vmul.f32 %v6109, %v6301
      %v6310 = vmul.f32 %v6302, %v4275
      %v6311 = vmul.f32 %v6303, %v4277
      %v6312 = vmul.f32 %v6304, %v4279
      %v6313 = vmul.f32 %v6305, %v4281
      %v6314 = vmul.f32 %v6306, %v4283
      %v6315 = vmul.f32 %v6307, %v4285
      %v6316 = vmul.f32 %v6308, %v4284
      %6317 = vst.msk [vmem:[#allocation7] sm:$0xff] %vm4052, 0.0
      %6318 = vst.msk [vmem:[#allocation7 + $0x8] sm:$0x1] %vm4301, 0.0
      %6319 = vst.msk [vmem:[#allocation7 + $0x9] sm:$0xff] %vm4052, %v6310
      %6320 = vst.msk [vmem:[#allocation7 + $0x11] sm:$0xff] %vm4052, %v6311
      %6321 = vst.msk [vmem:[#allocation7 + $0x19] sm:$0xff] %vm4052, %v6312
      %6322 = vst.msk [vmem:[#allocation7 + $0x21] sm:$0xff] %vm4052, %v6313
      %6323 = vst.msk [vmem:[#allocation7 + $0x29] sm:$0xff] %vm4052, %v6314
      %6324 = vst.msk [vmem:[#allocation7 + $0x31] sm:$0xff] %vm4052, %v6315
      %6325 = vst.msk [vmem:[#allocation7 + $0x39] sm:$0x7f] %vm4309, %v6316
      %6326 = vst.msk [vmem:[#allocation7] sm:$0xff] %vm4311, 0.0
      %6334 = vrot.lane.b32.xlu0 %v6302, 8
      %v6335 = vpop.permute.xlu0 %6334
      %6336 = vrot.lane.b32.xlu0 %v6303, 8
      %v6337 = vpop.permute.xlu0 %6336
      %6338 = vrot.lane.b32.xlu0 %v6304, 8
      %v6339 = vpop.permute.xlu0 %6338
      %6340 = vrot.lane.b32.xlu0 %v6305, 8
      %v6341 = vpop.permute.xlu0 %6340
      %6342 = vrot.lane.b32.xlu0 %v6306, 8
      %v6343 = vpop.permute.xlu0 %6342
      %6344 = vrot.lane.b32.xlu0 %v6307, 8
      %v6345 = vpop.permute.xlu0 %6344
      %6346 = vrot.lane.b32.xlu0 %v6308, 8
      %v6347 = vpop.permute.xlu0 %6346
      %6355 = vst.msk [vmem:[#allocation7 + $0x8] sm:$0xff] %vm4311, %v6335
      %6356 = vst.msk [vmem:[#allocation7 + $0x10] sm:$0xff] %vm4311, %v6337
      %6357 = vst.msk [vmem:[#allocation7 + $0x18] sm:$0xff] %vm4311, %v6339
      %6358 = vst.msk [vmem:[#allocation7 + $0x20] sm:$0xff] %vm4311, %v6341
      %6359 = vst.msk [vmem:[#allocation7 + $0x28] sm:$0xff] %vm4311, %v6343
      %6360 = vst.msk [vmem:[#allocation7 + $0x30] sm:$0xff] %vm4311, %v6345
      %6361 = vst.msk [vmem:[#allocation7 + $0x38] sm:$0xff] %vm4311, %v6347
      %v6362 = vmul.f32 %v6302, %v4358
      %v6363 = vmul.f32 %v6303, %v4360
      %v6364 = vmul.f32 %v6304, %v4362
      %v6365 = vmul.f32 %v6305, %v4364
      %v6366 = vmul.f32 %v6306, %v4366
      %v6367 = vmul.f32 %v6307, %v4368
      %v6368 = vmul.f32 %v6308, %v4370
      %v6369 = vmul.f32 %v6309, %v4369
      %6370 = vst.msk [vmem:[#allocation7] sm:$0x7f] %vm4387, 0.0
      %6379 = vrot.lane.b32.xlu0 %v6362, 16
      %v6380 = vpop.permute.xlu0 %6379
      %6381 = vrot.lane.b32.xlu0 %v6363, 16
      %v6382 = vpop.permute.xlu0 %6381
      %6383 = vrot.lane.b32.xlu0 %v6364, 16
      %v6384 = vpop.permute.xlu0 %6383
      %6385 = vrot.lane.b32.xlu0 %v6365, 16
      %v6386 = vpop.permute.xlu0 %6385
      %6387 = vrot.lane.b32.xlu0 %v6366, 16
      %v6388 = vpop.permute.xlu0 %6387
      %6389 = vrot.lane.b32.xlu0 %v6367, 16
      %v6390 = vpop.permute.xlu0 %6389
      %6391 = vrot.lane.b32.xlu0 %v6368, 16
      %v6392 = vpop.permute.xlu0 %6391
      %6393 = vrot.lane.b32.xlu0 %v6369, 16
      %v6394 = vpop.permute.xlu0 %6393
      %6403 = vst.msk [vmem:[#allocation7 + $0x7] sm:$0xff] %vm4421, %v6380
      %6404 = vst.msk [vmem:[#allocation7 + $0xf] sm:$0xff] %vm4421, %v6382
      %6405 = vst.msk [vmem:[#allocation7 + $0x17] sm:$0xff] %vm4421, %v6384
      %6406 = vst.msk [vmem:[#allocation7 + $0x1f] sm:$0xff] %vm4421, %v6386
      %6407 = vst.msk [vmem:[#allocation7 + $0x27] sm:$0xff] %vm4421, %v6388
      %6408 = vst.msk [vmem:[#allocation7 + $0x2f] sm:$0xff] %vm4421, %v6390
      %6409 = vst.msk [vmem:[#allocation7 + $0x37] sm:$0xff] %vm4421, %v6392
      %6410 = vst.msk [vmem:[#allocation7 + $0x3f] sm:$0x1] %vm4429, %v6394
      %v6411 = vmul.f32 %v6302, %v4433
      %v6412 = vmul.f32 %v6303, %v4275
      %v6413 = vmul.f32 %v6304, %v4277
      %v6414 = vmul.f32 %v6305, %v4279
      %v6415 = vmul.f32 %v6306, %v4281
      %v6416 = vmul.f32 %v6307, %v4283
      %v6417 = vmul.f32 %v6308, %v4285
      %v6418 = vmul.f32 %v6309, %v4284
      %6419 = vst.msk [vmem:[#allocation7] sm:$0x1] %vm4443, 0.0
      %6428 = vrot.lane.b32.xlu0 %v6411, 24
      %v6429 = vpop.permute.xlu0 %6428
      %6430 = vrot.lane.b32.xlu0 %v6412, 24
      %v6431 = vpop.permute.xlu0 %6430
      %6432 = vrot.lane.b32.xlu0 %v6413, 24
      %v6433 = vpop.permute.xlu0 %6432
      %6434 = vrot.lane.b32.xlu0 %v6414, 24
      %v6435 = vpop.permute.xlu0 %6434
      %6436 = vrot.lane.b32.xlu0 %v6415, 24
      %v6437 = vpop.permute.xlu0 %6436
      %6438 = vrot.lane.b32.xlu0 %v6416, 24
      %v6439 = vpop.permute.xlu0 %6438
      %6440 = vrot.lane.b32.xlu0 %v6417, 24
      %v6441 = vpop.permute.xlu0 %6440
      %6442 = vrot.lane.b32.xlu0 %v6418, 24
      %v6443 = vpop.permute.xlu0 %6442
      %6452 = vst.msk [vmem:[#allocation7 + $0x1] sm:$0xff] %vm4477, %v6429
      %6453 = vst.msk [vmem:[#allocation7 + $0x9] sm:$0xff] %vm4477, %v6431
      %6454 = vst.msk [vmem:[#allocation7 + $0x11] sm:$0xff] %vm4477, %v6433
      %6455 = vst.msk [vmem:[#allocation7 + $0x19] sm:$0xff] %vm4477, %v6435
      %6456 = vst.msk [vmem:[#allocation7 + $0x21] sm:$0xff] %vm4477, %v6437
      %6457 = vst.msk [vmem:[#allocation7 + $0x29] sm:$0xff] %vm4477, %v6439
      %6458 = vst.msk [vmem:[#allocation7 + $0x31] sm:$0xff] %vm4477, %v6441
      %6459 = vst.msk [vmem:[#allocation7 + $0x39] sm:$0x7f] %vm4485, %v6443
      %6461 = vrot.lane.b32.xlu0 %v6302, 32
      %v6462 = vpop.permute.xlu0 %6461
      %6463 = vrot.lane.b32.xlu0 %v6303, 32
      %v6464 = vpop.permute.xlu0 %6463
      %6465 = vrot.lane.b32.xlu0 %v6304, 32
      %v6466 = vpop.permute.xlu0 %6465
      %6467 = vrot.lane.b32.xlu0 %v6305, 32
      %v6468 = vpop.permute.xlu0 %6467
      %6469 = vrot.lane.b32.xlu0 %v6306, 32
      %v6470 = vpop.permute.xlu0 %6469
      %6471 = vrot.lane.b32.xlu0 %v6307, 32
      %v6472 = vpop.permute.xlu0 %6471
      %6473 = vrot.lane.b32.xlu0 %v6308, 32
      %v6474 = vpop.permute.xlu0 %6473
      %6475 = vrot.lane.b32.xlu0 %v6309, 32
      %v6476 = vpop.permute.xlu0 %6475
      %6485 = vst.msk [vmem:[#allocation7] sm:$0xff] %vm4512, %v6462
      %6486 = vst.msk [vmem:[#allocation7 + $0x8] sm:$0xff] %vm4512, %v6464
      %6487 = vst.msk [vmem:[#allocation7 + $0x10] sm:$0xff] %vm4512, %v6466
      %6488 = vst.msk [vmem:[#allocation7 + $0x18] sm:$0xff] %vm4512, %v6468
      %6489 = vst.msk [vmem:[#allocation7 + $0x20] sm:$0xff] %vm4512, %v6470
      %6490 = vst.msk [vmem:[#allocation7 + $0x28] sm:$0xff] %vm4512, %v6472
      %6491 = vst.msk [vmem:[#allocation7 + $0x30] sm:$0xff] %vm4512, %v6474
      %6492 = vst.msk [vmem:[#allocation7 + $0x38] sm:$0xff] %vm4512, %v6476
      %v6493 = vmul.f32 %v6302, %v4356
      %v6494 = vmul.f32 %v6303, %v4358
      %v6495 = vmul.f32 %v6304, %v4360
      %v6496 = vmul.f32 %v6305, %v4362
      %v6497 = vmul.f32 %v6306, %v4364
      %v6498 = vmul.f32 %v6307, %v4366
      %v6499 = vmul.f32 %v6308, %v4368
      %v6500 = vmul.f32 %v6309, %v4370
      %6509 = vrot.lane.b32.xlu0 %v6493, 40
      %v6510 = vpop.permute.xlu0 %6509
      %6511 = vrot.lane.b32.xlu0 %v6494, 40
      %v6512 = vpop.permute.xlu0 %6511
      %6513 = vrot.lane.b32.xlu0 %v6495, 40
      %v6514 = vpop.permute.xlu0 %6513
      %6515 = vrot.lane.b32.xlu0 %v6496, 40
      %v6516 = vpop.permute.xlu0 %6515
      %6517 = vrot.lane.b32.xlu0 %v6497, 40
      %v6518 = vpop.permute.xlu0 %6517
      %6519 = vrot.lane.b32.xlu0 %v6498, 40
      %v6520 = vpop.permute.xlu0 %6519
      %6521 = vrot.lane.b32.xlu0 %v6499, 40
      %v6522 = vpop.permute.xlu0 %6521
      %6523 = vrot.lane.b32.xlu0 %v6500, 40
      %v6524 = vpop.permute.xlu0 %6523
      %6533 = vst.msk [vmem:[#allocation7 - $0x1] sm:$0xfe] %vm4562, %v6510
      %6534 = vst.msk [vmem:[#allocation7 + $0x7] sm:$0xff] %vm4564, %v6512
      %6535 = vst.msk [vmem:[#allocation7 + $0xf] sm:$0xff] %vm4564, %v6514
      %6536 = vst.msk [vmem:[#allocation7 + $0x17] sm:$0xff] %vm4564, %v6516
      %6537 = vst.msk [vmem:[#allocation7 + $0x1f] sm:$0xff] %vm4564, %v6518
      %6538 = vst.msk [vmem:[#allocation7 + $0x27] sm:$0xff] %vm4564, %v6520
      %6539 = vst.msk [vmem:[#allocation7 + $0x2f] sm:$0xff] %vm4564, %v6522
      %6540 = vst.msk [vmem:[#allocation7 + $0x37] sm:$0xff] %vm4564, %v6524
      %6541 = vst.msk [vmem:[#allocation7 + $0x3f] sm:$0x1] %vm4572, 0.0
      %v6542 = vmul.f32 %v6302, %v4432
      %v6543 = vmul.f32 %v6303, %v4433
      %v6544 = vmul.f32 %v6304, %v4275
      %v6545 = vmul.f32 %v6305, %v4277
      %v6546 = vmul.f32 %v6306, %v4279
      %v6547 = vmul.f32 %v6307, %v4281
      %v6548 = vmul.f32 %v6308, %v4283
      %v6549 = vmul.f32 %v6309, %v4285
      %6558 = vrot.lane.b32.xlu0 %v6542, 48
      %v6559 = vpop.permute.xlu0 %6558
      %6560 = vrot.lane.b32.xlu0 %v6543, 48
      %v6561 = vpop.permute.xlu0 %6560
      %6562 = vrot.lane.b32.xlu0 %v6544, 48
      %v6563 = vpop.permute.xlu0 %6562
      %6564 = vrot.lane.b32.xlu0 %v6545, 48
      %v6565 = vpop.permute.xlu0 %6564
      %6566 = vrot.lane.b32.xlu0 %v6546, 48
      %v6567 = vpop.permute.xlu0 %6566
      %6568 = vrot.lane.b32.xlu0 %v6547, 48
      %v6569 = vpop.permute.xlu0 %6568
      %6570 = vrot.lane.b32.xlu0 %v6548, 48
      %v6571 = vpop.permute.xlu0 %6570
      %6572 = vrot.lane.b32.xlu0 %v6549, 48
      %v6573 = vpop.permute.xlu0 %6572
      %6582 = vst.msk [vmem:[#allocation7 - $0x7] sm:$0x80] %vm4615, %v6559
      %6583 = vst.msk [vmem:[#allocation7 + $0x1] sm:$0xff] %vm4617, %v6561
      %6584 = vst.msk [vmem:[#allocation7 + $0x9] sm:$0xff] %vm4617, %v6563
      %6585 = vst.msk [vmem:[#allocation7 + $0x11] sm:$0xff] %vm4617, %v6565
      %6586 = vst.msk [vmem:[#allocation7 + $0x19] sm:$0xff] %vm4617, %v6567
      %6587 = vst.msk [vmem:[#allocation7 + $0x21] sm:$0xff] %vm4617, %v6569
      %6588 = vst.msk [vmem:[#allocation7 + $0x29] sm:$0xff] %vm4617, %v6571
      %6589 = vst.msk [vmem:[#allocation7 + $0x31] sm:$0xff] %vm4617, %v6573
      %6590 = vst.msk [vmem:[#allocation7 + $0x39] sm:$0x7f] %vm4625, 0.0
      %6591 = vrot.lane.b32.xlu0 %v6303, 56
      %v6592 = vpop.permute.xlu0 %6591
      %6593 = vrot.lane.b32.xlu0 %v6304, 56
      %v6594 = vpop.permute.xlu0 %6593
      %6595 = vrot.lane.b32.xlu0 %v6305, 56
      %v6596 = vpop.permute.xlu0 %6595
      %6597 = vrot.lane.b32.xlu0 %v6306, 56
      %v6598 = vpop.permute.xlu0 %6597
      %6599 = vrot.lane.b32.xlu0 %v6307, 56
      %v6600 = vpop.permute.xlu0 %6599
      %6601 = vrot.lane.b32.xlu0 %v6308, 56
      %v6602 = vpop.permute.xlu0 %6601
      %6603 = vrot.lane.b32.xlu0 %v6309, 56
      %v6604 = vpop.permute.xlu0 %6603
      %6612 = vst.msk [vmem:[#allocation7] sm:$0xff] %vm4648, %v6592
      %6613 = vst.msk [vmem:[#allocation7 + $0x8] sm:$0xff] %vm4648, %v6594
      %6614 = vst.msk [vmem:[#allocation7 + $0x10] sm:$0xff] %vm4648, %v6596
      %6615 = vst.msk [vmem:[#allocation7 + $0x18] sm:$0xff] %vm4648, %v6598
      %6616 = vst.msk [vmem:[#allocation7 + $0x20] sm:$0xff] %vm4648, %v6600
      %6617 = vst.msk [vmem:[#allocation7 + $0x28] sm:$0xff] %vm4648, %v6602
      %6618 = vst.msk [vmem:[#allocation7 + $0x30] sm:$0xff] %vm4648, %v6604
      %6619 = vst.msk [vmem:[#allocation7 + $0x38] sm:$0xff] %vm4648, 0.0
      %v6620 = vmul.f32 %v6303, %v4356
      %v6621 = vmul.f32 %v6304, %v4358
      %v6622 = vmul.f32 %v6305, %v4360
      %v6623 = vmul.f32 %v6306, %v4362
      %v6624 = vmul.f32 %v6307, %v4364
      %v6625 = vmul.f32 %v6308, %v4366
      %v6626 = vmul.f32 %v6309, %v4368
      %6634 = vrot.lane.b32.xlu0 %v6620, 64
      %v6635 = vpop.permute.xlu0 %6634
      %6636 = vrot.lane.b32.xlu0 %v6621, 64
      %v6637 = vpop.permute.xlu0 %6636
      %6638 = vrot.lane.b32.xlu0 %v6622, 64
      %v6639 = vpop.permute.xlu0 %6638
      %6640 = vrot.lane.b32.xlu0 %v6623, 64
      %v6641 = vpop.permute.xlu0 %6640
      %6642 = vrot.lane.b32.xlu0 %v6624, 64
      %v6643 = vpop.permute.xlu0 %6642
      %6644 = vrot.lane.b32.xlu0 %v6625, 64
      %v6645 = vpop.permute.xlu0 %6644
      %6646 = vrot.lane.b32.xlu0 %v6626, 64
      %v6647 = vpop.permute.xlu0 %6646
      %6655 = vst.msk [vmem:[#allocation7 - $0x1] sm:$0xfe] %vm4692, %v6635
      %6656 = vst.msk [vmem:[#allocation7 + $0x7] sm:$0xff] %vm4694, %v6637
      %6657 = vst.msk [vmem:[#allocation7 + $0xf] sm:$0xff] %vm4694, %v6639
      %6658 = vst.msk [vmem:[#allocation7 + $0x17] sm:$0xff] %vm4694, %v6641
      %6659 = vst.msk [vmem:[#allocation7 + $0x1f] sm:$0xff] %vm4694, %v6643
      %6660 = vst.msk [vmem:[#allocation7 + $0x27] sm:$0xff] %vm4694, %v6645
      %6661 = vst.msk [vmem:[#allocation7 + $0x2f] sm:$0xff] %vm4694, %v6647
      %6662 = vst.msk [vmem:[#allocation7 + $0x37] sm:$0xff] %vm4694, 0.0
      %6663 = vst.msk [vmem:[#allocation7 + $0x3f] sm:$0x1] %vm4702, 0.0
      %v6664 = vld [vmem:[#allocation7] sm:$0xff]
      %v6665 = vld [vmem:[#allocation7 + $0x8] sm:$0xff]
      %v6666 = vld [vmem:[#allocation7 + $0x10] sm:$0xff]
      %v6667 = vld [vmem:[#allocation7 + $0x18] sm:$0xff]
      %v6668 = vld [vmem:[#allocation7 + $0x20] sm:$0xff]
      %v6669 = vld [vmem:[#allocation7 + $0x28] sm:$0xff]
      %v6670 = vld [vmem:[#allocation7 + $0x30] sm:$0xff]
      %v6671 = vld [vmem:[#allocation7 + $0x38] sm:$0xff]
      %v6672 = vpack.c.bf16 %v6665, %v6664
      %v6673 = vpack.c.bf16 %v6667, %v6666
      %v6674 = vpack.c.bf16 %v6669, %v6668
      %v6675 = vpack.c.bf16 %v6671, %v6670
      %v6676 = vld [vmem:[%s16] sm:$0xf]
      %v6677 = vld [vmem:[%s16 + $0x4] sm:$0xf]
      %v6678 = vld [vmem:[%s16 + $0x8] sm:$0xf]
      %v6679 = vld [vmem:[%s16 + $0xc] sm:$0xf]
      %v6680 = vld [vmem:[%s16 + $0x10] sm:$0xf]
      %v6681 = vld [vmem:[%s16 + $0x14] sm:$0xf]
      %v6682 = vld [vmem:[%s16 + $0x18] sm:$0xf]
      %v6683 = vld [vmem:[%s16 + $0x1c] sm:$0xf]
      %v6684 = vld [vmem:[%s16 + $0x20] sm:$0xf]
      %v6694 = vunpack.c.l.b16 %v6676
      %v6695 = vunpack.c.l.b16 %v6677
      %v6696 = vunpack.c.l.b16 %v6678
      %v6697 = vunpack.c.l.b16 %v6679
      %v6698 = vunpack.c.l.b16 %v6680
      %v6699 = vunpack.c.l.b16 %v6681
      %v6700 = vunpack.c.l.b16 %v6682
      %v6701 = vunpack.c.l.b16 %v6683
      %v6702 = vunpack.c.l.b16 %v6684
      %v6703 = vpack.c.b16 %v6695, %v6694
      %v6704 = vpack.c.b16 %v6697, %v6696
      %v6705 = vpack.c.b16 %v6699, %v6698
      %v6706 = vpack.c.b16 %v6701, %v6700
      %v6707 = vpack.c.b16 %v6702, %v6702
      %v6713 = vsel %vm4752, %v6672, 0
      %v6716 = vsel %vm4752, %v6673, 0
      %v6719 = vsel %vm4752, %v6674, 0
      %v6722 = vsel %vm4752, %v6675, 0
      %v6725 = vsel %vm4765, %v6707, 0
      %6727 = vmatpush.bf16.msra.mxu0 0
      %6728 = vmatpush.bf16.msra.mxu0 0
      %6729 = vmatpush.bf16.msra.mxu0 0
      %6730 = vmatpush.bf16.msra.mxu0 %v6725
      %6731 = vmatpush.bf16.msra.mxu0 %v6706
      %6732 = vmatpush.bf16.msra.mxu0 %v6705
      %6733 = vmatpush.bf16.msra.mxu0 %v6704
      %6734 = vmatpush.bf16.msra.mxu0 %v6703
      %6735 = vmatmul.bf16.gmra.mxu0 %v6713
      %v6736 = vpop.f32.mrf.mxu0
      %v6737 = vadd.f32 0.0, %v6736
      %v6738 = vpop.f32.mrf.mxu0
      %v6739 = vadd.f32 0.0, %v6738
      %6740 = vmatmul.bf16.gmra.mxu0 %v6716
      %v6741 = vpop.f32.mrf.mxu0
      %v6742 = vadd.f32 0.0, %v6741
      %v6743 = vpop.f32.mrf.mxu0
      %v6744 = vadd.f32 0.0, %v6743
      %6745 = vmatmul.bf16.gmra.mxu0 %v6719
      %v6746 = vpop.f32.mrf.mxu0
      %v6747 = vadd.f32 0.0, %v6746
      %v6748 = vpop.f32.mrf.mxu0
      %v6749 = vadd.f32 0.0, %v6748
      %6750 = vmatmul.bf16.gmra.mxu0 %v6722
      %v6751 = vpop.f32.mrf.mxu0
      %v6752 = vadd.f32 0.0, %v6751
      %v6753 = vpop.f32.mrf.mxu0
      %v6754 = vadd.f32 0.0, %v6753
      %6755 = vdwg.mxu0
      %v6756 = vld [vmem:[%s17] sm:$0x1]
      %v6758 = vperm.slane %v6756, 0
      %v6760 = vmul.f32 %v6737, %v6758
      %v6761 = vmul.f32 %v6739, %v6758
      %v6762 = vmul.f32 %v6742, %v6758
      %v6763 = vmul.f32 %v6744, %v6758
      %v6764 = vmul.f32 %v6747, %v6758
      %v6765 = vmul.f32 %v6749, %v6758
      %v6766 = vmul.f32 %v6752, %v6758
      %v6767 = vmul.f32 %v6754, %v6758
      %v6768 = vld [vmem:[%s18] sm:$0x1]
      %v6770 = vperm.slane %v6768, 0
      %v6772 = vadd.f32 %v6760, %v6770
      %v6773 = vadd.f32 %v6761, %v6770
      %v6774 = vadd.f32 %v6762, %v6770
      %v6775 = vadd.f32 %v6763, %v6770
      %v6776 = vadd.f32 %v6764, %v6770
      %v6777 = vadd.f32 %v6765, %v6770
      %v6778 = vadd.f32 %v6766, %v6770
      %v6779 = vadd.f32 %v6767, %v6770
      %v6780 = vmul.f32 %v6772, 0.5
      %v6781 = vmul.f32 %v6773, 0.5
      %v6782 = vmul.f32 %v6774, 0.5
      %v6783 = vmul.f32 %v6775, 0.5
      %v6784 = vmul.f32 %v6776, 0.5
      %v6785 = vmul.f32 %v6777, 0.5
      %v6786 = vmul.f32 %v6778, 0.5
      %v6787 = vmul.f32 %v6779, 0.5
      %v6788 = vmul.f32 %v6772, 0.70710677
      %v6789 = vmul.f32 %v6773, 0.70710677
      %v6790 = vmul.f32 %v6774, 0.70710677
      %v6791 = vmul.f32 %v6775, 0.70710677
      %v6792 = vmul.f32 %v6776, 0.70710677
      %v6793 = vmul.f32 %v6777, 0.70710677
      %v6794 = vmul.f32 %v6778, 0.70710677
      %v6795 = vmul.f32 %v6779, 0.70710677
      %v6796 = vand.u32 2147483647, %v6788
      %v6797 = vand.u32 2147483647, %v6789
      %v6798 = vand.u32 2147483647, %v6790
      %v6799 = vand.u32 2147483647, %v6791
      %v6800 = vand.u32 2147483647, %v6792
      %v6801 = vand.u32 2147483647, %v6793
      %v6802 = vand.u32 2147483647, %v6794
      %v6803 = vand.u32 2147483647, %v6795
      %v6804 = vmul.f32 %v6796, 0.3275911
      %v6805 = vmul.f32 %v6797, 0.3275911
      %v6806 = vmul.f32 %v6798, 0.3275911
      %v6807 = vmul.f32 %v6799, 0.3275911
      %v6808 = vmul.f32 %v6800, 0.3275911
      %v6809 = vmul.f32 %v6801, 0.3275911
      %v6810 = vmul.f32 %v6802, 0.3275911
      %v6811 = vmul.f32 %v6803, 0.3275911
      %v6812 = vadd.f32 %v6804, 1.0
      %v6813 = vadd.f32 %v6805, 1.0
      %v6814 = vadd.f32 %v6806, 1.0
      %v6815 = vadd.f32 %v6807, 1.0
      %v6816 = vadd.f32 %v6808, 1.0
      %v6817 = vadd.f32 %v6809, 1.0
      %v6818 = vadd.f32 %v6810, 1.0
      %v6819 = vadd.f32 %v6811, 1.0
      %v6820 = vrcp.pop %v6812
      %v6821 = vrcp.pop %v6813
      %v6822 = vrcp.pop %v6814
      %v6823 = vrcp.pop %v6815
      %v6824 = vrcp.pop %v6816
      %v6825 = vrcp.pop %v6817
      %v6826 = vrcp.pop %v6818
      %v6827 = vrcp.pop %v6819
      %v6828 = vmul.f32 %v6820, 1.0614054
      %v6829 = vmul.f32 %v6821, 1.0614054
      %v6830 = vmul.f32 %v6822, 1.0614054
      %v6831 = vmul.f32 %v6823, 1.0614054
      %v6832 = vmul.f32 %v6824, 1.0614054
      %v6833 = vmul.f32 %v6825, 1.0614054
      %v6834 = vmul.f32 %v6826, 1.0614054
      %v6835 = vmul.f32 %v6827, 1.0614054
      %v6836 = vadd.f32 %v6828, -1.4531521
      %v6837 = vadd.f32 %v6829, -1.4531521
      %v6838 = vadd.f32 %v6830, -1.4531521
      %v6839 = vadd.f32 %v6831, -1.4531521
      %v6840 = vadd.f32 %v6832, -1.4531521
      %v6841 = vadd.f32 %v6833, -1.4531521
      %v6842 = vadd.f32 %v6834, -1.4531521
      %v6843 = vadd.f32 %v6835, -1.4531521
      %v6844 = vmul.f32 %v6836, %v6820
      %v6845 = vmul.f32 %v6837, %v6821
      %v6846 = vmul.f32 %v6838, %v6822
      %v6847 = vmul.f32 %v6839, %v6823
      %v6848 = vmul.f32 %v6840, %v6824
      %v6849 = vmul.f32 %v6841, %v6825
      %v6850 = vmul.f32 %v6842, %v6826
      %v6851 = vmul.f32 %v6843, %v6827
      %v6852 = vadd.f32 %v6844, 1.4214138
      %v6853 = vadd.f32 %v6845, 1.4214138
      %v6854 = vadd.f32 %v6846, 1.4214138
      %v6855 = vadd.f32 %v6847, 1.4214138
      %v6856 = vadd.f32 %v6848, 1.4214138
      %v6857 = vadd.f32 %v6849, 1.4214138
      %v6858 = vadd.f32 %v6850, 1.4214138
      %v6859 = vadd.f32 %v6851, 1.4214138
      %v6860 = vmul.f32 %v6852, %v6820
      %v6861 = vmul.f32 %v6853, %v6821
      %v6862 = vmul.f32 %v6854, %v6822
      %v6863 = vmul.f32 %v6855, %v6823
      %v6864 = vmul.f32 %v6856, %v6824
      %v6865 = vmul.f32 %v6857, %v6825
      %v6866 = vmul.f32 %v6858, %v6826
      %v6867 = vmul.f32 %v6859, %v6827
      %v6868 = vadd.f32 %v6860, -0.28449672
      %v6869 = vadd.f32 %v6861, -0.28449672
      %v6870 = vadd.f32 %v6862, -0.28449672
      %v6871 = vadd.f32 %v6863, -0.28449672
      %v6872 = vadd.f32 %v6864, -0.28449672
      %v6873 = vadd.f32 %v6865, -0.28449672
      %v6874 = vadd.f32 %v6866, -0.28449672
      %v6875 = vadd.f32 %v6867, -0.28449672
      %v6876 = vmul.f32 %v6868, %v6820
      %v6877 = vmul.f32 %v6869, %v6821
      %v6878 = vmul.f32 %v6870, %v6822
      %v6879 = vmul.f32 %v6871, %v6823
      %v6880 = vmul.f32 %v6872, %v6824
      %v6881 = vmul.f32 %v6873, %v6825
      %v6882 = vmul.f32 %v6874, %v6826
      %v6883 = vmul.f32 %v6875, %v6827
      %v6884 = vadd.f32 %v6876, 0.2548296
      %v6885 = vadd.f32 %v6877, 0.2548296
      %v6886 = vadd.f32 %v6878, 0.2548296
      %v6887 = vadd.f32 %v6879, 0.2548296
      %v6888 = vadd.f32 %v6880, 0.2548296
      %v6889 = vadd.f32 %v6881, 0.2548296
      %v6890 = vadd.f32 %v6882, 0.2548296
      %v6891 = vadd.f32 %v6883, 0.2548296
      %v6892 = vmul.f32 %v6884, %v6820
      %v6893 = vmul.f32 %v6885, %v6821
      %v6894 = vmul.f32 %v6886, %v6822
      %v6895 = vmul.f32 %v6887, %v6823
      %v6896 = vmul.f32 %v6888, %v6824
      %v6897 = vmul.f32 %v6889, %v6825
      %v6898 = vmul.f32 %v6890, %v6826
      %v6899 = vmul.f32 %v6891, %v6827
      %v6900 = vsub.f32 0.0, %v6796
      %v6901 = vsub.f32 0.0, %v6797
      %v6902 = vsub.f32 0.0, %v6798
      %v6903 = vsub.f32 0.0, %v6799
      %v6904 = vsub.f32 0.0, %v6800
      %v6905 = vsub.f32 0.0, %v6801
      %v6906 = vsub.f32 0.0, %v6802
      %v6907 = vsub.f32 0.0, %v6803
      %v6908 = vmul.f32 %v6900, %v6796
      %v6909 = vmul.f32 %v6901, %v6797
      %v6910 = vmul.f32 %v6902, %v6798
      %v6911 = vmul.f32 %v6903, %v6799
      %v6912 = vmul.f32 %v6904, %v6800
      %v6913 = vmul.f32 %v6905, %v6801
      %v6914 = vmul.f32 %v6906, %v6802
      %v6915 = vmul.f32 %v6907, %v6803
      %v6916 = vmul.f32 %v6908, 1.442695
      %v6917 = vpow.pop %v6916
      %v6918 = vmul.f32 %v6909, 1.442695
      %v6919 = vpow.pop %v6918
      %v6920 = vmul.f32 %v6910, 1.442695
      %v6921 = vpow.pop %v6920
      %v6922 = vmul.f32 %v6911, 1.442695
      %v6923 = vpow.pop %v6922
      %v6924 = vmul.f32 %v6912, 1.442695
      %v6925 = vpow.pop %v6924
      %v6926 = vmul.f32 %v6913, 1.442695
      %v6927 = vpow.pop %v6926
      %v6928 = vmul.f32 %v6914, 1.442695
      %v6929 = vpow.pop %v6928
      %v6930 = vmul.f32 %v6915, 1.442695
      %v6931 = vpow.pop %v6930
      %v6932 = vmul.f32 %v6892, %v6917
      %v6933 = vmul.f32 %v6893, %v6919
      %v6934 = vmul.f32 %v6894, %v6921
      %v6935 = vmul.f32 %v6895, %v6923
      %v6936 = vmul.f32 %v6896, %v6925
      %v6937 = vmul.f32 %v6897, %v6927
      %v6938 = vmul.f32 %v6898, %v6929
      %v6939 = vmul.f32 %v6899, %v6931
      %v6940 = vsub.f32 1.0, %v6932
      %v6941 = vsub.f32 1.0, %v6933
      %v6942 = vsub.f32 1.0, %v6934
      %v6943 = vsub.f32 1.0, %v6935
      %v6944 = vsub.f32 1.0, %v6936
      %v6945 = vsub.f32 1.0, %v6937
      %v6946 = vsub.f32 1.0, %v6938
      %v6947 = vsub.f32 1.0, %v6939
      %vm6948 = vcmp.ge.f32.partialorder %v6788, 0.0
      %vm6949 = vcmp.ge.f32.partialorder %v6789, 0.0
      %vm6950 = vcmp.ge.f32.partialorder %v6790, 0.0
      %vm6951 = vcmp.ge.f32.partialorder %v6791, 0.0
      %vm6952 = vcmp.ge.f32.partialorder %v6792, 0.0
      %vm6953 = vcmp.ge.f32.partialorder %v6793, 0.0
      %vm6954 = vcmp.ge.f32.partialorder %v6794, 0.0
      %vm6955 = vcmp.ge.f32.partialorder %v6795, 0.0
      %v6956 = vsub.f32 0.0, %v6940
      %v6957 = vsub.f32 0.0, %v6941
      %v6958 = vsub.f32 0.0, %v6942
      %v6959 = vsub.f32 0.0, %v6943
      %v6960 = vsub.f32 0.0, %v6944
      %v6961 = vsub.f32 0.0, %v6945
      %v6962 = vsub.f32 0.0, %v6946
      %v6963 = vsub.f32 0.0, %v6947
      %v6964 = vsel %vm6948, %v6940, %v6956
      %v6965 = vsel %vm6949, %v6941, %v6957
      %v6966 = vsel %vm6950, %v6942, %v6958
      %v6967 = vsel %vm6951, %v6943, %v6959
      %v6968 = vsel %vm6952, %v6944, %v6960
      %v6969 = vsel %vm6953, %v6945, %v6961
      %v6970 = vsel %vm6954, %v6946, %v6962
      %v6971 = vsel %vm6955, %v6947, %v6963
      %v6972 = vadd.f32 %v6964, 1.0
      %v6973 = vadd.f32 %v6965, 1.0
      %v6974 = vadd.f32 %v6966, 1.0
      %v6975 = vadd.f32 %v6967, 1.0
      %v6976 = vadd.f32 %v6968, 1.0
      %v6977 = vadd.f32 %v6969, 1.0
      %v6978 = vadd.f32 %v6970, 1.0
      %v6979 = vadd.f32 %v6971, 1.0
      %v6980 = vmul.f32 %v6780, %v6972
      %v6981 = vmul.f32 %v6781, %v6973
      %v6982 = vmul.f32 %v6782, %v6974
      %v6983 = vmul.f32 %v6783, %v6975
      %v6984 = vmul.f32 %v6784, %v6976
      %v6985 = vmul.f32 %v6785, %v6977
      %v6986 = vmul.f32 %v6786, %v6978
      %v6987 = vmul.f32 %v6787, %v6979
      %6988 = vst [vmem:[#allocation11] ss:$2 sm:$0xff] %v6980
      %s6989 = scalar_lea.vmem [#allocation11], 16
      %6990 = vst [vmem:[%s6989] ss:$2 sm:$0xff] %v6981
      %s6991 = scalar_lea.vmem [#allocation11], 32
      %6992 = vst [vmem:[%s6991] ss:$2 sm:$0xff] %v6982
      %s6993 = scalar_lea.vmem [#allocation11], 48
      %6994 = vst [vmem:[%s6993] ss:$2 sm:$0xff] %v6983
      %s6995 = scalar_lea.vmem [#allocation11], 64
      %6996 = vst [vmem:[%s6995] ss:$2 sm:$0xff] %v6984
      %s6997 = scalar_lea.vmem [#allocation11], 80
      %6998 = vst [vmem:[%s6997] ss:$2 sm:$0xff] %v6985
      %s6999 = scalar_lea.vmem [#allocation11], 96
      %7000 = vst [vmem:[%s6999] ss:$2 sm:$0xff] %v6986
      %s7001 = scalar_lea.vmem [#allocation11], 112
      %7002 = vst [vmem:[%s7001] ss:$2 sm:$0xff] %v6987
      %s7003 = scalar_lea.vmem [#allocation11], 1
      %7004 = vst [vmem:[%s7003] ss:$2 sm:$0xff] %v6980
      %s7005 = scalar_lea.vmem [#allocation11], 17
      %7006 = vst [vmem:[%s7005] ss:$2 sm:$0xff] %v6981
      %s7007 = scalar_lea.vmem [#allocation11], 33
      %7008 = vst [vmem:[%s7007] ss:$2 sm:$0xff] %v6982
      %s7009 = scalar_lea.vmem [#allocation11], 49
      %7010 = vst [vmem:[%s7009] ss:$2 sm:$0xff] %v6983
      %s7011 = scalar_lea.vmem [#allocation11], 65
      %7012 = vst [vmem:[%s7011] ss:$2 sm:$0xff] %v6984
      %s7013 = scalar_lea.vmem [#allocation11], 81
      %7014 = vst [vmem:[%s7013] ss:$2 sm:$0xff] %v6985
      %s7015 = scalar_lea.vmem [#allocation11], 97
      %7016 = vst [vmem:[%s7015] ss:$2 sm:$0xff] %v6986
      %s7017 = scalar_lea.vmem [#allocation11], 113
      %7018 = vst [vmem:[%s7017] ss:$2 sm:$0xff] %v6987
      %v7019 = vld [vmem:[#allocation11] sm:$0xff]
      %v7020 = vld [vmem:[#allocation11 + $0x8] sm:$0xff]
      %7021 = vst.msk [vmem:[%s602] sm:$0xff] %vm1395, %v7019
      %7022 = vst.msk [vmem:[%s602 + $0x8] sm:$0xff] %vm1395, %v7020
      %7023 = vst.msk [vmem:[%s602 + $0x10] sm:$0xff] %vm1395, %v7019
      %7024 = vst.msk [vmem:[%s602 + $0x18] sm:$0xff] %vm1395, %v7020
      %v7025 = vld [vmem:[#allocation11 + $0x10] sm:$0xff]
      %v7026 = vld [vmem:[#allocation11 + $0x18] sm:$0xff]
      %7027 = vst.msk [vmem:[%s602 + $0x20] sm:$0xff] %vm1395, %v7025
      %7028 = vst.msk [vmem:[%s602 + $0x28] sm:$0xff] %vm1395, %v7026
      %7029 = vst.msk [vmem:[%s602 + $0x30] sm:$0xff] %vm1395, %v7025
      %7030 = vst.msk [vmem:[%s602 + $0x38] sm:$0xff] %vm1395, %v7026
      %v7031 = vld [vmem:[#allocation11 + $0x20] sm:$0xff]
      %v7032 = vld [vmem:[#allocation11 + $0x28] sm:$0xff]
      %7033 = vst.msk [vmem:[%s602 + $0x40] sm:$0xff] %vm1395, %v7031
      %7034 = vst.msk [vmem:[%s602 + $0x48] sm:$0xff] %vm1395, %v7032
      %7035 = vst.msk [vmem:[%s602 + $0x50] sm:$0xff] %vm1395, %v7031
      %7036 = vst.msk [vmem:[%s602 + $0x58] sm:$0xff] %vm1395, %v7032
      %v7037 = vld [vmem:[#allocation11 + $0x30] sm:$0xff]
      %v7038 = vld [vmem:[#allocation11 + $0x38] sm:$0xff]
      %7039 = vst.msk [vmem:[%s602 + $0x60] sm:$0xff] %vm1395, %v7037
      %7040 = vst.msk [vmem:[%s602 + $0x68] sm:$0xff] %vm1395, %v7038
      %7041 = vst.msk [vmem:[%s602 + $0x70] sm:$0xff] %vm1395, %v7037
      %7042 = vst.msk [vmem:[%s602 + $0x78] sm:$0xff] %vm1395, %v7038
      %v7043 = vld [vmem:[#allocation11 + $0x40] sm:$0xff]
      %v7044 = vld [vmem:[#allocation11 + $0x48] sm:$0xff]
      %7045 = vst.msk [vmem:[%s602 + $0x80] sm:$0xff] %vm1395, %v7043
      %7046 = vst.msk [vmem:[%s602 + $0x88] sm:$0xff] %vm1395, %v7044
      %7047 = vst.msk [vmem:[%s602 + $0x90] sm:$0xff] %vm1395, %v7043
      %7048 = vst.msk [vmem:[%s602 + $0x98] sm:$0xff] %vm1395, %v7044
      %v7049 = vld [vmem:[#allocation11 + $0x50] sm:$0xff]
      %v7050 = vld [vmem:[#allocation11 + $0x58] sm:$0xff]
      %7051 = vst.msk [vmem:[%s602 + $0xa0] sm:$0xff] %vm1395, %v7049
      %7052 = vst.msk [vmem:[%s602 + $0xa8] sm:$0xff] %vm1395, %v7050
      %7053 = vst.msk [vmem:[%s602 + $0xb0] sm:$0xff] %vm1395, %v7049
      %7054 = vst.msk [vmem:[%s602 + $0xb8] sm:$0xff] %vm1395, %v7050
      %v7055 = vld [vmem:[#allocation11 + $0x60] sm:$0xff]
      %v7056 = vld [vmem:[#allocation11 + $0x68] sm:$0xff]
      %7057 = vst.msk [vmem:[%s602 + $0xc0] sm:$0xff] %vm1395, %v7055
      %7058 = vst.msk [vmem:[%s602 + $0xc8] sm:$0xff] %vm1395, %v7056
      %7059 = vst.msk [vmem:[%s602 + $0xd0] sm:$0xff] %vm1395, %v7055
      %7060 = vst.msk [vmem:[%s602 + $0xd8] sm:$0xff] %vm1395, %v7056
      %v7061 = vld [vmem:[#allocation11 + $0x70] sm:$0xff]
      %v7062 = vld [vmem:[#allocation11 + $0x78] sm:$0xff]
      %7063 = vst.msk [vmem:[%s602 + $0xe0] sm:$0xff] %vm1395, %v7061
      %7064 = vst.msk [vmem:[%s602 + $0xe8] sm:$0xff] %vm1395, %v7062
      %7065 = vst.msk [vmem:[%s602 + $0xf0] sm:$0xff] %vm1395, %v7061
      %7066 = vst.msk [vmem:[%s602 + $0xf8] sm:$0xff] %vm1395, %v7062
      %p7067 = scmp.lt.s32.totalorder %s30, 1
      %s7068 = scalar_select %p7067, %s30, 1
      %s7069 = smul.addr %s7068, 32
      %s7070 = smul.addr %s7069, 8
      %s7071 = scalar_lea.vmem %s19, %s7070
      // Predicated region
      $region97: #{hourglass_forward.1} parent=95 // pred_check
        %p7072 = pneg %p452
      $region98: #{hourglass_forward.1} parent=95 // pred_check_branch
        %7074 = sbr.rel (%p7072) target = $region100
      $region99: #{hourglass_forward.1} parent=95 // pred_region
        _
      $region100: #{hourglass_forward.1} parent=95 // pred_fallthru
        _
    $region96: #{hourglass_forward.1} parent=5 // pred_fallthru
      _
    %p7075 = scmp.le.s32.totalorder 2, %s25
    // Predicated region
    $region101: #{hourglass_forward.1} parent=5 // pred_check
      %p7076 = pneg %p7075
    $region102: #{hourglass_forward.1} parent=5 // pred_check_branch
      %7078 = sbr.rel (%p7076) target = $region104
    $region103: #{hourglass_forward.1} parent=5 // pred_region
      %s7079 = ssub.s32 %s25, 2
      // Predicated region
      $region105: #{hourglass_forward.1} parent=103 // pred_check
        %p7080 = pneg %p458
      $region106: #{hourglass_forward.1} parent=103 // pred_check_branch
        %7082 = sbr.rel (%p7080) target = $region108
      $region107: #{hourglass_forward.1} parent=103 // pred_region
        %p7083 = scmp.lt.s32.totalorder %s31, 1
        %s7084 = scalar_select %p7083, %s31, 1
        %s7085 = smul.addr %s7084, 32
        %s7086 = smul.addr %s7085, 8
        %s7087 = scalar_lea.vmem %s19, %s7086
      $region108: #{hourglass_forward.1} parent=103 // pred_fallthru
        _
    $region104: #{hourglass_forward.1} parent=5 // pred_fallthru
      _
  $region6: #{hourglass_forward.1} parent=0 // loop_footer
    %s29 = sadd.s32 1, %s25
  $region7: #{hourglass_forward.1} parent=0 // loop_footer_branch
    %24 = sbr.rel target = $region3
  $region8: #{hourglass_forward.1} parent=0 // loop_exit
    _

</llo_original>
